<compile_context>
chip_gen: v7x
topology: tpu7x:2x2x1
jax: 0.10.0
libtpu: 0.0.40
codegen_flags: <defaults>
</compile_context>

<pallas_src>
import math

import jax
import jax.numpy as jnp
from jax import lax
from jax.experimental import pallas as pl
from jax.experimental.pallas import tpu as pltpu


def _vmem_limit_bytes():
    # Generation-aware budget: ~75% of per-core VMEM (96 MiB on v5e/v6e, 48 MiB on v7x).
    # Conservative 48 MiB fallback (safe on every generation) if the query is unavailable.
    try:
        cap = int(pltpu.get_tpu_info().vmem_capacity_bytes)
        return max(32 * 1024 * 1024, min(int(cap * 3 // 4), 96 * 1024 * 1024))
    except Exception:
        return 48 * 1024 * 1024


_VMEM_LIMIT = _vmem_limit_bytes()


# --------------------------------------------------------------------------
# in-kernel helpers
# --------------------------------------------------------------------------
def _rmsnorm(x, scale, eps):
    # x: (M, D) f32, scale: (D,) f32
    ms = jnp.mean(x * x, axis=-1, keepdims=True)
    return x * lax.rsqrt(ms + eps) * scale


# --------------------------------------------------------------------------
# stacked transformer-layer kernel   grid = (B, n_layer), layer axis innermost
# --------------------------------------------------------------------------
def _make_stack_kernel(L, D, n_head, eps=1e-6):
    H = D // n_head
    half = H // 2
    Dh = D // 2

    def kernel(x_ref, n1_ref, wqkv_ref, cos_ref, sin_ref,
               wo_ref, n2_ref, w1_ref, w2_ref, w3_ref, y_ref):
        # y_ref's block index only depends on the batch axis, so the (1, L, D) output
        # block stays resident across the layer axis and carries the residual stream.
        @pl.when(pl.program_id(1) == 0)
        def _():
            y_ref[0] = x_ref[0]

        x = y_ref[0]                                                  # (L, D) f32

        # ----- attention branch -----
        h = _rmsnorm(x, n1_ref[0, 0], eps).astype(jnp.bfloat16)      # (L, D) bf16
        qkv = jnp.dot(h, wqkv_ref[0],
                      preferred_element_type=jnp.float32)             # (L, 3D) f32
        q = qkv[:, :D]
        k = qkv[:, D:2 * D]
        v = qkv[:, 2 * D:].astype(jnp.bfloat16)

        # Full-width RoPE in the offline "split" layout: rotate-half == swap of the two
        # D/2-wide halves (both 128-lane aligned). cos/sin are (L, D), lane-dense, with
        # the attention scale folded in, and sin is pre-signed (-sin | +sin).
        cos = cos_ref[...]
        sin = sin_ref[...]
        q_sw = jnp.concatenate([q[:, Dh:], q[:, :Dh]], axis=1)
        k_sw = jnp.concatenate([k[:, Dh:], k[:, :Dh]], axis=1)
        qr = (q * cos + q_sw * sin).astype(jnp.bfloat16)
        kr = (k * cos + k_sw * sin).astype(jnp.bfloat16)

        row = lax.broadcasted_iota(jnp.int32, (L, L), 0)
        col = lax.broadcasted_iota(jnp.int32, (L, L), 1)
        causal = col <= row

        # TODO(synk): for large n_head, stage qr/kr/v into VMEM scratch and switch this
        # static loop to lax.fori_loop to bound vreg live ranges.
        ctx_heads = []
        for hh in range(n_head):
            a0 = hh * half
            # Head hh occupies lanes [a0, a0+half) (even comps) and [Dh+a0, Dh+a0+half)
            # (odd comps); the per-head score is the sum of the two partial contractions
            # (scores are invariant to the within-head column permutation).
            s = lax.dot_general(qr[:, a0:a0 + half], kr[:, a0:a0 + half],
                                (((1,), (1,)), ((), ())),
                                preferred_element_type=jnp.float32)
            s = s + lax.dot_general(qr[:, Dh + a0:Dh + a0 + half],
                                    kr[:, Dh + a0:Dh + a0 + half],
                                    (((1,), (1,)), ((), ())),
                                    preferred_element_type=jnp.float32)
            s = jnp.where(causal, s, -1e30)
            s = s - jnp.max(s, axis=-1, keepdims=True)
            p = jnp.exp(s)                                            # unnormalized
            denom = jnp.sum(p, axis=-1, keepdims=True)                # (L, 1) f32
            o = jnp.dot(p.astype(jnp.bfloat16), v[:, hh * H:(hh + 1) * H],
                        preferred_element_type=jnp.float32)           # (L, H) f32
            # normalize the (L, H) context, not the (L, L) probabilities (EUP recip)
            o = o * pl.reciprocal(denom, approx=True)
            ctx_heads.append(o.astype(jnp.bfloat16))
        ctx = jnp.concatenate(ctx_heads, axis=1)                      # (L, D) bf16
        # single output projection with K = D (full MXU depth)
        x_att = x + jnp.dot(ctx, wo_ref[0], preferred_element_type=jnp.float32)

        # ----- MLP branch (SwiGLU); n_hidden zero-padded to a lane multiple -----
        h2 = _rmsnorm(x_att, n2_ref[0, 0], eps).astype(jnp.bfloat16)
        g = jnp.dot(h2, w1_ref[0], preferred_element_type=jnp.float32)
        u = jnp.dot(h2, w2_ref[0], preferred_element_type=jnp.float32)
        m = ((g * jax.nn.sigmoid(g)) * u).astype(jnp.bfloat16)
        mlp = jnp.dot(m, w3_ref[0], preferred_element_type=jnp.float32)

        y_ref[0] = (x_att + mlp).astype(y_ref.dtype)

    return kernel


def llama_stack(x, params, n_head):
    B, L, D = x.shape
    n_layer = params["wqkv_split"].shape[0]
    nh_pad = params["w1_pad"].shape[2]
    cos_full, sin_signed = rope_tables_split(L, D, n_head)
    kernel = _make_stack_kernel(L, D, n_head)

    def lspec(shape):
        nd = len(shape)
        return pl.BlockSpec((1,) + shape, lambda b, l, _nd=nd: (l,) + (0,) * _nd)

    in_specs = [
        pl.BlockSpec((1, L, D), lambda b, l: (b, 0, 0)),   # x (consumed at layer 0)
        lspec((1, D)),                                     # norm1 scale (f32)
        lspec((D, 3 * D)),                                 # wqkv, split layout (bf16)
        pl.BlockSpec((L, D), lambda b, l: (0, 0)),         # rope cos (scaled, f32)
        pl.BlockSpec((L, D), lambda b, l: (0, 0)),         # rope sin (signed+scaled, f32)
        lspec((D, D)),                                     # attn out proj (bf16)
        lspec((1, D)),                                     # norm2 scale (f32)
        lspec((D, nh_pad)),                                # fc1 (bf16, lane-padded)
        lspec((D, nh_pad)),                                # fc2 (bf16, lane-padded)
        lspec((nh_pad, D)),                                # mlp proj (bf16, lane-padded)
    ]
    out_specs = pl.BlockSpec((1, L, D), lambda b, l: (b, 0, 0))

    flops = int(B * n_layer * 2 * L * D * (3 * D + 2 * L + D + 3 * nh_pad))
    trans = int(B * n_layer * (n_head * L * L + L * nh_pad + 2 * L))
    bytes_acc = int(B * n_layer * 2 * (3 * D * D + D * D + 3 * D * nh_pad)
                    + 2 * B * L * D * 4 + 2 * L * D * 4)
    cost = pl.CostEstimate(flops=flops, transcendentals=trans, bytes_accessed=bytes_acc)

    return pl.pallas_call(
        kernel,
        out_shape=jax.ShapeDtypeStruct((B, L, D), jnp.float32),
        grid_spec=pltpu.PrefetchScalarGridSpec(
            num_scalar_prefetch=0,
            grid=(B, n_layer),                 # layer axis innermost (sequential carry)
            in_specs=in_specs,
            out_specs=out_specs,
        ),
        compiler_params=pltpu.CompilerParams(
            dimension_semantics=("parallel", "arbitrary"),
            vmem_limit_bytes=_VMEM_LIMIT),
        cost_estimate=cost,
    )(x, params["norm1"], params["wqkv_split"], cos_full, sin_signed,
      params["wo"], params["norm2"], params["w1_pad"], params["w2_pad"],
      params["w3_pad"])


# --------------------------------------------------------------------------
# final RMSNorm (emits bf16) + lm_head matmul, tiled over (rows, vocab)
# --------------------------------------------------------------------------
def _pick_tile(n, pref):
    # Largest tile <= pref dividing n; demo shapes are multiples of 128 so this never
    # degenerates into a giant full-array block.
    t = min(pref, n)
    while t > 128 and n % t:
        t //= 2
    if n % t:
        t = n
    return t


def _final_norm_kernel(x_ref, scale_ref, o_ref):
    o_ref[...] = _rmsnorm(x_ref[...], scale_ref[0], 1e-6).astype(o_ref.dtype)


def final_norm(x2d, scale, *, tm=128):
    M, D = x2d.shape
    tm = _pick_tile(M, tm)
    cost = pl.CostEstimate(flops=int(4 * M * D), transcendentals=int(M),
                           bytes_accessed=int(M * D * 4 + M * D * 2 + D * 4))
    return pl.pallas_call(
        _final_norm_kernel,
        out_shape=jax.ShapeDtypeStruct((M, D), jnp.bfloat16),
        grid_spec=pltpu.PrefetchScalarGridSpec(
            num_scalar_prefetch=0,
            grid=(M // tm,),
            in_specs=[pl.BlockSpec((tm, D), lambda i: (i, 0)),
                      pl.BlockSpec((1, D), lambda i: (0, 0))],
            out_specs=pl.BlockSpec((tm, D), lambda i: (i, 0)),
        ),
        compiler_params=pltpu.CompilerParams(
            dimension_semantics=("parallel",),
            vmem_limit_bytes=_VMEM_LIMIT),
        cost_estimate=cost,
    )(x2d, scale)


def _head_kernel(h_ref, w_ref, o_ref):
    o_ref[...] = jnp.dot(h_ref[...], w_ref[...],
                         preferred_element_type=jnp.float32).astype(o_ref.dtype)


def lm_head(h2d, w_head, *, tm=128, tv=512):
    # TODO(synk): at production vocab/D, add an embed-dim reduction grid axis and a bf16
    # logits option instead of keeping D resident per tile.
    M, D = h2d.shape
    V = w_head.shape[1]
    tm = _pick_tile(M, tm)
    tv = _pick_tile(V, tv)
    cost = pl.CostEstimate(flops=int(2 * M * D * V), transcendentals=0,
                           bytes_accessed=int(M * D * 2 + D * V * 2 + M * V * 4))
    return pl.pallas_call(
        _head_kernel,
        out_shape=jax.ShapeDtypeStruct((M, V), jnp.float32),
        grid_spec=pltpu.PrefetchScalarGridSpec(
            num_scalar_prefetch=0,
            grid=(M // tm, V // tv),
            in_specs=[pl.BlockSpec((tm, D), lambda i, j: (i, 0)),
                      pl.BlockSpec((D, tv), lambda i, j: (0, j))],
            out_specs=pl.BlockSpec((tm, tv), lambda i, j: (i, j)),
        ),
        compiler_params=pltpu.CompilerParams(
            dimension_semantics=("parallel", "parallel"),
            vmem_limit_bytes=_VMEM_LIMIT),
        cost_estimate=cost,
    )(h2d, w_head)


# --------------------------------------------------------------------------
# RoPE tables + offline weight column permutation (interleaved -> split layout)
# --------------------------------------------------------------------------
def rope_tables(L, D, n_head):
    H = D // n_head
    half = H // 2
    inv_freq = 1.0 / (10000.0 ** (jnp.arange(half, dtype=jnp.float32) * 2.0 / H))
    ang = jnp.outer(jnp.arange(L, dtype=jnp.float32), inv_freq)       # (L, half)
    return jnp.cos(ang), jnp.sin(ang)


def rope_tables_split(L, D, n_head):
    # Lane-dense (L, D) tables matching the split layout, with the attention scale
    # (H**-0.25 on each of q and k -> H**-0.5 on the scores) folded in, and the sign of
    # the rotate-half partner folded into sin ([-sin | +sin]).
    cos, sin = rope_tables(L, D, n_head)
    H = D // n_head
    scale = float(H) ** -0.25
    cos_full = jnp.tile(cos, (1, 2 * n_head)) * scale
    sin_half = jnp.tile(sin, (1, n_head)) * scale
    sin_signed = jnp.concatenate([-sin_half, sin_half], axis=1)
    return cos_full, sin_signed


def _split_perm(D, n_head):
    H = D // n_head
    half = H // 2
    h = jnp.arange(n_head)
    i = jnp.arange(half)
    x1 = (h[:, None] * H + 2 * i[None, :]).reshape(-1)                # even components
    x2 = x1 + 1                                                        # odd components
    return jnp.concatenate([x1, x2]).astype(jnp.int32)                 # (D,)


def permute_wqkv_split(wqkv, n_head):
    # Permute q/k output columns into the split layout (all even-pair components first,
    # then all odd-pair components); v is untouched.  Scores are invariant because the
    # same within-head permutation is applied to both q and k.
    D = wqkv.shape[0]
    perm = _split_perm(D, n_head)
    wq = wqkv[:, :D][:, perm]
    wk = wqkv[:, D:2 * D][:, perm]
    wv = wqkv[:, 2 * D:]
    return jnp.concatenate([wq, wk, wv], axis=1)


# --------------------------------------------------------------------------
# full forward
# --------------------------------------------------------------------------
def llama_forward(ids, params, n_head):
    B, L = ids.shape
    emb = params["emb"]                                               # (V, D) f32
    D = emb.shape[1]
    # embedding gather stays in plain JAX (glue).
    x = jnp.take(emb, ids, axis=0).astype(jnp.float32)                # (B, L, D)
    x = llama_stack(x, params, n_head)                                # all layers
    h = final_norm(x.reshape(B * L, D), params["final_norm"])         # bf16 (B*L, D)
    logits = lm_head(h, params["lm_head"])                            # f32 (B*L, V)
    return logits.reshape(B, L, -1)


# --------------------------------------------------------------------------
# pure-JAX reference (mirrors the PyTorch semantics + the kernel's bf16 casts)
# --------------------------------------------------------------------------
def _ref_rmsnorm(x, scale, eps=1e-6):
    ms = jnp.mean(x * x, axis=-1, keepdims=True)
    return x * lax.rsqrt(ms + eps) * scale


def _ref_rope(x, cos, sin):
    # x: (B, L, N, H), interleaved pairs
    B, L, N, H = x.shape
    xr = x.reshape(B, L, N, H // 2, 2)
    x1, x2 = xr[..., 0], xr[..., 1]
    c = cos[None, :, None, :]
    s = sin[None, :, None, :]
    o1 = x1 * c - x2 * s
    o2 = x1 * s + x2 * c
    return jnp.stack([o1, o2], axis=-1).reshape(B, L, N, H)


def ref_forward(ids, params, n_head):
    B, L = ids.shape
    emb = params["emb"]
    D = emb.shape[1]
    Hd = D // n_head
    n_layer = params["wqkv"].shape[0]
    cos, sin = rope_tables(L, D, n_head)
    x = jnp.take(emb, ids, axis=0).astype(jnp.float32)
    causal = jnp.tril(jnp.ones((L, L), dtype=bool))

    def bdot(a, b):                     # b is bf16; mirror the kernel's bf16 inputs
        return jnp.dot(a.astype(jnp.bfloat16), b, preferred_element_type=jnp.float32)

    for li in range(n_layer):
        h = _ref_rmsnorm(x, params["norm1"][li, 0])
        qkv = bdot(h, params["wqkv"][li])
        q, k, v = jnp.split(qkv, 3, axis=-1)
        q = _ref_rope(q.reshape(B, L, n_head, Hd), cos, sin)
        k = _ref_rope(k.reshape(B, L, n_head, Hd), cos, sin)
        v = v.reshape(B, L, n_head, Hd)
        s = jnp.einsum("blnh,bmnh->bnlm",
                       q.astype(jnp.bfloat16), k.astype(jnp.bfloat16),
                       preferred_element_type=jnp.float32) / math.sqrt(Hd)
        s = jnp.where(causal[None, None], s, -jnp.inf)
        p = jax.nn.softmax(s, axis=-1)
        o = jnp.einsum("bnlm,bmnh->blnh",
                       p.astype(jnp.bfloat16), v.astype(jnp.bfloat16),
                       preferred_element_type=jnp.float32).reshape(B, L, D)
        x = x + bdot(o, params["wo"][li])
        h2 = _ref_rmsnorm(x, params["norm2"][li, 0])
        g = bdot(h2, params["w1"][li])
        u = bdot(h2, params["w2"][li])
        x = x + bdot((g * jax.nn.sigmoid(g)) * u, params["w3"][li])
    xh = _ref_rmsnorm(x, params["final_norm"][0])
    return bdot(xh, params["lm_head"])


# --------------------------------------------------------------------------
# parameter init (weights stored bf16, norms/embedding f32, layers stacked)
# --------------------------------------------------------------------------
def init_params(key, vocab_size, n_embd, n_head, n_layer):
    n_hidden = int(8 * n_embd / 3)                 # module semantics (682 at n_embd=256)
    nh_pad = 128 * pl.cdiv(n_hidden, 128)          # lane-dense kernel layout (768)
    keys = jax.random.split(key, 2 + 5 * n_layer)
    kit = iter(keys)

    def w(k, shape):
        return (0.02 * jax.random.normal(k, shape, jnp.float32)).astype(jnp.bfloat16)

    emb = 0.02 * jax.random.normal(next(kit), (vocab_size, n_embd), jnp.float32)
    lm_head_w = w(next(kit), (n_embd, vocab_size))

    per_layer = {"norm1": [], "norm2": [], "wqkv": [], "wqkv_split": [], "wo": [],
                 "w1": [], "w2": [], "w3": [], "w1_pad": [], "w2_pad": [], "w3_pad": []}
    for _ in range(n_layer):
        wqkv = w(next(kit), (n_embd, 3 * n_embd))
        wo = w(next(kit), (n_embd, n_embd))
        w1 = w(next(kit), (n_embd, n_hidden))
        w2 = w(next(kit), (n_embd, n_hidden))
        w3 = w(next(kit), (n_hidden, n_embd))
        per_layer["norm1"].append(jnp.ones((1, n_embd), jnp.float32))
        per_layer["norm2"].append(jnp.ones((1, n_embd), jnp.float32))
        per_layer["wqkv"].append(wqkv)                                  # reference layout
        per_layer["wqkv_split"].append(permute_wqkv_split(wqkv, n_head))  # kernel layout
        per_layer["wo"].append(wo)
        per_layer["w1"].append(w1)
        per_layer["w2"].append(w2)
        per_layer["w3"].append(w3)
        # zero-padding the hidden dim to 128-multiple is numerically exact:
        # silu(0) * 0 contributes nothing and the padded w3 rows are zero.
        per_layer["w1_pad"].append(jnp.pad(w1, ((0, 0), (0, nh_pad - n_hidden))))
        per_layer["w2_pad"].append(jnp.pad(w2, ((0, 0), (0, nh_pad - n_hidden))))
        per_layer["w3_pad"].append(jnp.pad(w3, ((0, nh_pad - n_hidden), (0, 0))))

    params = {k: jnp.stack(v) for k, v in per_layer.items()}
    params.update({
        "emb": emb,
        "lm_head": lm_head_w,
        "final_norm": jnp.ones((1, n_embd), jnp.float32),
    })
    return params


# --------------------------------------------------------------------------
# main
# --------------------------------------------------------------------------
if __name__ == "__main__":
    # small, lane-aligned config: D multiple of 128, head_dim = 128, L = 128,
    # n_hidden padded 682 -> 768 (multiple of 128)
    B, L = 2, 128
    vocab_size, n_embd, n_head, n_layer = 512, 256, 2, 2

    key = jax.random.PRNGKey(0)
    pkey, ikey = jax.random.split(key)
    params = init_params(pkey, vocab_size, n_embd, n_head, n_layer)
    ids = jax.random.randint(ikey, (B, L), 0, vocab_size, dtype=jnp.int32)

    fwd = jax.jit(lambda i, p: llama_forward(i, p, n_head))
    logits = jax.block_until_ready(fwd(ids, params))
    assert logits.shape == (B, L, vocab_size)

    ref = jax.block_until_ready(ref_forward(ids, params, n_head))
    max_err = float(jnp.max(jnp.abs(logits - ref)))
    assert jnp.allclose(logits, ref, atol=2e-2, rtol=2e-2), max_err

    # TODO(synk): Llama.generate (autoregressive multinomial sampling) is host-side
    # control flow and is not implemented as a kernel.
    print("KERNEL_OK")
</pallas_src>

<mosaic_0001>
module attributes {stable_mosaic.version = 11 : i64} {
  func.func @_final_norm_kernel(%arg0: i32, %arg1: memref<128x256xf32, #tpu.memory_space<vmem>>, %arg2: memref<1x256xf32, #tpu.memory_space<vmem>>, %arg3: memref<128x256xbf16, #tpu.memory_space<vmem>>) attributes {dimension_semantics = [#tpu.dimension_semantics<parallel>], iteration_bounds = array<i64: 2>, scalar_prefetch = 0 : i64, scratch_operands = 0 : i64, tpu.core_type = #tpu.core_type<tc>, window_params = [{transform_indices = @transform_0, window_bounds = array<i64: 128, 256>}, {pipeline_mode = #tpu.pipeline_mode<synchronous>, transform_indices = @transform_1, window_bounds = array<i64: 1, 256>}, {transform_indices = @transform_2, window_bounds = array<i64: 128, 256>}]} {
    %c0 = arith.constant 0 : index
    %c0_0 = arith.constant 0 : index
    %0 = vector.load %arg1[%c0, %c0_0] : memref<128x256xf32, #tpu.memory_space<vmem>>, vector<128x256xf32>
    %c0_1 = arith.constant 0 : index
    %c0_2 = arith.constant 0 : index
    %1 = vector.load %arg2[%c0_1, %c0_2] : memref<1x256xf32, #tpu.memory_space<vmem>>, vector<1x256xf32>
    %2 = vector.shape_cast %1 : vector<1x256xf32> to vector<256xf32>
    %3 = arith.mulf %0, %0 : vector<128x256xf32>
    %cst = arith.constant dense<0.000000e+00> : vector<128xf32>
    %4 = vector.multi_reduction <add>, %3, %cst [1] : vector<128x256xf32> to vector<128xf32>
    %5 = vector.shape_cast %4 : vector<128xf32> to vector<128x1xf32>
    %cst_3 = arith.constant 2.560000e+02 : f32
    %6 = vector.broadcast %cst_3 : f32 to vector<128x1xf32>
    %7 = arith.divf %5, %6 : vector<128x1xf32>
    %cst_4 = arith.constant 9.99999997E-7 : f32
    %8 = vector.broadcast %cst_4 : f32 to vector<128x1xf32>
    %9 = arith.addf %7, %8 : vector<128x1xf32>
    %10 = math.rsqrt %9 : vector<128x1xf32>
    %11 = vector.broadcast %10 : vector<128x1xf32> to vector<128x256xf32>
    %12 = arith.mulf %0, %11 : vector<128x256xf32>
    %13 = vector.shape_cast %2 : vector<256xf32> to vector<1x256xf32>
    %14 = vector.broadcast %13 : vector<1x256xf32> to vector<128x256xf32>
    %15 = arith.mulf %12, %14 : vector<128x256xf32>
    %16 = arith.truncf %15 : vector<128x256xf32> to vector<128x256xbf16>
    %c0_5 = arith.constant 0 : index
    %c0_6 = arith.constant 0 : index
    %17 = vector.load %arg3[%c0_5, %c0_6] : memref<128x256xbf16, #tpu.memory_space<vmem>>, vector<128x256xbf16>
    tpu.vector_store %arg3[%c0_5, %c0_6], %16 {strides = array<i32>} : memref<128x256xbf16, #tpu.memory_space<vmem>>, vector<128x256xbf16>,
    return
  }
  func.func @transform_0(%arg0: i32) -> (i32, i32) {
    %c0_i32 = arith.constant 0 : i32
    %c0_i32_0 = arith.constant 0 : i32
    return %arg0, %c0_i32 : i32, i32
  }
  func.func @transform_1(%arg0: i32) -> (i32, i32) {
    %c0_i32 = arith.constant 0 : i32
    %c0_i32_0 = arith.constant 0 : i32
    %c0_i32_1 = arith.constant 0 : i32
    return %c0_i32, %c0_i32_0 : i32, i32
  }
  func.func @transform_2(%arg0: i32) -> (i32, i32) {
    %c0_i32 = arith.constant 0 : i32
    %c0_i32_0 = arith.constant 0 : i32
    return %arg0, %c0_i32 : i32, i32
  }
}

module attributes {stable_mosaic.version = 11 : i64} {
  func.func @kernel(%arg0: i32, %arg1: i32, %arg2: memref<1x128x256xf32, #tpu.memory_space<vmem>>, %arg3: memref<1x1x256xf32, #tpu.memory_space<vmem>>, %arg4: memref<1x256x768xbf16, #tpu.memory_space<vmem>>, %arg5: memref<128x256xf32, #tpu.memory_space<vmem>>, %arg6: memref<128x256xf32, #tpu.memory_space<vmem>>, %arg7: memref<1x256x256xbf16, #tpu.memory_space<vmem>>, %arg8: memref<1x1x256xf32, #tpu.memory_space<vmem>>, %arg9: memref<1x256x768xbf16, #tpu.memory_space<vmem>>, %arg10: memref<1x256x768xbf16, #tpu.memory_space<vmem>>, %arg11: memref<1x768x256xbf16, #tpu.memory_space<vmem>>, %arg12: memref<1x128x256xf32, #tpu.memory_space<vmem>>) attributes {dimension_semantics = [#tpu.dimension_semantics<parallel>, #tpu.dimension_semantics<arbitrary>], iteration_bounds = array<i64: 2, 2>, scalar_prefetch = 0 : i64, scratch_operands = 0 : i64, tpu.core_type = #tpu.core_type<tc>, window_params = [{transform_indices = @transform_0, window_bounds = array<i64: 1, 128, 256>}, {transform_indices = @transform_1, window_bounds = array<i64: 1, 1, 256>}, {transform_indices = @transform_2, window_bounds = array<i64: 1, 256, 768>}, {pipeline_mode = #tpu.pipeline_mode<synchronous>, transform_indices = @transform_3, window_bounds = array<i64: 128, 256>}, {pipeline_mode = #tpu.pipeline_mode<synchronous>, transform_indices = @transform_4, window_bounds = array<i64: 128, 256>}, {transform_indices = @transform_5, window_bounds = array<i64: 1, 256, 256>}, {transform_indices = @transform_6, window_bounds = array<i64: 1, 1, 256>}, {transform_indices = @transform_7, window_bounds = array<i64: 1, 256, 768>}, {transform_indices = @transform_8, window_bounds = array<i64: 1, 256, 768>}, {transform_indices = @transform_9, window_bounds = array<i64: 1, 768, 256>}, {transform_indices = @transform_10, window_bounds = array<i64: 1, 128, 256>}]} {
    %c0_i32 = arith.constant 0 : i32
    %0 = arith.cmpi eq, %arg1, %c0_i32 : i32
    %1 = arith.extui %0 : i1 to i32
    %c0_i32_0 = arith.constant 0 : i32
    %2 = arith.cmpi ne, %1, %c0_i32_0 : i32
    scf.if %2 {
      %c0_54 = arith.constant 0 : index
      %c0_55 = arith.constant 0 : index
      %c0_56 = arith.constant 0 : index
      %135 = vector.load %arg2[%c0_54, %c0_55, %c0_56] : memref<1x128x256xf32, #tpu.memory_space<vmem>>, vector<1x128x256xf32>
      %136 = vector.shape_cast %135 : vector<1x128x256xf32> to vector<128x256xf32>
      %c0_57 = arith.constant 0 : index
      %c0_58 = arith.constant 0 : index
      %c0_59 = arith.constant 0 : index
      %137 = vector.load %arg12[%c0_57, %c0_58, %c0_59] : memref<1x128x256xf32, #tpu.memory_space<vmem>>, vector<1x128x256xf32>
      %138 = vector.shape_cast %137 : vector<1x128x256xf32> to vector<128x256xf32>
      %139 = vector.shape_cast %136 : vector<128x256xf32> to vector<1x128x256xf32>
      tpu.vector_store %arg12[%c0_57, %c0_58, %c0_59], %139 {strides = array<i32>} : memref<1x128x256xf32, #tpu.memory_space<vmem>>, vector<1x128x256xf32>,
    } else {
    }
    %c0 = arith.constant 0 : index
    %c0_1 = arith.constant 0 : index
    %c0_2 = arith.constant 0 : index
    %3 = vector.load %arg12[%c0, %c0_1, %c0_2] : memref<1x128x256xf32, #tpu.memory_space<vmem>>, vector<1x128x256xf32>
    %4 = vector.shape_cast %3 : vector<1x128x256xf32> to vector<128x256xf32>
    %c0_3 = arith.constant 0 : index
    %c0_4 = arith.constant 0 : index
    %c0_5 = arith.constant 0 : index
    %5 = vector.load %arg3[%c0_3, %c0_4, %c0_5] : memref<1x1x256xf32, #tpu.memory_space<vmem>>, vector<1x1x256xf32>
    %6 = vector.shape_cast %5 : vector<1x1x256xf32> to vector<256xf32>
    %7 = arith.mulf %4, %4 : vector<128x256xf32>
    %cst = arith.constant dense<0.000000e+00> : vector<128xf32>
    %8 = vector.multi_reduction <add>, %7, %cst [1] : vector<128x256xf32> to vector<128xf32>
    %9 = vector.shape_cast %8 : vector<128xf32> to vector<128x1xf32>
    %cst_6 = arith.constant 2.560000e+02 : f32
    %10 = vector.broadcast %cst_6 : f32 to vector<128x1xf32>
    %11 = arith.divf %9, %10 : vector<128x1xf32>
    %cst_7 = arith.constant 9.99999997E-7 : f32
    %12 = vector.broadcast %cst_7 : f32 to vector<128x1xf32>
    %13 = arith.addf %11, %12 : vector<128x1xf32>
    %14 = math.rsqrt %13 : vector<128x1xf32>
    %15 = vector.broadcast %14 : vector<128x1xf32> to vector<128x256xf32>
    %16 = arith.mulf %4, %15 : vector<128x256xf32>
    %17 = vector.shape_cast %6 : vector<256xf32> to vector<1x256xf32>
    %18 = vector.broadcast %17 : vector<1x256xf32> to vector<128x256xf32>
    %19 = arith.mulf %16, %18 : vector<128x256xf32>
    %20 = arith.truncf %19 : vector<128x256xf32> to vector<128x256xbf16>
    %c0_8 = arith.constant 0 : index
    %c0_9 = arith.constant 0 : index
    %c0_10 = arith.constant 0 : index
    %21 = vector.load %arg4[%c0_8, %c0_9, %c0_10] : memref<1x256x768xbf16, #tpu.memory_space<vmem>>, vector<1x256x768xbf16>
    %22 = vector.shape_cast %21 : vector<1x256x768xbf16> to vector<256x768xbf16>
    %cst_11 = arith.constant dense<0.000000e+00> : vector<128x768xf32>
    %23 = tpu.matmul %20, %22, %cst_11 {dimension_numbers = #tpu.dot_dimension_numbers<[1], [0], [0], [1], [0, 0, 1, 1], [], []>} : vector<128x256xbf16>, vector<256x768xbf16>, vector<128x768xf32> -> vector<128x768xf32>
    %24 = vector.extract_strided_slice %23 {offsets = [0, 0], sizes = [128, 256], strides = [1, 1]} : vector<128x768xf32> to vector<128x256xf32>
    %25 = vector.extract_strided_slice %23 {offsets = [0, 256], sizes = [128, 256], strides = [1, 1]} : vector<128x768xf32> to vector<128x256xf32>
    %26 = vector.extract_strided_slice %23 {offsets = [0, 512], sizes = [128, 256], strides = [1, 1]} : vector<128x768xf32> to vector<128x256xf32>
    %27 = arith.truncf %26 : vector<128x256xf32> to vector<128x256xbf16>
    %c0_12 = arith.constant 0 : index
    %c0_13 = arith.constant 0 : index
    %28 = vector.load %arg5[%c0_12, %c0_13] : memref<128x256xf32, #tpu.memory_space<vmem>>, vector<128x256xf32>
    %c0_14 = arith.constant 0 : index
    %c0_15 = arith.constant 0 : index
    %29 = vector.load %arg6[%c0_14, %c0_15] : memref<128x256xf32, #tpu.memory_space<vmem>>, vector<128x256xf32>
    %30 = vector.extract_strided_slice %24 {offsets = [0, 128], sizes = [128, 128], strides = [1, 1]} : vector<128x256xf32> to vector<128x128xf32>
    %31 = vector.extract_strided_slice %24 {offsets = [0, 0], sizes = [128, 128], strides = [1, 1]} : vector<128x256xf32> to vector<128x128xf32>
    %32 = tpu.concatenate %30, %31 in 1 : vector<128x128xf32>, vector<128x128xf32> -> vector<128x256xf32>
    %33 = vector.extract_strided_slice %25 {offsets = [0, 128], sizes = [128, 128], strides = [1, 1]} : vector<128x256xf32> to vector<128x128xf32>
    %34 = vector.extract_strided_slice %25 {offsets = [0, 0], sizes = [128, 128], strides = [1, 1]} : vector<128x256xf32> to vector<128x128xf32>
    %35 = tpu.concatenate %33, %34 in 1 : vector<128x128xf32>, vector<128x128xf32> -> vector<128x256xf32>
    %36 = arith.mulf %24, %28 : vector<128x256xf32>
    %37 = arith.mulf %32, %29 : vector<128x256xf32>
    %38 = arith.addf %36, %37 : vector<128x256xf32>
    %39 = arith.truncf %38 : vector<128x256xf32> to vector<128x256xbf16>
    %40 = arith.mulf %25, %28 : vector<128x256xf32>
    %41 = arith.mulf %35, %29 : vector<128x256xf32>
    %42 = arith.addf %40, %41 : vector<128x256xf32>
    %43 = arith.truncf %42 : vector<128x256xf32> to vector<128x256xbf16>
    %44 = tpu.iota {dimensions = array<i32: 0>} : vector<128x128xi32>
    %45 = tpu.iota {dimensions = array<i32: 1>} : vector<128x128xi32>
    %46 = arith.cmpi sle, %45, %44 : vector<128x128xi32>
    %47 = vector.extract_strided_slice %39 {offsets = [0, 0], sizes = [128, 64], strides = [1, 1]} : vector<128x256xbf16> to vector<128x64xbf16>
    %48 = vector.extract_strided_slice %43 {offsets = [0, 0], sizes = [128, 64], strides = [1, 1]} : vector<128x256xbf16> to vector<128x64xbf16>
    %cst_16 = arith.constant dense<0.000000e+00> : vector<128x128xf32>
    %49 = tpu.matmul %47, %48, %cst_16 {dimension_numbers = #tpu.dot_dimension_numbers<[1], [1], [0], [0], [0, 0, 1, 0], [], []>} : vector<128x64xbf16>, vector<128x64xbf16>, vector<128x128xf32> -> vector<128x128xf32>
    %50 = vector.extract_strided_slice %39 {offsets = [0, 128], sizes = [128, 64], strides = [1, 1]} : vector<128x256xbf16> to vector<128x64xbf16>
    %51 = vector.extract_strided_slice %43 {offsets = [0, 128], sizes = [128, 64], strides = [1, 1]} : vector<128x256xbf16> to vector<128x64xbf16>
    %cst_17 = arith.constant dense<0.000000e+00> : vector<128x128xf32>
    %52 = tpu.matmul %50, %51, %cst_17 {dimension_numbers = #tpu.dot_dimension_numbers<[1], [1], [0], [0], [0, 0, 1, 0], [], []>} : vector<128x64xbf16>, vector<128x64xbf16>, vector<128x128xf32> -> vector<128x128xf32>
    %53 = arith.addf %49, %52 : vector<128x128xf32>
    %cst_18 = arith.constant -1.000000e+30 : f32
    %54 = vector.broadcast %cst_18 : f32 to vector<128x128xf32>
    %55 = arith.select %46, %53, %54 : vector<128x128xi1>, vector<128x128xf32>
    %cst_19 = arith.constant dense<0xFF800000> : vector<128xf32>
    %56 = vector.multi_reduction <maximumf>, %55, %cst_19 [1] : vector<128x128xf32> to vector<128xf32>
    %57 = vector.shape_cast %56 : vector<128xf32> to vector<128x1xf32>
    %58 = vector.broadcast %57 : vector<128x1xf32> to vector<128x128xf32>
    %59 = arith.subf %55, %58 : vector<128x128xf32>
    %60 = math.exp %59 : vector<128x128xf32>
    %cst_20 = arith.constant dense<0.000000e+00> : vector<128xf32>
    %61 = vector.multi_reduction <add>, %60, %cst_20 [1] : vector<128x128xf32> to vector<128xf32>
    %62 = vector.shape_cast %61 : vector<128xf32> to vector<128x1xf32>
    %63 = arith.truncf %60 : vector<128x128xf32> to vector<128x128xbf16>
    %64 = vector.extract_strided_slice %27 {offsets = [0, 0], sizes = [128, 128], strides = [1, 1]} : vector<128x256xbf16> to vector<128x128xbf16>
    %cst_21 = arith.constant dense<0.000000e+00> : vector<128x128xf32>
    %65 = tpu.matmul %63, %64, %cst_21 {dimension_numbers = #tpu.dot_dimension_numbers<[1], [0], [0], [1], [0, 0, 1, 1], [], []>} : vector<128x128xbf16>, vector<128x128xbf16>, vector<128x128xf32> -> vector<128x128xf32>
    %66 = tpu.reciprocal %62 {approx = true} : vector<128x1xf32> -> vector<128x1xf32>
    %67 = vector.broadcast %66 : vector<128x1xf32> to vector<128x128xf32>
    %68 = arith.mulf %65, %67 : vector<128x128xf32>
    %69 = arith.truncf %68 : vector<128x128xf32> to vector<128x128xbf16>
    %70 = vector.extract_strided_slice %39 {offsets = [0, 64], sizes = [128, 64], strides = [1, 1]} : vector<128x256xbf16> to vector<128x64xbf16>
    %71 = vector.extract_strided_slice %43 {offsets = [0, 64], sizes = [128, 64], strides = [1, 1]} : vector<128x256xbf16> to vector<128x64xbf16>
    %cst_22 = arith.constant dense<0.000000e+00> : vector<128x128xf32>
    %72 = tpu.matmul %70, %71, %cst_22 {dimension_numbers = #tpu.dot_dimension_numbers<[1], [1], [0], [0], [0, 0, 1, 0], [], []>} : vector<128x64xbf16>, vector<128x64xbf16>, vector<128x128xf32> -> vector<128x128xf32>
    %73 = vector.extract_strided_slice %39 {offsets = [0, 192], sizes = [128, 64], strides = [1, 1]} : vector<128x256xbf16> to vector<128x64xbf16>
    %74 = vector.extract_strided_slice %43 {offsets = [0, 192], sizes = [128, 64], strides = [1, 1]} : vector<128x256xbf16> to vector<128x64xbf16>
    %cst_23 = arith.constant dense<0.000000e+00> : vector<128x128xf32>
    %75 = tpu.matmul %73, %74, %cst_23 {dimension_numbers = #tpu.dot_dimension_numbers<[1], [1], [0], [0], [0, 0, 1, 0], [], []>} : vector<128x64xbf16>, vector<128x64xbf16>, vector<128x128xf32> -> vector<128x128xf32>
    %76 = arith.addf %72, %75 : vector<128x128xf32>
    %cst_24 = arith.constant -1.000000e+30 : f32
    %77 = vector.broadcast %cst_24 : f32 to vector<128x128xf32>
    %78 = arith.select %46, %76, %77 : vector<128x128xi1>, vector<128x128xf32>
    %cst_25 = arith.constant dense<0xFF800000> : vector<128xf32>
    %79 = vector.multi_reduction <maximumf>, %78, %cst_25 [1] : vector<128x128xf32> to vector<128xf32>
    %80 = vector.shape_cast %79 : vector<128xf32> to vector<128x1xf32>
    %81 = vector.broadcast %80 : vector<128x1xf32> to vector<128x128xf32>
    %82 = arith.subf %78, %81 : vector<128x128xf32>
    %83 = math.exp %82 : vector<128x128xf32>
    %cst_26 = arith.constant dense<0.000000e+00> : vector<128xf32>
    %84 = vector.multi_reduction <add>, %83, %cst_26 [1] : vector<128x128xf32> to vector<128xf32>
    %85 = vector.shape_cast %84 : vector<128xf32> to vector<128x1xf32>
    %86 = arith.truncf %83 : vector<128x128xf32> to vector<128x128xbf16>
    %87 = vector.extract_strided_slice %27 {offsets = [0, 128], sizes = [128, 128], strides = [1, 1]} : vector<128x256xbf16> to vector<128x128xbf16>
    %cst_27 = arith.constant dense<0.000000e+00> : vector<128x128xf32>
    %88 = tpu.matmul %86, %87, %cst_27 {dimension_numbers = #tpu.dot_dimension_numbers<[1], [0], [0], [1], [0, 0, 1, 1], [], []>} : vector<128x128xbf16>, vector<128x128xbf16>, vector<128x128xf32> -> vector<128x128xf32>
    %89 = tpu.reciprocal %85 {approx = true} : vector<128x1xf32> -> vector<128x1xf32>
    %90 = vector.broadcast %89 : vector<128x1xf32> to vector<128x128xf32>
    %91 = arith.mulf %88, %90 : vector<128x128xf32>
    %92 = arith.truncf %91 : vector<128x128xf32> to vector<128x128xbf16>
    %93 = tpu.concatenate %69, %92 in 1 : vector<128x128xbf16>, vector<128x128xbf16> -> vector<128x256xbf16>
    %c0_28 = arith.constant 0 : index
    %c0_29 = arith.constant 0 : index
    %c0_30 = arith.constant 0 : index
    %94 = vector.load %arg7[%c0_28, %c0_29, %c0_30] : memref<1x256x256xbf16, #tpu.memory_space<vmem>>, vector<1x256x256xbf16>
    %95 = vector.shape_cast %94 : vector<1x256x256xbf16> to vector<256x256xbf16>
    %cst_31 = arith.constant dense<0.000000e+00> : vector<128x256xf32>
    %96 = tpu.matmul %93, %95, %cst_31 {dimension_numbers = #tpu.dot_dimension_numbers<[1], [0], [0], [1], [0, 0, 1, 1], [], []>} : vector<128x256xbf16>, vector<256x256xbf16>, vector<128x256xf32> -> vector<128x256xf32>
    %97 = arith.addf %4, %96 : vector<128x256xf32>
    %c0_32 = arith.constant 0 : index
    %c0_33 = arith.constant 0 : index
    %c0_34 = arith.constant 0 : index
    %98 = vector.load %arg8[%c0_32, %c0_33, %c0_34] : memref<1x1x256xf32, #tpu.memory_space<vmem>>, vector<1x1x256xf32>
    %99 = vector.shape_cast %98 : vector<1x1x256xf32> to vector<256xf32>
    %100 = arith.mulf %97, %97 : vector<128x256xf32>
    %cst_35 = arith.constant dense<0.000000e+00> : vector<128xf32>
    %101 = vector.multi_reduction <add>, %100, %cst_35 [1] : vector<128x256xf32> to vector<128xf32>
    %102 = vector.shape_cast %101 : vector<128xf32> to vector<128x1xf32>
    %cst_36 = arith.constant 2.560000e+02 : f32
    %103 = vector.broadcast %cst_36 : f32 to vector<128x1xf32>
    %104 = arith.divf %102, %103 : vector<128x1xf32>
    %cst_37 = arith.constant 9.99999997E-7 : f32
    %105 = vector.broadcast %cst_37 : f32 to vector<128x1xf32>
    %106 = arith.addf %104, %105 : vector<128x1xf32>
    %107 = math.rsqrt %106 : vector<128x1xf32>
    %108 = vector.broadcast %107 : vector<128x1xf32> to vector<128x256xf32>
    %109 = arith.mulf %97, %108 : vector<128x256xf32>
    %110 = vector.shape_cast %99 : vector<256xf32> to vector<1x256xf32>
    %111 = vector.broadcast %110 : vector<1x256xf32> to vector<128x256xf32>
    %112 = arith.mulf %109, %111 : vector<128x256xf32>
    %113 = arith.truncf %112 : vector<128x256xf32> to vector<128x256xbf16>
    %c0_38 = arith.constant 0 : index
    %c0_39 = arith.constant 0 : index
    %c0_40 = arith.constant 0 : index
    %114 = vector.load %arg9[%c0_38, %c0_39, %c0_40] : memref<1x256x768xbf16, #tpu.memory_space<vmem>>, vector<1x256x768xbf16>
    %115 = vector.shape_cast %114 : vector<1x256x768xbf16> to vector<256x768xbf16>
    %cst_41 = arith.constant dense<0.000000e+00> : vector<128x768xf32>
    %116 = tpu.matmul %113, %115, %cst_41 {dimension_numbers = #tpu.dot_dimension_numbers<[1], [0], [0], [1], [0, 0, 1, 1], [], []>} : vector<128x256xbf16>, vector<256x768xbf16>, vector<128x768xf32> -> vector<128x768xf32>
    %c0_42 = arith.constant 0 : index
    %c0_43 = arith.constant 0 : index
    %c0_44 = arith.constant 0 : index
    %117 = vector.load %arg10[%c0_42, %c0_43, %c0_44] : memref<1x256x768xbf16, #tpu.memory_space<vmem>>, vector<1x256x768xbf16>
    %118 = vector.shape_cast %117 : vector<1x256x768xbf16> to vector<256x768xbf16>
    %cst_45 = arith.constant dense<0.000000e+00> : vector<128x768xf32>
    %119 = tpu.matmul %113, %118, %cst_45 {dimension_numbers = #tpu.dot_dimension_numbers<[1], [0], [0], [1], [0, 0, 1, 1], [], []>} : vector<128x256xbf16>, vector<256x768xbf16>, vector<128x768xf32> -> vector<128x768xf32>
    %120 = arith.negf %116 : vector<128x768xf32>
    %121 = math.exp %120 : vector<128x768xf32>
    %cst_46 = arith.constant 1.000000e+00 : f32
    %122 = vector.broadcast %cst_46 : f32 to vector<128x768xf32>
    %123 = arith.addf %122, %121 : vector<128x768xf32>
    %124 = arith.divf %122, %123 : vector<128x768xf32>
    %125 = arith.mulf %116, %124 : vector<128x768xf32>
    %126 = arith.mulf %125, %119 : vector<128x768xf32>
    %127 = arith.truncf %126 : vector<128x768xf32> to vector<128x768xbf16>
    %c0_47 = arith.constant 0 : index
    %c0_48 = arith.constant 0 : index
    %c0_49 = arith.constant 0 : index
    %128 = vector.load %arg11[%c0_47, %c0_48, %c0_49] : memref<1x768x256xbf16, #tpu.memory_space<vmem>>, vector<1x768x256xbf16>
    %129 = vector.shape_cast %128 : vector<1x768x256xbf16> to vector<768x256xbf16>
    %cst_50 = arith.constant dense<0.000000e+00> : vector<128x256xf32>
    %130 = tpu.matmul %127, %129, %cst_50 {dimension_numbers = #tpu.dot_dimension_numbers<[1], [0], [0], [1], [0, 0, 1, 1], [], []>} : vector<128x768xbf16>, vector<768x256xbf16>, vector<128x256xf32> -> vector<128x256xf32>
    %131 = arith.addf %97, %130 : vector<128x256xf32>
    %c0_51 = arith.constant 0 : index
    %c0_52 = arith.constant 0 : index
    %c0_53 = arith.constant 0 : index
    %132 = vector.load %arg12[%c0_51, %c0_52, %c0_53] : memref<1x128x256xf32, #tpu.memory_space<vmem>>, vector<1x128x256xf32>
    %133 = vector.shape_cast %132 : vector<1x128x256xf32> to vector<128x256xf32>
    %134 = vector.shape_cast %131 : vector<128x256xf32> to vector<1x128x256xf32>
    tpu.vector_store %arg12[%c0_51, %c0_52, %c0_53], %134 {strides = array<i32>} : memref<1x128x256xf32, #tpu.memory_space<vmem>>, vector<1x128x256xf32>,
    return
  }
  func.func @transform_0(%arg0: i32, %arg1: i32) -> (i32, i32, i32) {
    %c0_i32 = arith.constant 0 : i32
    %c0_i32_0 = arith.constant 0 : i32
    %c0_i32_1 = arith.constant 0 : i32
    return %arg0, %c0_i32, %c0_i32_0 : i32, i32, i32
  }
  func.func @transform_1(%arg0: i32, %arg1: i32) -> (i32, i32, i32) {
    %c0_i32 = arith.constant 0 : i32
    %c0_i32_0 = arith.constant 0 : i32
    %c0_i32_1 = arith.constant 0 : i32
    return %arg1, %c0_i32, %c0_i32_0 : i32, i32, i32
  }
  func.func @transform_2(%arg0: i32, %arg1: i32) -> (i32, i32, i32) {
    %c0_i32 = arith.constant 0 : i32
    %c0_i32_0 = arith.constant 0 : i32
    %c0_i32_1 = arith.constant 0 : i32
    return %arg1, %c0_i32, %c0_i32_0 : i32, i32, i32
  }
  func.func @transform_3(%arg0: i32, %arg1: i32) -> (i32, i32) {
    %c0_i32 = arith.constant 0 : i32
    %c0_i32_0 = arith.constant 0 : i32
    %c0_i32_1 = arith.constant 0 : i32
    return %c0_i32, %c0_i32_0 : i32, i32
  }
  func.func @transform_4(%arg0: i32, %arg1: i32) -> (i32, i32) {
    %c0_i32 = arith.constant 0 : i32
    %c0_i32_0 = arith.constant 0 : i32
    %c0_i32_1 = arith.constant 0 : i32
    return %c0_i32, %c0_i32_0 : i32, i32
  }
  func.func @transform_5(%arg0: i32, %arg1: i32) -> (i32, i32, i32) {
    %c0_i32 = arith.constant 0 : i32
    %c0_i32_0 = arith.constant 0 : i32
    %c0_i32_1 = arith.constant 0 : i32
    return %arg1, %c0_i32, %c0_i32_0 : i32, i32, i32
  }
  func.func @transform_6(%arg0: i32, %arg1: i32) -> (i32, i32, i32) {
    %c0_i32 = arith.constant 0 : i32
    %c0_i32_0 = arith.constant 0 : i32
    %c0_i32_1 = arith.constant 0 : i32
    return %arg1, %c0_i32, %c0_i32_0 : i32, i32, i32
  }
  func.func @transform_7(%arg0: i32, %arg1: i32) -> (i32, i32, i32) {
    %c0_i32 = arith.constant 0 : i32
    %c0_i32_0 = arith.constant 0 : i32
    %c0_i32_1 = arith.constant 0 : i32
    return %arg1, %c0_i32, %c0_i32_0 : i32, i32, i32
  }
  func.func @transform_8(%arg0: i32, %arg1: i32) -> (i32, i32, i32) {
    %c0_i32 = arith.constant 0 : i32
    %c0_i32_0 = arith.constant 0 : i32
    %c0_i32_1 = arith.constant 0 : i32
    return %arg1, %c0_i32, %c0_i32_0 : i32, i32, i32
  }
  func.func @transform_9(%arg0: i32, %arg1: i32) -> (i32, i32, i32) {
    %c0_i32 = arith.constant 0 : i32
    %c0_i32_0 = arith.constant 0 : i32
    %c0_i32_1 = arith.constant 0 : i32
    return %arg1, %c0_i32, %c0_i32_0 : i32, i32, i32
  }
  func.func @transform_10(%arg0: i32, %arg1: i32) -> (i32, i32, i32) {
    %c0_i32 = arith.constant 0 : i32
    %c0_i32_0 = arith.constant 0 : i32
    %c0_i32_1 = arith.constant 0 : i32
    return %arg0, %c0_i32, %c0_i32_0 : i32, i32, i32
  }
}

module attributes {stable_mosaic.version = 11 : i64} {
  func.func @_head_kernel(%arg0: i32, %arg1: i32, %arg2: memref<128x256xbf16, #tpu.memory_space<vmem>>, %arg3: memref<256x512xbf16, #tpu.memory_space<vmem>>, %arg4: memref<128x512xf32, #tpu.memory_space<vmem>>) attributes {dimension_semantics = [#tpu.dimension_semantics<parallel>, #tpu.dimension_semantics<parallel>], iteration_bounds = array<i64: 2, 1>, scalar_prefetch = 0 : i64, scratch_operands = 0 : i64, tpu.core_type = #tpu.core_type<tc>, window_params = [{transform_indices = @transform_0, window_bounds = array<i64: 128, 256>}, {transform_indices = @transform_1, window_bounds = array<i64: 256, 512>}, {transform_indices = @transform_2, window_bounds = array<i64: 128, 512>}]} {
    %c0 = arith.constant 0 : index
    %c0_0 = arith.constant 0 : index
    %0 = vector.load %arg2[%c0, %c0_0] : memref<128x256xbf16, #tpu.memory_space<vmem>>, vector<128x256xbf16>
    %c0_1 = arith.constant 0 : index
    %c0_2 = arith.constant 0 : index
    %1 = vector.load %arg3[%c0_1, %c0_2] : memref<256x512xbf16, #tpu.memory_space<vmem>>, vector<256x512xbf16>
    %cst = arith.constant dense<0.000000e+00> : vector<128x512xf32>
    %2 = tpu.matmul %0, %1, %cst {dimension_numbers = #tpu.dot_dimension_numbers<[1], [0], [0], [1], [0, 0, 1, 1], [], []>} : vector<128x256xbf16>, vector<256x512xbf16>, vector<128x512xf32> -> vector<128x512xf32>
    %c0_3 = arith.constant 0 : index
    %c0_4 = arith.constant 0 : index
    %3 = vector.load %arg4[%c0_3, %c0_4] : memref<128x512xf32, #tpu.memory_space<vmem>>, vector<128x512xf32>
    tpu.vector_store %arg4[%c0_3, %c0_4], %2 {strides = array<i32>} : memref<128x512xf32, #tpu.memory_space<vmem>>, vector<128x512xf32>,
    return
  }
  func.func @transform_0(%arg0: i32, %arg1: i32) -> (i32, i32) {
    %c0_i32 = arith.constant 0 : i32
    %c0_i32_0 = arith.constant 0 : i32
    return %arg0, %c0_i32 : i32, i32
  }
  func.func @transform_1(%arg0: i32, %arg1: i32) -> (i32, i32) {
    %c0_i32 = arith.constant 0 : i32
    %c0_i32_0 = arith.constant 0 : i32
    return %c0_i32, %arg1 : i32, i32
  }
  func.func @transform_2(%arg0: i32, %arg1: i32) -> (i32, i32) {
    %c0_i32 = arith.constant 0 : i32
    return %arg0, %arg1 : i32, i32
  }
}

</mosaic_0001>

<llo_original>
// kernel: neg.1
$region0: #{neg.1}
  #allocation0 [shape = 's32[1]{0}', space=sflag, size = 0x4, scoped, tag = 'scoped memory for neg.1']
  %s0 = inlined_call_operand.vmem [shape: f32[128,128], index: 0, kind: input, shape index: {}]
  %s1 = inlined_call_operand.vmem [shape: f32[128,128], index: 1, kind: output, shape index: {}]
  %v2 = vld [vmem:[%s0] sm:$0xff]
  %3 = xla_tuple %v2
  %4 = xla_tuple %3
  %v5 = vxor.u32 %v2, 2147483648
  %6 = xla_tuple %v5
  %7 = vst [vmem:[%s1] sm:$0xff] %v5
  %s8 = scalar_lea.vmem %s0, 8
  %v9 = vld [vmem:[%s8] sm:$0xff]
  %10 = xla_tuple %v9
  %11 = xla_tuple %10
  %v12 = vxor.u32 %v9, 2147483648
  %13 = xla_tuple %v12
  %s14 = scalar_lea.vmem %s1, 8
  %15 = vst [vmem:[%s14] sm:$0xff] %v12
  %s16 = scalar_lea.vmem %s0, 16
  %v17 = vld [vmem:[%s16] sm:$0xff]
  %18 = xla_tuple %v17
  %19 = xla_tuple %18
  %v20 = vxor.u32 %v17, 2147483648
  %21 = xla_tuple %v20
  %s22 = scalar_lea.vmem %s1, 16
  %23 = vst [vmem:[%s22] sm:$0xff] %v20
  %s24 = scalar_lea.vmem %s0, 24
  %v25 = vld [vmem:[%s24] sm:$0xff]
  %26 = xla_tuple %v25
  %27 = xla_tuple %26
  %v28 = vxor.u32 %v25, 2147483648
  %29 = xla_tuple %v28
  %s30 = scalar_lea.vmem %s1, 24
  %31 = vst [vmem:[%s30] sm:$0xff] %v28
  %s32 = scalar_lea.vmem %s0, 32
  %v33 = vld [vmem:[%s32] sm:$0xff]
  %34 = xla_tuple %v33
  %35 = xla_tuple %34
  %v36 = vxor.u32 %v33, 2147483648
  %37 = xla_tuple %v36
  %s38 = scalar_lea.vmem %s1, 32
  %39 = vst [vmem:[%s38] sm:$0xff] %v36
  %s40 = scalar_lea.vmem %s0, 40
  %v41 = vld [vmem:[%s40] sm:$0xff]
  %42 = xla_tuple %v41
  %43 = xla_tuple %42
  %v44 = vxor.u32 %v41, 2147483648
  %45 = xla_tuple %v44
  %s46 = scalar_lea.vmem %s1, 40
  %47 = vst [vmem:[%s46] sm:$0xff] %v44
  %s48 = scalar_lea.vmem %s0, 48
  %v49 = vld [vmem:[%s48] sm:$0xff]
  %50 = xla_tuple %v49
  %51 = xla_tuple %50
  %v52 = vxor.u32 %v49, 2147483648
  %53 = xla_tuple %v52
  %s54 = scalar_lea.vmem %s1, 48
  %55 = vst [vmem:[%s54] sm:$0xff] %v52
  %s56 = scalar_lea.vmem %s0, 56
  %v57 = vld [vmem:[%s56] sm:$0xff]
  %58 = xla_tuple %v57
  %59 = xla_tuple %58
  %v60 = vxor.u32 %v57, 2147483648
  %61 = xla_tuple %v60
  %s62 = scalar_lea.vmem %s1, 56
  %63 = vst [vmem:[%s62] sm:$0xff] %v60
  %s64 = scalar_lea.vmem %s0, 64
  %v65 = vld [vmem:[%s64] sm:$0xff]
  %66 = xla_tuple %v65
  %67 = xla_tuple %66
  %v68 = vxor.u32 %v65, 2147483648
  %69 = xla_tuple %v68
  %s70 = scalar_lea.vmem %s1, 64
  %71 = vst [vmem:[%s70] sm:$0xff] %v68
  %s72 = scalar_lea.vmem %s0, 72
  %v73 = vld [vmem:[%s72] sm:$0xff]
  %74 = xla_tuple %v73
  %75 = xla_tuple %74
  %v76 = vxor.u32 %v73, 2147483648
  %77 = xla_tuple %v76
  %s78 = scalar_lea.vmem %s1, 72
  %79 = vst [vmem:[%s78] sm:$0xff] %v76
  %s80 = scalar_lea.vmem %s0, 80
  %v81 = vld [vmem:[%s80] sm:$0xff]
  %82 = xla_tuple %v81
  %83 = xla_tuple %82
  %v84 = vxor.u32 %v81, 2147483648
  %85 = xla_tuple %v84
  %s86 = scalar_lea.vmem %s1, 80
  %87 = vst [vmem:[%s86] sm:$0xff] %v84
  %s88 = scalar_lea.vmem %s0, 88
  %v89 = vld [vmem:[%s88] sm:$0xff]
  %90 = xla_tuple %v89
  %91 = xla_tuple %90
  %v92 = vxor.u32 %v89, 2147483648
  %93 = xla_tuple %v92
  %s94 = scalar_lea.vmem %s1, 88
  %95 = vst [vmem:[%s94] sm:$0xff] %v92
  %s96 = scalar_lea.vmem %s0, 96
  %v97 = vld [vmem:[%s96] sm:$0xff]
  %98 = xla_tuple %v97
  %99 = xla_tuple %98
  %v100 = vxor.u32 %v97, 2147483648
  %101 = xla_tuple %v100
  %s102 = scalar_lea.vmem %s1, 96
  %103 = vst [vmem:[%s102] sm:$0xff] %v100
  %s104 = scalar_lea.vmem %s0, 104
  %v105 = vld [vmem:[%s104] sm:$0xff]
  %106 = xla_tuple %v105
  %107 = xla_tuple %106
  %v108 = vxor.u32 %v105, 2147483648
  %109 = xla_tuple %v108
  %s110 = scalar_lea.vmem %s1, 104
  %111 = vst [vmem:[%s110] sm:$0xff] %v108
  %s112 = scalar_lea.vmem %s0, 112
  %v113 = vld [vmem:[%s112] sm:$0xff]
  %114 = xla_tuple %v113
  %115 = xla_tuple %114
  %v116 = vxor.u32 %v113, 2147483648
  %117 = xla_tuple %v116
  %s118 = scalar_lea.vmem %s1, 112
  %119 = vst [vmem:[%s118] sm:$0xff] %v116
  %s120 = scalar_lea.vmem %s0, 120
  %v121 = vld [vmem:[%s120] sm:$0xff]
  %122 = xla_tuple %v121
  %123 = xla_tuple %122
  %v124 = vxor.u32 %v121, 2147483648
  %125 = xla_tuple %v124
  %s126 = scalar_lea.vmem %s1, 120
  %127 = vst [vmem:[%s126] sm:$0xff] %v124

// kernel: _lambda_.4
$region0: #{_lambda_.4}
  #allocation0 [shape = 'u32[]', space=smem, size = 0x4, offset = 0x4, fixed_abs, tag = 'smem constant byte address 0x4 - core index']
  #allocation1 [shape = 'u32[144,128]{1,0:T(1,128)}', space=vmem, size = 0x12000, scoped, tag = 'internal scratch']
  %s0 = inlined_call_operand.vmem [shape: f32[256,256], index: 0, kind: input, shape index: {}]
  %s1 = inlined_call_operand.vmem [shape: f32[1,256], index: 1, kind: input, shape index: {}]
  %s2 = inlined_call_operand.vmem [shape: bf16[256,256], index: 2, kind: output, shape index: {}]
  %s3 = sld [smem:[#allocation0]]
  $region41: #{_lambda_.4} parent=0
    _
  %s5 = ssub.s32 1, %s3
  %s6 = scalar_select 0, %s5, %s3
  loop: start=0, step=1, limit=4
  $region2: #{_lambda_.4} parent=0 // loop_pre_header
    _
  $region3: #{_lambda_.4} parent=0 // loop_header
    %s8 = sphi 0, %s12
    %p9 = scmp.ge.s32.totalorder %s8, 4
    %s18 = sphi 0, %s20
    %s21 = sphi 0, %s18
    %s22 = sphi 0, %s21
    %s38 = sphi 0, %s22
    %s42 = sphi 0, %s42
    %s44 = sphi 0, %s42
    %s45 = sphi 0, %s44
    %s59 = sphi 0, %s45
    %s65 = sphi 0, %s67
    %s68 = sphi 0, %s65
    %s69 = sphi 0, %s68
    %s85 = sphi 0, %s69
  $region4: #{_lambda_.4} parent=0 // loop_header_branch
    %11 = sbr.rel (%p9) target = $region8
  $region5: #{_lambda_.4} parent=0 // loop_body
    %s13 = ssub.s32 %s8, 1
    %s14 = ssub.s32 %s8, 2
    %s15 = sadd.s32 %s8, 1
    %s16 = ssub.s32 %s8, %s15
    %p17 = scmp.eq.s32.totalorder %s16, 0
    %s19 = sadd.s32 %s18, 1
    %s20 = scalar_select %p17, %s18, %s19
    %p23 = pneg %p17
    %p24 = scmp.eq.s32.totalorder %s8, 1
    %p25 = por %p23, %p24
    %p26 = scmp.ne.s32.totalorder %s18, %s21
    %p27 = scmp.eq.s32.totalorder %s8, 0
    %p28 = por %p26, %p27
    %p29 = scmp.ne.s32.totalorder %s18, %s21
    %p30 = scmp.eq.s32.totalorder %s13, 1
    %p31 = por %p29, %p30
    %p32 = scmp.ne.s32.totalorder %s21, %s22
    %p33 = scmp.eq.s32.totalorder %s13, 0
    %p34 = por %p32, %p33
    %p35 = scmp.ne.s32.totalorder %s21, %s22
    %p36 = scmp.eq.s32.totalorder %s14, 1
    %p37 = por %p35, %p36
    %p39 = scmp.ne.s32.totalorder %s22, %s38
    %p40 = scmp.eq.s32.totalorder %s14, 0
    %p41 = por %p39, %p40
    %s43 = sadd.s32 %s42, 1
    %p46 = scmp.eq.s32.totalorder %s8, 1
    %p47 = scmp.ne.s32.totalorder %s42, %s44
    %p48 = scmp.eq.s32.totalorder %s8, 0
    %p49 = por %p47, %p48
    %p50 = scmp.ne.s32.totalorder %s42, %s44
    %p51 = scmp.eq.s32.totalorder %s13, 1
    %p52 = por %p50, %p51
    %p53 = scmp.ne.s32.totalorder %s44, %s45
    %p54 = scmp.eq.s32.totalorder %s13, 0
    %p55 = por %p53, %p54
    %p56 = scmp.ne.s32.totalorder %s44, %s45
    %p57 = scmp.eq.s32.totalorder %s14, 1
    %p58 = por %p56, %p57
    %p60 = scmp.ne.s32.totalorder %s45, %s59
    %p61 = scmp.eq.s32.totalorder %s14, 0
    %p62 = por %p60, %p61
    %s63 = ssub.s32 %s8, %s15
    %p64 = scmp.eq.s32.totalorder %s63, 0
    %s66 = sadd.s32 %s65, 1
    %s67 = scalar_select %p64, %s65, %s66
    %p70 = pneg %p64
    %p71 = scmp.eq.s32.totalorder %s8, 1
    %p72 = por %p70, %p71
    %p73 = scmp.ne.s32.totalorder %s65, %s68
    %p74 = scmp.eq.s32.totalorder %s8, 0
    %p75 = por %p73, %p74
    %p76 = scmp.ne.s32.totalorder %s65, %s68
    %p77 = scmp.eq.s32.totalorder %s13, 1
    %p78 = por %p76, %p77
    %p79 = scmp.ne.s32.totalorder %s68, %s69
    %p80 = scmp.eq.s32.totalorder %s13, 0
    %p81 = por %p79, %p80
    %p82 = scmp.ne.s32.totalorder %s68, %s69
    %p83 = scmp.eq.s32.totalorder %s14, 1
    %p84 = por %p82, %p83
    %p86 = scmp.ne.s32.totalorder %s69, %s85
    %p87 = scmp.eq.s32.totalorder %s14, 0
    %p88 = por %p86, %p87
    %p89 = scmp.le.s32.totalorder 1, %s8
    %p90 = scmp.lt.s32.totalorder %s8, 3
    %p91 = pnand %p89, %p90
    %p92 = pneg %p91
    // Predicated region
    $region9: #{_lambda_.4} parent=5 // pred_check
      _
    $region10: #{_lambda_.4} parent=5 // pred_check_branch
      %94 = sbr.rel (%p91) target = $region12
    $region11: #{_lambda_.4} parent=5 // pred_region
      %s95 = ssub.s32 %s8, 1
      // Predicated region
      $region13: #{_lambda_.4} parent=11 // pred_check
        %p96 = pneg %p55
      $region14: #{_lambda_.4} parent=11 // pred_check_branch
        %98 = sbr.rel (%p96) target = $region16
      $region15: #{_lambda_.4} parent=11 // pred_region
        _
      $region16: #{_lambda_.4} parent=11 // pred_fallthru
        _
    $region12: #{_lambda_.4} parent=5 // pred_fallthru
      _
    %p99 = scmp.lt.s32.totalorder %s8, 2
    // Predicated region
    $region17: #{_lambda_.4} parent=5 // pred_check
      %p100 = pneg %p99
    $region18: #{_lambda_.4} parent=5 // pred_check_branch
      %102 = sbr.rel (%p100) target = $region20
    $region19: #{_lambda_.4} parent=5 // pred_region
      // Predicated region
      $region21: #{_lambda_.4} parent=19 // pred_check
        %p103 = pneg %p28
      $region22: #{_lambda_.4} parent=19 // pred_check_branch
        %105 = sbr.rel (%p103) target = $region24
      $region23: #{_lambda_.4} parent=19 // pred_region
        %s106 = smul.u32 16, %s8
        %p107 = scmp.lt.s32.totalorder %s106, 31
        %s108 = scalar_select %p107, %s106, 31
        %s109 = smul.addr %s108, 2
        %s110 = smul.addr %s109, 8
        %s111 = scalar_lea.vmem %s0, %s110
        %s112 = smul.u32 16, %s8
      $region24: #{_lambda_.4} parent=19 // pred_fallthru
        _
    $region20: #{_lambda_.4} parent=5 // pred_fallthru
      _
    %p113 = scmp.le.s32.totalorder 1, %s8
    %p114 = scmp.lt.s32.totalorder %s8, 3
    %p115 = pnand %p113, %p114
    %p116 = pneg %p115
    // Predicated region
    $region25: #{_lambda_.4} parent=5 // pred_check
      _
    $region26: #{_lambda_.4} parent=5 // pred_check_branch
      %118 = sbr.rel (%p115) target = $region28
    $region27: #{_lambda_.4} parent=5 // pred_region
      %s119 = ssub.s32 %s8, 1
      %s120 = smul.u32 16, %s13
      %p121 = scmp.lt.s32.totalorder %s120, 31
      %s122 = scalar_select %p121, %s120, 31
      %s123 = smul.addr %s122, 2
      %s124 = smul.addr %s123, 8
      %s125 = scalar_lea.vmem %s0, %s124
      %p126 = pneg %p34
      %p127 = pneg %p31
      %p128 = pneg %p55
      %p129 = pneg %p52
      %p130 = pneg %p81
      %p131 = pneg %p78
      %s132 = smul.u32 16, %s13
      %p133 = scmp.lt.s32.totalorder %s132, 31
      %s134 = scalar_select %p133, %s132, 31
      %s135 = smul.addr %s134, 2
      %s136 = smul.addr %s135, 4
      %s137 = scalar_lea.vmem %s2, %s136
      %s138 = smul.u32 16, %s13
      %p139 = scmp.lt.s32.totalorder %s138, 31
      %s140 = scalar_select %p139, %s138, 31
      %s141 = smul.addr %s140, 2
      %s142 = smul.addr %s141, 8
      %s143 = scalar_lea.vmem %s0, %s142
      %s144 = smul.u32 16, %s13
      %s145 = smul.u32 16, %s13
      %p146 = scmp.lt.s32.totalorder %s145, 31
      %s147 = scalar_select %p146, %s145, 31
      %s148 = smul.addr %s147, 2
      %s149 = smul.addr %s148, 4
      %s150 = scalar_lea.vmem %s2, %s149
      %s151 = smul.u32 16, %s13
      %v152 = vld [vmem:[%s143] sm:$0xff]
      %v153 = vld [vmem:[%s143 + $0x8] sm:$0xff]
      %v154 = vld [vmem:[%s143 + $0x10] sm:$0xff]
      %v155 = vld [vmem:[%s143 + $0x18] sm:$0xff]
      %v156 = vld [vmem:[%s143 + $0x20] sm:$0xff]
      %v157 = vld [vmem:[%s143 + $0x28] sm:$0xff]
      %v158 = vld [vmem:[%s143 + $0x30] sm:$0xff]
      %v159 = vld [vmem:[%s143 + $0x38] sm:$0xff]
      %v160 = vld [vmem:[%s143 + $0x40] sm:$0xff]
      %v161 = vld [vmem:[%s143 + $0x48] sm:$0xff]
      %v162 = vld [vmem:[%s143 + $0x50] sm:$0xff]
      %v163 = vld [vmem:[%s143 + $0x58] sm:$0xff]
      %v164 = vld [vmem:[%s143 + $0x60] sm:$0xff]
      %v165 = vld [vmem:[%s143 + $0x68] sm:$0xff]
      %v166 = vld [vmem:[%s143 + $0x70] sm:$0xff]
      %v167 = vld [vmem:[%s143 + $0x78] sm:$0xff]
      %v168 = vld [vmem:[%s143 + $0x80] sm:$0xff]
      %v169 = vld [vmem:[%s143 + $0x88] sm:$0xff]
      %v170 = vld [vmem:[%s143 + $0x90] sm:$0xff]
      %v171 = vld [vmem:[%s143 + $0x98] sm:$0xff]
      %v172 = vld [vmem:[%s143 + $0xa0] sm:$0xff]
      %v173 = vld [vmem:[%s143 + $0xa8] sm:$0xff]
      %v174 = vld [vmem:[%s143 + $0xb0] sm:$0xff]
      %v175 = vld [vmem:[%s143 + $0xb8] sm:$0xff]
      %v176 = vld [vmem:[%s143 + $0xc0] sm:$0xff]
      %v177 = vld [vmem:[%s143 + $0xc8] sm:$0xff]
      %v178 = vld [vmem:[%s143 + $0xd0] sm:$0xff]
      %v179 = vld [vmem:[%s143 + $0xd8] sm:$0xff]
      %v180 = vld [vmem:[%s143 + $0xe0] sm:$0xff]
      %v181 = vld [vmem:[%s143 + $0xe8] sm:$0xff]
      %v182 = vld [vmem:[%s143 + $0xf0] sm:$0xff]
      %v183 = vld [vmem:[%s143 + $0xf8] sm:$0xff]
      %v184 = vld [vmem:[%s1] sm:$0x3]
      %v185 = vmul.f32 %v152, %v152
      %v186 = vmul.f32 %v153, %v153
      %v187 = vmul.f32 %v154, %v154
      %v188 = vmul.f32 %v155, %v155
      %v189 = vmul.f32 %v156, %v156
      %v190 = vmul.f32 %v157, %v157
      %v191 = vmul.f32 %v158, %v158
      %v192 = vmul.f32 %v159, %v159
      %v193 = vmul.f32 %v160, %v160
      %v194 = vmul.f32 %v161, %v161
      %v195 = vmul.f32 %v162, %v162
      %v196 = vmul.f32 %v163, %v163
      %v197 = vmul.f32 %v164, %v164
      %v198 = vmul.f32 %v165, %v165
      %v199 = vmul.f32 %v166, %v166
      %v200 = vmul.f32 %v167, %v167
      %v201 = vmul.f32 %v168, %v168
      %v202 = vmul.f32 %v169, %v169
      %v203 = vmul.f32 %v170, %v170
      %v204 = vmul.f32 %v171, %v171
      %v205 = vmul.f32 %v172, %v172
      %v206 = vmul.f32 %v173, %v173
      %v207 = vmul.f32 %v174, %v174
      %v208 = vmul.f32 %v175, %v175
      %v209 = vmul.f32 %v176, %v176
      %v210 = vmul.f32 %v177, %v177
      %v211 = vmul.f32 %v178, %v178
      %v212 = vmul.f32 %v179, %v179
      %v213 = vmul.f32 %v180, %v180
      %v214 = vmul.f32 %v181, %v181
      %v215 = vmul.f32 %v182, %v182
      %v216 = vmul.f32 %v183, %v183
      %v217 = vadd.f32 %v185, %v186
      %218 = vadd.xlane.f32.xlu0 %v217
      %v219 = vpop.xlane.xlu0 %218
      %v220 = vadd.f32 %v187, %v188
      %221 = vadd.xlane.f32.xlu0 %v220
      %v222 = vpop.xlane.xlu0 %221
      %v223 = vadd.f32 %v189, %v190
      %224 = vadd.xlane.f32.xlu0 %v223
      %v225 = vpop.xlane.xlu0 %224
      %v226 = vadd.f32 %v191, %v192
      %227 = vadd.xlane.f32.xlu0 %v226
      %v228 = vpop.xlane.xlu0 %227
      %v229 = vadd.f32 %v193, %v194
      %230 = vadd.xlane.f32.xlu0 %v229
      %v231 = vpop.xlane.xlu0 %230
      %v232 = vadd.f32 %v195, %v196
      %233 = vadd.xlane.f32.xlu0 %v232
      %v234 = vpop.xlane.xlu0 %233
      %v235 = vadd.f32 %v197, %v198
      %236 = vadd.xlane.f32.xlu0 %v235
      %v237 = vpop.xlane.xlu0 %236
      %v238 = vadd.f32 %v199, %v200
      %239 = vadd.xlane.f32.xlu0 %v238
      %v240 = vpop.xlane.xlu0 %239
      %v241 = vadd.f32 %v201, %v202
      %242 = vadd.xlane.f32.xlu0 %v241
      %v243 = vpop.xlane.xlu0 %242
      %v244 = vadd.f32 %v203, %v204
      %245 = vadd.xlane.f32.xlu0 %v244
      %v246 = vpop.xlane.xlu0 %245
      %v247 = vadd.f32 %v205, %v206
      %248 = vadd.xlane.f32.xlu0 %v247
      %v249 = vpop.xlane.xlu0 %248
      %v250 = vadd.f32 %v207, %v208
      %251 = vadd.xlane.f32.xlu0 %v250
      %v252 = vpop.xlane.xlu0 %251
      %v253 = vadd.f32 %v209, %v210
      %254 = vadd.xlane.f32.xlu0 %v253
      %v255 = vpop.xlane.xlu0 %254
      %v256 = vadd.f32 %v211, %v212
      %257 = vadd.xlane.f32.xlu0 %v256
      %v258 = vpop.xlane.xlu0 %257
      %v259 = vadd.f32 %v213, %v214
      %260 = vadd.xlane.f32.xlu0 %v259
      %v261 = vpop.xlane.xlu0 %260
      %v262 = vadd.f32 %v215, %v216
      %263 = vadd.xlane.f32.xlu0 %v262
      %v264 = vpop.xlane.xlu0 %263
      %v265 = vrcp.pop 256.0
      %v266 = vmul.f32 %v219, %v265
      %v267 = vmul.f32 %v222, %v265
      %v268 = vmul.f32 %v225, %v265
      %v269 = vmul.f32 %v228, %v265
      %v270 = vmul.f32 %v231, %v265
      %v271 = vmul.f32 %v234, %v265
      %v272 = vmul.f32 %v237, %v265
      %v273 = vmul.f32 %v240, %v265
      %v274 = vmul.f32 %v243, %v265
      %v275 = vmul.f32 %v246, %v265
      %v276 = vmul.f32 %v249, %v265
      %v277 = vmul.f32 %v252, %v265
      %v278 = vmul.f32 %v255, %v265
      %v279 = vmul.f32 %v258, %v265
      %v280 = vmul.f32 %v261, %v265
      %v281 = vmul.f32 %v264, %v265
      %v282 = vadd.f32 %v266, 1e-06
      %v283 = vadd.f32 %v267, 1e-06
      %v284 = vadd.f32 %v268, 1e-06
      %v285 = vadd.f32 %v269, 1e-06
      %v286 = vadd.f32 %v270, 1e-06
      %v287 = vadd.f32 %v271, 1e-06
      %v288 = vadd.f32 %v272, 1e-06
      %v289 = vadd.f32 %v273, 1e-06
      %v290 = vadd.f32 %v274, 1e-06
      %v291 = vadd.f32 %v275, 1e-06
      %v292 = vadd.f32 %v276, 1e-06
      %v293 = vadd.f32 %v277, 1e-06
      %v294 = vadd.f32 %v278, 1e-06
      %v295 = vadd.f32 %v279, 1e-06
      %v296 = vadd.f32 %v280, 1e-06
      %v297 = vadd.f32 %v281, 1e-06
      %v298 = vrsqrt.pop %v282
      %v299 = vrsqrt.pop %v283
      %v300 = vrsqrt.pop %v284
      %v301 = vrsqrt.pop %v285
      %v302 = vrsqrt.pop %v286
      %v303 = vrsqrt.pop %v287
      %v304 = vrsqrt.pop %v288
      %v305 = vrsqrt.pop %v289
      %v306 = vrsqrt.pop %v290
      %v307 = vrsqrt.pop %v291
      %v308 = vrsqrt.pop %v292
      %v309 = vrsqrt.pop %v293
      %v310 = vrsqrt.pop %v294
      %v311 = vrsqrt.pop %v295
      %v312 = vrsqrt.pop %v296
      %v313 = vrsqrt.pop %v297
      %v314 = vmul.f32 %v152, %v298
      %v315 = vmul.f32 %v153, %v298
      %v316 = vmul.f32 %v154, %v299
      %v317 = vmul.f32 %v155, %v299
      %v318 = vmul.f32 %v156, %v300
      %v319 = vmul.f32 %v157, %v300
      %v320 = vmul.f32 %v158, %v301
      %v321 = vmul.f32 %v159, %v301
      %v322 = vmul.f32 %v160, %v302
      %v323 = vmul.f32 %v161, %v302
      %v324 = vmul.f32 %v162, %v303
      %v325 = vmul.f32 %v163, %v303
      %v326 = vmul.f32 %v164, %v304
      %v327 = vmul.f32 %v165, %v304
      %v328 = vmul.f32 %v166, %v305
      %v329 = vmul.f32 %v167, %v305
      %v330 = vmul.f32 %v168, %v306
      %v331 = vmul.f32 %v169, %v306
      %v332 = vmul.f32 %v170, %v307
      %v333 = vmul.f32 %v171, %v307
      %v334 = vmul.f32 %v172, %v308
      %v335 = vmul.f32 %v173, %v308
      %v336 = vmul.f32 %v174, %v309
      %v337 = vmul.f32 %v175, %v309
      %v338 = vmul.f32 %v176, %v310
      %v339 = vmul.f32 %v177, %v310
      %v340 = vmul.f32 %v178, %v311
      %v341 = vmul.f32 %v179, %v311
      %v342 = vmul.f32 %v180, %v312
      %v343 = vmul.f32 %v181, %v312
      %v344 = vmul.f32 %v182, %v313
      %v345 = vmul.f32 %v183, %v313
      %v347 = vlaneseq
      %v348 = vshrl.u32 %v347, 7
      %v349 = vsub.s32 0, %v348
      %v350 = vrot.slane %v184, %v349
      %v351 = vlaneseq
      %v352 = vshrl.u32 %v351, 7
      %v353 = vsub.s32 1, %v352
      %v354 = vrot.slane %v184, %v353
      %v357 = vmul.f32 %v314, %v350
      %v358 = vmul.f32 %v315, %v354
      %v359 = vmul.f32 %v316, %v350
      %v360 = vmul.f32 %v317, %v354
      %v361 = vmul.f32 %v318, %v350
      %v362 = vmul.f32 %v319, %v354
      %v363 = vmul.f32 %v320, %v350
      %v364 = vmul.f32 %v321, %v354
      %v365 = vmul.f32 %v322, %v350
      %v366 = vmul.f32 %v323, %v354
      %v367 = vmul.f32 %v324, %v350
      %v368 = vmul.f32 %v325, %v354
      %v369 = vmul.f32 %v326, %v350
      %v370 = vmul.f32 %v327, %v354
      %v371 = vmul.f32 %v328, %v350
      %v372 = vmul.f32 %v329, %v354
      %v373 = vmul.f32 %v330, %v350
      %v374 = vmul.f32 %v331, %v354
      %v375 = vmul.f32 %v332, %v350
      %v376 = vmul.f32 %v333, %v354
      %v377 = vmul.f32 %v334, %v350
      %v378 = vmul.f32 %v335, %v354
      %v379 = vmul.f32 %v336, %v350
      %v380 = vmul.f32 %v337, %v354
      %v381 = vmul.f32 %v338, %v350
      %v382 = vmul.f32 %v339, %v354
      %v383 = vmul.f32 %v340, %v350
      %v384 = vmul.f32 %v341, %v354
      %v385 = vmul.f32 %v342, %v350
      %v386 = vmul.f32 %v343, %v354
      %v387 = vmul.f32 %v344, %v350
      %v388 = vmul.f32 %v345, %v354
      %v389 = vpack.c.bf16 %v359, %v357
      %v390 = vpack.c.bf16 %v360, %v358
      %v391 = vpack.c.bf16 %v363, %v361
      %v392 = vpack.c.bf16 %v364, %v362
      %v393 = vpack.c.bf16 %v367, %v365
      %v394 = vpack.c.bf16 %v368, %v366
      %v395 = vpack.c.bf16 %v371, %v369
      %v396 = vpack.c.bf16 %v372, %v370
      %v397 = vpack.c.bf16 %v375, %v373
      %v398 = vpack.c.bf16 %v376, %v374
      %v399 = vpack.c.bf16 %v379, %v377
      %v400 = vpack.c.bf16 %v380, %v378
      %v401 = vpack.c.bf16 %v383, %v381
      %v402 = vpack.c.bf16 %v384, %v382
      %v403 = vpack.c.bf16 %v387, %v385
      %v404 = vpack.c.bf16 %v388, %v386
      %v421 = vunpack.c.l.b16 %v389
      %v422 = vunpack.c.l.b16 %v390
      %v423 = vunpack.c.h.b16 %v389
      %v424 = vunpack.c.h.b16 %v390
      %v425 = vunpack.c.l.b16 %v391
      %v426 = vunpack.c.l.b16 %v392
      %v427 = vunpack.c.h.b16 %v391
      %v428 = vunpack.c.h.b16 %v392
      %v429 = vunpack.c.l.b16 %v393
      %v430 = vunpack.c.l.b16 %v394
      %v431 = vunpack.c.h.b16 %v393
      %v432 = vunpack.c.h.b16 %v394
      %v433 = vunpack.c.l.b16 %v395
      %v434 = vunpack.c.l.b16 %v396
      %v435 = vunpack.c.h.b16 %v395
      %v436 = vunpack.c.h.b16 %v396
      %v437 = vunpack.c.l.b16 %v397
      %v438 = vunpack.c.l.b16 %v398
      %v439 = vunpack.c.h.b16 %v397
      %v440 = vunpack.c.h.b16 %v398
      %v441 = vunpack.c.l.b16 %v399
      %v442 = vunpack.c.l.b16 %v400
      %v443 = vunpack.c.h.b16 %v399
      %v444 = vunpack.c.h.b16 %v400
      %v445 = vunpack.c.l.b16 %v401
      %v446 = vunpack.c.l.b16 %v402
      %v447 = vunpack.c.h.b16 %v401
      %v448 = vunpack.c.h.b16 %v402
      %v449 = vunpack.c.l.b16 %v403
      %v450 = vunpack.c.l.b16 %v404
      %v451 = vunpack.c.h.b16 %v403
      %v452 = vunpack.c.h.b16 %v404
      %v453 = vpack.c.b16 %v422, %v421
      %v454 = vpack.c.b16 %v424, %v423
      %v455 = vpack.c.b16 %v426, %v425
      %v456 = vpack.c.b16 %v428, %v427
      %v457 = vpack.c.b16 %v430, %v429
      %v458 = vpack.c.b16 %v432, %v431
      %v459 = vpack.c.b16 %v434, %v433
      %v460 = vpack.c.b16 %v436, %v435
      %v461 = vpack.c.b16 %v438, %v437
      %v462 = vpack.c.b16 %v440, %v439
      %v463 = vpack.c.b16 %v442, %v441
      %v464 = vpack.c.b16 %v444, %v443
      %v465 = vpack.c.b16 %v446, %v445
      %v466 = vpack.c.b16 %v448, %v447
      %v467 = vpack.c.b16 %v450, %v449
      %v468 = vpack.c.b16 %v452, %v451
      %485 = vst [vmem:[%s150] sm:$0xff] %v453
      %486 = vst [vmem:[%s150 + $0x8] sm:$0xff] %v454
      %487 = vst [vmem:[%s150 + $0x10] sm:$0xff] %v455
      %488 = vst [vmem:[%s150 + $0x18] sm:$0xff] %v456
      %489 = vst [vmem:[%s150 + $0x20] sm:$0xff] %v457
      %490 = vst [vmem:[%s150 + $0x28] sm:$0xff] %v458
      %491 = vst [vmem:[%s150 + $0x30] sm:$0xff] %v459
      %492 = vst [vmem:[%s150 + $0x38] sm:$0xff] %v460
      %493 = vst [vmem:[%s150 + $0x40] sm:$0xff] %v461
      %494 = vst [vmem:[%s150 + $0x48] sm:$0xff] %v462
      %495 = vst [vmem:[%s150 + $0x50] sm:$0xff] %v463
      %496 = vst [vmem:[%s150 + $0x58] sm:$0xff] %v464
      %497 = vst [vmem:[%s150 + $0x60] sm:$0xff] %v465
      %498 = vst [vmem:[%s150 + $0x68] sm:$0xff] %v466
      %499 = vst [vmem:[%s150 + $0x70] sm:$0xff] %v467
      %500 = vst [vmem:[%s150 + $0x78] sm:$0xff] %v468
      %s501 = smul.u32 16, %s13
      %p502 = scmp.lt.s32.totalorder %s501, 31
      %s503 = scalar_select %p502, %s501, 31
      %s504 = smul.addr %s503, 2
      %s505 = smul.addr %s504, 4
      %s506 = scalar_lea.vmem %s2, %s505
      // Predicated region
      $region29: #{_lambda_.4} parent=27 // pred_check
        %p507 = pneg %p78
      $region30: #{_lambda_.4} parent=27 // pred_check_branch
        %509 = sbr.rel (%p507) target = $region32
      $region31: #{_lambda_.4} parent=27 // pred_region
        %s510 = smul.u32 16, %s13
      $region32: #{_lambda_.4} parent=27 // pred_fallthru
        _
    $region28: #{_lambda_.4} parent=5 // pred_fallthru
      _
    %p511 = scmp.le.s32.totalorder 2, %s8
    // Predicated region
    $region33: #{_lambda_.4} parent=5 // pred_check
      %p512 = pneg %p511
    $region34: #{_lambda_.4} parent=5 // pred_check_branch
      %514 = sbr.rel (%p512) target = $region36
    $region35: #{_lambda_.4} parent=5 // pred_region
      %s515 = ssub.s32 %s8, 2
      // Predicated region
      $region37: #{_lambda_.4} parent=35 // pred_check
        %p516 = pneg %p84
      $region38: #{_lambda_.4} parent=35 // pred_check_branch
        %518 = sbr.rel (%p516) target = $region40
      $region39: #{_lambda_.4} parent=35 // pred_region
        %s519 = smul.u32 16, %s14
        %p520 = scmp.lt.s32.totalorder %s519, 31
        %s521 = scalar_select %p520, %s519, 31
        %s522 = smul.addr %s521, 2
        %s523 = smul.addr %s522, 4
        %s524 = scalar_lea.vmem %s2, %s523
      $region40: #{_lambda_.4} parent=35 // pred_fallthru
        _
    $region36: #{_lambda_.4} parent=5 // pred_fallthru
      _
  $region6: #{_lambda_.4} parent=0 // loop_footer
    %s12 = sadd.s32 1, %s8
  $region7: #{_lambda_.4} parent=0 // loop_footer_branch
    %7 = sbr.rel target = $region3
  $region8: #{_lambda_.4} parent=0 // loop_exit
    _

// kernel: _lambda_.5
$region0: #{_lambda_.5}
  #allocation0 [shape = 'u32[]', space=smem, size = 0x4, offset = 0x4, fixed_abs, tag = 'smem constant byte address 0x4 - core index']
  #allocation1 [shape = 'u32[144,128]{1,0:T(1,128)}', space=vmem, size = 0x12000, scoped, tag = 'internal scratch']
  %s0 = inlined_call_operand.vmem [shape: bf16[256,256], index: 0, kind: input, shape index: {}]
  %s1 = inlined_call_operand.vmem [shape: bf16[256,512], index: 1, kind: input, shape index: {}]
  %s2 = inlined_call_operand.hbm [shape: f32[256,512], index: 2, kind: output, shape index: {}]
  %s3 = sld [smem:[#allocation0]]
  $region41: #{_lambda_.5} parent=0
    _
  %s5 = ssub.s32 1, %s3
  %s6 = scalar_select 0, %s5, %s3
  $region1: #{_lambda_.5} parent=0
    #allocation2 [shape = 'u8[524288]{0}', space=vmem, size = 0x80000, scoped, tag = 'output window, operand 0']
    #allocation3 [shape = 's32[2]{0}', space=sflag, size = 0x8, scoped, tag = 'scoped memory for _lambda_.5']
    %7 = vsyncpa [#allocation3], 0
    %s8 = scalar_lea.sflag [#allocation3], 1
    %9 = vsyncpa %s8, 0
    loop: start=0, step=1, limit=4
    $region2: #{_lambda_.5} parent=1 // loop_pre_header
      _
    $region3: #{_lambda_.5} parent=1 // loop_header
      %s11 = sphi 0, %s15
      %p12 = scmp.ge.s32.totalorder %s11, 4
      %s18 = sphi 0, %s30
      %s19 = sphi 0, %s26
      %s20 = sphi 0, %s18
      %s21 = sphi 0, %s19
      %s22 = sphi 0, %s20
      %s23 = sphi 0, %s21
      %s33 = sphi 0, %s35
      %s36 = sphi 0, %s33
      %s37 = sphi 0, %s36
      %s53 = sphi 0, %s37
      %s59 = sphi 0, %s61
      %s62 = sphi 0, %s59
      %s63 = sphi 0, %s62
      %s79 = sphi 0, %s63
      %s87 = sphi 0, %s89
      %s90 = sphi 0, %s87
      %s91 = sphi 0, %s90
      %s107 = sphi 0, %s91
    $region4: #{_lambda_.5} parent=1 // loop_header_branch
      %14 = sbr.rel (%p12) target = $region8
    $region5: #{_lambda_.5} parent=1 // loop_body
      %s16 = ssub.s32 %s11, 1
      %s17 = ssub.s32 %s11, 2
      %s24 = sadd.s32 1, %s19
      %p25 = scmp.ge.s32.totalorder %s24, 1
      %s26 = scalar_select %p25, 0, %s24
      %s27 = sadd.s32 1, %s18
      %s28 = scalar_select %p25, %s27, %s18
      %p29 = scmp.ge.s32.totalorder %s28, 2
      %s30 = scalar_select %p29, 0, %s28
      %s31 = ssub.s32 %s18, %s30
      %p32 = scmp.eq.s32.totalorder %s31, 0
      %s34 = sadd.s32 %s33, 1
      %s35 = scalar_select %p32, %s33, %s34
      %p38 = pneg %p32
      %p39 = scmp.eq.s32.totalorder %s11, 1
      %p40 = por %p38, %p39
      %p41 = scmp.ne.s32.totalorder %s33, %s36
      %p42 = scmp.eq.s32.totalorder %s11, 0
      %p43 = por %p41, %p42
      %p44 = scmp.ne.s32.totalorder %s33, %s36
      %p45 = scmp.eq.s32.totalorder %s16, 1
      %p46 = por %p44, %p45
      %p47 = scmp.ne.s32.totalorder %s36, %s37
      %p48 = scmp.eq.s32.totalorder %s16, 0
      %p49 = por %p47, %p48
      %p50 = scmp.ne.s32.totalorder %s36, %s37
      %p51 = scmp.eq.s32.totalorder %s17, 1
      %p52 = por %p50, %p51
      %p54 = scmp.ne.s32.totalorder %s37, %s53
      %p55 = scmp.eq.s32.totalorder %s17, 0
      %p56 = por %p54, %p55
      %s57 = ssub.s32 %s19, %s26
      %p58 = scmp.eq.s32.totalorder %s57, 0
      %s60 = sadd.s32 %s59, 1
      %s61 = scalar_select %p58, %s59, %s60
      %p64 = pneg %p58
      %p65 = scmp.eq.s32.totalorder %s11, 1
      %p66 = por %p64, %p65
      %p67 = scmp.ne.s32.totalorder %s59, %s62
      %p68 = scmp.eq.s32.totalorder %s11, 0
      %p69 = por %p67, %p68
      %p70 = scmp.ne.s32.totalorder %s59, %s62
      %p71 = scmp.eq.s32.totalorder %s16, 1
      %p72 = por %p70, %p71
      %p73 = scmp.ne.s32.totalorder %s62, %s63
      %p74 = scmp.eq.s32.totalorder %s16, 0
      %p75 = por %p73, %p74
      %p76 = scmp.ne.s32.totalorder %s62, %s63
      %p77 = scmp.eq.s32.totalorder %s17, 1
      %p78 = por %p76, %p77
      %p80 = scmp.ne.s32.totalorder %s63, %s79
      %p81 = scmp.eq.s32.totalorder %s17, 0
      %p82 = por %p80, %p81
      %s83 = ssub.s32 %s18, %s30
      %s84 = ssub.s32 %s19, %s26
      %s85 = sor.u32 %s83, %s84
      %p86 = scmp.eq.s32.totalorder %s85, 0
      %s88 = sadd.s32 %s87, 1
      %s89 = scalar_select %p86, %s87, %s88
      %p92 = pneg %p86
      %p93 = scmp.eq.s32.totalorder %s11, 1
      %p94 = por %p92, %p93
      %p95 = scmp.ne.s32.totalorder %s87, %s90
      %p96 = scmp.eq.s32.totalorder %s11, 0
      %p97 = por %p95, %p96
      %p98 = scmp.ne.s32.totalorder %s87, %s90
      %p99 = scmp.eq.s32.totalorder %s16, 1
      %p100 = por %p98, %p99
      %p101 = scmp.ne.s32.totalorder %s90, %s91
      %p102 = scmp.eq.s32.totalorder %s16, 0
      %p103 = por %p101, %p102
      %p104 = scmp.ne.s32.totalorder %s90, %s91
      %p105 = scmp.eq.s32.totalorder %s17, 1
      %p106 = por %p104, %p105
      %p108 = scmp.ne.s32.totalorder %s91, %s107
      %p109 = scmp.eq.s32.totalorder %s17, 0
      %p110 = por %p108, %p109
      %p111 = scmp.le.s32.totalorder 1, %s11
      %p112 = scmp.lt.s32.totalorder %s11, 3
      %p113 = pnand %p111, %p112
      %p114 = pneg %p113
      // Predicated region
      $region9: #{_lambda_.5} parent=5 // pred_check
        _
      $region10: #{_lambda_.5} parent=5 // pred_check_branch
        %116 = sbr.rel (%p113) target = $region12
      $region11: #{_lambda_.5} parent=5 // pred_region
        %s117 = ssub.s32 %s11, 1
        // Predicated region
        $region13: #{_lambda_.5} parent=11 // pred_check
          %p118 = pneg %p75
        $region14: #{_lambda_.5} parent=11 // pred_check_branch
          %120 = sbr.rel (%p118) target = $region16
        $region15: #{_lambda_.5} parent=11 // pred_region
          %s121 = smul.u32 4, %s21
          %p122 = scmp.lt.s32.totalorder %s121, 3
          %s123 = scalar_select %p122, %s121, 3
          %s124 = smul.addr %s123, 4
          %s125 = scalar_lea.vmem %s1, %s124
          %s126 = smul.u32 4, %s21
        $region16: #{_lambda_.5} parent=11 // pred_fallthru
          _
      $region12: #{_lambda_.5} parent=5 // pred_fallthru
        _
      %p127 = scmp.lt.s32.totalorder %s11, 2
      // Predicated region
      $region17: #{_lambda_.5} parent=5 // pred_check
        %p128 = pneg %p127
      $region18: #{_lambda_.5} parent=5 // pred_check_branch
        %130 = sbr.rel (%p128) target = $region20
      $region19: #{_lambda_.5} parent=5 // pred_region
        // Predicated region
        $region21: #{_lambda_.5} parent=19 // pred_check
          %p131 = pneg %p43
        $region22: #{_lambda_.5} parent=19 // pred_check_branch
          %133 = sbr.rel (%p131) target = $region24
        $region23: #{_lambda_.5} parent=19 // pred_region
          %s134 = smul.u32 16, %s18
          %p135 = scmp.lt.s32.totalorder %s134, 31
          %s136 = scalar_select %p135, %s134, 31
          %s137 = smul.addr %s136, 2
          %s138 = smul.addr %s137, 4
          %s139 = scalar_lea.vmem %s0, %s138
          %s140 = smul.u32 16, %s18
        $region24: #{_lambda_.5} parent=19 // pred_fallthru
          _
      $region20: #{_lambda_.5} parent=5 // pred_fallthru
        _
      %p141 = scmp.le.s32.totalorder 1, %s11
      %p142 = scmp.lt.s32.totalorder %s11, 3
      %p143 = pnand %p141, %p142
      %p144 = pneg %p143
      // Predicated region
      $region25: #{_lambda_.5} parent=5 // pred_check
        _
      $region26: #{_lambda_.5} parent=5 // pred_check_branch
        %146 = sbr.rel (%p143) target = $region28
      $region27: #{_lambda_.5} parent=5 // pred_region
        %s147 = ssub.s32 %s11, 1
        %s148 = smul.u32 16, %s20
        %p149 = scmp.lt.s32.totalorder %s148, 31
        %s150 = scalar_select %p149, %s148, 31
        %s151 = smul.addr %s150, 2
        %s152 = smul.addr %s151, 4
        %s153 = scalar_lea.vmem %s0, %s152
        %p154 = pneg %p49
        %p155 = pneg %p46
        %s156 = smul.u32 4, %s21
        %p157 = scmp.lt.s32.totalorder %s156, 3
        %s158 = scalar_select %p157, %s156, 3
        %s159 = smul.addr %s158, 4
        %s160 = scalar_lea.vmem %s1, %s159
        %p161 = pneg %p75
        %p162 = pneg %p72
        %p163 = pneg %p103
        %p164 = pneg %p100
        %s165 = sand.u32 %s90, 1
        %s166 = scalar_lea.sflag [#allocation3], %s165
        %s167 = sand.u32 %s90, 1
        %s168 = smul.addr %s167, 512
        %s169 = scalar_lea.vmem [#allocation2], %s168
        %s170 = smul.u32 16, %s20
        %p171 = scmp.lt.s32.totalorder %s170, 31
        %s172 = scalar_select %p171, %s170, 31
        %s173 = smul.addr %s172, 2
        %s174 = smul.addr %s173, 4
        %s175 = scalar_lea.vmem %s0, %s174
        %s176 = smul.u32 16, %s20
        %s177 = smul.u32 4, %s21
        %p178 = scmp.lt.s32.totalorder %s177, 3
        %s179 = scalar_select %p178, %s177, 3
        %s180 = smul.addr %s179, 4
        %s181 = scalar_lea.vmem %s1, %s180
        %s182 = smul.u32 4, %s21
        %s183 = smul.u32 16, %s20
        %s184 = smul.u32 4, %s21
        %v185 = vld [vmem:[%s175] sm:$0xff]
        %v186 = vld [vmem:[%s175 + $0x8] sm:$0xff]
        %v187 = vld [vmem:[%s175 + $0x10] sm:$0xff]
        %v188 = vld [vmem:[%s175 + $0x18] sm:$0xff]
        %v189 = vld [vmem:[%s175 + $0x20] sm:$0xff]
        %v190 = vld [vmem:[%s175 + $0x28] sm:$0xff]
        %v191 = vld [vmem:[%s175 + $0x30] sm:$0xff]
        %v192 = vld [vmem:[%s175 + $0x38] sm:$0xff]
        %v193 = vld [vmem:[%s175 + $0x40] sm:$0xff]
        %v194 = vld [vmem:[%s175 + $0x48] sm:$0xff]
        %v195 = vld [vmem:[%s175 + $0x50] sm:$0xff]
        %v196 = vld [vmem:[%s175 + $0x58] sm:$0xff]
        %v197 = vld [vmem:[%s175 + $0x60] sm:$0xff]
        %v198 = vld [vmem:[%s175 + $0x68] sm:$0xff]
        %v199 = vld [vmem:[%s175 + $0x70] sm:$0xff]
        %v200 = vld [vmem:[%s175 + $0x78] sm:$0xff]
        %v201 = vld [vmem:[%s181] sm:$0xff]
        %v202 = vld [vmem:[%s181 + $0x8] sm:$0xff]
        %v203 = vld [vmem:[%s181 + $0x10] sm:$0xff]
        %v204 = vld [vmem:[%s181 + $0x18] sm:$0xff]
        %v205 = vld [vmem:[%s181 + $0x20] sm:$0xff]
        %v206 = vld [vmem:[%s181 + $0x28] sm:$0xff]
        %v207 = vld [vmem:[%s181 + $0x30] sm:$0xff]
        %v208 = vld [vmem:[%s181 + $0x38] sm:$0xff]
        %v209 = vld [vmem:[%s181 + $0x40] sm:$0xff]
        %v210 = vld [vmem:[%s181 + $0x48] sm:$0xff]
        %v211 = vld [vmem:[%s181 + $0x50] sm:$0xff]
        %v212 = vld [vmem:[%s181 + $0x58] sm:$0xff]
        %v213 = vld [vmem:[%s181 + $0x60] sm:$0xff]
        %v214 = vld [vmem:[%s181 + $0x68] sm:$0xff]
        %v215 = vld [vmem:[%s181 + $0x70] sm:$0xff]
        %v216 = vld [vmem:[%s181 + $0x78] sm:$0xff]
        %v217 = vld [vmem:[%s181 + $0x80] sm:$0xff]
        %v218 = vld [vmem:[%s181 + $0x88] sm:$0xff]
        %v219 = vld [vmem:[%s181 + $0x90] sm:$0xff]
        %v220 = vld [vmem:[%s181 + $0x98] sm:$0xff]
        %v221 = vld [vmem:[%s181 + $0xa0] sm:$0xff]
        %v222 = vld [vmem:[%s181 + $0xa8] sm:$0xff]
        %v223 = vld [vmem:[%s181 + $0xb0] sm:$0xff]
        %v224 = vld [vmem:[%s181 + $0xb8] sm:$0xff]
        %v225 = vld [vmem:[%s181 + $0xc0] sm:$0xff]
        %v226 = vld [vmem:[%s181 + $0xc8] sm:$0xff]
        %v227 = vld [vmem:[%s181 + $0xd0] sm:$0xff]
        %v228 = vld [vmem:[%s181 + $0xd8] sm:$0xff]
        %v229 = vld [vmem:[%s181 + $0xe0] sm:$0xff]
        %v230 = vld [vmem:[%s181 + $0xe8] sm:$0xff]
        %v231 = vld [vmem:[%s181 + $0xf0] sm:$0xff]
        %v232 = vld [vmem:[%s181 + $0xf8] sm:$0xff]
        %v233 = vld [vmem:[%s181 + $0x100] sm:$0xff]
        %v234 = vld [vmem:[%s181 + $0x108] sm:$0xff]
        %v235 = vld [vmem:[%s181 + $0x110] sm:$0xff]
        %v236 = vld [vmem:[%s181 + $0x118] sm:$0xff]
        %v237 = vld [vmem:[%s181 + $0x120] sm:$0xff]
        %v238 = vld [vmem:[%s181 + $0x128] sm:$0xff]
        %v239 = vld [vmem:[%s181 + $0x130] sm:$0xff]
        %v240 = vld [vmem:[%s181 + $0x138] sm:$0xff]
        %v241 = vld [vmem:[%s181 + $0x140] sm:$0xff]
        %v242 = vld [vmem:[%s181 + $0x148] sm:$0xff]
        %v243 = vld [vmem:[%s181 + $0x150] sm:$0xff]
        %v244 = vld [vmem:[%s181 + $0x158] sm:$0xff]
        %v245 = vld [vmem:[%s181 + $0x160] sm:$0xff]
        %v246 = vld [vmem:[%s181 + $0x168] sm:$0xff]
        %v247 = vld [vmem:[%s181 + $0x170] sm:$0xff]
        %v248 = vld [vmem:[%s181 + $0x178] sm:$0xff]
        %v249 = vld [vmem:[%s181 + $0x180] sm:$0xff]
        %v250 = vld [vmem:[%s181 + $0x188] sm:$0xff]
        %v251 = vld [vmem:[%s181 + $0x190] sm:$0xff]
        %v252 = vld [vmem:[%s181 + $0x198] sm:$0xff]
        %v253 = vld [vmem:[%s181 + $0x1a0] sm:$0xff]
        %v254 = vld [vmem:[%s181 + $0x1a8] sm:$0xff]
        %v255 = vld [vmem:[%s181 + $0x1b0] sm:$0xff]
        %v256 = vld [vmem:[%s181 + $0x1b8] sm:$0xff]
        %v257 = vld [vmem:[%s181 + $0x1c0] sm:$0xff]
        %v258 = vld [vmem:[%s181 + $0x1c8] sm:$0xff]
        %v259 = vld [vmem:[%s181 + $0x1d0] sm:$0xff]
        %v260 = vld [vmem:[%s181 + $0x1d8] sm:$0xff]
        %v261 = vld [vmem:[%s181 + $0x1e0] sm:$0xff]
        %v262 = vld [vmem:[%s181 + $0x1e8] sm:$0xff]
        %v263 = vld [vmem:[%s181 + $0x1f0] sm:$0xff]
        %v264 = vld [vmem:[%s181 + $0x1f8] sm:$0xff]
        %v281 = vunpack.c.l.b16 %v185
        %v282 = vunpack.c.h.b16 %v185
        %v283 = vunpack.c.l.b16 %v186
        %v284 = vunpack.c.h.b16 %v186
        %v285 = vunpack.c.l.b16 %v187
        %v286 = vunpack.c.h.b16 %v187
        %v287 = vunpack.c.l.b16 %v188
        %v288 = vunpack.c.h.b16 %v188
        %v289 = vunpack.c.l.b16 %v189
        %v290 = vunpack.c.h.b16 %v189
        %v291 = vunpack.c.l.b16 %v190
        %v292 = vunpack.c.h.b16 %v190
        %v293 = vunpack.c.l.b16 %v191
        %v294 = vunpack.c.h.b16 %v191
        %v295 = vunpack.c.l.b16 %v192
        %v296 = vunpack.c.h.b16 %v192
        %v297 = vunpack.c.l.b16 %v193
        %v298 = vunpack.c.h.b16 %v193
        %v299 = vunpack.c.l.b16 %v194
        %v300 = vunpack.c.h.b16 %v194
        %v301 = vunpack.c.l.b16 %v195
        %v302 = vunpack.c.h.b16 %v195
        %v303 = vunpack.c.l.b16 %v196
        %v304 = vunpack.c.h.b16 %v196
        %v305 = vunpack.c.l.b16 %v197
        %v306 = vunpack.c.h.b16 %v197
        %v307 = vunpack.c.l.b16 %v198
        %v308 = vunpack.c.h.b16 %v198
        %v309 = vunpack.c.l.b16 %v199
        %v310 = vunpack.c.h.b16 %v199
        %v311 = vunpack.c.l.b16 %v200
        %v312 = vunpack.c.h.b16 %v200
        %v313 = vpack.c.b16 %v283, %v281
        %v314 = vpack.c.b16 %v284, %v282
        %v315 = vpack.c.b16 %v287, %v285
        %v316 = vpack.c.b16 %v288, %v286
        %v317 = vpack.c.b16 %v291, %v289
        %v318 = vpack.c.b16 %v292, %v290
        %v319 = vpack.c.b16 %v295, %v293
        %v320 = vpack.c.b16 %v296, %v294
        %v321 = vpack.c.b16 %v299, %v297
        %v322 = vpack.c.b16 %v300, %v298
        %v323 = vpack.c.b16 %v303, %v301
        %v324 = vpack.c.b16 %v304, %v302
        %v325 = vpack.c.b16 %v307, %v305
        %v326 = vpack.c.b16 %v308, %v306
        %v327 = vpack.c.b16 %v311, %v309
        %v328 = vpack.c.b16 %v312, %v310
        %v409 = vunpack.c.l.b16 %v201
        %v410 = vunpack.c.h.b16 %v201
        %v411 = vunpack.c.l.b16 %v202
        %v412 = vunpack.c.h.b16 %v202
        %v413 = vunpack.c.l.b16 %v203
        %v414 = vunpack.c.h.b16 %v203
        %v415 = vunpack.c.l.b16 %v204
        %v416 = vunpack.c.h.b16 %v204
        %v417 = vunpack.c.l.b16 %v205
        %v418 = vunpack.c.h.b16 %v205
        %v419 = vunpack.c.l.b16 %v206
        %v420 = vunpack.c.h.b16 %v206
        %v421 = vunpack.c.l.b16 %v207
        %v422 = vunpack.c.h.b16 %v207
        %v423 = vunpack.c.l.b16 %v208
        %v424 = vunpack.c.h.b16 %v208
        %v425 = vunpack.c.l.b16 %v209
        %v426 = vunpack.c.h.b16 %v209
        %v427 = vunpack.c.l.b16 %v210
        %v428 = vunpack.c.h.b16 %v210
        %v429 = vunpack.c.l.b16 %v211
        %v430 = vunpack.c.h.b16 %v211
        %v431 = vunpack.c.l.b16 %v212
        %v432 = vunpack.c.h.b16 %v212
        %v433 = vunpack.c.l.b16 %v213
        %v434 = vunpack.c.h.b16 %v213
        %v435 = vunpack.c.l.b16 %v214
        %v436 = vunpack.c.h.b16 %v214
        %v437 = vunpack.c.l.b16 %v215
        %v438 = vunpack.c.h.b16 %v215
        %v439 = vunpack.c.l.b16 %v216
        %v440 = vunpack.c.h.b16 %v216
        %v441 = vunpack.c.l.b16 %v217
        %v442 = vunpack.c.h.b16 %v217
        %v443 = vunpack.c.l.b16 %v218
        %v444 = vunpack.c.h.b16 %v218
        %v445 = vunpack.c.l.b16 %v219
        %v446 = vunpack.c.h.b16 %v219
        %v447 = vunpack.c.l.b16 %v220
        %v448 = vunpack.c.h.b16 %v220
        %v449 = vunpack.c.l.b16 %v221
        %v450 = vunpack.c.h.b16 %v221
        %v451 = vunpack.c.l.b16 %v222
        %v452 = vunpack.c.h.b16 %v222
        %v453 = vunpack.c.l.b16 %v223
        %v454 = vunpack.c.h.b16 %v223
        %v455 = vunpack.c.l.b16 %v224
        %v456 = vunpack.c.h.b16 %v224
        %v457 = vunpack.c.l.b16 %v225
        %v458 = vunpack.c.h.b16 %v225
        %v459 = vunpack.c.l.b16 %v226
        %v460 = vunpack.c.h.b16 %v226
        %v461 = vunpack.c.l.b16 %v227
        %v462 = vunpack.c.h.b16 %v227
        %v463 = vunpack.c.l.b16 %v228
        %v464 = vunpack.c.h.b16 %v228
        %v465 = vunpack.c.l.b16 %v229
        %v466 = vunpack.c.h.b16 %v229
        %v467 = vunpack.c.l.b16 %v230
        %v468 = vunpack.c.h.b16 %v230
        %v469 = vunpack.c.l.b16 %v231
        %v470 = vunpack.c.h.b16 %v231
        %v471 = vunpack.c.l.b16 %v232
        %v472 = vunpack.c.h.b16 %v232
        %v473 = vunpack.c.l.b16 %v233
        %v474 = vunpack.c.h.b16 %v233
        %v475 = vunpack.c.l.b16 %v234
        %v476 = vunpack.c.h.b16 %v234
        %v477 = vunpack.c.l.b16 %v235
        %v478 = vunpack.c.h.b16 %v235
        %v479 = vunpack.c.l.b16 %v236
        %v480 = vunpack.c.h.b16 %v236
        %v481 = vunpack.c.l.b16 %v237
        %v482 = vunpack.c.h.b16 %v237
        %v483 = vunpack.c.l.b16 %v238
        %v484 = vunpack.c.h.b16 %v238
        %v485 = vunpack.c.l.b16 %v239
        %v486 = vunpack.c.h.b16 %v239
        %v487 = vunpack.c.l.b16 %v240
        %v488 = vunpack.c.h.b16 %v240
        %v489 = vunpack.c.l.b16 %v241
        %v490 = vunpack.c.h.b16 %v241
        %v491 = vunpack.c.l.b16 %v242
        %v492 = vunpack.c.h.b16 %v242
        %v493 = vunpack.c.l.b16 %v243
        %v494 = vunpack.c.h.b16 %v243
        %v495 = vunpack.c.l.b16 %v244
        %v496 = vunpack.c.h.b16 %v244
        %v497 = vunpack.c.l.b16 %v245
        %v498 = vunpack.c.h.b16 %v245
        %v499 = vunpack.c.l.b16 %v246
        %v500 = vunpack.c.h.b16 %v246
        %v501 = vunpack.c.l.b16 %v247
        %v502 = vunpack.c.h.b16 %v247
        %v503 = vunpack.c.l.b16 %v248
        %v504 = vunpack.c.h.b16 %v248
        %v505 = vunpack.c.l.b16 %v249
        %v506 = vunpack.c.h.b16 %v249
        %v507 = vunpack.c.l.b16 %v250
        %v508 = vunpack.c.h.b16 %v250
        %v509 = vunpack.c.l.b16 %v251
        %v510 = vunpack.c.h.b16 %v251
        %v511 = vunpack.c.l.b16 %v252
        %v512 = vunpack.c.h.b16 %v252
        %v513 = vunpack.c.l.b16 %v253
        %v514 = vunpack.c.h.b16 %v253
        %v515 = vunpack.c.l.b16 %v254
        %v516 = vunpack.c.h.b16 %v254
        %v517 = vunpack.c.l.b16 %v255
        %v518 = vunpack.c.h.b16 %v255
        %v519 = vunpack.c.l.b16 %v256
        %v520 = vunpack.c.h.b16 %v256
        %v521 = vunpack.c.l.b16 %v257
        %v522 = vunpack.c.h.b16 %v257
        %v523 = vunpack.c.l.b16 %v258
        %v524 = vunpack.c.h.b16 %v258
        %v525 = vunpack.c.l.b16 %v259
        %v526 = vunpack.c.h.b16 %v259
        %v527 = vunpack.c.l.b16 %v260
        %v528 = vunpack.c.h.b16 %v260
        %v529 = vunpack.c.l.b16 %v261
        %v530 = vunpack.c.h.b16 %v261
        %v531 = vunpack.c.l.b16 %v262
        %v532 = vunpack.c.h.b16 %v262
        %v533 = vunpack.c.l.b16 %v263
        %v534 = vunpack.c.h.b16 %v263
        %v535 = vunpack.c.l.b16 %v264
        %v536 = vunpack.c.h.b16 %v264
        %v537 = vpack.c.b16 %v413, %v409
        %v538 = vpack.c.b16 %v414, %v410
        %v539 = vpack.c.b16 %v415, %v411
        %v540 = vpack.c.b16 %v416, %v412
        %v541 = vpack.c.b16 %v421, %v417
        %v542 = vpack.c.b16 %v422, %v418
        %v543 = vpack.c.b16 %v423, %v419
        %v544 = vpack.c.b16 %v424, %v420
        %v545 = vpack.c.b16 %v429, %v425
        %v546 = vpack.c.b16 %v430, %v426
        %v547 = vpack.c.b16 %v431, %v427
        %v548 = vpack.c.b16 %v432, %v428
        %v549 = vpack.c.b16 %v437, %v433
        %v550 = vpack.c.b16 %v438, %v434
        %v551 = vpack.c.b16 %v439, %v435
        %v552 = vpack.c.b16 %v440, %v436
        %v553 = vpack.c.b16 %v445, %v441
        %v554 = vpack.c.b16 %v446, %v442
        %v555 = vpack.c.b16 %v447, %v443
        %v556 = vpack.c.b16 %v448, %v444
        %v557 = vpack.c.b16 %v453, %v449
        %v558 = vpack.c.b16 %v454, %v450
        %v559 = vpack.c.b16 %v455, %v451
        %v560 = vpack.c.b16 %v456, %v452
        %v561 = vpack.c.b16 %v461, %v457
        %v562 = vpack.c.b16 %v462, %v458
        %v563 = vpack.c.b16 %v463, %v459
        %v564 = vpack.c.b16 %v464, %v460
        %v565 = vpack.c.b16 %v469, %v465
        %v566 = vpack.c.b16 %v470, %v466
        %v567 = vpack.c.b16 %v471, %v467
        %v568 = vpack.c.b16 %v472, %v468
        %v569 = vpack.c.b16 %v477, %v473
        %v570 = vpack.c.b16 %v478, %v474
        %v571 = vpack.c.b16 %v479, %v475
        %v572 = vpack.c.b16 %v480, %v476
        %v573 = vpack.c.b16 %v485, %v481
        %v574 = vpack.c.b16 %v486, %v482
        %v575 = vpack.c.b16 %v487, %v483
        %v576 = vpack.c.b16 %v488, %v484
        %v577 = vpack.c.b16 %v493, %v489
        %v578 = vpack.c.b16 %v494, %v490
        %v579 = vpack.c.b16 %v495, %v491
        %v580 = vpack.c.b16 %v496, %v492
        %v581 = vpack.c.b16 %v501, %v497
        %v582 = vpack.c.b16 %v502, %v498
        %v583 = vpack.c.b16 %v503, %v499
        %v584 = vpack.c.b16 %v504, %v500
        %v585 = vpack.c.b16 %v509, %v505
        %v586 = vpack.c.b16 %v510, %v506
        %v587 = vpack.c.b16 %v511, %v507
        %v588 = vpack.c.b16 %v512, %v508
        %v589 = vpack.c.b16 %v517, %v513
        %v590 = vpack.c.b16 %v518, %v514
        %v591 = vpack.c.b16 %v519, %v515
        %v592 = vpack.c.b16 %v520, %v516
        %v593 = vpack.c.b16 %v525, %v521
        %v594 = vpack.c.b16 %v526, %v522
        %v595 = vpack.c.b16 %v527, %v523
        %v596 = vpack.c.b16 %v528, %v524
        %v597 = vpack.c.b16 %v533, %v529
        %v598 = vpack.c.b16 %v534, %v530
        %v599 = vpack.c.b16 %v535, %v531
        %v600 = vpack.c.b16 %v536, %v532
        %665 = vmatprep.subr.bf16.mxu0 %v538
        %666 = vmatpush1.bf16.msra.mxu0 %v537
        %667 = vmatprep.subr.bf16.mxu0 %v542
        %668 = vmatpush1.bf16.msra.mxu0 %v541
        %669 = vmatprep.subr.bf16.mxu0 %v546
        %670 = vmatpush1.bf16.msra.mxu0 %v545
        %671 = vmatprep.subr.bf16.mxu0 %v550
        %672 = vmatpush1.bf16.msra.mxu0 %v549
        %673 = vmatprep.subr.bf16.mxu0 %v554
        %674 = vmatpush1.bf16.msra.mxu0 %v553
        %675 = vmatprep.subr.bf16.mxu0 %v558
        %676 = vmatpush1.bf16.msra.mxu0 %v557
        %677 = vmatprep.subr.bf16.mxu0 %v562
        %678 = vmatpush1.bf16.msra.mxu0 %v561
        %679 = vmatprep.subr.bf16.mxu0 %v566
        %680 = vmatpush1.bf16.msra.mxu0 %v565
        %681 = vmatprep.subr.bf16.mxu0 %v570
        %682 = vmatpush1.bf16.msra.mxu0 %v569
        %683 = vmatprep.subr.bf16.mxu0 %v574
        %684 = vmatpush1.bf16.msra.mxu0 %v573
        %685 = vmatprep.subr.bf16.mxu0 %v578
        %686 = vmatpush1.bf16.msra.mxu0 %v577
        %687 = vmatprep.subr.bf16.mxu0 %v582
        %688 = vmatpush1.bf16.msra.mxu0 %v581
        %689 = vmatprep.subr.bf16.mxu0 %v586
        %690 = vmatpush1.bf16.msra.mxu0 %v585
        %691 = vmatprep.subr.bf16.mxu0 %v590
        %692 = vmatpush1.bf16.msra.mxu0 %v589
        %693 = vmatprep.subr.bf16.mxu0 %v594
        %694 = vmatpush1.bf16.msra.mxu0 %v593
        %695 = vmatprep.subr.bf16.mxu0 %v598
        %696 = vmatpush1.bf16.msra.mxu0 %v597
        %697 = vmatprep.mubr.bf16.mxu0 %v314
        %698 = vmatmul.mubr.bf16.gmra.mrb[0].mxu0 %v313
        %v699 = vpop.f32.mrb[0].mxu0
        %v700 = vadd.f32 0.0, %v699
        %v701 = vpop.f32.mrb[0].mxu0
        %v702 = vadd.f32 0.0, %v701
        %v703 = vpop.f32.mrb[0].mxu0
        %v704 = vadd.f32 0.0, %v703
        %v705 = vpop.f32.mrb[0].mxu0
        %v706 = vadd.f32 0.0, %v705
        %707 = vmatprep.mubr.bf16.mxu0 %v316
        %708 = vmatmul.mubr.bf16.gmra.mrb[0].mxu0 %v315
        %v709 = vpop.f32.mrb[0].mxu0
        %v710 = vadd.f32 0.0, %v709
        %v711 = vpop.f32.mrb[0].mxu0
        %v712 = vadd.f32 0.0, %v711
        %v713 = vpop.f32.mrb[0].mxu0
        %v714 = vadd.f32 0.0, %v713
        %v715 = vpop.f32.mrb[0].mxu0
        %v716 = vadd.f32 0.0, %v715
        %717 = vmatprep.mubr.bf16.mxu0 %v318
        %718 = vmatmul.mubr.bf16.gmra.mrb[0].mxu0 %v317
        %v719 = vpop.f32.mrb[0].mxu0
        %v720 = vadd.f32 0.0, %v719
        %v721 = vpop.f32.mrb[0].mxu0
        %v722 = vadd.f32 0.0, %v721
        %v723 = vpop.f32.mrb[0].mxu0
        %v724 = vadd.f32 0.0, %v723
        %v725 = vpop.f32.mrb[0].mxu0
        %v726 = vadd.f32 0.0, %v725
        %727 = vmatprep.mubr.bf16.mxu0 %v320
        %728 = vmatmul.mubr.bf16.gmra.mrb[0].mxu0 %v319
        %v729 = vpop.f32.mrb[0].mxu0
        %v730 = vadd.f32 0.0, %v729
        %v731 = vpop.f32.mrb[0].mxu0
        %v732 = vadd.f32 0.0, %v731
        %v733 = vpop.f32.mrb[0].mxu0
        %v734 = vadd.f32 0.0, %v733
        %v735 = vpop.f32.mrb[0].mxu0
        %v736 = vadd.f32 0.0, %v735
        %737 = vmatprep.mubr.bf16.mxu0 %v322
        %738 = vmatmul.mubr.bf16.gmra.mrb[0].mxu0 %v321
        %v739 = vpop.f32.mrb[0].mxu0
        %v740 = vadd.f32 0.0, %v739
        %v741 = vpop.f32.mrb[0].mxu0
        %v742 = vadd.f32 0.0, %v741
        %v743 = vpop.f32.mrb[0].mxu0
        %v744 = vadd.f32 0.0, %v743
        %v745 = vpop.f32.mrb[0].mxu0
        %v746 = vadd.f32 0.0, %v745
        %747 = vmatprep.mubr.bf16.mxu0 %v324
        %748 = vmatmul.mubr.bf16.gmra.mrb[0].mxu0 %v323
        %v749 = vpop.f32.mrb[0].mxu0
        %v750 = vadd.f32 0.0, %v749
        %v751 = vpop.f32.mrb[0].mxu0
        %v752 = vadd.f32 0.0, %v751
        %v753 = vpop.f32.mrb[0].mxu0
        %v754 = vadd.f32 0.0, %v753
        %v755 = vpop.f32.mrb[0].mxu0
        %v756 = vadd.f32 0.0, %v755
        %757 = vmatprep.mubr.bf16.mxu0 %v326
        %758 = vmatmul.mubr.bf16.gmra.mrb[0].mxu0 %v325
        %v759 = vpop.f32.mrb[0].mxu0
        %v760 = vadd.f32 0.0, %v759
        %v761 = vpop.f32.mrb[0].mxu0
        %v762 = vadd.f32 0.0, %v761
        %v763 = vpop.f32.mrb[0].mxu0
        %v764 = vadd.f32 0.0, %v763
        %v765 = vpop.f32.mrb[0].mxu0
        %v766 = vadd.f32 0.0, %v765
        %767 = vmatprep.mubr.bf16.mxu0 %v328
        %768 = vmatmul.mubr.bf16.gmra.mrb[0].mxu0 %v327
        %v769 = vpop.f32.mrb[0].mxu0
        %v770 = vadd.f32 0.0, %v769
        %v771 = vpop.f32.mrb[0].mxu0
        %v772 = vadd.f32 0.0, %v771
        %v773 = vpop.f32.mrb[0].mxu0
        %v774 = vadd.f32 0.0, %v773
        %v775 = vpop.f32.mrb[0].mxu0
        %v776 = vadd.f32 0.0, %v775
        %777 = vdwg.mxu0
        %778 = vmatprep.subr.bf16.mxu0 %v540
        %779 = vmatpush1.bf16.msra.mxu0 %v539
        %780 = vmatprep.subr.bf16.mxu0 %v544
        %781 = vmatpush1.bf16.msra.mxu0 %v543
        %782 = vmatprep.subr.bf16.mxu0 %v548
        %783 = vmatpush1.bf16.msra.mxu0 %v547
        %784 = vmatprep.subr.bf16.mxu0 %v552
        %785 = vmatpush1.bf16.msra.mxu0 %v551
        %786 = vmatprep.subr.bf16.mxu0 %v556
        %787 = vmatpush1.bf16.msra.mxu0 %v555
        %788 = vmatprep.subr.bf16.mxu0 %v560
        %789 = vmatpush1.bf16.msra.mxu0 %v559
        %790 = vmatprep.subr.bf16.mxu0 %v564
        %791 = vmatpush1.bf16.msra.mxu0 %v563
        %792 = vmatprep.subr.bf16.mxu0 %v568
        %793 = vmatpush1.bf16.msra.mxu0 %v567
        %794 = vmatprep.subr.bf16.mxu0 %v572
        %795 = vmatpush1.bf16.msra.mxu0 %v571
        %796 = vmatprep.subr.bf16.mxu0 %v576
        %797 = vmatpush1.bf16.msra.mxu0 %v575
        %798 = vmatprep.subr.bf16.mxu0 %v580
        %799 = vmatpush1.bf16.msra.mxu0 %v579
        %800 = vmatprep.subr.bf16.mxu0 %v584
        %801 = vmatpush1.bf16.msra.mxu0 %v583
        %802 = vmatprep.subr.bf16.mxu0 %v588
        %803 = vmatpush1.bf16.msra.mxu0 %v587
        %804 = vmatprep.subr.bf16.mxu0 %v592
        %805 = vmatpush1.bf16.msra.mxu0 %v591
        %806 = vmatprep.subr.bf16.mxu0 %v596
        %807 = vmatpush1.bf16.msra.mxu0 %v595
        %808 = vmatprep.subr.bf16.mxu0 %v600
        %809 = vmatpush1.bf16.msra.mxu0 %v599
        %810 = vmatprep.mubr.bf16.mxu0 %v314
        %811 = vmatmul.mubr.bf16.gmra.mrb[0].mxu0 %v313
        %v812 = vpop.f32.mrb[0].mxu0
        %v813 = vadd.f32 0.0, %v812
        %v814 = vpop.f32.mrb[0].mxu0
        %v815 = vadd.f32 0.0, %v814
        %v816 = vpop.f32.mrb[0].mxu0
        %v817 = vadd.f32 0.0, %v816
        %v818 = vpop.f32.mrb[0].mxu0
        %v819 = vadd.f32 0.0, %v818
        %820 = vmatprep.mubr.bf16.mxu0 %v316
        %821 = vmatmul.mubr.bf16.gmra.mrb[0].mxu0 %v315
        %v822 = vpop.f32.mrb[0].mxu0
        %v823 = vadd.f32 0.0, %v822
        %v824 = vpop.f32.mrb[0].mxu0
        %v825 = vadd.f32 0.0, %v824
        %v826 = vpop.f32.mrb[0].mxu0
        %v827 = vadd.f32 0.0, %v826
        %v828 = vpop.f32.mrb[0].mxu0
        %v829 = vadd.f32 0.0, %v828
        %830 = vmatprep.mubr.bf16.mxu0 %v318
        %831 = vmatmul.mubr.bf16.gmra.mrb[0].mxu0 %v317
        %v832 = vpop.f32.mrb[0].mxu0
        %v833 = vadd.f32 0.0, %v832
        %v834 = vpop.f32.mrb[0].mxu0
        %v835 = vadd.f32 0.0, %v834
        %v836 = vpop.f32.mrb[0].mxu0
        %v837 = vadd.f32 0.0, %v836
        %v838 = vpop.f32.mrb[0].mxu0
        %v839 = vadd.f32 0.0, %v838
        %840 = vmatprep.mubr.bf16.mxu0 %v320
        %841 = vmatmul.mubr.bf16.gmra.mrb[0].mxu0 %v319
        %v842 = vpop.f32.mrb[0].mxu0
        %v843 = vadd.f32 0.0, %v842
        %v844 = vpop.f32.mrb[0].mxu0
        %v845 = vadd.f32 0.0, %v844
        %v846 = vpop.f32.mrb[0].mxu0
        %v847 = vadd.f32 0.0, %v846
        %v848 = vpop.f32.mrb[0].mxu0
        %v849 = vadd.f32 0.0, %v848
        %850 = vmatprep.mubr.bf16.mxu0 %v322
        %851 = vmatmul.mubr.bf16.gmra.mrb[0].mxu0 %v321
        %v852 = vpop.f32.mrb[0].mxu0
        %v853 = vadd.f32 0.0, %v852
        %v854 = vpop.f32.mrb[0].mxu0
        %v855 = vadd.f32 0.0, %v854
        %v856 = vpop.f32.mrb[0].mxu0
        %v857 = vadd.f32 0.0, %v856
        %v858 = vpop.f32.mrb[0].mxu0
        %v859 = vadd.f32 0.0, %v858
        %860 = vmatprep.mubr.bf16.mxu0 %v324
        %861 = vmatmul.mubr.bf16.gmra.mrb[0].mxu0 %v323
        %v862 = vpop.f32.mrb[0].mxu0
        %v863 = vadd.f32 0.0, %v862
        %v864 = vpop.f32.mrb[0].mxu0
        %v865 = vadd.f32 0.0, %v864
        %v866 = vpop.f32.mrb[0].mxu0
        %v867 = vadd.f32 0.0, %v866
        %v868 = vpop.f32.mrb[0].mxu0
        %v869 = vadd.f32 0.0, %v868
        %870 = vmatprep.mubr.bf16.mxu0 %v326
        %871 = vmatmul.mubr.bf16.gmra.mrb[0].mxu0 %v325
        %v872 = vpop.f32.mrb[0].mxu0
        %v873 = vadd.f32 0.0, %v872
        %v874 = vpop.f32.mrb[0].mxu0
        %v875 = vadd.f32 0.0, %v874
        %v876 = vpop.f32.mrb[0].mxu0
        %v877 = vadd.f32 0.0, %v876
        %v878 = vpop.f32.mrb[0].mxu0
        %v879 = vadd.f32 0.0, %v878
        %880 = vmatprep.mubr.bf16.mxu0 %v328
        %881 = vmatmul.mubr.bf16.gmra.mrb[0].mxu0 %v327
        %v882 = vpop.f32.mrb[0].mxu0
        %v883 = vadd.f32 0.0, %v882
        %v884 = vpop.f32.mrb[0].mxu0
        %v885 = vadd.f32 0.0, %v884
        %v886 = vpop.f32.mrb[0].mxu0
        %v887 = vadd.f32 0.0, %v886
        %v888 = vpop.f32.mrb[0].mxu0
        %v889 = vadd.f32 0.0, %v888
        %890 = vdwg.mxu0
        %891 = vst [vmem:[%s169] sm:$0xff] %v700
        %892 = vst [vmem:[%s169 + $0x8] sm:$0xff] %v702
        %893 = vst [vmem:[%s169 + $0x10] sm:$0xff] %v813
        %894 = vst [vmem:[%s169 + $0x18] sm:$0xff] %v815
        %895 = vst [vmem:[%s169 + $0x20] sm:$0xff] %v704
        %896 = vst [vmem:[%s169 + $0x28] sm:$0xff] %v706
        %897 = vst [vmem:[%s169 + $0x30] sm:$0xff] %v817
        %898 = vst [vmem:[%s169 + $0x38] sm:$0xff] %v819
        %899 = vst [vmem:[%s169 + $0x40] sm:$0xff] %v710
        %900 = vst [vmem:[%s169 + $0x48] sm:$0xff] %v712
        %901 = vst [vmem:[%s169 + $0x50] sm:$0xff] %v823
        %902 = vst [vmem:[%s169 + $0x58] sm:$0xff] %v825
        %903 = vst [vmem:[%s169 + $0x60] sm:$0xff] %v714
        %904 = vst [vmem:[%s169 + $0x68] sm:$0xff] %v716
        %905 = vst [vmem:[%s169 + $0x70] sm:$0xff] %v827
        %906 = vst [vmem:[%s169 + $0x78] sm:$0xff] %v829
        %907 = vst [vmem:[%s169 + $0x80] sm:$0xff] %v720
        %908 = vst [vmem:[%s169 + $0x88] sm:$0xff] %v722
        %909 = vst [vmem:[%s169 + $0x90] sm:$0xff] %v833
        %910 = vst [vmem:[%s169 + $0x98] sm:$0xff] %v835
        %911 = vst [vmem:[%s169 + $0xa0] sm:$0xff] %v724
        %912 = vst [vmem:[%s169 + $0xa8] sm:$0xff] %v726
        %913 = vst [vmem:[%s169 + $0xb0] sm:$0xff] %v837
        %914 = vst [vmem:[%s169 + $0xb8] sm:$0xff] %v839
        %915 = vst [vmem:[%s169 + $0xc0] sm:$0xff] %v730
        %916 = vst [vmem:[%s169 + $0xc8] sm:$0xff] %v732
        %917 = vst [vmem:[%s169 + $0xd0] sm:$0xff] %v843
        %918 = vst [vmem:[%s169 + $0xd8] sm:$0xff] %v845
        %919 = vst [vmem:[%s169 + $0xe0] sm:$0xff] %v734
        %920 = vst [vmem:[%s169 + $0xe8] sm:$0xff] %v736
        %921 = vst [vmem:[%s169 + $0xf0] sm:$0xff] %v847
        %922 = vst [vmem:[%s169 + $0xf8] sm:$0xff] %v849
        %923 = vst [vmem:[%s169 + $0x100] sm:$0xff] %v740
        %924 = vst [vmem:[%s169 + $0x108] sm:$0xff] %v742
        %925 = vst [vmem:[%s169 + $0x110] sm:$0xff] %v853
        %926 = vst [vmem:[%s169 + $0x118] sm:$0xff] %v855
        %927 = vst [vmem:[%s169 + $0x120] sm:$0xff] %v744
        %928 = vst [vmem:[%s169 + $0x128] sm:$0xff] %v746
        %929 = vst [vmem:[%s169 + $0x130] sm:$0xff] %v857
        %930 = vst [vmem:[%s169 + $0x138] sm:$0xff] %v859
        %931 = vst [vmem:[%s169 + $0x140] sm:$0xff] %v750
        %932 = vst [vmem:[%s169 + $0x148] sm:$0xff] %v752
        %933 = vst [vmem:[%s169 + $0x150] sm:$0xff] %v863
        %934 = vst [vmem:[%s169 + $0x158] sm:$0xff] %v865
        %935 = vst [vmem:[%s169 + $0x160] sm:$0xff] %v754
        %936 = vst [vmem:[%s169 + $0x168] sm:$0xff] %v756
        %937 = vst [vmem:[%s169 + $0x170] sm:$0xff] %v867
        %938 = vst [vmem:[%s169 + $0x178] sm:$0xff] %v869
        %939 = vst [vmem:[%s169 + $0x180] sm:$0xff] %v760
        %940 = vst [vmem:[%s169 + $0x188] sm:$0xff] %v762
        %941 = vst [vmem:[%s169 + $0x190] sm:$0xff] %v873
        %942 = vst [vmem:[%s169 + $0x198] sm:$0xff] %v875
        %943 = vst [vmem:[%s169 + $0x1a0] sm:$0xff] %v764
        %944 = vst [vmem:[%s169 + $0x1a8] sm:$0xff] %v766
        %945 = vst [vmem:[%s169 + $0x1b0] sm:$0xff] %v877
        %946 = vst [vmem:[%s169 + $0x1b8] sm:$0xff] %v879
        %947 = vst [vmem:[%s169 + $0x1c0] sm:$0xff] %v770
        %948 = vst [vmem:[%s169 + $0x1c8] sm:$0xff] %v772
        %949 = vst [vmem:[%s169 + $0x1d0] sm:$0xff] %v883
        %950 = vst [vmem:[%s169 + $0x1d8] sm:$0xff] %v885
        %951 = vst [vmem:[%s169 + $0x1e0] sm:$0xff] %v774
        %952 = vst [vmem:[%s169 + $0x1e8] sm:$0xff] %v776
        %953 = vst [vmem:[%s169 + $0x1f0] sm:$0xff] %v887
        %954 = vst [vmem:[%s169 + $0x1f8] sm:$0xff] %v889
        %s955 = sand.u32 %s90, 1
        %s956 = scalar_lea.sflag [#allocation3], %s955
        %s957 = sand.u32 %s90, 1
        %s958 = smul.addr %s957, 512
        %s959 = scalar_lea.vmem [#allocation2], %s958
        // Predicated region
        $region29: #{_lambda_.5} parent=27 // pred_check
          %p960 = pneg %p100
        $region30: #{_lambda_.5} parent=27 // pred_check_branch
          %962 = sbr.rel (%p960) target = $region32
        $region31: #{_lambda_.5} parent=27 // pred_region
          %s963 = smul.u32 16, %s20
          %s964 = smul.u32 4, %s21
          %s966 = ssub.s32 8192, 8192
          %967 = vsyncadd %s956, %s966
          %s968 = smul.addr %s963, 4
          %s969 = sadd.s32 %s964, %s968
          %s970 = smul.addr %s969, 128
          %s971 = scalar_lea.hbm %s2, %s970
          %s972 = sshll.u32 %s959, 4
          %s973 = int_to_ptr.vmem [resolvable:$true] %s972
          %978 = dma.vmem_to_hbm [thread:$0]  %s973, 8192, %s971, %s956, 512, 512, 32
        $region32: #{_lambda_.5} parent=27 // pred_fallthru
          _
      $region28: #{_lambda_.5} parent=5 // pred_fallthru
        _
      %p979 = scmp.le.s32.totalorder 2, %s11
      // Predicated region
      $region33: #{_lambda_.5} parent=5 // pred_check
        %p980 = pneg %p979
      $region34: #{_lambda_.5} parent=5 // pred_check_branch
        %982 = sbr.rel (%p980) target = $region36
      $region35: #{_lambda_.5} parent=5 // pred_region
        %s983 = ssub.s32 %s11, 2
        // Predicated region
        $region37: #{_lambda_.5} parent=35 // pred_check
          %p984 = pneg %p106
        $region38: #{_lambda_.5} parent=35 // pred_check_branch
          %986 = sbr.rel (%p984) target = $region40
        $region39: #{_lambda_.5} parent=35 // pred_region
          %s987 = sand.u32 %s91, 1
          %s988 = scalar_lea.sflag [#allocation3], %s987
          %s989 = sand.u32 %s91, 1
          %s990 = smul.addr %s989, 512
          %s991 = scalar_lea.vmem [#allocation2], %s990
          %992 = dma.done %s988, 8192
        $region40: #{_lambda_.5} parent=35 // pred_fallthru
          _
      $region36: #{_lambda_.5} parent=5 // pred_fallthru
        _
    $region6: #{_lambda_.5} parent=1 // loop_footer
      %s15 = sadd.s32 1, %s11
    $region7: #{_lambda_.5} parent=1 // loop_footer_branch
      %10 = sbr.rel target = $region3
    $region8: #{_lambda_.5} parent=1 // loop_exit
      _
    %993 = vsyncpa [#allocation3], 1
    %s994 = scalar_lea.sflag [#allocation3], 1
    %995 = vsyncpa %s994, 1

// kernel: _lambda_.3
$region0: #{_lambda_.3}
  #allocation0 [shape = 'u32[]', space=smem, size = 0x4, offset = 0x4, fixed_abs, tag = 'smem constant byte address 0x4 - core index']
  #allocation1 [shape = 'u32[144,128]{1,0:T(1,128)}', space=vmem, size = 0x12000, scoped, tag = 'internal scratch']
  %s0 = inlined_call_operand.vmem [shape: f32[2,128,256], index: 0, kind: input, shape index: {}]
  %s1 = inlined_call_operand.vmem [shape: f32[2,1,256], index: 1, kind: input, shape index: {}]
  %s2 = inlined_call_operand.vmem [shape: bf16[2,256,768], index: 2, kind: input, shape index: {}]
  %s3 = inlined_call_operand.vmem [shape: f32[128,256], index: 3, kind: input, shape index: {}]
  %s4 = inlined_call_operand.vmem [shape: f32[128,256], index: 4, kind: input, shape index: {}]
  %s5 = inlined_call_operand.vmem [shape: bf16[2,256,256], index: 5, kind: input, shape index: {}]
  %s6 = inlined_call_operand.vmem [shape: f32[2,1,256], index: 6, kind: input, shape index: {}]
  %s7 = inlined_call_operand.vmem [shape: bf16[2,256,768], index: 7, kind: input, shape index: {}]
  %s8 = inlined_call_operand.vmem [shape: bf16[2,256,768], index: 8, kind: input, shape index: {}]
  %s9 = inlined_call_operand.vmem [shape: bf16[2,768,256], index: 9, kind: input, shape index: {}]
  %s10 = inlined_call_operand.vmem [shape: f32[2,128,256], index: 10, kind: output, shape index: {}]
  %s11 = sld [smem:[#allocation0]]
  $region77: #{_lambda_.3} parent=0
    _
  %s13 = ssub.s32 1, %s11
  %s14 = scalar_select 0, %s13, %s11
  loop: start=0, step=1, limit=6
  $region2: #{_lambda_.3} parent=0 // loop_pre_header
    _
  $region3: #{_lambda_.3} parent=0 // loop_header
    %s16 = sphi 0, %s20
    %p17 = scmp.ge.s32.totalorder %s16, 6
    %s23 = sphi 0, %s35
    %s24 = sphi 0, %s31
    %s25 = sphi 0, %s23
    %s26 = sphi 0, %s24
    %s27 = sphi 0, %s25
    %s28 = sphi 0, %s26
    %s38 = sphi 0, %s40
    %s41 = sphi 0, %s38
    %s42 = sphi 0, %s41
    %s58 = sphi 0, %s42
    %s64 = sphi 0, %s66
    %s67 = sphi 0, %s64
    %s68 = sphi 0, %s67
    %s84 = sphi 0, %s68
    %s90 = sphi 0, %s92
    %s93 = sphi 0, %s90
    %s94 = sphi 0, %s93
    %s110 = sphi 0, %s94
    %s114 = sphi 0, %s114
    %s116 = sphi 0, %s114
    %s117 = sphi 0, %s116
    %s131 = sphi 0, %s117
    %s135 = sphi 0, %s135
    %s137 = sphi 0, %s135
    %s138 = sphi 0, %s137
    %s152 = sphi 0, %s138
    %s158 = sphi 0, %s160
    %s161 = sphi 0, %s158
    %s162 = sphi 0, %s161
    %s178 = sphi 0, %s162
    %s184 = sphi 0, %s186
    %s187 = sphi 0, %s184
    %s188 = sphi 0, %s187
    %s204 = sphi 0, %s188
    %s210 = sphi 0, %s212
    %s213 = sphi 0, %s210
    %s214 = sphi 0, %s213
    %s230 = sphi 0, %s214
    %s236 = sphi 0, %s238
    %s239 = sphi 0, %s236
    %s240 = sphi 0, %s239
    %s256 = sphi 0, %s240
    %s262 = sphi 0, %s264
    %s265 = sphi 0, %s262
    %s266 = sphi 0, %s265
    %s282 = sphi 0, %s266
    %s288 = sphi 0, %s290
    %s291 = sphi 0, %s288
    %s292 = sphi 0, %s291
    %s308 = sphi 0, %s292
  $region4: #{_lambda_.3} parent=0 // loop_header_branch
    %19 = sbr.rel (%p17) target = $region8
  $region5: #{_lambda_.3} parent=0 // loop_body
    %s21 = ssub.s32 %s16, 1
    %s22 = ssub.s32 %s16, 2
    %s29 = sadd.s32 1, %s24
    %p30 = scmp.ge.s32.totalorder %s29, 2
    %s31 = scalar_select %p30, 0, %s29
    %s32 = sadd.s32 1, %s23
    %s33 = scalar_select %p30, %s32, %s23
    %p34 = scmp.ge.s32.totalorder %s33, 2
    %s35 = scalar_select %p34, 0, %s33
    %s36 = ssub.s32 %s23, %s35
    %p37 = scmp.eq.s32.totalorder %s36, 0
    %s39 = sadd.s32 %s38, 1
    %s40 = scalar_select %p37, %s38, %s39
    %p43 = pneg %p37
    %p44 = scmp.eq.s32.totalorder %s16, 3
    %p45 = por %p43, %p44
    %p46 = scmp.ne.s32.totalorder %s38, %s41
    %p47 = scmp.eq.s32.totalorder %s16, 0
    %p48 = por %p46, %p47
    %p49 = scmp.ne.s32.totalorder %s38, %s41
    %p50 = scmp.eq.s32.totalorder %s21, 3
    %p51 = por %p49, %p50
    %p52 = scmp.ne.s32.totalorder %s41, %s42
    %p53 = scmp.eq.s32.totalorder %s21, 0
    %p54 = por %p52, %p53
    %p55 = scmp.ne.s32.totalorder %s41, %s42
    %p56 = scmp.eq.s32.totalorder %s22, 3
    %p57 = por %p55, %p56
    %p59 = scmp.ne.s32.totalorder %s42, %s58
    %p60 = scmp.eq.s32.totalorder %s22, 0
    %p61 = por %p59, %p60
    %s62 = ssub.s32 %s24, %s31
    %p63 = scmp.eq.s32.totalorder %s62, 0
    %s65 = sadd.s32 %s64, 1
    %s66 = scalar_select %p63, %s64, %s65
    %p69 = pneg %p63
    %p70 = scmp.eq.s32.totalorder %s16, 3
    %p71 = por %p69, %p70
    %p72 = scmp.ne.s32.totalorder %s64, %s67
    %p73 = scmp.eq.s32.totalorder %s16, 0
    %p74 = por %p72, %p73
    %p75 = scmp.ne.s32.totalorder %s64, %s67
    %p76 = scmp.eq.s32.totalorder %s21, 3
    %p77 = por %p75, %p76
    %p78 = scmp.ne.s32.totalorder %s67, %s68
    %p79 = scmp.eq.s32.totalorder %s21, 0
    %p80 = por %p78, %p79
    %p81 = scmp.ne.s32.totalorder %s67, %s68
    %p82 = scmp.eq.s32.totalorder %s22, 3
    %p83 = por %p81, %p82
    %p85 = scmp.ne.s32.totalorder %s68, %s84
    %p86 = scmp.eq.s32.totalorder %s22, 0
    %p87 = por %p85, %p86
    %s88 = ssub.s32 %s24, %s31
    %p89 = scmp.eq.s32.totalorder %s88, 0
    %s91 = sadd.s32 %s90, 1
    %s92 = scalar_select %p89, %s90, %s91
    %p95 = pneg %p89
    %p96 = scmp.eq.s32.totalorder %s16, 3
    %p97 = por %p95, %p96
    %p98 = scmp.ne.s32.totalorder %s90, %s93
    %p99 = scmp.eq.s32.totalorder %s16, 0
    %p100 = por %p98, %p99
    %p101 = scmp.ne.s32.totalorder %s90, %s93
    %p102 = scmp.eq.s32.totalorder %s21, 3
    %p103 = por %p101, %p102
    %p104 = scmp.ne.s32.totalorder %s93, %s94
    %p105 = scmp.eq.s32.totalorder %s21, 0
    %p106 = por %p104, %p105
    %p107 = scmp.ne.s32.totalorder %s93, %s94
    %p108 = scmp.eq.s32.totalorder %s22, 3
    %p109 = por %p107, %p108
    %p111 = scmp.ne.s32.totalorder %s94, %s110
    %p112 = scmp.eq.s32.totalorder %s22, 0
    %p113 = por %p111, %p112
    %s115 = sadd.s32 %s114, 1
    %p118 = scmp.eq.s32.totalorder %s16, 3
    %p119 = scmp.ne.s32.totalorder %s114, %s116
    %p120 = scmp.eq.s32.totalorder %s16, 0
    %p121 = por %p119, %p120
    %p122 = scmp.ne.s32.totalorder %s114, %s116
    %p123 = scmp.eq.s32.totalorder %s21, 3
    %p124 = por %p122, %p123
    %p125 = scmp.ne.s32.totalorder %s116, %s117
    %p126 = scmp.eq.s32.totalorder %s21, 0
    %p127 = por %p125, %p126
    %p128 = scmp.ne.s32.totalorder %s116, %s117
    %p129 = scmp.eq.s32.totalorder %s22, 3
    %p130 = por %p128, %p129
    %p132 = scmp.ne.s32.totalorder %s117, %s131
    %p133 = scmp.eq.s32.totalorder %s22, 0
    %p134 = por %p132, %p133
    %s136 = sadd.s32 %s135, 1
    %p139 = scmp.eq.s32.totalorder %s16, 3
    %p140 = scmp.ne.s32.totalorder %s135, %s137
    %p141 = scmp.eq.s32.totalorder %s16, 0
    %p142 = por %p140, %p141
    %p143 = scmp.ne.s32.totalorder %s135, %s137
    %p144 = scmp.eq.s32.totalorder %s21, 3
    %p145 = por %p143, %p144
    %p146 = scmp.ne.s32.totalorder %s137, %s138
    %p147 = scmp.eq.s32.totalorder %s21, 0
    %p148 = por %p146, %p147
    %p149 = scmp.ne.s32.totalorder %s137, %s138
    %p150 = scmp.eq.s32.totalorder %s22, 3
    %p151 = por %p149, %p150
    %p153 = scmp.ne.s32.totalorder %s138, %s152
    %p154 = scmp.eq.s32.totalorder %s22, 0
    %p155 = por %p153, %p154
    %s156 = ssub.s32 %s24, %s31
    %p157 = scmp.eq.s32.totalorder %s156, 0
    %s159 = sadd.s32 %s158, 1
    %s160 = scalar_select %p157, %s158, %s159
    %p163 = pneg %p157
    %p164 = scmp.eq.s32.totalorder %s16, 3
    %p165 = por %p163, %p164
    %p166 = scmp.ne.s32.totalorder %s158, %s161
    %p167 = scmp.eq.s32.totalorder %s16, 0
    %p168 = por %p166, %p167
    %p169 = scmp.ne.s32.totalorder %s158, %s161
    %p170 = scmp.eq.s32.totalorder %s21, 3
    %p171 = por %p169, %p170
    %p172 = scmp.ne.s32.totalorder %s161, %s162
    %p173 = scmp.eq.s32.totalorder %s21, 0
    %p174 = por %p172, %p173
    %p175 = scmp.ne.s32.totalorder %s161, %s162
    %p176 = scmp.eq.s32.totalorder %s22, 3
    %p177 = por %p175, %p176
    %p179 = scmp.ne.s32.totalorder %s162, %s178
    %p180 = scmp.eq.s32.totalorder %s22, 0
    %p181 = por %p179, %p180
    %s182 = ssub.s32 %s24, %s31
    %p183 = scmp.eq.s32.totalorder %s182, 0
    %s185 = sadd.s32 %s184, 1
    %s186 = scalar_select %p183, %s184, %s185
    %p189 = pneg %p183
    %p190 = scmp.eq.s32.totalorder %s16, 3
    %p191 = por %p189, %p190
    %p192 = scmp.ne.s32.totalorder %s184, %s187
    %p193 = scmp.eq.s32.totalorder %s16, 0
    %p194 = por %p192, %p193
    %p195 = scmp.ne.s32.totalorder %s184, %s187
    %p196 = scmp.eq.s32.totalorder %s21, 3
    %p197 = por %p195, %p196
    %p198 = scmp.ne.s32.totalorder %s187, %s188
    %p199 = scmp.eq.s32.totalorder %s21, 0
    %p200 = por %p198, %p199
    %p201 = scmp.ne.s32.totalorder %s187, %s188
    %p202 = scmp.eq.s32.totalorder %s22, 3
    %p203 = por %p201, %p202
    %p205 = scmp.ne.s32.totalorder %s188, %s204
    %p206 = scmp.eq.s32.totalorder %s22, 0
    %p207 = por %p205, %p206
    %s208 = ssub.s32 %s24, %s31
    %p209 = scmp.eq.s32.totalorder %s208, 0
    %s211 = sadd.s32 %s210, 1
    %s212 = scalar_select %p209, %s210, %s211
    %p215 = pneg %p209
    %p216 = scmp.eq.s32.totalorder %s16, 3
    %p217 = por %p215, %p216
    %p218 = scmp.ne.s32.totalorder %s210, %s213
    %p219 = scmp.eq.s32.totalorder %s16, 0
    %p220 = por %p218, %p219
    %p221 = scmp.ne.s32.totalorder %s210, %s213
    %p222 = scmp.eq.s32.totalorder %s21, 3
    %p223 = por %p221, %p222
    %p224 = scmp.ne.s32.totalorder %s213, %s214
    %p225 = scmp.eq.s32.totalorder %s21, 0
    %p226 = por %p224, %p225
    %p227 = scmp.ne.s32.totalorder %s213, %s214
    %p228 = scmp.eq.s32.totalorder %s22, 3
    %p229 = por %p227, %p228
    %p231 = scmp.ne.s32.totalorder %s214, %s230
    %p232 = scmp.eq.s32.totalorder %s22, 0
    %p233 = por %p231, %p232
    %s234 = ssub.s32 %s24, %s31
    %p235 = scmp.eq.s32.totalorder %s234, 0
    %s237 = sadd.s32 %s236, 1
    %s238 = scalar_select %p235, %s236, %s237
    %p241 = pneg %p235
    %p242 = scmp.eq.s32.totalorder %s16, 3
    %p243 = por %p241, %p242
    %p244 = scmp.ne.s32.totalorder %s236, %s239
    %p245 = scmp.eq.s32.totalorder %s16, 0
    %p246 = por %p244, %p245
    %p247 = scmp.ne.s32.totalorder %s236, %s239
    %p248 = scmp.eq.s32.totalorder %s21, 3
    %p249 = por %p247, %p248
    %p250 = scmp.ne.s32.totalorder %s239, %s240
    %p251 = scmp.eq.s32.totalorder %s21, 0
    %p252 = por %p250, %p251
    %p253 = scmp.ne.s32.totalorder %s239, %s240
    %p254 = scmp.eq.s32.totalorder %s22, 3
    %p255 = por %p253, %p254
    %p257 = scmp.ne.s32.totalorder %s240, %s256
    %p258 = scmp.eq.s32.totalorder %s22, 0
    %p259 = por %p257, %p258
    %s260 = ssub.s32 %s24, %s31
    %p261 = scmp.eq.s32.totalorder %s260, 0
    %s263 = sadd.s32 %s262, 1
    %s264 = scalar_select %p261, %s262, %s263
    %p267 = pneg %p261
    %p268 = scmp.eq.s32.totalorder %s16, 3
    %p269 = por %p267, %p268
    %p270 = scmp.ne.s32.totalorder %s262, %s265
    %p271 = scmp.eq.s32.totalorder %s16, 0
    %p272 = por %p270, %p271
    %p273 = scmp.ne.s32.totalorder %s262, %s265
    %p274 = scmp.eq.s32.totalorder %s21, 3
    %p275 = por %p273, %p274
    %p276 = scmp.ne.s32.totalorder %s265, %s266
    %p277 = scmp.eq.s32.totalorder %s21, 0
    %p278 = por %p276, %p277
    %p279 = scmp.ne.s32.totalorder %s265, %s266
    %p280 = scmp.eq.s32.totalorder %s22, 3
    %p281 = por %p279, %p280
    %p283 = scmp.ne.s32.totalorder %s266, %s282
    %p284 = scmp.eq.s32.totalorder %s22, 0
    %p285 = por %p283, %p284
    %s286 = ssub.s32 %s23, %s35
    %p287 = scmp.eq.s32.totalorder %s286, 0
    %s289 = sadd.s32 %s288, 1
    %s290 = scalar_select %p287, %s288, %s289
    %p293 = pneg %p287
    %p294 = scmp.eq.s32.totalorder %s16, 3
    %p295 = por %p293, %p294
    %p296 = scmp.ne.s32.totalorder %s288, %s291
    %p297 = scmp.eq.s32.totalorder %s16, 0
    %p298 = por %p296, %p297
    %p299 = scmp.ne.s32.totalorder %s288, %s291
    %p300 = scmp.eq.s32.totalorder %s21, 3
    %p301 = por %p299, %p300
    %p302 = scmp.ne.s32.totalorder %s291, %s292
    %p303 = scmp.eq.s32.totalorder %s21, 0
    %p304 = por %p302, %p303
    %p305 = scmp.ne.s32.totalorder %s291, %s292
    %p306 = scmp.eq.s32.totalorder %s22, 3
    %p307 = por %p305, %p306
    %p309 = scmp.ne.s32.totalorder %s292, %s308
    %p310 = scmp.eq.s32.totalorder %s22, 0
    %p311 = por %p309, %p310
    %p312 = scmp.le.s32.totalorder 1, %s16
    %p313 = scmp.lt.s32.totalorder %s16, 5
    %p314 = pnand %p312, %p313
    %p315 = pneg %p314
    // Predicated region
    $region9: #{_lambda_.3} parent=5 // pred_check
      _
    $region10: #{_lambda_.3} parent=5 // pred_check_branch
      %317 = sbr.rel (%p314) target = $region12
    $region11: #{_lambda_.3} parent=5 // pred_region
      %s318 = ssub.s32 %s16, 1
      // Predicated region
      $region13: #{_lambda_.3} parent=11 // pred_check
        %p319 = pneg %p127
      $region14: #{_lambda_.3} parent=11 // pred_check_branch
        %321 = sbr.rel (%p319) target = $region16
      $region15: #{_lambda_.3} parent=11 // pred_region
        _
      $region16: #{_lambda_.3} parent=11 // pred_fallthru
        _
      // Predicated region
      $region17: #{_lambda_.3} parent=11 // pred_check
        %p322 = pneg %p148
      $region18: #{_lambda_.3} parent=11 // pred_check_branch
        %324 = sbr.rel (%p322) target = $region20
      $region19: #{_lambda_.3} parent=11 // pred_region
        _
      $region20: #{_lambda_.3} parent=11 // pred_fallthru
        _
    $region12: #{_lambda_.3} parent=5 // pred_fallthru
      _
    %p325 = scmp.lt.s32.totalorder %s16, 4
    // Predicated region
    $region21: #{_lambda_.3} parent=5 // pred_check
      %p326 = pneg %p325
    $region22: #{_lambda_.3} parent=5 // pred_check_branch
      %328 = sbr.rel (%p326) target = $region24
    $region23: #{_lambda_.3} parent=5 // pred_region
      // Predicated region
      $region25: #{_lambda_.3} parent=23 // pred_check
        %p329 = pneg %p48
      $region26: #{_lambda_.3} parent=23 // pred_check_branch
        %331 = sbr.rel (%p329) target = $region28
      $region27: #{_lambda_.3} parent=23 // pred_region
        %p332 = scmp.lt.s32.totalorder %s23, 1
        %s333 = scalar_select %p332, %s23, 1
        %s334 = smul.addr %s333, 32
        %s335 = smul.addr %s334, 8
        %s336 = scalar_lea.vmem %s0, %s335
      $region28: #{_lambda_.3} parent=23 // pred_fallthru
        _
      // Predicated region
      $region29: #{_lambda_.3} parent=23 // pred_check
        %p337 = pneg %p74
      $region30: #{_lambda_.3} parent=23 // pred_check_branch
        %339 = sbr.rel (%p337) target = $region32
      $region31: #{_lambda_.3} parent=23 // pred_region
        %p340 = scmp.lt.s32.totalorder %s24, 1
        %s341 = scalar_select %p340, %s24, 1
        %s342 = smul.addr %s341, 2
        %s343 = scalar_lea.vmem %s1, %s342
      $region32: #{_lambda_.3} parent=23 // pred_fallthru
        _
      // Predicated region
      $region33: #{_lambda_.3} parent=23 // pred_check
        %p344 = pneg %p100
      $region34: #{_lambda_.3} parent=23 // pred_check_branch
        %346 = sbr.rel (%p344) target = $region36
      $region35: #{_lambda_.3} parent=23 // pred_region
        %p347 = scmp.lt.s32.totalorder %s24, 1
        %s348 = scalar_select %p347, %s24, 1
        %s349 = smul.addr %s348, 192
        %s350 = smul.addr %s349, 4
        %s351 = scalar_lea.vmem %s2, %s350
      $region36: #{_lambda_.3} parent=23 // pred_fallthru
        _
      // Predicated region
      $region37: #{_lambda_.3} parent=23 // pred_check
        %p352 = pneg %p168
      $region38: #{_lambda_.3} parent=23 // pred_check_branch
        %354 = sbr.rel (%p352) target = $region40
      $region39: #{_lambda_.3} parent=23 // pred_region
        %p355 = scmp.lt.s32.totalorder %s24, 1
        %s356 = scalar_select %p355, %s24, 1
        %s357 = smul.addr %s356, 64
        %s358 = smul.addr %s357, 4
        %s359 = scalar_lea.vmem %s5, %s358
      $region40: #{_lambda_.3} parent=23 // pred_fallthru
        _
      // Predicated region
      $region41: #{_lambda_.3} parent=23 // pred_check
        %p360 = pneg %p194
      $region42: #{_lambda_.3} parent=23 // pred_check_branch
        %362 = sbr.rel (%p360) target = $region44
      $region43: #{_lambda_.3} parent=23 // pred_region
        %p363 = scmp.lt.s32.totalorder %s24, 1
        %s364 = scalar_select %p363, %s24, 1
        %s365 = smul.addr %s364, 2
        %s366 = scalar_lea.vmem %s6, %s365
      $region44: #{_lambda_.3} parent=23 // pred_fallthru
        _
      // Predicated region
      $region45: #{_lambda_.3} parent=23 // pred_check
        %p367 = pneg %p220
      $region46: #{_lambda_.3} parent=23 // pred_check_branch
        %369 = sbr.rel (%p367) target = $region48
      $region47: #{_lambda_.3} parent=23 // pred_region
        %p370 = scmp.lt.s32.totalorder %s24, 1
        %s371 = scalar_select %p370, %s24, 1
        %s372 = smul.addr %s371, 192
        %s373 = smul.addr %s372, 4
        %s374 = scalar_lea.vmem %s7, %s373
      $region48: #{_lambda_.3} parent=23 // pred_fallthru
        _
      // Predicated region
      $region49: #{_lambda_.3} parent=23 // pred_check
        %p375 = pneg %p246
      $region50: #{_lambda_.3} parent=23 // pred_check_branch
        %377 = sbr.rel (%p375) target = $region52
      $region51: #{_lambda_.3} parent=23 // pred_region
        %p378 = scmp.lt.s32.totalorder %s24, 1
        %s379 = scalar_select %p378, %s24, 1
        %s380 = smul.addr %s379, 192
        %s381 = smul.addr %s380, 4
        %s382 = scalar_lea.vmem %s8, %s381
      $region52: #{_lambda_.3} parent=23 // pred_fallthru
        _
      // Predicated region
      $region53: #{_lambda_.3} parent=23 // pred_check
        %p383 = pneg %p272
      $region54: #{_lambda_.3} parent=23 // pred_check_branch
        %385 = sbr.rel (%p383) target = $region56
      $region55: #{_lambda_.3} parent=23 // pred_region
        %p386 = scmp.lt.s32.totalorder %s24, 1
        %s387 = scalar_select %p386, %s24, 1
        %s388 = smul.addr %s387, 192
        %s389 = smul.addr %s388, 4
        %s390 = scalar_lea.vmem %s9, %s389
      $region56: #{_lambda_.3} parent=23 // pred_fallthru
        _
    $region24: #{_lambda_.3} parent=5 // pred_fallthru
      _
    %p391 = scmp.le.s32.totalorder 1, %s16
    %p392 = scmp.lt.s32.totalorder %s16, 5
    %p393 = pnand %p391, %p392
    %p394 = pneg %p393
    // Predicated region
    $region57: #{_lambda_.3} parent=5 // pred_check
      _
    $region58: #{_lambda_.3} parent=5 // pred_check_branch
      %396 = sbr.rel (%p393) target = $region60
    $region59: #{_lambda_.3} parent=5 // pred_region
      %s397 = ssub.s32 %s16, 1
      %p398 = scmp.lt.s32.totalorder %s25, 1
      %s399 = scalar_select %p398, %s25, 1
      %s400 = smul.addr %s399, 32
      %s401 = smul.addr %s400, 8
      %s402 = scalar_lea.vmem %s0, %s401
      %p403 = pneg %p54
      %p404 = pneg %p51
      %p405 = scmp.lt.s32.totalorder %s26, 1
      %s406 = scalar_select %p405, %s26, 1
      %s407 = smul.addr %s406, 2
      %s408 = scalar_lea.vmem %s1, %s407
      %p409 = pneg %p80
      %p410 = pneg %p77
      %p411 = scmp.lt.s32.totalorder %s26, 1
      %s412 = scalar_select %p411, %s26, 1
      %s413 = smul.addr %s412, 192
      %s414 = smul.addr %s413, 4
      %s415 = scalar_lea.vmem %s2, %s414
      %p416 = pneg %p106
      %p417 = pneg %p103
      %p418 = pneg %p127
      %p419 = pneg %p124
      %p420 = pneg %p148
      %p421 = pneg %p145
      %p422 = scmp.lt.s32.totalorder %s26, 1
      %s423 = scalar_select %p422, %s26, 1
      %s424 = smul.addr %s423, 64
      %s425 = smul.addr %s424, 4
      %s426 = scalar_lea.vmem %s5, %s425
      %p427 = pneg %p174
      %p428 = pneg %p171
      %p429 = scmp.lt.s32.totalorder %s26, 1
      %s430 = scalar_select %p429, %s26, 1
      %s431 = smul.addr %s430, 2
      %s432 = scalar_lea.vmem %s6, %s431
      %p433 = pneg %p200
      %p434 = pneg %p197
      %p435 = scmp.lt.s32.totalorder %s26, 1
      %s436 = scalar_select %p435, %s26, 1
      %s437 = smul.addr %s436, 192
      %s438 = smul.addr %s437, 4
      %s439 = scalar_lea.vmem %s7, %s438
      %p440 = pneg %p226
      %p441 = pneg %p223
      %p442 = scmp.lt.s32.totalorder %s26, 1
      %s443 = scalar_select %p442, %s26, 1
      %s444 = smul.addr %s443, 192
      %s445 = smul.addr %s444, 4
      %s446 = scalar_lea.vmem %s8, %s445
      %p447 = pneg %p252
      %p448 = pneg %p249
      %p449 = scmp.lt.s32.totalorder %s26, 1
      %s450 = scalar_select %p449, %s26, 1
      %s451 = smul.addr %s450, 192
      %s452 = smul.addr %s451, 4
      %s453 = scalar_lea.vmem %s9, %s452
      %p454 = pneg %p278
      %p455 = pneg %p275
      %p456 = pneg %p304
      %p457 = pneg %p301
      %p458 = scmp.lt.s32.totalorder %s25, 1
      %s459 = scalar_select %p458, %s25, 1
      %s460 = smul.addr %s459, 32
      %s461 = smul.addr %s460, 8
      %s462 = scalar_lea.vmem %s10, %s461
      %p463 = scmp.lt.s32.totalorder %s25, 1
      %s464 = scalar_select %p463, %s25, 1
      %s465 = smul.addr %s464, 32
      %s466 = smul.addr %s465, 8
      %s467 = scalar_lea.vmem %s0, %s466
      %p468 = scmp.lt.s32.totalorder %s26, 1
      %s469 = scalar_select %p468, %s26, 1
      %s470 = smul.addr %s469, 2
      %s471 = scalar_lea.vmem %s1, %s470
      %p472 = scmp.lt.s32.totalorder %s26, 1
      %s473 = scalar_select %p472, %s26, 1
      %s474 = smul.addr %s473, 192
      %s475 = smul.addr %s474, 4
      %s476 = scalar_lea.vmem %s2, %s475
      %p477 = scmp.lt.s32.totalorder %s26, 1
      %s478 = scalar_select %p477, %s26, 1
      %s479 = smul.addr %s478, 64
      %s480 = smul.addr %s479, 4
      %s481 = scalar_lea.vmem %s5, %s480
      %p482 = scmp.lt.s32.totalorder %s26, 1
      %s483 = scalar_select %p482, %s26, 1
      %s484 = smul.addr %s483, 2
      %s485 = scalar_lea.vmem %s6, %s484
      %p486 = scmp.lt.s32.totalorder %s26, 1
      %s487 = scalar_select %p486, %s26, 1
      %s488 = smul.addr %s487, 192
      %s489 = smul.addr %s488, 4
      %s490 = scalar_lea.vmem %s7, %s489
      %p491 = scmp.lt.s32.totalorder %s26, 1
      %s492 = scalar_select %p491, %s26, 1
      %s493 = smul.addr %s492, 192
      %s494 = smul.addr %s493, 4
      %s495 = scalar_lea.vmem %s8, %s494
      %p496 = scmp.lt.s32.totalorder %s26, 1
      %s497 = scalar_select %p496, %s26, 1
      %s498 = smul.addr %s497, 192
      %s499 = smul.addr %s498, 4
      %s500 = scalar_lea.vmem %s9, %s499
      %p501 = scmp.lt.s32.totalorder %s25, 1
      %s502 = scalar_select %p501, %s25, 1
      %s503 = smul.addr %s502, 32
      %s504 = smul.addr %s503, 8
      %s505 = scalar_lea.vmem %s10, %s504
      %p507 = scmp.eq.s32.totalorder %s26, 0
      // Predicated region
      $region61: #{_lambda_.3} parent=59 // pred_check
        %p508 = pneg %p507
      $region62: #{_lambda_.3} parent=59 // pred_check_branch
        %510 = sbr.rel (%p508) target = $region64
      $region63: #{_lambda_.3} parent=59 // pred_region
        %v511 = vld [vmem:[%s467] sm:$0xff]
        %v512 = vld [vmem:[%s467 + $0x8] sm:$0xff]
        %v513 = vld [vmem:[%s467 + $0x10] sm:$0xff]
        %v514 = vld [vmem:[%s467 + $0x18] sm:$0xff]
        %v515 = vld [vmem:[%s467 + $0x20] sm:$0xff]
        %v516 = vld [vmem:[%s467 + $0x28] sm:$0xff]
        %v517 = vld [vmem:[%s467 + $0x30] sm:$0xff]
        %v518 = vld [vmem:[%s467 + $0x38] sm:$0xff]
        %v519 = vld [vmem:[%s467 + $0x40] sm:$0xff]
        %v520 = vld [vmem:[%s467 + $0x48] sm:$0xff]
        %v521 = vld [vmem:[%s467 + $0x50] sm:$0xff]
        %v522 = vld [vmem:[%s467 + $0x58] sm:$0xff]
        %v523 = vld [vmem:[%s467 + $0x60] sm:$0xff]
        %v524 = vld [vmem:[%s467 + $0x68] sm:$0xff]
        %v525 = vld [vmem:[%s467 + $0x70] sm:$0xff]
        %v526 = vld [vmem:[%s467 + $0x78] sm:$0xff]
        %v527 = vld [vmem:[%s467 + $0x80] sm:$0xff]
        %v528 = vld [vmem:[%s467 + $0x88] sm:$0xff]
        %v529 = vld [vmem:[%s467 + $0x90] sm:$0xff]
        %v530 = vld [vmem:[%s467 + $0x98] sm:$0xff]
        %v531 = vld [vmem:[%s467 + $0xa0] sm:$0xff]
        %v532 = vld [vmem:[%s467 + $0xa8] sm:$0xff]
        %v533 = vld [vmem:[%s467 + $0xb0] sm:$0xff]
        %v534 = vld [vmem:[%s467 + $0xb8] sm:$0xff]
        %v535 = vld [vmem:[%s467 + $0xc0] sm:$0xff]
        %v536 = vld [vmem:[%s467 + $0xc8] sm:$0xff]
        %v537 = vld [vmem:[%s467 + $0xd0] sm:$0xff]
        %v538 = vld [vmem:[%s467 + $0xd8] sm:$0xff]
        %v539 = vld [vmem:[%s467 + $0xe0] sm:$0xff]
        %v540 = vld [vmem:[%s467 + $0xe8] sm:$0xff]
        %v541 = vld [vmem:[%s467 + $0xf0] sm:$0xff]
        %v542 = vld [vmem:[%s467 + $0xf8] sm:$0xff]
        %543 = vst [vmem:[%s505] sm:$0xff] %v511
        %544 = vst [vmem:[%s505 + $0x8] sm:$0xff] %v512
        %545 = vst [vmem:[%s505 + $0x10] sm:$0xff] %v513
        %546 = vst [vmem:[%s505 + $0x18] sm:$0xff] %v514
        %547 = vst [vmem:[%s505 + $0x20] sm:$0xff] %v515
        %548 = vst [vmem:[%s505 + $0x28] sm:$0xff] %v516
        %549 = vst [vmem:[%s505 + $0x30] sm:$0xff] %v517
        %550 = vst [vmem:[%s505 + $0x38] sm:$0xff] %v518
        %551 = vst [vmem:[%s505 + $0x40] sm:$0xff] %v519
        %552 = vst [vmem:[%s505 + $0x48] sm:$0xff] %v520
        %553 = vst [vmem:[%s505 + $0x50] sm:$0xff] %v521
        %554 = vst [vmem:[%s505 + $0x58] sm:$0xff] %v522
        %555 = vst [vmem:[%s505 + $0x60] sm:$0xff] %v523
        %556 = vst [vmem:[%s505 + $0x68] sm:$0xff] %v524
        %557 = vst [vmem:[%s505 + $0x70] sm:$0xff] %v525
        %558 = vst [vmem:[%s505 + $0x78] sm:$0xff] %v526
        %559 = vst [vmem:[%s505 + $0x80] sm:$0xff] %v527
        %560 = vst [vmem:[%s505 + $0x88] sm:$0xff] %v528
        %561 = vst [vmem:[%s505 + $0x90] sm:$0xff] %v529
        %562 = vst [vmem:[%s505 + $0x98] sm:$0xff] %v530
        %563 = vst [vmem:[%s505 + $0xa0] sm:$0xff] %v531
        %564 = vst [vmem:[%s505 + $0xa8] sm:$0xff] %v532
        %565 = vst [vmem:[%s505 + $0xb0] sm:$0xff] %v533
        %566 = vst [vmem:[%s505 + $0xb8] sm:$0xff] %v534
        %567 = vst [vmem:[%s505 + $0xc0] sm:$0xff] %v535
        %568 = vst [vmem:[%s505 + $0xc8] sm:$0xff] %v536
        %569 = vst [vmem:[%s505 + $0xd0] sm:$0xff] %v537
        %570 = vst [vmem:[%s505 + $0xd8] sm:$0xff] %v538
        %571 = vst [vmem:[%s505 + $0xe0] sm:$0xff] %v539
        %572 = vst [vmem:[%s505 + $0xe8] sm:$0xff] %v540
        %573 = vst [vmem:[%s505 + $0xf0] sm:$0xff] %v541
        %574 = vst [vmem:[%s505 + $0xf8] sm:$0xff] %v542
      $region64: #{_lambda_.3} parent=59 // pred_fallthru
        _
      %v575 = vld [vmem:[%s505] sm:$0xff]
      %v576 = vld [vmem:[%s505 + $0x8] sm:$0xff]
      %v577 = vld [vmem:[%s505 + $0x10] sm:$0xff]
      %v578 = vld [vmem:[%s505 + $0x18] sm:$0xff]
      %v579 = vld [vmem:[%s505 + $0x20] sm:$0xff]
      %v580 = vld [vmem:[%s505 + $0x28] sm:$0xff]
      %v581 = vld [vmem:[%s505 + $0x30] sm:$0xff]
      %v582 = vld [vmem:[%s505 + $0x38] sm:$0xff]
      %v583 = vld [vmem:[%s505 + $0x40] sm:$0xff]
      %v584 = vld [vmem:[%s505 + $0x48] sm:$0xff]
      %v585 = vld [vmem:[%s505 + $0x50] sm:$0xff]
      %v586 = vld [vmem:[%s505 + $0x58] sm:$0xff]
      %v587 = vld [vmem:[%s505 + $0x60] sm:$0xff]
      %v588 = vld [vmem:[%s505 + $0x68] sm:$0xff]
      %v589 = vld [vmem:[%s505 + $0x70] sm:$0xff]
      %v590 = vld [vmem:[%s505 + $0x78] sm:$0xff]
      %v591 = vld [vmem:[%s505 + $0x80] sm:$0xff]
      %v592 = vld [vmem:[%s505 + $0x88] sm:$0xff]
      %v593 = vld [vmem:[%s505 + $0x90] sm:$0xff]
      %v594 = vld [vmem:[%s505 + $0x98] sm:$0xff]
      %v595 = vld [vmem:[%s505 + $0xa0] sm:$0xff]
      %v596 = vld [vmem:[%s505 + $0xa8] sm:$0xff]
      %v597 = vld [vmem:[%s505 + $0xb0] sm:$0xff]
      %v598 = vld [vmem:[%s505 + $0xb8] sm:$0xff]
      %v599 = vld [vmem:[%s505 + $0xc0] sm:$0xff]
      %v600 = vld [vmem:[%s505 + $0xc8] sm:$0xff]
      %v601 = vld [vmem:[%s505 + $0xd0] sm:$0xff]
      %v602 = vld [vmem:[%s505 + $0xd8] sm:$0xff]
      %v603 = vld [vmem:[%s505 + $0xe0] sm:$0xff]
      %v604 = vld [vmem:[%s505 + $0xe8] sm:$0xff]
      %v605 = vld [vmem:[%s505 + $0xf0] sm:$0xff]
      %v606 = vld [vmem:[%s505 + $0xf8] sm:$0xff]
      %v607 = vld [vmem:[%s471] sm:$0x3]
      %v608 = vmul.f32 %v575, %v575
      %v609 = vmul.f32 %v576, %v576
      %v610 = vmul.f32 %v577, %v577
      %v611 = vmul.f32 %v578, %v578
      %v612 = vmul.f32 %v579, %v579
      %v613 = vmul.f32 %v580, %v580
      %v614 = vmul.f32 %v581, %v581
      %v615 = vmul.f32 %v582, %v582
      %v616 = vmul.f32 %v583, %v583
      %v617 = vmul.f32 %v584, %v584
      %v618 = vmul.f32 %v585, %v585
      %v619 = vmul.f32 %v586, %v586
      %v620 = vmul.f32 %v587, %v587
      %v621 = vmul.f32 %v588, %v588
      %v622 = vmul.f32 %v589, %v589
      %v623 = vmul.f32 %v590, %v590
      %v624 = vmul.f32 %v591, %v591
      %v625 = vmul.f32 %v592, %v592
      %v626 = vmul.f32 %v593, %v593
      %v627 = vmul.f32 %v594, %v594
      %v628 = vmul.f32 %v595, %v595
      %v629 = vmul.f32 %v596, %v596
      %v630 = vmul.f32 %v597, %v597
      %v631 = vmul.f32 %v598, %v598
      %v632 = vmul.f32 %v599, %v599
      %v633 = vmul.f32 %v600, %v600
      %v634 = vmul.f32 %v601, %v601
      %v635 = vmul.f32 %v602, %v602
      %v636 = vmul.f32 %v603, %v603
      %v637 = vmul.f32 %v604, %v604
      %v638 = vmul.f32 %v605, %v605
      %v639 = vmul.f32 %v606, %v606
      %v640 = vadd.f32 %v608, %v609
      %641 = vadd.xlane.f32.xlu0 %v640
      %v642 = vpop.xlane.xlu0 %641
      %v643 = vadd.f32 %v610, %v611
      %644 = vadd.xlane.f32.xlu0 %v643
      %v645 = vpop.xlane.xlu0 %644
      %v646 = vadd.f32 %v612, %v613
      %647 = vadd.xlane.f32.xlu0 %v646
      %v648 = vpop.xlane.xlu0 %647
      %v649 = vadd.f32 %v614, %v615
      %650 = vadd.xlane.f32.xlu0 %v649
      %v651 = vpop.xlane.xlu0 %650
      %v652 = vadd.f32 %v616, %v617
      %653 = vadd.xlane.f32.xlu0 %v652
      %v654 = vpop.xlane.xlu0 %653
      %v655 = vadd.f32 %v618, %v619
      %656 = vadd.xlane.f32.xlu0 %v655
      %v657 = vpop.xlane.xlu0 %656
      %v658 = vadd.f32 %v620, %v621
      %659 = vadd.xlane.f32.xlu0 %v658
      %v660 = vpop.xlane.xlu0 %659
      %v661 = vadd.f32 %v622, %v623
      %662 = vadd.xlane.f32.xlu0 %v661
      %v663 = vpop.xlane.xlu0 %662
      %v664 = vadd.f32 %v624, %v625
      %665 = vadd.xlane.f32.xlu0 %v664
      %v666 = vpop.xlane.xlu0 %665
      %v667 = vadd.f32 %v626, %v627
      %668 = vadd.xlane.f32.xlu0 %v667
      %v669 = vpop.xlane.xlu0 %668
      %v670 = vadd.f32 %v628, %v629
      %671 = vadd.xlane.f32.xlu0 %v670
      %v672 = vpop.xlane.xlu0 %671
      %v673 = vadd.f32 %v630, %v631
      %674 = vadd.xlane.f32.xlu0 %v673
      %v675 = vpop.xlane.xlu0 %674
      %v676 = vadd.f32 %v632, %v633
      %677 = vadd.xlane.f32.xlu0 %v676
      %v678 = vpop.xlane.xlu0 %677
      %v679 = vadd.f32 %v634, %v635
      %680 = vadd.xlane.f32.xlu0 %v679
      %v681 = vpop.xlane.xlu0 %680
      %v682 = vadd.f32 %v636, %v637
      %683 = vadd.xlane.f32.xlu0 %v682
      %v684 = vpop.xlane.xlu0 %683
      %v685 = vadd.f32 %v638, %v639
      %686 = vadd.xlane.f32.xlu0 %v685
      %v687 = vpop.xlane.xlu0 %686
      %v688 = vrcp.pop 256.0
      %v689 = vmul.f32 %v642, %v688
      %v690 = vmul.f32 %v645, %v688
      %v691 = vmul.f32 %v648, %v688
      %v692 = vmul.f32 %v651, %v688
      %v693 = vmul.f32 %v654, %v688
      %v694 = vmul.f32 %v657, %v688
      %v695 = vmul.f32 %v660, %v688
      %v696 = vmul.f32 %v663, %v688
      %v697 = vmul.f32 %v666, %v688
      %v698 = vmul.f32 %v669, %v688
      %v699 = vmul.f32 %v672, %v688
      %v700 = vmul.f32 %v675, %v688
      %v701 = vmul.f32 %v678, %v688
      %v702 = vmul.f32 %v681, %v688
      %v703 = vmul.f32 %v684, %v688
      %v704 = vmul.f32 %v687, %v688
      %v705 = vadd.f32 %v689, 1e-06
      %v706 = vadd.f32 %v690, 1e-06
      %v707 = vadd.f32 %v691, 1e-06
      %v708 = vadd.f32 %v692, 1e-06
      %v709 = vadd.f32 %v693, 1e-06
      %v710 = vadd.f32 %v694, 1e-06
      %v711 = vadd.f32 %v695, 1e-06
      %v712 = vadd.f32 %v696, 1e-06
      %v713 = vadd.f32 %v697, 1e-06
      %v714 = vadd.f32 %v698, 1e-06
      %v715 = vadd.f32 %v699, 1e-06
      %v716 = vadd.f32 %v700, 1e-06
      %v717 = vadd.f32 %v701, 1e-06
      %v718 = vadd.f32 %v702, 1e-06
      %v719 = vadd.f32 %v703, 1e-06
      %v720 = vadd.f32 %v704, 1e-06
      %v721 = vrsqrt.pop %v705
      %v722 = vrsqrt.pop %v706
      %v723 = vrsqrt.pop %v707
      %v724 = vrsqrt.pop %v708
      %v725 = vrsqrt.pop %v709
      %v726 = vrsqrt.pop %v710
      %v727 = vrsqrt.pop %v711
      %v728 = vrsqrt.pop %v712
      %v729 = vrsqrt.pop %v713
      %v730 = vrsqrt.pop %v714
      %v731 = vrsqrt.pop %v715
      %v732 = vrsqrt.pop %v716
      %v733 = vrsqrt.pop %v717
      %v734 = vrsqrt.pop %v718
      %v735 = vrsqrt.pop %v719
      %v736 = vrsqrt.pop %v720
      %v737 = vmul.f32 %v575, %v721
      %v738 = vmul.f32 %v576, %v721
      %v739 = vmul.f32 %v577, %v722
      %v740 = vmul.f32 %v578, %v722
      %v741 = vmul.f32 %v579, %v723
      %v742 = vmul.f32 %v580, %v723
      %v743 = vmul.f32 %v581, %v724
      %v744 = vmul.f32 %v582, %v724
      %v745 = vmul.f32 %v583, %v725
      %v746 = vmul.f32 %v584, %v725
      %v747 = vmul.f32 %v585, %v726
      %v748 = vmul.f32 %v586, %v726
      %v749 = vmul.f32 %v587, %v727
      %v750 = vmul.f32 %v588, %v727
      %v751 = vmul.f32 %v589, %v728
      %v752 = vmul.f32 %v590, %v728
      %v753 = vmul.f32 %v591, %v729
      %v754 = vmul.f32 %v592, %v729
      %v755 = vmul.f32 %v593, %v730
      %v756 = vmul.f32 %v594, %v730
      %v757 = vmul.f32 %v595, %v731
      %v758 = vmul.f32 %v596, %v731
      %v759 = vmul.f32 %v597, %v732
      %v760 = vmul.f32 %v598, %v732
      %v761 = vmul.f32 %v599, %v733
      %v762 = vmul.f32 %v600, %v733
      %v763 = vmul.f32 %v601, %v734
      %v764 = vmul.f32 %v602, %v734
      %v765 = vmul.f32 %v603, %v735
      %v766 = vmul.f32 %v604, %v735
      %v767 = vmul.f32 %v605, %v736
      %v768 = vmul.f32 %v606, %v736
      %v770 = vlaneseq
      %v771 = vshrl.u32 %v770, 7
      %v772 = vsub.s32 0, %v771
      %v773 = vrot.slane %v607, %v772
      %v774 = vlaneseq
      %v775 = vshrl.u32 %v774, 7
      %v776 = vsub.s32 1, %v775
      %v777 = vrot.slane %v607, %v776
      %v780 = vmul.f32 %v737, %v773
      %v781 = vmul.f32 %v738, %v777
      %v782 = vmul.f32 %v739, %v773
      %v783 = vmul.f32 %v740, %v777
      %v784 = vmul.f32 %v741, %v773
      %v785 = vmul.f32 %v742, %v777
      %v786 = vmul.f32 %v743, %v773
      %v787 = vmul.f32 %v744, %v777
      %v788 = vmul.f32 %v745, %v773
      %v789 = vmul.f32 %v746, %v777
      %v790 = vmul.f32 %v747, %v773
      %v791 = vmul.f32 %v748, %v777
      %v792 = vmul.f32 %v749, %v773
      %v793 = vmul.f32 %v750, %v777
      %v794 = vmul.f32 %v751, %v773
      %v795 = vmul.f32 %v752, %v777
      %v796 = vmul.f32 %v753, %v773
      %v797 = vmul.f32 %v754, %v777
      %v798 = vmul.f32 %v755, %v773
      %v799 = vmul.f32 %v756, %v777
      %v800 = vmul.f32 %v757, %v773
      %v801 = vmul.f32 %v758, %v777
      %v802 = vmul.f32 %v759, %v773
      %v803 = vmul.f32 %v760, %v777
      %v804 = vmul.f32 %v761, %v773
      %v805 = vmul.f32 %v762, %v777
      %v806 = vmul.f32 %v763, %v773
      %v807 = vmul.f32 %v764, %v777
      %v808 = vmul.f32 %v765, %v773
      %v809 = vmul.f32 %v766, %v777
      %v810 = vmul.f32 %v767, %v773
      %v811 = vmul.f32 %v768, %v777
      %v812 = vpack.c.bf16 %v782, %v780
      %v813 = vpack.c.bf16 %v783, %v781
      %v814 = vpack.c.bf16 %v786, %v784
      %v815 = vpack.c.bf16 %v787, %v785
      %v816 = vpack.c.bf16 %v790, %v788
      %v817 = vpack.c.bf16 %v791, %v789
      %v818 = vpack.c.bf16 %v794, %v792
      %v819 = vpack.c.bf16 %v795, %v793
      %v820 = vpack.c.bf16 %v798, %v796
      %v821 = vpack.c.bf16 %v799, %v797
      %v822 = vpack.c.bf16 %v802, %v800
      %v823 = vpack.c.bf16 %v803, %v801
      %v824 = vpack.c.bf16 %v806, %v804
      %v825 = vpack.c.bf16 %v807, %v805
      %v826 = vpack.c.bf16 %v810, %v808
      %v827 = vpack.c.bf16 %v811, %v809
      %v828 = vld [vmem:[%s476] sm:$0xff]
      %v829 = vld [vmem:[%s476 + $0x8] sm:$0xff]
      %v830 = vld [vmem:[%s476 + $0x10] sm:$0xff]
      %v831 = vld [vmem:[%s476 + $0x18] sm:$0xff]
      %v832 = vld [vmem:[%s476 + $0x20] sm:$0xff]
      %v833 = vld [vmem:[%s476 + $0x28] sm:$0xff]
      %v834 = vld [vmem:[%s476 + $0x30] sm:$0xff]
      %v835 = vld [vmem:[%s476 + $0x38] sm:$0xff]
      %v836 = vld [vmem:[%s476 + $0x40] sm:$0xff]
      %v837 = vld [vmem:[%s476 + $0x48] sm:$0xff]
      %v838 = vld [vmem:[%s476 + $0x50] sm:$0xff]
      %v839 = vld [vmem:[%s476 + $0x58] sm:$0xff]
      %v840 = vld [vmem:[%s476 + $0x60] sm:$0xff]
      %v841 = vld [vmem:[%s476 + $0x68] sm:$0xff]
      %v842 = vld [vmem:[%s476 + $0x70] sm:$0xff]
      %v843 = vld [vmem:[%s476 + $0x78] sm:$0xff]
      %v844 = vld [vmem:[%s476 + $0x80] sm:$0xff]
      %v845 = vld [vmem:[%s476 + $0x88] sm:$0xff]
      %v846 = vld [vmem:[%s476 + $0x90] sm:$0xff]
      %v847 = vld [vmem:[%s476 + $0x98] sm:$0xff]
      %v848 = vld [vmem:[%s476 + $0xa0] sm:$0xff]
      %v849 = vld [vmem:[%s476 + $0xa8] sm:$0xff]
      %v850 = vld [vmem:[%s476 + $0xb0] sm:$0xff]
      %v851 = vld [vmem:[%s476 + $0xb8] sm:$0xff]
      %v852 = vld [vmem:[%s476 + $0xc0] sm:$0xff]
      %v853 = vld [vmem:[%s476 + $0xc8] sm:$0xff]
      %v854 = vld [vmem:[%s476 + $0xd0] sm:$0xff]
      %v855 = vld [vmem:[%s476 + $0xd8] sm:$0xff]
      %v856 = vld [vmem:[%s476 + $0xe0] sm:$0xff]
      %v857 = vld [vmem:[%s476 + $0xe8] sm:$0xff]
      %v858 = vld [vmem:[%s476 + $0xf0] sm:$0xff]
      %v859 = vld [vmem:[%s476 + $0xf8] sm:$0xff]
      %v860 = vld [vmem:[%s476 + $0x100] sm:$0xff]
      %v861 = vld [vmem:[%s476 + $0x108] sm:$0xff]
      %v862 = vld [vmem:[%s476 + $0x110] sm:$0xff]
      %v863 = vld [vmem:[%s476 + $0x118] sm:$0xff]
      %v864 = vld [vmem:[%s476 + $0x120] sm:$0xff]
      %v865 = vld [vmem:[%s476 + $0x128] sm:$0xff]
      %v866 = vld [vmem:[%s476 + $0x130] sm:$0xff]
      %v867 = vld [vmem:[%s476 + $0x138] sm:$0xff]
      %v868 = vld [vmem:[%s476 + $0x140] sm:$0xff]
      %v869 = vld [vmem:[%s476 + $0x148] sm:$0xff]
      %v870 = vld [vmem:[%s476 + $0x150] sm:$0xff]
      %v871 = vld [vmem:[%s476 + $0x158] sm:$0xff]
      %v872 = vld [vmem:[%s476 + $0x160] sm:$0xff]
      %v873 = vld [vmem:[%s476 + $0x168] sm:$0xff]
      %v874 = vld [vmem:[%s476 + $0x170] sm:$0xff]
      %v875 = vld [vmem:[%s476 + $0x178] sm:$0xff]
      %v876 = vld [vmem:[%s476 + $0x180] sm:$0xff]
      %v877 = vld [vmem:[%s476 + $0x188] sm:$0xff]
      %v878 = vld [vmem:[%s476 + $0x190] sm:$0xff]
      %v879 = vld [vmem:[%s476 + $0x198] sm:$0xff]
      %v880 = vld [vmem:[%s476 + $0x1a0] sm:$0xff]
      %v881 = vld [vmem:[%s476 + $0x1a8] sm:$0xff]
      %v882 = vld [vmem:[%s476 + $0x1b0] sm:$0xff]
      %v883 = vld [vmem:[%s476 + $0x1b8] sm:$0xff]
      %v884 = vld [vmem:[%s476 + $0x1c0] sm:$0xff]
      %v885 = vld [vmem:[%s476 + $0x1c8] sm:$0xff]
      %v886 = vld [vmem:[%s476 + $0x1d0] sm:$0xff]
      %v887 = vld [vmem:[%s476 + $0x1d8] sm:$0xff]
      %v888 = vld [vmem:[%s476 + $0x1e0] sm:$0xff]
      %v889 = vld [vmem:[%s476 + $0x1e8] sm:$0xff]
      %v890 = vld [vmem:[%s476 + $0x1f0] sm:$0xff]
      %v891 = vld [vmem:[%s476 + $0x1f8] sm:$0xff]
      %v892 = vld [vmem:[%s476 + $0x200] sm:$0xff]
      %v893 = vld [vmem:[%s476 + $0x208] sm:$0xff]
      %v894 = vld [vmem:[%s476 + $0x210] sm:$0xff]
      %v895 = vld [vmem:[%s476 + $0x218] sm:$0xff]
      %v896 = vld [vmem:[%s476 + $0x220] sm:$0xff]
      %v897 = vld [vmem:[%s476 + $0x228] sm:$0xff]
      %v898 = vld [vmem:[%s476 + $0x230] sm:$0xff]
      %v899 = vld [vmem:[%s476 + $0x238] sm:$0xff]
      %v900 = vld [vmem:[%s476 + $0x240] sm:$0xff]
      %v901 = vld [vmem:[%s476 + $0x248] sm:$0xff]
      %v902 = vld [vmem:[%s476 + $0x250] sm:$0xff]
      %v903 = vld [vmem:[%s476 + $0x258] sm:$0xff]
      %v904 = vld [vmem:[%s476 + $0x260] sm:$0xff]
      %v905 = vld [vmem:[%s476 + $0x268] sm:$0xff]
      %v906 = vld [vmem:[%s476 + $0x270] sm:$0xff]
      %v907 = vld [vmem:[%s476 + $0x278] sm:$0xff]
      %v908 = vld [vmem:[%s476 + $0x280] sm:$0xff]
      %v909 = vld [vmem:[%s476 + $0x288] sm:$0xff]
      %v910 = vld [vmem:[%s476 + $0x290] sm:$0xff]
      %v911 = vld [vmem:[%s476 + $0x298] sm:$0xff]
      %v912 = vld [vmem:[%s476 + $0x2a0] sm:$0xff]
      %v913 = vld [vmem:[%s476 + $0x2a8] sm:$0xff]
      %v914 = vld [vmem:[%s476 + $0x2b0] sm:$0xff]
      %v915 = vld [vmem:[%s476 + $0x2b8] sm:$0xff]
      %v916 = vld [vmem:[%s476 + $0x2c0] sm:$0xff]
      %v917 = vld [vmem:[%s476 + $0x2c8] sm:$0xff]
      %v918 = vld [vmem:[%s476 + $0x2d0] sm:$0xff]
      %v919 = vld [vmem:[%s476 + $0x2d8] sm:$0xff]
      %v920 = vld [vmem:[%s476 + $0x2e0] sm:$0xff]
      %v921 = vld [vmem:[%s476 + $0x2e8] sm:$0xff]
      %v922 = vld [vmem:[%s476 + $0x2f0] sm:$0xff]
      %v923 = vld [vmem:[%s476 + $0x2f8] sm:$0xff]
      %v1020 = vunpack.c.l.b16 %v828
      %v1021 = vunpack.c.h.b16 %v828
      %v1022 = vunpack.c.l.b16 %v829
      %v1023 = vunpack.c.h.b16 %v829
      %v1024 = vunpack.c.l.b16 %v830
      %v1025 = vunpack.c.h.b16 %v830
      %v1026 = vunpack.c.l.b16 %v831
      %v1027 = vunpack.c.h.b16 %v831
      %v1028 = vunpack.c.l.b16 %v832
      %v1029 = vunpack.c.h.b16 %v832
      %v1030 = vunpack.c.l.b16 %v833
      %v1031 = vunpack.c.h.b16 %v833
      %v1032 = vunpack.c.l.b16 %v834
      %v1033 = vunpack.c.h.b16 %v834
      %v1034 = vunpack.c.l.b16 %v835
      %v1035 = vunpack.c.h.b16 %v835
      %v1036 = vunpack.c.l.b16 %v836
      %v1037 = vunpack.c.h.b16 %v836
      %v1038 = vunpack.c.l.b16 %v837
      %v1039 = vunpack.c.h.b16 %v837
      %v1040 = vunpack.c.l.b16 %v838
      %v1041 = vunpack.c.h.b16 %v838
      %v1042 = vunpack.c.l.b16 %v839
      %v1043 = vunpack.c.h.b16 %v839
      %v1044 = vunpack.c.l.b16 %v840
      %v1045 = vunpack.c.h.b16 %v840
      %v1046 = vunpack.c.l.b16 %v841
      %v1047 = vunpack.c.h.b16 %v841
      %v1048 = vunpack.c.l.b16 %v842
      %v1049 = vunpack.c.h.b16 %v842
      %v1050 = vunpack.c.l.b16 %v843
      %v1051 = vunpack.c.h.b16 %v843
      %v1052 = vunpack.c.l.b16 %v844
      %v1053 = vunpack.c.h.b16 %v844
      %v1054 = vunpack.c.l.b16 %v845
      %v1055 = vunpack.c.h.b16 %v845
      %v1056 = vunpack.c.l.b16 %v846
      %v1057 = vunpack.c.h.b16 %v846
      %v1058 = vunpack.c.l.b16 %v847
      %v1059 = vunpack.c.h.b16 %v847
      %v1060 = vunpack.c.l.b16 %v848
      %v1061 = vunpack.c.h.b16 %v848
      %v1062 = vunpack.c.l.b16 %v849
      %v1063 = vunpack.c.h.b16 %v849
      %v1064 = vunpack.c.l.b16 %v850
      %v1065 = vunpack.c.h.b16 %v850
      %v1066 = vunpack.c.l.b16 %v851
      %v1067 = vunpack.c.h.b16 %v851
      %v1068 = vunpack.c.l.b16 %v852
      %v1069 = vunpack.c.h.b16 %v852
      %v1070 = vunpack.c.l.b16 %v853
      %v1071 = vunpack.c.h.b16 %v853
      %v1072 = vunpack.c.l.b16 %v854
      %v1073 = vunpack.c.h.b16 %v854
      %v1074 = vunpack.c.l.b16 %v855
      %v1075 = vunpack.c.h.b16 %v855
      %v1076 = vunpack.c.l.b16 %v856
      %v1077 = vunpack.c.h.b16 %v856
      %v1078 = vunpack.c.l.b16 %v857
      %v1079 = vunpack.c.h.b16 %v857
      %v1080 = vunpack.c.l.b16 %v858
      %v1081 = vunpack.c.h.b16 %v858
      %v1082 = vunpack.c.l.b16 %v859
      %v1083 = vunpack.c.h.b16 %v859
      %v1084 = vunpack.c.l.b16 %v860
      %v1085 = vunpack.c.h.b16 %v860
      %v1086 = vunpack.c.l.b16 %v861
      %v1087 = vunpack.c.h.b16 %v861
      %v1088 = vunpack.c.l.b16 %v862
      %v1089 = vunpack.c.h.b16 %v862
      %v1090 = vunpack.c.l.b16 %v863
      %v1091 = vunpack.c.h.b16 %v863
      %v1092 = vunpack.c.l.b16 %v864
      %v1093 = vunpack.c.h.b16 %v864
      %v1094 = vunpack.c.l.b16 %v865
      %v1095 = vunpack.c.h.b16 %v865
      %v1096 = vunpack.c.l.b16 %v866
      %v1097 = vunpack.c.h.b16 %v866
      %v1098 = vunpack.c.l.b16 %v867
      %v1099 = vunpack.c.h.b16 %v867
      %v1100 = vunpack.c.l.b16 %v868
      %v1101 = vunpack.c.h.b16 %v868
      %v1102 = vunpack.c.l.b16 %v869
      %v1103 = vunpack.c.h.b16 %v869
      %v1104 = vunpack.c.l.b16 %v870
      %v1105 = vunpack.c.h.b16 %v870
      %v1106 = vunpack.c.l.b16 %v871
      %v1107 = vunpack.c.h.b16 %v871
      %v1108 = vunpack.c.l.b16 %v872
      %v1109 = vunpack.c.h.b16 %v872
      %v1110 = vunpack.c.l.b16 %v873
      %v1111 = vunpack.c.h.b16 %v873
      %v1112 = vunpack.c.l.b16 %v874
      %v1113 = vunpack.c.h.b16 %v874
      %v1114 = vunpack.c.l.b16 %v875
      %v1115 = vunpack.c.h.b16 %v875
      %v1116 = vunpack.c.l.b16 %v876
      %v1117 = vunpack.c.h.b16 %v876
      %v1118 = vunpack.c.l.b16 %v877
      %v1119 = vunpack.c.h.b16 %v877
      %v1120 = vunpack.c.l.b16 %v878
      %v1121 = vunpack.c.h.b16 %v878
      %v1122 = vunpack.c.l.b16 %v879
      %v1123 = vunpack.c.h.b16 %v879
      %v1124 = vunpack.c.l.b16 %v880
      %v1125 = vunpack.c.h.b16 %v880
      %v1126 = vunpack.c.l.b16 %v881
      %v1127 = vunpack.c.h.b16 %v881
      %v1128 = vunpack.c.l.b16 %v882
      %v1129 = vunpack.c.h.b16 %v882
      %v1130 = vunpack.c.l.b16 %v883
      %v1131 = vunpack.c.h.b16 %v883
      %v1132 = vunpack.c.l.b16 %v884
      %v1133 = vunpack.c.h.b16 %v884
      %v1134 = vunpack.c.l.b16 %v885
      %v1135 = vunpack.c.h.b16 %v885
      %v1136 = vunpack.c.l.b16 %v886
      %v1137 = vunpack.c.h.b16 %v886
      %v1138 = vunpack.c.l.b16 %v887
      %v1139 = vunpack.c.h.b16 %v887
      %v1140 = vunpack.c.l.b16 %v888
      %v1141 = vunpack.c.h.b16 %v888
      %v1142 = vunpack.c.l.b16 %v889
      %v1143 = vunpack.c.h.b16 %v889
      %v1144 = vunpack.c.l.b16 %v890
      %v1145 = vunpack.c.h.b16 %v890
      %v1146 = vunpack.c.l.b16 %v891
      %v1147 = vunpack.c.h.b16 %v891
      %v1148 = vunpack.c.l.b16 %v892
      %v1149 = vunpack.c.h.b16 %v892
      %v1150 = vunpack.c.l.b16 %v893
      %v1151 = vunpack.c.h.b16 %v893
      %v1152 = vunpack.c.l.b16 %v894
      %v1153 = vunpack.c.h.b16 %v894
      %v1154 = vunpack.c.l.b16 %v895
      %v1155 = vunpack.c.h.b16 %v895
      %v1156 = vunpack.c.l.b16 %v896
      %v1157 = vunpack.c.h.b16 %v896
      %v1158 = vunpack.c.l.b16 %v897
      %v1159 = vunpack.c.h.b16 %v897
      %v1160 = vunpack.c.l.b16 %v898
      %v1161 = vunpack.c.h.b16 %v898
      %v1162 = vunpack.c.l.b16 %v899
      %v1163 = vunpack.c.h.b16 %v899
      %v1164 = vunpack.c.l.b16 %v900
      %v1165 = vunpack.c.h.b16 %v900
      %v1166 = vunpack.c.l.b16 %v901
      %v1167 = vunpack.c.h.b16 %v901
      %v1168 = vunpack.c.l.b16 %v902
      %v1169 = vunpack.c.h.b16 %v902
      %v1170 = vunpack.c.l.b16 %v903
      %v1171 = vunpack.c.h.b16 %v903
      %v1172 = vunpack.c.l.b16 %v904
      %v1173 = vunpack.c.h.b16 %v904
      %v1174 = vunpack.c.l.b16 %v905
      %v1175 = vunpack.c.h.b16 %v905
      %v1176 = vunpack.c.l.b16 %v906
      %v1177 = vunpack.c.h.b16 %v906
      %v1178 = vunpack.c.l.b16 %v907
      %v1179 = vunpack.c.h.b16 %v907
      %v1180 = vunpack.c.l.b16 %v908
      %v1181 = vunpack.c.h.b16 %v908
      %v1182 = vunpack.c.l.b16 %v909
      %v1183 = vunpack.c.h.b16 %v909
      %v1184 = vunpack.c.l.b16 %v910
      %v1185 = vunpack.c.h.b16 %v910
      %v1186 = vunpack.c.l.b16 %v911
      %v1187 = vunpack.c.h.b16 %v911
      %v1188 = vunpack.c.l.b16 %v912
      %v1189 = vunpack.c.h.b16 %v912
      %v1190 = vunpack.c.l.b16 %v913
      %v1191 = vunpack.c.h.b16 %v913
      %v1192 = vunpack.c.l.b16 %v914
      %v1193 = vunpack.c.h.b16 %v914
      %v1194 = vunpack.c.l.b16 %v915
      %v1195 = vunpack.c.h.b16 %v915
      %v1196 = vunpack.c.l.b16 %v916
      %v1197 = vunpack.c.h.b16 %v916
      %v1198 = vunpack.c.l.b16 %v917
      %v1199 = vunpack.c.h.b16 %v917
      %v1200 = vunpack.c.l.b16 %v918
      %v1201 = vunpack.c.h.b16 %v918
      %v1202 = vunpack.c.l.b16 %v919
      %v1203 = vunpack.c.h.b16 %v919
      %v1204 = vunpack.c.l.b16 %v920
      %v1205 = vunpack.c.h.b16 %v920
      %v1206 = vunpack.c.l.b16 %v921
      %v1207 = vunpack.c.h.b16 %v921
      %v1208 = vunpack.c.l.b16 %v922
      %v1209 = vunpack.c.h.b16 %v922
      %v1210 = vunpack.c.l.b16 %v923
      %v1211 = vunpack.c.h.b16 %v923
      %v1212 = vpack.c.b16 %v1026, %v1020
      %v1213 = vpack.c.b16 %v1027, %v1021
      %v1214 = vpack.c.b16 %v1028, %v1022
      %v1215 = vpack.c.b16 %v1029, %v1023
      %v1216 = vpack.c.b16 %v1030, %v1024
      %v1217 = vpack.c.b16 %v1031, %v1025
      %v1218 = vpack.c.b16 %v1038, %v1032
      %v1219 = vpack.c.b16 %v1039, %v1033
      %v1220 = vpack.c.b16 %v1040, %v1034
      %v1221 = vpack.c.b16 %v1041, %v1035
      %v1222 = vpack.c.b16 %v1042, %v1036
      %v1223 = vpack.c.b16 %v1043, %v1037
      %v1224 = vpack.c.b16 %v1050, %v1044
      %v1225 = vpack.c.b16 %v1051, %v1045
      %v1226 = vpack.c.b16 %v1052, %v1046
      %v1227 = vpack.c.b16 %v1053, %v1047
      %v1228 = vpack.c.b16 %v1054, %v1048
      %v1229 = vpack.c.b16 %v1055, %v1049
      %v1230 = vpack.c.b16 %v1062, %v1056
      %v1231 = vpack.c.b16 %v1063, %v1057
      %v1232 = vpack.c.b16 %v1064, %v1058
      %v1233 = vpack.c.b16 %v1065, %v1059
      %v1234 = vpack.c.b16 %v1066, %v1060
      %v1235 = vpack.c.b16 %v1067, %v1061
      %v1236 = vpack.c.b16 %v1074, %v1068
      %v1237 = vpack.c.b16 %v1075, %v1069
      %v1238 = vpack.c.b16 %v1076, %v1070
      %v1239 = vpack.c.b16 %v1077, %v1071
      %v1240 = vpack.c.b16 %v1078, %v1072
      %v1241 = vpack.c.b16 %v1079, %v1073
      %v1242 = vpack.c.b16 %v1086, %v1080
      %v1243 = vpack.c.b16 %v1087, %v1081
      %v1244 = vpack.c.b16 %v1088, %v1082
      %v1245 = vpack.c.b16 %v1089, %v1083
      %v1246 = vpack.c.b16 %v1090, %v1084
      %v1247 = vpack.c.b16 %v1091, %v1085
      %v1248 = vpack.c.b16 %v1098, %v1092
      %v1249 = vpack.c.b16 %v1099, %v1093
      %v1250 = vpack.c.b16 %v1100, %v1094
      %v1251 = vpack.c.b16 %v1101, %v1095
      %v1252 = vpack.c.b16 %v1102, %v1096
      %v1253 = vpack.c.b16 %v1103, %v1097
      %v1254 = vpack.c.b16 %v1110, %v1104
      %v1255 = vpack.c.b16 %v1111, %v1105
      %v1256 = vpack.c.b16 %v1112, %v1106
      %v1257 = vpack.c.b16 %v1113, %v1107
      %v1258 = vpack.c.b16 %v1114, %v1108
      %v1259 = vpack.c.b16 %v1115, %v1109
      %v1260 = vpack.c.b16 %v1122, %v1116
      %v1261 = vpack.c.b16 %v1123, %v1117
      %v1262 = vpack.c.b16 %v1124, %v1118
      %v1263 = vpack.c.b16 %v1125, %v1119
      %v1264 = vpack.c.b16 %v1126, %v1120
      %v1265 = vpack.c.b16 %v1127, %v1121
      %v1266 = vpack.c.b16 %v1134, %v1128
      %v1267 = vpack.c.b16 %v1135, %v1129
      %v1268 = vpack.c.b16 %v1136, %v1130
      %v1269 = vpack.c.b16 %v1137, %v1131
      %v1270 = vpack.c.b16 %v1138, %v1132
      %v1271 = vpack.c.b16 %v1139, %v1133
      %v1272 = vpack.c.b16 %v1146, %v1140
      %v1273 = vpack.c.b16 %v1147, %v1141
      %v1274 = vpack.c.b16 %v1148, %v1142
      %v1275 = vpack.c.b16 %v1149, %v1143
      %v1276 = vpack.c.b16 %v1150, %v1144
      %v1277 = vpack.c.b16 %v1151, %v1145
      %v1278 = vpack.c.b16 %v1158, %v1152
      %v1279 = vpack.c.b16 %v1159, %v1153
      %v1280 = vpack.c.b16 %v1160, %v1154
      %v1281 = vpack.c.b16 %v1161, %v1155
      %v1282 = vpack.c.b16 %v1162, %v1156
      %v1283 = vpack.c.b16 %v1163, %v1157
      %v1284 = vpack.c.b16 %v1170, %v1164
      %v1285 = vpack.c.b16 %v1171, %v1165
      %v1286 = vpack.c.b16 %v1172, %v1166
      %v1287 = vpack.c.b16 %v1173, %v1167
      %v1288 = vpack.c.b16 %v1174, %v1168
      %v1289 = vpack.c.b16 %v1175, %v1169
      %v1290 = vpack.c.b16 %v1182, %v1176
      %v1291 = vpack.c.b16 %v1183, %v1177
      %v1292 = vpack.c.b16 %v1184, %v1178
      %v1293 = vpack.c.b16 %v1185, %v1179
      %v1294 = vpack.c.b16 %v1186, %v1180
      %v1295 = vpack.c.b16 %v1187, %v1181
      %v1296 = vpack.c.b16 %v1194, %v1188
      %v1297 = vpack.c.b16 %v1195, %v1189
      %v1298 = vpack.c.b16 %v1196, %v1190
      %v1299 = vpack.c.b16 %v1197, %v1191
      %v1300 = vpack.c.b16 %v1198, %v1192
      %v1301 = vpack.c.b16 %v1199, %v1193
      %v1302 = vpack.c.b16 %v1206, %v1200
      %v1303 = vpack.c.b16 %v1207, %v1201
      %v1304 = vpack.c.b16 %v1208, %v1202
      %v1305 = vpack.c.b16 %v1209, %v1203
      %v1306 = vpack.c.b16 %v1210, %v1204
      %v1307 = vpack.c.b16 %v1211, %v1205
      %1404 = vmatprep.subr.bf16.mxu0 %v1213
      %1405 = vmatpush1.bf16.msra.mxu0 %v1212
      %1406 = vmatprep.subr.bf16.mxu0 %v1219
      %1407 = vmatpush1.bf16.msra.mxu0 %v1218
      %1408 = vmatprep.subr.bf16.mxu0 %v1225
      %1409 = vmatpush1.bf16.msra.mxu0 %v1224
      %1410 = vmatprep.subr.bf16.mxu0 %v1231
      %1411 = vmatpush1.bf16.msra.mxu0 %v1230
      %1412 = vmatprep.subr.bf16.mxu0 %v1237
      %1413 = vmatpush1.bf16.msra.mxu0 %v1236
      %1414 = vmatprep.subr.bf16.mxu0 %v1243
      %1415 = vmatpush1.bf16.msra.mxu0 %v1242
      %1416 = vmatprep.subr.bf16.mxu0 %v1249
      %1417 = vmatpush1.bf16.msra.mxu0 %v1248
      %1418 = vmatprep.subr.bf16.mxu0 %v1255
      %1419 = vmatpush1.bf16.msra.mxu0 %v1254
      %1420 = vmatprep.subr.bf16.mxu0 %v1261
      %1421 = vmatpush1.bf16.msra.mxu0 %v1260
      %1422 = vmatprep.subr.bf16.mxu0 %v1267
      %1423 = vmatpush1.bf16.msra.mxu0 %v1266
      %1424 = vmatprep.subr.bf16.mxu0 %v1273
      %1425 = vmatpush1.bf16.msra.mxu0 %v1272
      %1426 = vmatprep.subr.bf16.mxu0 %v1279
      %1427 = vmatpush1.bf16.msra.mxu0 %v1278
      %1428 = vmatprep.subr.bf16.mxu0 %v1285
      %1429 = vmatpush1.bf16.msra.mxu0 %v1284
      %1430 = vmatprep.subr.bf16.mxu0 %v1291
      %1431 = vmatpush1.bf16.msra.mxu0 %v1290
      %1432 = vmatprep.subr.bf16.mxu0 %v1297
      %1433 = vmatpush1.bf16.msra.mxu0 %v1296
      %1434 = vmatprep.subr.bf16.mxu0 %v1303
      %1435 = vmatpush1.bf16.msra.mxu0 %v1302
      %1436 = vmatprep.mubr.bf16.mxu0 %v813
      %1437 = vmatmul.mubr.bf16.gmra.mrb[0].mxu0 %v812
      %v1438 = vpop.f32.mrb[0].mxu0
      %v1439 = vadd.f32 0.0, %v1438
      %v1440 = vpop.f32.mrb[0].mxu0
      %v1441 = vadd.f32 0.0, %v1440
      %v1442 = vpop.f32.mrb[0].mxu0
      %v1443 = vadd.f32 0.0, %v1442
      %v1444 = vpop.f32.mrb[0].mxu0
      %v1445 = vadd.f32 0.0, %v1444
      %1446 = vmatprep.mubr.bf16.mxu0 %v815
      %1447 = vmatmul.mubr.bf16.gmra.mrb[0].mxu0 %v814
      %v1448 = vpop.f32.mrb[0].mxu0
      %v1449 = vadd.f32 0.0, %v1448
      %v1450 = vpop.f32.mrb[0].mxu0
      %v1451 = vadd.f32 0.0, %v1450
      %v1452 = vpop.f32.mrb[0].mxu0
      %v1453 = vadd.f32 0.0, %v1452
      %v1454 = vpop.f32.mrb[0].mxu0
      %v1455 = vadd.f32 0.0, %v1454
      %1456 = vmatprep.mubr.bf16.mxu0 %v817
      %1457 = vmatmul.mubr.bf16.gmra.mrb[0].mxu0 %v816
      %v1458 = vpop.f32.mrb[0].mxu0
      %v1459 = vadd.f32 0.0, %v1458
      %v1460 = vpop.f32.mrb[0].mxu0
      %v1461 = vadd.f32 0.0, %v1460
      %v1462 = vpop.f32.mrb[0].mxu0
      %v1463 = vadd.f32 0.0, %v1462
      %v1464 = vpop.f32.mrb[0].mxu0
      %v1465 = vadd.f32 0.0, %v1464
      %1466 = vmatprep.mubr.bf16.mxu0 %v819
      %1467 = vmatmul.mubr.bf16.gmra.mrb[0].mxu0 %v818
      %v1468 = vpop.f32.mrb[0].mxu0
      %v1469 = vadd.f32 0.0, %v1468
      %v1470 = vpop.f32.mrb[0].mxu0
      %v1471 = vadd.f32 0.0, %v1470
      %v1472 = vpop.f32.mrb[0].mxu0
      %v1473 = vadd.f32 0.0, %v1472
      %v1474 = vpop.f32.mrb[0].mxu0
      %v1475 = vadd.f32 0.0, %v1474
      %1476 = vmatprep.mubr.bf16.mxu0 %v821
      %1477 = vmatmul.mubr.bf16.gmra.mrb[0].mxu0 %v820
      %v1478 = vpop.f32.mrb[0].mxu0
      %v1479 = vadd.f32 0.0, %v1478
      %v1480 = vpop.f32.mrb[0].mxu0
      %v1481 = vadd.f32 0.0, %v1480
      %v1482 = vpop.f32.mrb[0].mxu0
      %v1483 = vadd.f32 0.0, %v1482
      %v1484 = vpop.f32.mrb[0].mxu0
      %v1485 = vadd.f32 0.0, %v1484
      %1486 = vmatprep.mubr.bf16.mxu0 %v823
      %1487 = vmatmul.mubr.bf16.gmra.mrb[0].mxu0 %v822
      %v1488 = vpop.f32.mrb[0].mxu0
      %v1489 = vadd.f32 0.0, %v1488
      %v1490 = vpop.f32.mrb[0].mxu0
      %v1491 = vadd.f32 0.0, %v1490
      %v1492 = vpop.f32.mrb[0].mxu0
      %v1493 = vadd.f32 0.0, %v1492
      %v1494 = vpop.f32.mrb[0].mxu0
      %v1495 = vadd.f32 0.0, %v1494
      %1496 = vmatprep.mubr.bf16.mxu0 %v825
      %1497 = vmatmul.mubr.bf16.gmra.mrb[0].mxu0 %v824
      %v1498 = vpop.f32.mrb[0].mxu0
      %v1499 = vadd.f32 0.0, %v1498
      %v1500 = vpop.f32.mrb[0].mxu0
      %v1501 = vadd.f32 0.0, %v1500
      %v1502 = vpop.f32.mrb[0].mxu0
      %v1503 = vadd.f32 0.0, %v1502
      %v1504 = vpop.f32.mrb[0].mxu0
      %v1505 = vadd.f32 0.0, %v1504
      %1506 = vmatprep.mubr.bf16.mxu0 %v827
      %1507 = vmatmul.mubr.bf16.gmra.mrb[0].mxu0 %v826
      %v1508 = vpop.f32.mrb[0].mxu0
      %v1509 = vadd.f32 0.0, %v1508
      %v1510 = vpop.f32.mrb[0].mxu0
      %v1511 = vadd.f32 0.0, %v1510
      %v1512 = vpop.f32.mrb[0].mxu0
      %v1513 = vadd.f32 0.0, %v1512
      %v1514 = vpop.f32.mrb[0].mxu0
      %v1515 = vadd.f32 0.0, %v1514
      %1516 = vdwg.mxu0
      %1517 = vmatprep.subr.bf16.mxu0 %v1215
      %1518 = vmatpush1.bf16.msra.mxu0 %v1214
      %1519 = vmatprep.subr.bf16.mxu0 %v1221
      %1520 = vmatpush1.bf16.msra.mxu0 %v1220
      %1521 = vmatprep.subr.bf16.mxu0 %v1227
      %1522 = vmatpush1.bf16.msra.mxu0 %v1226
      %1523 = vmatprep.subr.bf16.mxu0 %v1233
      %1524 = vmatpush1.bf16.msra.mxu0 %v1232
      %1525 = vmatprep.subr.bf16.mxu0 %v1239
      %1526 = vmatpush1.bf16.msra.mxu0 %v1238
      %1527 = vmatprep.subr.bf16.mxu0 %v1245
      %1528 = vmatpush1.bf16.msra.mxu0 %v1244
      %1529 = vmatprep.subr.bf16.mxu0 %v1251
      %1530 = vmatpush1.bf16.msra.mxu0 %v1250
      %1531 = vmatprep.subr.bf16.mxu0 %v1257
      %1532 = vmatpush1.bf16.msra.mxu0 %v1256
      %1533 = vmatprep.subr.bf16.mxu0 %v1263
      %1534 = vmatpush1.bf16.msra.mxu0 %v1262
      %1535 = vmatprep.subr.bf16.mxu0 %v1269
      %1536 = vmatpush1.bf16.msra.mxu0 %v1268
      %1537 = vmatprep.subr.bf16.mxu0 %v1275
      %1538 = vmatpush1.bf16.msra.mxu0 %v1274
      %1539 = vmatprep.subr.bf16.mxu0 %v1281
      %1540 = vmatpush1.bf16.msra.mxu0 %v1280
      %1541 = vmatprep.subr.bf16.mxu0 %v1287
      %1542 = vmatpush1.bf16.msra.mxu0 %v1286
      %1543 = vmatprep.subr.bf16.mxu0 %v1293
      %1544 = vmatpush1.bf16.msra.mxu0 %v1292
      %1545 = vmatprep.subr.bf16.mxu0 %v1299
      %1546 = vmatpush1.bf16.msra.mxu0 %v1298
      %1547 = vmatprep.subr.bf16.mxu0 %v1305
      %1548 = vmatpush1.bf16.msra.mxu0 %v1304
      %1549 = vmatprep.mubr.bf16.mxu0 %v813
      %1550 = vmatmul.mubr.bf16.gmra.mrb[0].mxu0 %v812
      %v1551 = vpop.f32.mrb[0].mxu0
      %v1552 = vadd.f32 0.0, %v1551
      %v1553 = vpop.f32.mrb[0].mxu0
      %v1554 = vadd.f32 0.0, %v1553
      %v1555 = vpop.f32.mrb[0].mxu0
      %v1556 = vadd.f32 0.0, %v1555
      %v1557 = vpop.f32.mrb[0].mxu0
      %v1558 = vadd.f32 0.0, %v1557
      %1559 = vmatprep.mubr.bf16.mxu0 %v815
      %1560 = vmatmul.mubr.bf16.gmra.mrb[0].mxu0 %v814
      %v1561 = vpop.f32.mrb[0].mxu0
      %v1562 = vadd.f32 0.0, %v1561
      %v1563 = vpop.f32.mrb[0].mxu0
      %v1564 = vadd.f32 0.0, %v1563
      %v1565 = vpop.f32.mrb[0].mxu0
      %v1566 = vadd.f32 0.0, %v1565
      %v1567 = vpop.f32.mrb[0].mxu0
      %v1568 = vadd.f32 0.0, %v1567
      %1569 = vmatprep.mubr.bf16.mxu0 %v817
      %1570 = vmatmul.mubr.bf16.gmra.mrb[0].mxu0 %v816
      %v1571 = vpop.f32.mrb[0].mxu0
      %v1572 = vadd.f32 0.0, %v1571
      %v1573 = vpop.f32.mrb[0].mxu0
      %v1574 = vadd.f32 0.0, %v1573
      %v1575 = vpop.f32.mrb[0].mxu0
      %v1576 = vadd.f32 0.0, %v1575
      %v1577 = vpop.f32.mrb[0].mxu0
      %v1578 = vadd.f32 0.0, %v1577
      %1579 = vmatprep.mubr.bf16.mxu0 %v819
      %1580 = vmatmul.mubr.bf16.gmra.mrb[0].mxu0 %v818
      %v1581 = vpop.f32.mrb[0].mxu0
      %v1582 = vadd.f32 0.0, %v1581
      %v1583 = vpop.f32.mrb[0].mxu0
      %v1584 = vadd.f32 0.0, %v1583
      %v1585 = vpop.f32.mrb[0].mxu0
      %v1586 = vadd.f32 0.0, %v1585
      %v1587 = vpop.f32.mrb[0].mxu0
      %v1588 = vadd.f32 0.0, %v1587
      %1589 = vmatprep.mubr.bf16.mxu0 %v821
      %1590 = vmatmul.mubr.bf16.gmra.mrb[0].mxu0 %v820
      %v1591 = vpop.f32.mrb[0].mxu0
      %v1592 = vadd.f32 0.0, %v1591
      %v1593 = vpop.f32.mrb[0].mxu0
      %v1594 = vadd.f32 0.0, %v1593
      %v1595 = vpop.f32.mrb[0].mxu0
      %v1596 = vadd.f32 0.0, %v1595
      %v1597 = vpop.f32.mrb[0].mxu0
      %v1598 = vadd.f32 0.0, %v1597
      %1599 = vmatprep.mubr.bf16.mxu0 %v823
      %1600 = vmatmul.mubr.bf16.gmra.mrb[0].mxu0 %v822
      %v1601 = vpop.f32.mrb[0].mxu0
      %v1602 = vadd.f32 0.0, %v1601
      %v1603 = vpop.f32.mrb[0].mxu0
      %v1604 = vadd.f32 0.0, %v1603
      %v1605 = vpop.f32.mrb[0].mxu0
      %v1606 = vadd.f32 0.0, %v1605
      %v1607 = vpop.f32.mrb[0].mxu0
      %v1608 = vadd.f32 0.0, %v1607
      %1609 = vmatprep.mubr.bf16.mxu0 %v825
      %1610 = vmatmul.mubr.bf16.gmra.mrb[0].mxu0 %v824
      %v1611 = vpop.f32.mrb[0].mxu0
      %v1612 = vadd.f32 0.0, %v1611
      %v1613 = vpop.f32.mrb[0].mxu0
      %v1614 = vadd.f32 0.0, %v1613
      %v1615 = vpop.f32.mrb[0].mxu0
      %v1616 = vadd.f32 0.0, %v1615
      %v1617 = vpop.f32.mrb[0].mxu0
      %v1618 = vadd.f32 0.0, %v1617
      %1619 = vmatprep.mubr.bf16.mxu0 %v827
      %1620 = vmatmul.mubr.bf16.gmra.mrb[0].mxu0 %v826
      %v1621 = vpop.f32.mrb[0].mxu0
      %v1622 = vadd.f32 0.0, %v1621
      %v1623 = vpop.f32.mrb[0].mxu0
      %v1624 = vadd.f32 0.0, %v1623
      %v1625 = vpop.f32.mrb[0].mxu0
      %v1626 = vadd.f32 0.0, %v1625
      %v1627 = vpop.f32.mrb[0].mxu0
      %v1628 = vadd.f32 0.0, %v1627
      %1629 = vdwg.mxu0
      %1630 = vmatprep.subr.bf16.mxu0 %v1217
      %1631 = vmatpush1.bf16.msra.mxu0 %v1216
      %1632 = vmatprep.subr.bf16.mxu0 %v1223
      %1633 = vmatpush1.bf16.msra.mxu0 %v1222
      %1634 = vmatprep.subr.bf16.mxu0 %v1229
      %1635 = vmatpush1.bf16.msra.mxu0 %v1228
      %1636 = vmatprep.subr.bf16.mxu0 %v1235
      %1637 = vmatpush1.bf16.msra.mxu0 %v1234
      %1638 = vmatprep.subr.bf16.mxu0 %v1241
      %1639 = vmatpush1.bf16.msra.mxu0 %v1240
      %1640 = vmatprep.subr.bf16.mxu0 %v1247
      %1641 = vmatpush1.bf16.msra.mxu0 %v1246
      %1642 = vmatprep.subr.bf16.mxu0 %v1253
      %1643 = vmatpush1.bf16.msra.mxu0 %v1252
      %1644 = vmatprep.subr.bf16.mxu0 %v1259
      %1645 = vmatpush1.bf16.msra.mxu0 %v1258
      %1646 = vmatprep.subr.bf16.mxu0 %v1265
      %1647 = vmatpush1.bf16.msra.mxu0 %v1264
      %1648 = vmatprep.subr.bf16.mxu0 %v1271
      %1649 = vmatpush1.bf16.msra.mxu0 %v1270
      %1650 = vmatprep.subr.bf16.mxu0 %v1277
      %1651 = vmatpush1.bf16.msra.mxu0 %v1276
      %1652 = vmatprep.subr.bf16.mxu0 %v1283
      %1653 = vmatpush1.bf16.msra.mxu0 %v1282
      %1654 = vmatprep.subr.bf16.mxu0 %v1289
      %1655 = vmatpush1.bf16.msra.mxu0 %v1288
      %1656 = vmatprep.subr.bf16.mxu0 %v1295
      %1657 = vmatpush1.bf16.msra.mxu0 %v1294
      %1658 = vmatprep.subr.bf16.mxu0 %v1301
      %1659 = vmatpush1.bf16.msra.mxu0 %v1300
      %1660 = vmatprep.subr.bf16.mxu0 %v1307
      %1661 = vmatpush1.bf16.msra.mxu0 %v1306
      %1662 = vmatprep.mubr.bf16.mxu0 %v813
      %1663 = vmatmul.mubr.bf16.gmra.mrb[0].mxu0 %v812
      %v1664 = vpop.f32.mrb[0].mxu0
      %v1665 = vadd.f32 0.0, %v1664
      %v1666 = vpop.f32.mrb[0].mxu0
      %v1667 = vadd.f32 0.0, %v1666
      %v1668 = vpop.f32.mrb[0].mxu0
      %v1669 = vadd.f32 0.0, %v1668
      %v1670 = vpop.f32.mrb[0].mxu0
      %v1671 = vadd.f32 0.0, %v1670
      %1672 = vmatprep.mubr.bf16.mxu0 %v815
      %1673 = vmatmul.mubr.bf16.gmra.mrb[0].mxu0 %v814
      %v1674 = vpop.f32.mrb[0].mxu0
      %v1675 = vadd.f32 0.0, %v1674
      %v1676 = vpop.f32.mrb[0].mxu0
      %v1677 = vadd.f32 0.0, %v1676
      %v1678 = vpop.f32.mrb[0].mxu0
      %v1679 = vadd.f32 0.0, %v1678
      %v1680 = vpop.f32.mrb[0].mxu0
      %v1681 = vadd.f32 0.0, %v1680
      %1682 = vmatprep.mubr.bf16.mxu0 %v817
      %1683 = vmatmul.mubr.bf16.gmra.mrb[0].mxu0 %v816
      %v1684 = vpop.f32.mrb[0].mxu0
      %v1685 = vadd.f32 0.0, %v1684
      %v1686 = vpop.f32.mrb[0].mxu0
      %v1687 = vadd.f32 0.0, %v1686
      %v1688 = vpop.f32.mrb[0].mxu0
      %v1689 = vadd.f32 0.0, %v1688
      %v1690 = vpop.f32.mrb[0].mxu0
      %v1691 = vadd.f32 0.0, %v1690
      %1692 = vmatprep.mubr.bf16.mxu0 %v819
      %1693 = vmatmul.mubr.bf16.gmra.mrb[0].mxu0 %v818
      %v1694 = vpop.f32.mrb[0].mxu0
      %v1695 = vadd.f32 0.0, %v1694
      %v1696 = vpop.f32.mrb[0].mxu0
      %v1697 = vadd.f32 0.0, %v1696
      %v1698 = vpop.f32.mrb[0].mxu0
      %v1699 = vadd.f32 0.0, %v1698
      %v1700 = vpop.f32.mrb[0].mxu0
      %v1701 = vadd.f32 0.0, %v1700
      %1702 = vmatprep.mubr.bf16.mxu0 %v821
      %1703 = vmatmul.mubr.bf16.gmra.mrb[0].mxu0 %v820
      %v1704 = vpop.f32.mrb[0].mxu0
      %v1705 = vadd.f32 0.0, %v1704
      %v1706 = vpop.f32.mrb[0].mxu0
      %v1707 = vadd.f32 0.0, %v1706
      %v1708 = vpop.f32.mrb[0].mxu0
      %v1709 = vadd.f32 0.0, %v1708
      %v1710 = vpop.f32.mrb[0].mxu0
      %v1711 = vadd.f32 0.0, %v1710
      %1712 = vmatprep.mubr.bf16.mxu0 %v823
      %1713 = vmatmul.mubr.bf16.gmra.mrb[0].mxu0 %v822
      %v1714 = vpop.f32.mrb[0].mxu0
      %v1715 = vadd.f32 0.0, %v1714
      %v1716 = vpop.f32.mrb[0].mxu0
      %v1717 = vadd.f32 0.0, %v1716
      %v1718 = vpop.f32.mrb[0].mxu0
      %v1719 = vadd.f32 0.0, %v1718
      %v1720 = vpop.f32.mrb[0].mxu0
      %v1721 = vadd.f32 0.0, %v1720
      %1722 = vmatprep.mubr.bf16.mxu0 %v825
      %1723 = vmatmul.mubr.bf16.gmra.mrb[0].mxu0 %v824
      %v1724 = vpop.f32.mrb[0].mxu0
      %v1725 = vadd.f32 0.0, %v1724
      %v1726 = vpop.f32.mrb[0].mxu0
      %v1727 = vadd.f32 0.0, %v1726
      %v1728 = vpop.f32.mrb[0].mxu0
      %v1729 = vadd.f32 0.0, %v1728
      %v1730 = vpop.f32.mrb[0].mxu0
      %v1731 = vadd.f32 0.0, %v1730
      %1732 = vmatprep.mubr.bf16.mxu0 %v827
      %1733 = vmatmul.mubr.bf16.gmra.mrb[0].mxu0 %v826
      %v1734 = vpop.f32.mrb[0].mxu0
      %v1735 = vadd.f32 0.0, %v1734
      %v1736 = vpop.f32.mrb[0].mxu0
      %v1737 = vadd.f32 0.0, %v1736
      %v1738 = vpop.f32.mrb[0].mxu0
      %v1739 = vadd.f32 0.0, %v1738
      %v1740 = vpop.f32.mrb[0].mxu0
      %v1741 = vadd.f32 0.0, %v1740
      %1742 = vdwg.mxu0
      %v1743 = vpack.c.bf16 %v1669, %v1665
      %v1744 = vpack.c.bf16 %v1671, %v1667
      %v1745 = vpack.c.bf16 %v1679, %v1675
      %v1746 = vpack.c.bf16 %v1681, %v1677
      %v1747 = vpack.c.bf16 %v1689, %v1685
      %v1748 = vpack.c.bf16 %v1691, %v1687
      %v1749 = vpack.c.bf16 %v1699, %v1695
      %v1750 = vpack.c.bf16 %v1701, %v1697
      %v1751 = vpack.c.bf16 %v1709, %v1705
      %v1752 = vpack.c.bf16 %v1711, %v1707
      %v1753 = vpack.c.bf16 %v1719, %v1715
      %v1754 = vpack.c.bf16 %v1721, %v1717
      %v1755 = vpack.c.bf16 %v1729, %v1725
      %v1756 = vpack.c.bf16 %v1731, %v1727
      %v1757 = vpack.c.bf16 %v1739, %v1735
      %v1758 = vpack.c.bf16 %v1741, %v1737
      %v1759 = vld [vmem:[%s3] sm:$0xff]
      %v1760 = vld [vmem:[%s3 + $0x8] sm:$0xff]
      %v1761 = vld [vmem:[%s3 + $0x10] sm:$0xff]
      %v1762 = vld [vmem:[%s3 + $0x18] sm:$0xff]
      %v1763 = vld [vmem:[%s3 + $0x20] sm:$0xff]
      %v1764 = vld [vmem:[%s3 + $0x28] sm:$0xff]
      %v1765 = vld [vmem:[%s3 + $0x30] sm:$0xff]
      %v1766 = vld [vmem:[%s3 + $0x38] sm:$0xff]
      %v1767 = vld [vmem:[%s3 + $0x40] sm:$0xff]
      %v1768 = vld [vmem:[%s3 + $0x48] sm:$0xff]
      %v1769 = vld [vmem:[%s3 + $0x50] sm:$0xff]
      %v1770 = vld [vmem:[%s3 + $0x58] sm:$0xff]
      %v1771 = vld [vmem:[%s3 + $0x60] sm:$0xff]
      %v1772 = vld [vmem:[%s3 + $0x68] sm:$0xff]
      %v1773 = vld [vmem:[%s3 + $0x70] sm:$0xff]
      %v1774 = vld [vmem:[%s3 + $0x78] sm:$0xff]
      %v1775 = vld [vmem:[%s3 + $0x80] sm:$0xff]
      %v1776 = vld [vmem:[%s3 + $0x88] sm:$0xff]
      %v1777 = vld [vmem:[%s3 + $0x90] sm:$0xff]
      %v1778 = vld [vmem:[%s3 + $0x98] sm:$0xff]
      %v1779 = vld [vmem:[%s3 + $0xa0] sm:$0xff]
      %v1780 = vld [vmem:[%s3 + $0xa8] sm:$0xff]
      %v1781 = vld [vmem:[%s3 + $0xb0] sm:$0xff]
      %v1782 = vld [vmem:[%s3 + $0xb8] sm:$0xff]
      %v1783 = vld [vmem:[%s3 + $0xc0] sm:$0xff]
      %v1784 = vld [vmem:[%s3 + $0xc8] sm:$0xff]
      %v1785 = vld [vmem:[%s3 + $0xd0] sm:$0xff]
      %v1786 = vld [vmem:[%s3 + $0xd8] sm:$0xff]
      %v1787 = vld [vmem:[%s3 + $0xe0] sm:$0xff]
      %v1788 = vld [vmem:[%s3 + $0xe8] sm:$0xff]
      %v1789 = vld [vmem:[%s3 + $0xf0] sm:$0xff]
      %v1790 = vld [vmem:[%s3 + $0xf8] sm:$0xff]
      %v1791 = vld [vmem:[%s4] sm:$0xff]
      %v1792 = vld [vmem:[%s4 + $0x8] sm:$0xff]
      %v1793 = vld [vmem:[%s4 + $0x10] sm:$0xff]
      %v1794 = vld [vmem:[%s4 + $0x18] sm:$0xff]
      %v1795 = vld [vmem:[%s4 + $0x20] sm:$0xff]
      %v1796 = vld [vmem:[%s4 + $0x28] sm:$0xff]
      %v1797 = vld [vmem:[%s4 + $0x30] sm:$0xff]
      %v1798 = vld [vmem:[%s4 + $0x38] sm:$0xff]
      %v1799 = vld [vmem:[%s4 + $0x40] sm:$0xff]
      %v1800 = vld [vmem:[%s4 + $0x48] sm:$0xff]
      %v1801 = vld [vmem:[%s4 + $0x50] sm:$0xff]
      %v1802 = vld [vmem:[%s4 + $0x58] sm:$0xff]
      %v1803 = vld [vmem:[%s4 + $0x60] sm:$0xff]
      %v1804 = vld [vmem:[%s4 + $0x68] sm:$0xff]
      %v1805 = vld [vmem:[%s4 + $0x70] sm:$0xff]
      %v1806 = vld [vmem:[%s4 + $0x78] sm:$0xff]
      %v1807 = vld [vmem:[%s4 + $0x80] sm:$0xff]
      %v1808 = vld [vmem:[%s4 + $0x88] sm:$0xff]
      %v1809 = vld [vmem:[%s4 + $0x90] sm:$0xff]
      %v1810 = vld [vmem:[%s4 + $0x98] sm:$0xff]
      %v1811 = vld [vmem:[%s4 + $0xa0] sm:$0xff]
      %v1812 = vld [vmem:[%s4 + $0xa8] sm:$0xff]
      %v1813 = vld [vmem:[%s4 + $0xb0] sm:$0xff]
      %v1814 = vld [vmem:[%s4 + $0xb8] sm:$0xff]
      %v1815 = vld [vmem:[%s4 + $0xc0] sm:$0xff]
      %v1816 = vld [vmem:[%s4 + $0xc8] sm:$0xff]
      %v1817 = vld [vmem:[%s4 + $0xd0] sm:$0xff]
      %v1818 = vld [vmem:[%s4 + $0xd8] sm:$0xff]
      %v1819 = vld [vmem:[%s4 + $0xe0] sm:$0xff]
      %v1820 = vld [vmem:[%s4 + $0xe8] sm:$0xff]
      %v1821 = vld [vmem:[%s4 + $0xf0] sm:$0xff]
      %v1822 = vld [vmem:[%s4 + $0xf8] sm:$0xff]
      %v1823 = vmul.f32 %v1439, %v1759
      %v1824 = vmul.f32 %v1441, %v1760
      %v1825 = vmul.f32 %v1443, %v1761
      %v1826 = vmul.f32 %v1445, %v1762
      %v1827 = vmul.f32 %v1449, %v1763
      %v1828 = vmul.f32 %v1451, %v1764
      %v1829 = vmul.f32 %v1453, %v1765
      %v1830 = vmul.f32 %v1455, %v1766
      %v1831 = vmul.f32 %v1459, %v1767
      %v1832 = vmul.f32 %v1461, %v1768
      %v1833 = vmul.f32 %v1463, %v1769
      %v1834 = vmul.f32 %v1465, %v1770
      %v1835 = vmul.f32 %v1469, %v1771
      %v1836 = vmul.f32 %v1471, %v1772
      %v1837 = vmul.f32 %v1473, %v1773
      %v1838 = vmul.f32 %v1475, %v1774
      %v1839 = vmul.f32 %v1479, %v1775
      %v1840 = vmul.f32 %v1481, %v1776
      %v1841 = vmul.f32 %v1483, %v1777
      %v1842 = vmul.f32 %v1485, %v1778
      %v1843 = vmul.f32 %v1489, %v1779
      %v1844 = vmul.f32 %v1491, %v1780
      %v1845 = vmul.f32 %v1493, %v1781
      %v1846 = vmul.f32 %v1495, %v1782
      %v1847 = vmul.f32 %v1499, %v1783
      %v1848 = vmul.f32 %v1501, %v1784
      %v1849 = vmul.f32 %v1503, %v1785
      %v1850 = vmul.f32 %v1505, %v1786
      %v1851 = vmul.f32 %v1509, %v1787
      %v1852 = vmul.f32 %v1511, %v1788
      %v1853 = vmul.f32 %v1513, %v1789
      %v1854 = vmul.f32 %v1515, %v1790
      %v1855 = vmul.f32 %v1441, %v1791
      %v1856 = vmul.f32 %v1439, %v1792
      %v1857 = vmul.f32 %v1445, %v1793
      %v1858 = vmul.f32 %v1443, %v1794
      %v1859 = vmul.f32 %v1451, %v1795
      %v1860 = vmul.f32 %v1449, %v1796
      %v1861 = vmul.f32 %v1455, %v1797
      %v1862 = vmul.f32 %v1453, %v1798
      %v1863 = vmul.f32 %v1461, %v1799
      %v1864 = vmul.f32 %v1459, %v1800
      %v1865 = vmul.f32 %v1465, %v1801
      %v1866 = vmul.f32 %v1463, %v1802
      %v1867 = vmul.f32 %v1471, %v1803
      %v1868 = vmul.f32 %v1469, %v1804
      %v1869 = vmul.f32 %v1475, %v1805
      %v1870 = vmul.f32 %v1473, %v1806
      %v1871 = vmul.f32 %v1481, %v1807
      %v1872 = vmul.f32 %v1479, %v1808
      %v1873 = vmul.f32 %v1485, %v1809
      %v1874 = vmul.f32 %v1483, %v1810
      %v1875 = vmul.f32 %v1491, %v1811
      %v1876 = vmul.f32 %v1489, %v1812
      %v1877 = vmul.f32 %v1495, %v1813
      %v1878 = vmul.f32 %v1493, %v1814
      %v1879 = vmul.f32 %v1501, %v1815
      %v1880 = vmul.f32 %v1499, %v1816
      %v1881 = vmul.f32 %v1505, %v1817
      %v1882 = vmul.f32 %v1503, %v1818
      %v1883 = vmul.f32 %v1511, %v1819
      %v1884 = vmul.f32 %v1509, %v1820
      %v1885 = vmul.f32 %v1515, %v1821
      %v1886 = vmul.f32 %v1513, %v1822
      %v1887 = vadd.f32 %v1823, %v1855
      %v1888 = vadd.f32 %v1824, %v1856
      %v1889 = vadd.f32 %v1825, %v1857
      %v1890 = vadd.f32 %v1826, %v1858
      %v1891 = vadd.f32 %v1827, %v1859
      %v1892 = vadd.f32 %v1828, %v1860
      %v1893 = vadd.f32 %v1829, %v1861
      %v1894 = vadd.f32 %v1830, %v1862
      %v1895 = vadd.f32 %v1831, %v1863
      %v1896 = vadd.f32 %v1832, %v1864
      %v1897 = vadd.f32 %v1833, %v1865
      %v1898 = vadd.f32 %v1834, %v1866
      %v1899 = vadd.f32 %v1835, %v1867
      %v1900 = vadd.f32 %v1836, %v1868
      %v1901 = vadd.f32 %v1837, %v1869
      %v1902 = vadd.f32 %v1838, %v1870
      %v1903 = vadd.f32 %v1839, %v1871
      %v1904 = vadd.f32 %v1840, %v1872
      %v1905 = vadd.f32 %v1841, %v1873
      %v1906 = vadd.f32 %v1842, %v1874
      %v1907 = vadd.f32 %v1843, %v1875
      %v1908 = vadd.f32 %v1844, %v1876
      %v1909 = vadd.f32 %v1845, %v1877
      %v1910 = vadd.f32 %v1846, %v1878
      %v1911 = vadd.f32 %v1847, %v1879
      %v1912 = vadd.f32 %v1848, %v1880
      %v1913 = vadd.f32 %v1849, %v1881
      %v1914 = vadd.f32 %v1850, %v1882
      %v1915 = vadd.f32 %v1851, %v1883
      %v1916 = vadd.f32 %v1852, %v1884
      %v1917 = vadd.f32 %v1853, %v1885
      %v1918 = vadd.f32 %v1854, %v1886
      %v1919 = vpack.c.bf16 %v1889, %v1887
      %v1920 = vpack.c.bf16 %v1890, %v1888
      %v1921 = vpack.c.bf16 %v1893, %v1891
      %v1922 = vpack.c.bf16 %v1894, %v1892
      %v1923 = vpack.c.bf16 %v1897, %v1895
      %v1924 = vpack.c.bf16 %v1898, %v1896
      %v1925 = vpack.c.bf16 %v1901, %v1899
      %v1926 = vpack.c.bf16 %v1902, %v1900
      %v1927 = vpack.c.bf16 %v1905, %v1903
      %v1928 = vpack.c.bf16 %v1906, %v1904
      %v1929 = vpack.c.bf16 %v1909, %v1907
      %v1930 = vpack.c.bf16 %v1910, %v1908
      %v1931 = vpack.c.bf16 %v1913, %v1911
      %v1932 = vpack.c.bf16 %v1914, %v1912
      %v1933 = vpack.c.bf16 %v1917, %v1915
      %v1934 = vpack.c.bf16 %v1918, %v1916
      %v1935 = vmul.f32 %v1552, %v1759
      %v1936 = vmul.f32 %v1554, %v1760
      %v1937 = vmul.f32 %v1556, %v1761
      %v1938 = vmul.f32 %v1558, %v1762
      %v1939 = vmul.f32 %v1562, %v1763
      %v1940 = vmul.f32 %v1564, %v1764
      %v1941 = vmul.f32 %v1566, %v1765
      %v1942 = vmul.f32 %v1568, %v1766
      %v1943 = vmul.f32 %v1572, %v1767
      %v1944 = vmul.f32 %v1574, %v1768
      %v1945 = vmul.f32 %v1576, %v1769
      %v1946 = vmul.f32 %v1578, %v1770
      %v1947 = vmul.f32 %v1582, %v1771
      %v1948 = vmul.f32 %v1584, %v1772
      %v1949 = vmul.f32 %v1586, %v1773
      %v1950 = vmul.f32 %v1588, %v1774
      %v1951 = vmul.f32 %v1592, %v1775
      %v1952 = vmul.f32 %v1594, %v1776
      %v1953 = vmul.f32 %v1596, %v1777
      %v1954 = vmul.f32 %v1598, %v1778
      %v1955 = vmul.f32 %v1602, %v1779
      %v1956 = vmul.f32 %v1604, %v1780
      %v1957 = vmul.f32 %v1606, %v1781
      %v1958 = vmul.f32 %v1608, %v1782
      %v1959 = vmul.f32 %v1612, %v1783
      %v1960 = vmul.f32 %v1614, %v1784
      %v1961 = vmul.f32 %v1616, %v1785
      %v1962 = vmul.f32 %v1618, %v1786
      %v1963 = vmul.f32 %v1622, %v1787
      %v1964 = vmul.f32 %v1624, %v1788
      %v1965 = vmul.f32 %v1626, %v1789
      %v1966 = vmul.f32 %v1628, %v1790
      %v1967 = vmul.f32 %v1554, %v1791
      %v1968 = vmul.f32 %v1552, %v1792
      %v1969 = vmul.f32 %v1558, %v1793
      %v1970 = vmul.f32 %v1556, %v1794
      %v1971 = vmul.f32 %v1564, %v1795
      %v1972 = vmul.f32 %v1562, %v1796
      %v1973 = vmul.f32 %v1568, %v1797
      %v1974 = vmul.f32 %v1566, %v1798
      %v1975 = vmul.f32 %v1574, %v1799
      %v1976 = vmul.f32 %v1572, %v1800
      %v1977 = vmul.f32 %v1578, %v1801
      %v1978 = vmul.f32 %v1576, %v1802
      %v1979 = vmul.f32 %v1584, %v1803
      %v1980 = vmul.f32 %v1582, %v1804
      %v1981 = vmul.f32 %v1588, %v1805
      %v1982 = vmul.f32 %v1586, %v1806
      %v1983 = vmul.f32 %v1594, %v1807
      %v1984 = vmul.f32 %v1592, %v1808
      %v1985 = vmul.f32 %v1598, %v1809
      %v1986 = vmul.f32 %v1596, %v1810
      %v1987 = vmul.f32 %v1604, %v1811
      %v1988 = vmul.f32 %v1602, %v1812
      %v1989 = vmul.f32 %v1608, %v1813
      %v1990 = vmul.f32 %v1606, %v1814
      %v1991 = vmul.f32 %v1614, %v1815
      %v1992 = vmul.f32 %v1612, %v1816
      %v1993 = vmul.f32 %v1618, %v1817
      %v1994 = vmul.f32 %v1616, %v1818
      %v1995 = vmul.f32 %v1624, %v1819
      %v1996 = vmul.f32 %v1622, %v1820
      %v1997 = vmul.f32 %v1628, %v1821
      %v1998 = vmul.f32 %v1626, %v1822
      %v1999 = vadd.f32 %v1935, %v1967
      %v2000 = vadd.f32 %v1936, %v1968
      %v2001 = vadd.f32 %v1937, %v1969
      %v2002 = vadd.f32 %v1938, %v1970
      %v2003 = vadd.f32 %v1939, %v1971
      %v2004 = vadd.f32 %v1940, %v1972
      %v2005 = vadd.f32 %v1941, %v1973
      %v2006 = vadd.f32 %v1942, %v1974
      %v2007 = vadd.f32 %v1943, %v1975
      %v2008 = vadd.f32 %v1944, %v1976
      %v2009 = vadd.f32 %v1945, %v1977
      %v2010 = vadd.f32 %v1946, %v1978
      %v2011 = vadd.f32 %v1947, %v1979
      %v2012 = vadd.f32 %v1948, %v1980
      %v2013 = vadd.f32 %v1949, %v1981
      %v2014 = vadd.f32 %v1950, %v1982
      %v2015 = vadd.f32 %v1951, %v1983
      %v2016 = vadd.f32 %v1952, %v1984
      %v2017 = vadd.f32 %v1953, %v1985
      %v2018 = vadd.f32 %v1954, %v1986
      %v2019 = vadd.f32 %v1955, %v1987
      %v2020 = vadd.f32 %v1956, %v1988
      %v2021 = vadd.f32 %v1957, %v1989
      %v2022 = vadd.f32 %v1958, %v1990
      %v2023 = vadd.f32 %v1959, %v1991
      %v2024 = vadd.f32 %v1960, %v1992
      %v2025 = vadd.f32 %v1961, %v1993
      %v2026 = vadd.f32 %v1962, %v1994
      %v2027 = vadd.f32 %v1963, %v1995
      %v2028 = vadd.f32 %v1964, %v1996
      %v2029 = vadd.f32 %v1965, %v1997
      %v2030 = vadd.f32 %v1966, %v1998
      %v2031 = vpack.c.bf16 %v2001, %v1999
      %v2032 = vpack.c.bf16 %v2002, %v2000
      %v2033 = vpack.c.bf16 %v2005, %v2003
      %v2034 = vpack.c.bf16 %v2006, %v2004
      %v2035 = vpack.c.bf16 %v2009, %v2007
      %v2036 = vpack.c.bf16 %v2010, %v2008
      %v2037 = vpack.c.bf16 %v2013, %v2011
      %v2038 = vpack.c.bf16 %v2014, %v2012
      %v2039 = vpack.c.bf16 %v2017, %v2015
      %v2040 = vpack.c.bf16 %v2018, %v2016
      %v2041 = vpack.c.bf16 %v2021, %v2019
      %v2042 = vpack.c.bf16 %v2022, %v2020
      %v2043 = vpack.c.bf16 %v2025, %v2023
      %v2044 = vpack.c.bf16 %v2026, %v2024
      %v2045 = vpack.c.bf16 %v2029, %v2027
      %v2046 = vpack.c.bf16 %v2030, %v2028
      %v2047 = vlaneseq
      %v2048 = vshrl.u32 %v2047, 7
      %v2049 = vadd.s32 %v2048, 8
      %v2050 = vadd.s32 %v2048, 16
      %v2051 = vadd.s32 %v2048, 24
      %v2052 = vadd.s32 %v2048, 32
      %v2053 = vadd.s32 %v2048, 40
      %v2054 = vadd.s32 %v2048, 48
      %v2055 = vadd.s32 %v2048, 56
      %v2056 = vadd.s32 %v2048, 64
      %v2057 = vadd.s32 %v2048, 72
      %v2058 = vadd.s32 %v2048, 80
      %v2059 = vadd.s32 %v2048, 88
      %v2060 = vadd.s32 %v2048, 96
      %v2061 = vadd.s32 %v2048, 104
      %v2062 = vadd.s32 %v2048, 112
      %v2063 = vadd.s32 %v2048, 120
      %v2064 = vlaneseq
      %v2065 = vand.u32 %v2064, 127
      %vm2066 = vcmp.le.s32.totalorder %v2065, %v2048
      %vm2067 = vcmp.le.s32.totalorder %v2065, %v2049
      %vm2068 = vcmp.le.s32.totalorder %v2065, %v2050
      %vm2069 = vcmp.le.s32.totalorder %v2065, %v2051
      %vm2070 = vcmp.le.s32.totalorder %v2065, %v2052
      %vm2071 = vcmp.le.s32.totalorder %v2065, %v2053
      %vm2072 = vcmp.le.s32.totalorder %v2065, %v2054
      %vm2073 = vcmp.le.s32.totalorder %v2065, %v2055
      %vm2074 = vcmp.le.s32.totalorder %v2065, %v2056
      %vm2075 = vcmp.le.s32.totalorder %v2065, %v2057
      %vm2076 = vcmp.le.s32.totalorder %v2065, %v2058
      %vm2077 = vcmp.le.s32.totalorder %v2065, %v2059
      %vm2078 = vcmp.le.s32.totalorder %v2065, %v2060
      %vm2079 = vcmp.le.s32.totalorder %v2065, %v2061
      %vm2080 = vcmp.le.s32.totalorder %v2065, %v2062
      %vm2081 = vcmp.le.s32.totalorder %v2065, %v2063
      %vm2082 = vcmask 523264
      %v2084 = vsel %vm2082, %v1920, 0
      %v2087 = vsel %vm2082, %v1922, 0
      %v2090 = vsel %vm2082, %v1924, 0
      %v2093 = vsel %vm2082, %v1926, 0
      %v2096 = vsel %vm2082, %v1928, 0
      %v2099 = vsel %vm2082, %v1930, 0
      %v2102 = vsel %vm2082, %v1932, 0
      %v2105 = vsel %vm2082, %v1934, 0
      %v2108 = vsel %vm2082, %v2032, 0
      %v2111 = vsel %vm2082, %v2034, 0
      %v2114 = vsel %vm2082, %v2036, 0
      %v2117 = vsel %vm2082, %v2038, 0
      %v2120 = vsel %vm2082, %v2040, 0
      %v2123 = vsel %vm2082, %v2042, 0
      %v2126 = vsel %vm2082, %v2044, 0
      %v2129 = vsel %vm2082, %v2046, 0
      %2131 = vmatprep.subr.bf16.mxu0 0
      %2132 = vmatpush1.bf16.xpose.msra.mxu0 %v2108
      %2133 = vmatprep.subr.bf16.mxu0 0
      %2134 = vmatpush1.bf16.xpose.msra.mxu0 %v2111
      %2135 = vmatprep.subr.bf16.mxu0 0
      %2136 = vmatpush1.bf16.xpose.msra.mxu0 %v2114
      %2137 = vmatprep.subr.bf16.mxu0 0
      %2138 = vmatpush1.bf16.xpose.msra.mxu0 %v2117
      %2139 = vmatprep.subr.bf16.mxu0 0
      %2140 = vmatpush1.bf16.xpose.msra.mxu0 %v2120
      %2141 = vmatprep.subr.bf16.mxu0 0
      %2142 = vmatpush1.bf16.xpose.msra.mxu0 %v2123
      %2143 = vmatprep.subr.bf16.mxu0 0
      %2144 = vmatpush1.bf16.xpose.msra.mxu0 %v2126
      %2145 = vmatprep.subr.bf16.mxu0 0
      %2146 = vmatpush1.bf16.xpose.msra.mxu0 %v2129
      %2147 = vmatprep.subr.bf16.mxu0 0
      %2148 = vmatpush1.bf16.xpose.msra.mxu0 0
      %2149 = vmatprep.subr.bf16.mxu0 0
      %2150 = vmatpush1.bf16.xpose.msra.mxu0 0
      %2151 = vmatprep.subr.bf16.mxu0 0
      %2152 = vmatpush1.bf16.xpose.msra.mxu0 0
      %2153 = vmatprep.subr.bf16.mxu0 0
      %2154 = vmatpush1.bf16.xpose.msra.mxu0 0
      %2155 = vmatprep.subr.bf16.mxu0 0
      %2156 = vmatpush1.bf16.xpose.msra.mxu0 0
      %2157 = vmatprep.subr.bf16.mxu0 0
      %2158 = vmatpush1.bf16.xpose.msra.mxu0 0
      %2159 = vmatprep.subr.bf16.mxu0 0
      %2160 = vmatpush1.bf16.xpose.msra.mxu0 0
      %2161 = vmatprep.subr.bf16.mxu0 0
      %2162 = vmatpush1.bf16.xpose.msra.mxu0 0
      %2163 = vmatprep.mubr.bf16.mxu0 0
      %2164 = vmatmul.mubr.bf16.gmra.mrb[0].mxu0 %v2084
      %v2165 = vpop.f32.mrb[0].mxu0
      %v2166 = vadd.f32 0.0, %v2165
      %v2167 = vpop.f32.mrb[0].mxu0
      %v2168 = vpop.f32.mrb[0].mxu0
      %v2169 = vadd.f32 0.0, %v2168
      %v2170 = vpop.f32.mrb[0].mxu0
      %2171 = vmatprep.mubr.bf16.mxu0 0
      %2172 = vmatmul.mubr.bf16.gmra.mrb[0].mxu0 %v2087
      %v2173 = vpop.f32.mrb[0].mxu0
      %v2174 = vadd.f32 0.0, %v2173
      %v2175 = vpop.f32.mrb[0].mxu0
      %v2176 = vpop.f32.mrb[0].mxu0
      %v2177 = vadd.f32 0.0, %v2176
      %v2178 = vpop.f32.mrb[0].mxu0
      %2179 = vmatprep.mubr.bf16.mxu0 0
      %2180 = vmatmul.mubr.bf16.gmra.mrb[0].mxu0 %v2090
      %v2181 = vpop.f32.mrb[0].mxu0
      %v2182 = vadd.f32 0.0, %v2181
      %v2183 = vpop.f32.mrb[0].mxu0
      %v2184 = vpop.f32.mrb[0].mxu0
      %v2185 = vadd.f32 0.0, %v2184
      %v2186 = vpop.f32.mrb[0].mxu0
      %2187 = vmatprep.mubr.bf16.mxu0 0
      %2188 = vmatmul.mubr.bf16.gmra.mrb[0].mxu0 %v2093
      %v2189 = vpop.f32.mrb[0].mxu0
      %v2190 = vadd.f32 0.0, %v2189
      %v2191 = vpop.f32.mrb[0].mxu0
      %v2192 = vpop.f32.mrb[0].mxu0
      %v2193 = vadd.f32 0.0, %v2192
      %v2194 = vpop.f32.mrb[0].mxu0
      %2195 = vmatprep.mubr.bf16.mxu0 0
      %2196 = vmatmul.mubr.bf16.gmra.mrb[0].mxu0 %v2096
      %v2197 = vpop.f32.mrb[0].mxu0
      %v2198 = vadd.f32 0.0, %v2197
      %v2199 = vpop.f32.mrb[0].mxu0
      %v2200 = vpop.f32.mrb[0].mxu0
      %v2201 = vadd.f32 0.0, %v2200
      %v2202 = vpop.f32.mrb[0].mxu0
      %2203 = vmatprep.mubr.bf16.mxu0 0
      %2204 = vmatmul.mubr.bf16.gmra.mrb[0].mxu0 %v2099
      %v2205 = vpop.f32.mrb[0].mxu0
      %v2206 = vadd.f32 0.0, %v2205
      %v2207 = vpop.f32.mrb[0].mxu0
      %v2208 = vpop.f32.mrb[0].mxu0
      %v2209 = vadd.f32 0.0, %v2208
      %v2210 = vpop.f32.mrb[0].mxu0
      %2211 = vmatprep.mubr.bf16.mxu0 0
      %2212 = vmatmul.mubr.bf16.gmra.mrb[0].mxu0 %v2102
      %v2213 = vpop.f32.mrb[0].mxu0
      %v2214 = vadd.f32 0.0, %v2213
      %v2215 = vpop.f32.mrb[0].mxu0
      %v2216 = vpop.f32.mrb[0].mxu0
      %v2217 = vadd.f32 0.0, %v2216
      %v2218 = vpop.f32.mrb[0].mxu0
      %2219 = vmatprep.mubr.bf16.mxu0 0
      %2220 = vmatmul.mubr.bf16.gmra.mrb[0].mxu0 %v2105
      %v2221 = vpop.f32.mrb[0].mxu0
      %v2222 = vadd.f32 0.0, %v2221
      %v2223 = vpop.f32.mrb[0].mxu0
      %v2224 = vpop.f32.mrb[0].mxu0
      %v2225 = vadd.f32 0.0, %v2224
      %v2226 = vpop.f32.mrb[0].mxu0
      %2227 = vdwg.mxu0
      %v2229 = vsel %vm2082, %v1919, 0
      %v2232 = vsel %vm2082, %v1921, 0
      %v2235 = vsel %vm2082, %v1923, 0
      %v2238 = vsel %vm2082, %v1925, 0
      %v2241 = vsel %vm2082, %v1927, 0
      %v2244 = vsel %vm2082, %v1929, 0
      %v2247 = vsel %vm2082, %v1931, 0
      %v2250 = vsel %vm2082, %v1933, 0
      %v2253 = vsel %vm2082, %v2031, 0
      %v2256 = vsel %vm2082, %v2033, 0
      %v2259 = vsel %vm2082, %v2035, 0
      %v2262 = vsel %vm2082, %v2037, 0
      %v2265 = vsel %vm2082, %v2039, 0
      %v2268 = vsel %vm2082, %v2041, 0
      %v2271 = vsel %vm2082, %v2043, 0
      %v2274 = vsel %vm2082, %v2045, 0
      %2276 = vmatprep.subr.bf16.mxu0 0
      %2277 = vmatpush1.bf16.xpose.msra.mxu0 %v2253
      %2278 = vmatprep.subr.bf16.mxu0 0
      %2279 = vmatpush1.bf16.xpose.msra.mxu0 %v2256
      %2280 = vmatprep.subr.bf16.mxu0 0
      %2281 = vmatpush1.bf16.xpose.msra.mxu0 %v2259
      %2282 = vmatprep.subr.bf16.mxu0 0
      %2283 = vmatpush1.bf16.xpose.msra.mxu0 %v2262
      %2284 = vmatprep.subr.bf16.mxu0 0
      %2285 = vmatpush1.bf16.xpose.msra.mxu0 %v2265
      %2286 = vmatprep.subr.bf16.mxu0 0
      %2287 = vmatpush1.bf16.xpose.msra.mxu0 %v2268
      %2288 = vmatprep.subr.bf16.mxu0 0
      %2289 = vmatpush1.bf16.xpose.msra.mxu0 %v2271
      %2290 = vmatprep.subr.bf16.mxu0 0
      %2291 = vmatpush1.bf16.xpose.msra.mxu0 %v2274
      %2292 = vmatprep.subr.bf16.mxu0 0
      %2293 = vmatpush1.bf16.xpose.msra.mxu0 0
      %2294 = vmatprep.subr.bf16.mxu0 0
      %2295 = vmatpush1.bf16.xpose.msra.mxu0 0
      %2296 = vmatprep.subr.bf16.mxu0 0
      %2297 = vmatpush1.bf16.xpose.msra.mxu0 0
      %2298 = vmatprep.subr.bf16.mxu0 0
      %2299 = vmatpush1.bf16.xpose.msra.mxu0 0
      %2300 = vmatprep.subr.bf16.mxu0 0
      %2301 = vmatpush1.bf16.xpose.msra.mxu0 0
      %2302 = vmatprep.subr.bf16.mxu0 0
      %2303 = vmatpush1.bf16.xpose.msra.mxu0 0
      %2304 = vmatprep.subr.bf16.mxu0 0
      %2305 = vmatpush1.bf16.xpose.msra.mxu0 0
      %2306 = vmatprep.subr.bf16.mxu0 0
      %2307 = vmatpush1.bf16.xpose.msra.mxu0 0
      %2308 = vmatprep.mubr.bf16.mxu0 0
      %2309 = vmatmul.mubr.bf16.gmra.mrb[0].mxu0 %v2229
      %v2310 = vpop.f32.mrb[0].mxu0
      %v2311 = vadd.f32 %v2166, %v2310
      %v2312 = vpop.f32.mrb[0].mxu0
      %v2313 = vpop.f32.mrb[0].mxu0
      %v2314 = vadd.f32 %v2169, %v2313
      %v2315 = vpop.f32.mrb[0].mxu0
      %2316 = vmatprep.mubr.bf16.mxu0 0
      %2317 = vmatmul.mubr.bf16.gmra.mrb[0].mxu0 %v2232
      %v2318 = vpop.f32.mrb[0].mxu0
      %v2319 = vadd.f32 %v2174, %v2318
      %v2320 = vpop.f32.mrb[0].mxu0
      %v2321 = vpop.f32.mrb[0].mxu0
      %v2322 = vadd.f32 %v2177, %v2321
      %v2323 = vpop.f32.mrb[0].mxu0
      %2324 = vmatprep.mubr.bf16.mxu0 0
      %2325 = vmatmul.mubr.bf16.gmra.mrb[0].mxu0 %v2235
      %v2326 = vpop.f32.mrb[0].mxu0
      %v2327 = vadd.f32 %v2182, %v2326
      %v2328 = vpop.f32.mrb[0].mxu0
      %v2329 = vpop.f32.mrb[0].mxu0
      %v2330 = vadd.f32 %v2185, %v2329
      %v2331 = vpop.f32.mrb[0].mxu0
      %2332 = vmatprep.mubr.bf16.mxu0 0
      %2333 = vmatmul.mubr.bf16.gmra.mrb[0].mxu0 %v2238
      %v2334 = vpop.f32.mrb[0].mxu0
      %v2335 = vadd.f32 %v2190, %v2334
      %v2336 = vpop.f32.mrb[0].mxu0
      %v2337 = vpop.f32.mrb[0].mxu0
      %v2338 = vadd.f32 %v2193, %v2337
      %v2339 = vpop.f32.mrb[0].mxu0
      %2340 = vmatprep.mubr.bf16.mxu0 0
      %2341 = vmatmul.mubr.bf16.gmra.mrb[0].mxu0 %v2241
      %v2342 = vpop.f32.mrb[0].mxu0
      %v2343 = vadd.f32 %v2198, %v2342
      %v2344 = vpop.f32.mrb[0].mxu0
      %v2345 = vpop.f32.mrb[0].mxu0
      %v2346 = vadd.f32 %v2201, %v2345
      %v2347 = vpop.f32.mrb[0].mxu0
      %2348 = vmatprep.mubr.bf16.mxu0 0
      %2349 = vmatmul.mubr.bf16.gmra.mrb[0].mxu0 %v2244
      %v2350 = vpop.f32.mrb[0].mxu0
      %v2351 = vadd.f32 %v2206, %v2350
      %v2352 = vpop.f32.mrb[0].mxu0
      %v2353 = vpop.f32.mrb[0].mxu0
      %v2354 = vadd.f32 %v2209, %v2353
      %v2355 = vpop.f32.mrb[0].mxu0
      %2356 = vmatprep.mubr.bf16.mxu0 0
      %2357 = vmatmul.mubr.bf16.gmra.mrb[0].mxu0 %v2247
      %v2358 = vpop.f32.mrb[0].mxu0
      %v2359 = vadd.f32 %v2214, %v2358
      %v2360 = vpop.f32.mrb[0].mxu0
      %v2361 = vpop.f32.mrb[0].mxu0
      %v2362 = vadd.f32 %v2217, %v2361
      %v2363 = vpop.f32.mrb[0].mxu0
      %2364 = vmatprep.mubr.bf16.mxu0 0
      %2365 = vmatmul.mubr.bf16.gmra.mrb[0].mxu0 %v2250
      %v2366 = vpop.f32.mrb[0].mxu0
      %v2367 = vadd.f32 %v2222, %v2366
      %v2368 = vpop.f32.mrb[0].mxu0
      %v2369 = vpop.f32.mrb[0].mxu0
      %v2370 = vadd.f32 %v2225, %v2369
      %v2371 = vpop.f32.mrb[0].mxu0
      %2372 = vdwg.mxu0
      %v2373 = vsel %vm2066, %v2311, -1e+30
      %v2374 = vsel %vm2067, %v2314, -1e+30
      %v2375 = vsel %vm2068, %v2319, -1e+30
      %v2376 = vsel %vm2069, %v2322, -1e+30
      %v2377 = vsel %vm2070, %v2327, -1e+30
      %v2378 = vsel %vm2071, %v2330, -1e+30
      %v2379 = vsel %vm2072, %v2335, -1e+30
      %v2380 = vsel %vm2073, %v2338, -1e+30
      %v2381 = vsel %vm2074, %v2343, -1e+30
      %v2382 = vsel %vm2075, %v2346, -1e+30
      %v2383 = vsel %vm2076, %v2351, -1e+30
      %v2384 = vsel %vm2077, %v2354, -1e+30
      %v2385 = vsel %vm2078, %v2359, -1e+30
      %v2386 = vsel %vm2079, %v2362, -1e+30
      %v2387 = vsel %vm2080, %v2367, -1e+30
      %v2388 = vsel %vm2081, %v2370, -1e+30
      %2389 = vmax.xlane.f32.xlu0 %v2373
      %v2390 = vpop.xlane.xlu0 %2389
      %2391 = vmax.xlane.f32.xlu0 %v2374
      %v2392 = vpop.xlane.xlu0 %2391
      %2393 = vmax.xlane.f32.xlu0 %v2375
      %v2394 = vpop.xlane.xlu0 %2393
      %2395 = vmax.xlane.f32.xlu0 %v2376
      %v2396 = vpop.xlane.xlu0 %2395
      %2397 = vmax.xlane.f32.xlu0 %v2377
      %v2398 = vpop.xlane.xlu0 %2397
      %2399 = vmax.xlane.f32.xlu0 %v2378
      %v2400 = vpop.xlane.xlu0 %2399
      %2401 = vmax.xlane.f32.xlu0 %v2379
      %v2402 = vpop.xlane.xlu0 %2401
      %2403 = vmax.xlane.f32.xlu0 %v2380
      %v2404 = vpop.xlane.xlu0 %2403
      %2405 = vmax.xlane.f32.xlu0 %v2381
      %v2406 = vpop.xlane.xlu0 %2405
      %2407 = vmax.xlane.f32.xlu0 %v2382
      %v2408 = vpop.xlane.xlu0 %2407
      %2409 = vmax.xlane.f32.xlu0 %v2383
      %v2410 = vpop.xlane.xlu0 %2409
      %2411 = vmax.xlane.f32.xlu0 %v2384
      %v2412 = vpop.xlane.xlu0 %2411
      %2413 = vmax.xlane.f32.xlu0 %v2385
      %v2414 = vpop.xlane.xlu0 %2413
      %2415 = vmax.xlane.f32.xlu0 %v2386
      %v2416 = vpop.xlane.xlu0 %2415
      %2417 = vmax.xlane.f32.xlu0 %v2387
      %v2418 = vpop.xlane.xlu0 %2417
      %2419 = vmax.xlane.f32.xlu0 %v2388
      %v2420 = vpop.xlane.xlu0 %2419
      %v2421 = vsub.f32 %v2373, %v2390
      %v2422 = vsub.f32 %v2374, %v2392
      %v2423 = vsub.f32 %v2375, %v2394
      %v2424 = vsub.f32 %v2376, %v2396
      %v2425 = vsub.f32 %v2377, %v2398
      %v2426 = vsub.f32 %v2378, %v2400
      %v2427 = vsub.f32 %v2379, %v2402
      %v2428 = vsub.f32 %v2380, %v2404
      %v2429 = vsub.f32 %v2381, %v2406
      %v2430 = vsub.f32 %v2382, %v2408
      %v2431 = vsub.f32 %v2383, %v2410
      %v2432 = vsub.f32 %v2384, %v2412
      %v2433 = vsub.f32 %v2385, %v2414
      %v2434 = vsub.f32 %v2386, %v2416
      %v2435 = vsub.f32 %v2387, %v2418
      %v2436 = vsub.f32 %v2388, %v2420
      %v2437 = vmul.f32 %v2421, 1.442695
      %v2438 = vpow.pop %v2437
      %v2439 = vmul.f32 %v2422, 1.442695
      %v2440 = vpow.pop %v2439
      %v2441 = vmul.f32 %v2423, 1.442695
      %v2442 = vpow.pop %v2441
      %v2443 = vmul.f32 %v2424, 1.442695
      %v2444 = vpow.pop %v2443
      %v2445 = vmul.f32 %v2425, 1.442695
      %v2446 = vpow.pop %v2445
      %v2447 = vmul.f32 %v2426, 1.442695
      %v2448 = vpow.pop %v2447
      %v2449 = vmul.f32 %v2427, 1.442695
      %v2450 = vpow.pop %v2449
      %v2451 = vmul.f32 %v2428, 1.442695
      %v2452 = vpow.pop %v2451
      %v2453 = vmul.f32 %v2429, 1.442695
      %v2454 = vpow.pop %v2453
      %v2455 = vmul.f32 %v2430, 1.442695
      %v2456 = vpow.pop %v2455
      %v2457 = vmul.f32 %v2431, 1.442695
      %v2458 = vpow.pop %v2457
      %v2459 = vmul.f32 %v2432, 1.442695
      %v2460 = vpow.pop %v2459
      %v2461 = vmul.f32 %v2433, 1.442695
      %v2462 = vpow.pop %v2461
      %v2463 = vmul.f32 %v2434, 1.442695
      %v2464 = vpow.pop %v2463
      %v2465 = vmul.f32 %v2435, 1.442695
      %v2466 = vpow.pop %v2465
      %v2467 = vmul.f32 %v2436, 1.442695
      %v2468 = vpow.pop %v2467
      %2469 = vadd.xlane.f32.xlu0 %v2438
      %v2470 = vpop.xlane.xlu0 %2469
      %2471 = vadd.xlane.f32.xlu0 %v2440
      %v2472 = vpop.xlane.xlu0 %2471
      %2473 = vadd.xlane.f32.xlu0 %v2442
      %v2474 = vpop.xlane.xlu0 %2473
      %2475 = vadd.xlane.f32.xlu0 %v2444
      %v2476 = vpop.xlane.xlu0 %2475
      %2477 = vadd.xlane.f32.xlu0 %v2446
      %v2478 = vpop.xlane.xlu0 %2477
      %2479 = vadd.xlane.f32.xlu0 %v2448
      %v2480 = vpop.xlane.xlu0 %2479
      %2481 = vadd.xlane.f32.xlu0 %v2450
      %v2482 = vpop.xlane.xlu0 %2481
      %2483 = vadd.xlane.f32.xlu0 %v2452
      %v2484 = vpop.xlane.xlu0 %2483
      %2485 = vadd.xlane.f32.xlu0 %v2454
      %v2486 = vpop.xlane.xlu0 %2485
      %2487 = vadd.xlane.f32.xlu0 %v2456
      %v2488 = vpop.xlane.xlu0 %2487
      %2489 = vadd.xlane.f32.xlu0 %v2458
      %v2490 = vpop.xlane.xlu0 %2489
      %2491 = vadd.xlane.f32.xlu0 %v2460
      %v2492 = vpop.xlane.xlu0 %2491
      %2493 = vadd.xlane.f32.xlu0 %v2462
      %v2494 = vpop.xlane.xlu0 %2493
      %2495 = vadd.xlane.f32.xlu0 %v2464
      %v2496 = vpop.xlane.xlu0 %2495
      %2497 = vadd.xlane.f32.xlu0 %v2466
      %v2498 = vpop.xlane.xlu0 %2497
      %2499 = vadd.xlane.f32.xlu0 %v2468
      %v2500 = vpop.xlane.xlu0 %2499
      %v2501 = vpack.c.bf16 %v2440, %v2438
      %v2502 = vpack.c.bf16 %v2444, %v2442
      %v2503 = vpack.c.bf16 %v2448, %v2446
      %v2504 = vpack.c.bf16 %v2452, %v2450
      %v2505 = vpack.c.bf16 %v2456, %v2454
      %v2506 = vpack.c.bf16 %v2460, %v2458
      %v2507 = vpack.c.bf16 %v2464, %v2462
      %v2508 = vpack.c.bf16 %v2468, %v2466
      %2509 = vmatprep.subr.bf16.mxu0 0
      %2510 = vmatpush1.bf16.msra.mxu0 %v1743
      %2511 = vmatprep.subr.bf16.mxu0 0
      %2512 = vmatpush1.bf16.msra.mxu0 %v1745
      %2513 = vmatprep.subr.bf16.mxu0 0
      %2514 = vmatpush1.bf16.msra.mxu0 %v1747
      %2515 = vmatprep.subr.bf16.mxu0 0
      %2516 = vmatpush1.bf16.msra.mxu0 %v1749
      %2517 = vmatprep.subr.bf16.mxu0 0
      %2518 = vmatpush1.bf16.msra.mxu0 %v1751
      %2519 = vmatprep.subr.bf16.mxu0 0
      %2520 = vmatpush1.bf16.msra.mxu0 %v1753
      %2521 = vmatprep.subr.bf16.mxu0 0
      %2522 = vmatpush1.bf16.msra.mxu0 %v1755
      %2523 = vmatprep.subr.bf16.mxu0 0
      %2524 = vmatpush1.bf16.msra.mxu0 %v1757
      %2525 = vmatprep.subr.bf16.mxu0 0
      %2526 = vmatpush1.bf16.msra.mxu0 0
      %2527 = vmatprep.subr.bf16.mxu0 0
      %2528 = vmatpush1.bf16.msra.mxu0 0
      %2529 = vmatprep.subr.bf16.mxu0 0
      %2530 = vmatpush1.bf16.msra.mxu0 0
      %2531 = vmatprep.subr.bf16.mxu0 0
      %2532 = vmatpush1.bf16.msra.mxu0 0
      %2533 = vmatprep.subr.bf16.mxu0 0
      %2534 = vmatpush1.bf16.msra.mxu0 0
      %2535 = vmatprep.subr.bf16.mxu0 0
      %2536 = vmatpush1.bf16.msra.mxu0 0
      %2537 = vmatprep.subr.bf16.mxu0 0
      %2538 = vmatpush1.bf16.msra.mxu0 0
      %2539 = vmatprep.subr.bf16.mxu0 0
      %2540 = vmatpush1.bf16.msra.mxu0 0
      %2541 = vmatprep.mubr.bf16.mxu0 0
      %2542 = vmatmul.mubr.bf16.gmra.mrb[0].mxu0 %v2501
      %v2543 = vpop.f32.mrb[0].mxu0
      %v2544 = vadd.f32 0.0, %v2543
      %v2545 = vpop.f32.mrb[0].mxu0
      %v2546 = vpop.f32.mrb[0].mxu0
      %v2547 = vadd.f32 0.0, %v2546
      %v2548 = vpop.f32.mrb[0].mxu0
      %2549 = vmatprep.mubr.bf16.mxu0 0
      %2550 = vmatmul.mubr.bf16.gmra.mrb[0].mxu0 %v2502
      %v2551 = vpop.f32.mrb[0].mxu0
      %v2552 = vadd.f32 0.0, %v2551
      %v2553 = vpop.f32.mrb[0].mxu0
      %v2554 = vpop.f32.mrb[0].mxu0
      %v2555 = vadd.f32 0.0, %v2554
      %v2556 = vpop.f32.mrb[0].mxu0
      %2557 = vmatprep.mubr.bf16.mxu0 0
      %2558 = vmatmul.mubr.bf16.gmra.mrb[0].mxu0 %v2503
      %v2559 = vpop.f32.mrb[0].mxu0
      %v2560 = vadd.f32 0.0, %v2559
      %v2561 = vpop.f32.mrb[0].mxu0
      %v2562 = vpop.f32.mrb[0].mxu0
      %v2563 = vadd.f32 0.0, %v2562
      %v2564 = vpop.f32.mrb[0].mxu0
      %2565 = vmatprep.mubr.bf16.mxu0 0
      %2566 = vmatmul.mubr.bf16.gmra.mrb[0].mxu0 %v2504
      %v2567 = vpop.f32.mrb[0].mxu0
      %v2568 = vadd.f32 0.0, %v2567
      %v2569 = vpop.f32.mrb[0].mxu0
      %v2570 = vpop.f32.mrb[0].mxu0
      %v2571 = vadd.f32 0.0, %v2570
      %v2572 = vpop.f32.mrb[0].mxu0
      %2573 = vmatprep.mubr.bf16.mxu0 0
      %2574 = vmatmul.mubr.bf16.gmra.mrb[0].mxu0 %v2505
      %v2575 = vpop.f32.mrb[0].mxu0
      %v2576 = vadd.f32 0.0, %v2575
      %v2577 = vpop.f32.mrb[0].mxu0
      %v2578 = vpop.f32.mrb[0].mxu0
      %v2579 = vadd.f32 0.0, %v2578
      %v2580 = vpop.f32.mrb[0].mxu0
      %2581 = vmatprep.mubr.bf16.mxu0 0
      %2582 = vmatmul.mubr.bf16.gmra.mrb[0].mxu0 %v2506
      %v2583 = vpop.f32.mrb[0].mxu0
      %v2584 = vadd.f32 0.0, %v2583
      %v2585 = vpop.f32.mrb[0].mxu0
      %v2586 = vpop.f32.mrb[0].mxu0
      %v2587 = vadd.f32 0.0, %v2586
      %v2588 = vpop.f32.mrb[0].mxu0
      %2589 = vmatprep.mubr.bf16.mxu0 0
      %2590 = vmatmul.mubr.bf16.gmra.mrb[0].mxu0 %v2507
      %v2591 = vpop.f32.mrb[0].mxu0
      %v2592 = vadd.f32 0.0, %v2591
      %v2593 = vpop.f32.mrb[0].mxu0
      %v2594 = vpop.f32.mrb[0].mxu0
      %v2595 = vadd.f32 0.0, %v2594
      %v2596 = vpop.f32.mrb[0].mxu0
      %2597 = vmatprep.mubr.bf16.mxu0 0
      %2598 = vmatmul.mubr.bf16.gmra.mrb[0].mxu0 %v2508
      %v2599 = vpop.f32.mrb[0].mxu0
      %v2600 = vadd.f32 0.0, %v2599
      %v2601 = vpop.f32.mrb[0].mxu0
      %v2602 = vpop.f32.mrb[0].mxu0
      %v2603 = vadd.f32 0.0, %v2602
      %v2604 = vpop.f32.mrb[0].mxu0
      %2605 = vdwg.mxu0
      %v2606 = vrcp.pop %v2470
      %v2607 = vrcp.pop %v2472
      %v2608 = vrcp.pop %v2474
      %v2609 = vrcp.pop %v2476
      %v2610 = vrcp.pop %v2478
      %v2611 = vrcp.pop %v2480
      %v2612 = vrcp.pop %v2482
      %v2613 = vrcp.pop %v2484
      %v2614 = vrcp.pop %v2486
      %v2615 = vrcp.pop %v2488
      %v2616 = vrcp.pop %v2490
      %v2617 = vrcp.pop %v2492
      %v2618 = vrcp.pop %v2494
      %v2619 = vrcp.pop %v2496
      %v2620 = vrcp.pop %v2498
      %v2621 = vrcp.pop %v2500
      %v2622 = vmul.f32 %v2544, %v2606
      %v2623 = vmul.f32 %v2547, %v2607
      %v2624 = vmul.f32 %v2552, %v2608
      %v2625 = vmul.f32 %v2555, %v2609
      %v2626 = vmul.f32 %v2560, %v2610
      %v2627 = vmul.f32 %v2563, %v2611
      %v2628 = vmul.f32 %v2568, %v2612
      %v2629 = vmul.f32 %v2571, %v2613
      %v2630 = vmul.f32 %v2576, %v2614
      %v2631 = vmul.f32 %v2579, %v2615
      %v2632 = vmul.f32 %v2584, %v2616
      %v2633 = vmul.f32 %v2587, %v2617
      %v2634 = vmul.f32 %v2592, %v2618
      %v2635 = vmul.f32 %v2595, %v2619
      %v2636 = vmul.f32 %v2600, %v2620
      %v2637 = vmul.f32 %v2603, %v2621
      %v2638 = vpack.c.bf16 %v2623, %v2622
      %v2639 = vpack.c.bf16 %v2625, %v2624
      %v2640 = vpack.c.bf16 %v2627, %v2626
      %v2641 = vpack.c.bf16 %v2629, %v2628
      %v2642 = vpack.c.bf16 %v2631, %v2630
      %v2643 = vpack.c.bf16 %v2633, %v2632
      %v2644 = vpack.c.bf16 %v2635, %v2634
      %v2645 = vpack.c.bf16 %v2637, %v2636
      %2654 = vrot.lane.b32.xlu0 %v1920, 64
      %v2655 = vpop.permute.xlu0 %2654
      %2656 = vrot.lane.b32.xlu0 %v1922, 64
      %v2657 = vpop.permute.xlu0 %2656
      %2658 = vrot.lane.b32.xlu0 %v1924, 64
      %v2659 = vpop.permute.xlu0 %2658
      %2660 = vrot.lane.b32.xlu0 %v1926, 64
      %v2661 = vpop.permute.xlu0 %2660
      %2662 = vrot.lane.b32.xlu0 %v1928, 64
      %v2663 = vpop.permute.xlu0 %2662
      %2664 = vrot.lane.b32.xlu0 %v1930, 64
      %v2665 = vpop.permute.xlu0 %2664
      %2666 = vrot.lane.b32.xlu0 %v1932, 64
      %v2667 = vpop.permute.xlu0 %2666
      %2668 = vrot.lane.b32.xlu0 %v1934, 64
      %v2669 = vpop.permute.xlu0 %2668
      %2678 = vrot.lane.b32.xlu0 %v2032, 64
      %v2679 = vpop.permute.xlu0 %2678
      %2680 = vrot.lane.b32.xlu0 %v2034, 64
      %v2681 = vpop.permute.xlu0 %2680
      %2682 = vrot.lane.b32.xlu0 %v2036, 64
      %v2683 = vpop.permute.xlu0 %2682
      %2684 = vrot.lane.b32.xlu0 %v2038, 64
      %v2685 = vpop.permute.xlu0 %2684
      %2686 = vrot.lane.b32.xlu0 %v2040, 64
      %v2687 = vpop.permute.xlu0 %2686
      %2688 = vrot.lane.b32.xlu0 %v2042, 64
      %v2689 = vpop.permute.xlu0 %2688
      %2690 = vrot.lane.b32.xlu0 %v2044, 64
      %v2691 = vpop.permute.xlu0 %2690
      %2692 = vrot.lane.b32.xlu0 %v2046, 64
      %v2693 = vpop.permute.xlu0 %2692
      %v2695 = vsel %vm2082, %v2655, 0
      %v2698 = vsel %vm2082, %v2657, 0
      %v2701 = vsel %vm2082, %v2659, 0
      %v2704 = vsel %vm2082, %v2661, 0
      %v2707 = vsel %vm2082, %v2663, 0
      %v2710 = vsel %vm2082, %v2665, 0
      %v2713 = vsel %vm2082, %v2667, 0
      %v2716 = vsel %vm2082, %v2669, 0
      %v2719 = vsel %vm2082, %v2679, 0
      %v2722 = vsel %vm2082, %v2681, 0
      %v2725 = vsel %vm2082, %v2683, 0
      %v2728 = vsel %vm2082, %v2685, 0
      %v2731 = vsel %vm2082, %v2687, 0
      %v2734 = vsel %vm2082, %v2689, 0
      %v2737 = vsel %vm2082, %v2691, 0
      %v2740 = vsel %vm2082, %v2693, 0
      %2742 = vmatprep.subr.bf16.mxu0 0
      %2743 = vmatpush1.bf16.xpose.msra.mxu0 %v2719
      %2744 = vmatprep.subr.bf16.mxu0 0
      %2745 = vmatpush1.bf16.xpose.msra.mxu0 %v2722
      %2746 = vmatprep.subr.bf16.mxu0 0
      %2747 = vmatpush1.bf16.xpose.msra.mxu0 %v2725
      %2748 = vmatprep.subr.bf16.mxu0 0
      %2749 = vmatpush1.bf16.xpose.msra.mxu0 %v2728
      %2750 = vmatprep.subr.bf16.mxu0 0
      %2751 = vmatpush1.bf16.xpose.msra.mxu0 %v2731
      %2752 = vmatprep.subr.bf16.mxu0 0
      %2753 = vmatpush1.bf16.xpose.msra.mxu0 %v2734
      %2754 = vmatprep.subr.bf16.mxu0 0
      %2755 = vmatpush1.bf16.xpose.msra.mxu0 %v2737
      %2756 = vmatprep.subr.bf16.mxu0 0
      %2757 = vmatpush1.bf16.xpose.msra.mxu0 %v2740
      %2758 = vmatprep.subr.bf16.mxu0 0
      %2759 = vmatpush1.bf16.xpose.msra.mxu0 0
      %2760 = vmatprep.subr.bf16.mxu0 0
      %2761 = vmatpush1.bf16.xpose.msra.mxu0 0
      %2762 = vmatprep.subr.bf16.mxu0 0
      %2763 = vmatpush1.bf16.xpose.msra.mxu0 0
      %2764 = vmatprep.subr.bf16.mxu0 0
      %2765 = vmatpush1.bf16.xpose.msra.mxu0 0
      %2766 = vmatprep.subr.bf16.mxu0 0
      %2767 = vmatpush1.bf16.xpose.msra.mxu0 0
      %2768 = vmatprep.subr.bf16.mxu0 0
      %2769 = vmatpush1.bf16.xpose.msra.mxu0 0
      %2770 = vmatprep.subr.bf16.mxu0 0
      %2771 = vmatpush1.bf16.xpose.msra.mxu0 0
      %2772 = vmatprep.subr.bf16.mxu0 0
      %2773 = vmatpush1.bf16.xpose.msra.mxu0 0
      %2774 = vmatprep.mubr.bf16.mxu0 0
      %2775 = vmatmul.mubr.bf16.gmra.mrb[0].mxu0 %v2695
      %v2776 = vpop.f32.mrb[0].mxu0
      %v2777 = vadd.f32 0.0, %v2776
      %v2778 = vpop.f32.mrb[0].mxu0
      %v2779 = vpop.f32.mrb[0].mxu0
      %v2780 = vadd.f32 0.0, %v2779
      %v2781 = vpop.f32.mrb[0].mxu0
      %2782 = vmatprep.mubr.bf16.mxu0 0
      %2783 = vmatmul.mubr.bf16.gmra.mrb[0].mxu0 %v2698
      %v2784 = vpop.f32.mrb[0].mxu0
      %v2785 = vadd.f32 0.0, %v2784
      %v2786 = vpop.f32.mrb[0].mxu0
      %v2787 = vpop.f32.mrb[0].mxu0
      %v2788 = vadd.f32 0.0, %v2787
      %v2789 = vpop.f32.mrb[0].mxu0
      %2790 = vmatprep.mubr.bf16.mxu0 0
      %2791 = vmatmul.mubr.bf16.gmra.mrb[0].mxu0 %v2701
      %v2792 = vpop.f32.mrb[0].mxu0
      %v2793 = vadd.f32 0.0, %v2792
      %v2794 = vpop.f32.mrb[0].mxu0
      %v2795 = vpop.f32.mrb[0].mxu0
      %v2796 = vadd.f32 0.0, %v2795
      %v2797 = vpop.f32.mrb[0].mxu0
      %2798 = vmatprep.mubr.bf16.mxu0 0
      %2799 = vmatmul.mubr.bf16.gmra.mrb[0].mxu0 %v2704
      %v2800 = vpop.f32.mrb[0].mxu0
      %v2801 = vadd.f32 0.0, %v2800
      %v2802 = vpop.f32.mrb[0].mxu0
      %v2803 = vpop.f32.mrb[0].mxu0
      %v2804 = vadd.f32 0.0, %v2803
      %v2805 = vpop.f32.mrb[0].mxu0
      %2806 = vmatprep.mubr.bf16.mxu0 0
      %2807 = vmatmul.mubr.bf16.gmra.mrb[0].mxu0 %v2707
      %v2808 = vpop.f32.mrb[0].mxu0
      %v2809 = vadd.f32 0.0, %v2808
      %v2810 = vpop.f32.mrb[0].mxu0
      %v2811 = vpop.f32.mrb[0].mxu0
      %v2812 = vadd.f32 0.0, %v2811
      %v2813 = vpop.f32.mrb[0].mxu0
      %2814 = vmatprep.mubr.bf16.mxu0 0
      %2815 = vmatmul.mubr.bf16.gmra.mrb[0].mxu0 %v2710
      %v2816 = vpop.f32.mrb[0].mxu0
      %v2817 = vadd.f32 0.0, %v2816
      %v2818 = vpop.f32.mrb[0].mxu0
      %v2819 = vpop.f32.mrb[0].mxu0
      %v2820 = vadd.f32 0.0, %v2819
      %v2821 = vpop.f32.mrb[0].mxu0
      %2822 = vmatprep.mubr.bf16.mxu0 0
      %2823 = vmatmul.mubr.bf16.gmra.mrb[0].mxu0 %v2713
      %v2824 = vpop.f32.mrb[0].mxu0
      %v2825 = vadd.f32 0.0, %v2824
      %v2826 = vpop.f32.mrb[0].mxu0
      %v2827 = vpop.f32.mrb[0].mxu0
      %v2828 = vadd.f32 0.0, %v2827
      %v2829 = vpop.f32.mrb[0].mxu0
      %2830 = vmatprep.mubr.bf16.mxu0 0
      %2831 = vmatmul.mubr.bf16.gmra.mrb[0].mxu0 %v2716
      %v2832 = vpop.f32.mrb[0].mxu0
      %v2833 = vadd.f32 0.0, %v2832
      %v2834 = vpop.f32.mrb[0].mxu0
      %v2835 = vpop.f32.mrb[0].mxu0
      %v2836 = vadd.f32 0.0, %v2835
      %v2837 = vpop.f32.mrb[0].mxu0
      %2838 = vdwg.mxu0
      %2847 = vrot.lane.b32.xlu0 %v1919, 64
      %v2848 = vpop.permute.xlu0 %2847
      %2849 = vrot.lane.b32.xlu0 %v1921, 64
      %v2850 = vpop.permute.xlu0 %2849
      %2851 = vrot.lane.b32.xlu0 %v1923, 64
      %v2852 = vpop.permute.xlu0 %2851
      %2853 = vrot.lane.b32.xlu0 %v1925, 64
      %v2854 = vpop.permute.xlu0 %2853
      %2855 = vrot.lane.b32.xlu0 %v1927, 64
      %v2856 = vpop.permute.xlu0 %2855
      %2857 = vrot.lane.b32.xlu0 %v1929, 64
      %v2858 = vpop.permute.xlu0 %2857
      %2859 = vrot.lane.b32.xlu0 %v1931, 64
      %v2860 = vpop.permute.xlu0 %2859
      %2861 = vrot.lane.b32.xlu0 %v1933, 64
      %v2862 = vpop.permute.xlu0 %2861
      %2871 = vrot.lane.b32.xlu0 %v2031, 64
      %v2872 = vpop.permute.xlu0 %2871
      %2873 = vrot.lane.b32.xlu0 %v2033, 64
      %v2874 = vpop.permute.xlu0 %2873
      %2875 = vrot.lane.b32.xlu0 %v2035, 64
      %v2876 = vpop.permute.xlu0 %2875
      %2877 = vrot.lane.b32.xlu0 %v2037, 64
      %v2878 = vpop.permute.xlu0 %2877
      %2879 = vrot.lane.b32.xlu0 %v2039, 64
      %v2880 = vpop.permute.xlu0 %2879
      %2881 = vrot.lane.b32.xlu0 %v2041, 64
      %v2882 = vpop.permute.xlu0 %2881
      %2883 = vrot.lane.b32.xlu0 %v2043, 64
      %v2884 = vpop.permute.xlu0 %2883
      %2885 = vrot.lane.b32.xlu0 %v2045, 64
      %v2886 = vpop.permute.xlu0 %2885
      %v2888 = vsel %vm2082, %v2848, 0
      %v2891 = vsel %vm2082, %v2850, 0
      %v2894 = vsel %vm2082, %v2852, 0
      %v2897 = vsel %vm2082, %v2854, 0
      %v2900 = vsel %vm2082, %v2856, 0
      %v2903 = vsel %vm2082, %v2858, 0
      %v2906 = vsel %vm2082, %v2860, 0
      %v2909 = vsel %vm2082, %v2862, 0
      %v2912 = vsel %vm2082, %v2872, 0
      %v2915 = vsel %vm2082, %v2874, 0
      %v2918 = vsel %vm2082, %v2876, 0
      %v2921 = vsel %vm2082, %v2878, 0
      %v2924 = vsel %vm2082, %v2880, 0
      %v2927 = vsel %vm2082, %v2882, 0
      %v2930 = vsel %vm2082, %v2884, 0
      %v2933 = vsel %vm2082, %v2886, 0
      %2935 = vmatprep.subr.bf16.mxu0 0
      %2936 = vmatpush1.bf16.xpose.msra.mxu0 %v2912
      %2937 = vmatprep.subr.bf16.mxu0 0
      %2938 = vmatpush1.bf16.xpose.msra.mxu0 %v2915
      %2939 = vmatprep.subr.bf16.mxu0 0
      %2940 = vmatpush1.bf16.xpose.msra.mxu0 %v2918
      %2941 = vmatprep.subr.bf16.mxu0 0
      %2942 = vmatpush1.bf16.xpose.msra.mxu0 %v2921
      %2943 = vmatprep.subr.bf16.mxu0 0
      %2944 = vmatpush1.bf16.xpose.msra.mxu0 %v2924
      %2945 = vmatprep.subr.bf16.mxu0 0
      %2946 = vmatpush1.bf16.xpose.msra.mxu0 %v2927
      %2947 = vmatprep.subr.bf16.mxu0 0
      %2948 = vmatpush1.bf16.xpose.msra.mxu0 %v2930
      %2949 = vmatprep.subr.bf16.mxu0 0
      %2950 = vmatpush1.bf16.xpose.msra.mxu0 %v2933
      %2951 = vmatprep.subr.bf16.mxu0 0
      %2952 = vmatpush1.bf16.xpose.msra.mxu0 0
      %2953 = vmatprep.subr.bf16.mxu0 0
      %2954 = vmatpush1.bf16.xpose.msra.mxu0 0
      %2955 = vmatprep.subr.bf16.mxu0 0
      %2956 = vmatpush1.bf16.xpose.msra.mxu0 0
      %2957 = vmatprep.subr.bf16.mxu0 0
      %2958 = vmatpush1.bf16.xpose.msra.mxu0 0
      %2959 = vmatprep.subr.bf16.mxu0 0
      %2960 = vmatpush1.bf16.xpose.msra.mxu0 0
      %2961 = vmatprep.subr.bf16.mxu0 0
      %2962 = vmatpush1.bf16.xpose.msra.mxu0 0
      %2963 = vmatprep.subr.bf16.mxu0 0
      %2964 = vmatpush1.bf16.xpose.msra.mxu0 0
      %2965 = vmatprep.subr.bf16.mxu0 0
      %2966 = vmatpush1.bf16.xpose.msra.mxu0 0
      %2967 = vmatprep.mubr.bf16.mxu0 0
      %2968 = vmatmul.mubr.bf16.gmra.mrb[0].mxu0 %v2888
      %v2969 = vpop.f32.mrb[0].mxu0
      %v2970 = vadd.f32 %v2777, %v2969
      %v2971 = vpop.f32.mrb[0].mxu0
      %v2972 = vpop.f32.mrb[0].mxu0
      %v2973 = vadd.f32 %v2780, %v2972
      %v2974 = vpop.f32.mrb[0].mxu0
      %2975 = vmatprep.mubr.bf16.mxu0 0
      %2976 = vmatmul.mubr.bf16.gmra.mrb[0].mxu0 %v2891
      %v2977 = vpop.f32.mrb[0].mxu0
      %v2978 = vadd.f32 %v2785, %v2977
      %v2979 = vpop.f32.mrb[0].mxu0
      %v2980 = vpop.f32.mrb[0].mxu0
      %v2981 = vadd.f32 %v2788, %v2980
      %v2982 = vpop.f32.mrb[0].mxu0
      %2983 = vmatprep.mubr.bf16.mxu0 0
      %2984 = vmatmul.mubr.bf16.gmra.mrb[0].mxu0 %v2894
      %v2985 = vpop.f32.mrb[0].mxu0
      %v2986 = vadd.f32 %v2793, %v2985
      %v2987 = vpop.f32.mrb[0].mxu0
      %v2988 = vpop.f32.mrb[0].mxu0
      %v2989 = vadd.f32 %v2796, %v2988
      %v2990 = vpop.f32.mrb[0].mxu0
      %2991 = vmatprep.mubr.bf16.mxu0 0
      %2992 = vmatmul.mubr.bf16.gmra.mrb[0].mxu0 %v2897
      %v2993 = vpop.f32.mrb[0].mxu0
      %v2994 = vadd.f32 %v2801, %v2993
      %v2995 = vpop.f32.mrb[0].mxu0
      %v2996 = vpop.f32.mrb[0].mxu0
      %v2997 = vadd.f32 %v2804, %v2996
      %v2998 = vpop.f32.mrb[0].mxu0
      %2999 = vmatprep.mubr.bf16.mxu0 0
      %3000 = vmatmul.mubr.bf16.gmra.mrb[0].mxu0 %v2900
      %v3001 = vpop.f32.mrb[0].mxu0
      %v3002 = vadd.f32 %v2809, %v3001
      %v3003 = vpop.f32.mrb[0].mxu0
      %v3004 = vpop.f32.mrb[0].mxu0
      %v3005 = vadd.f32 %v2812, %v3004
      %v3006 = vpop.f32.mrb[0].mxu0
      %3007 = vmatprep.mubr.bf16.mxu0 0
      %3008 = vmatmul.mubr.bf16.gmra.mrb[0].mxu0 %v2903
      %v3009 = vpop.f32.mrb[0].mxu0
      %v3010 = vadd.f32 %v2817, %v3009
      %v3011 = vpop.f32.mrb[0].mxu0
      %v3012 = vpop.f32.mrb[0].mxu0
      %v3013 = vadd.f32 %v2820, %v3012
      %v3014 = vpop.f32.mrb[0].mxu0
      %3015 = vmatprep.mubr.bf16.mxu0 0
      %3016 = vmatmul.mubr.bf16.gmra.mrb[0].mxu0 %v2906
      %v3017 = vpop.f32.mrb[0].mxu0
      %v3018 = vadd.f32 %v2825, %v3017
      %v3019 = vpop.f32.mrb[0].mxu0
      %v3020 = vpop.f32.mrb[0].mxu0
      %v3021 = vadd.f32 %v2828, %v3020
      %v3022 = vpop.f32.mrb[0].mxu0
      %3023 = vmatprep.mubr.bf16.mxu0 0
      %3024 = vmatmul.mubr.bf16.gmra.mrb[0].mxu0 %v2909
      %v3025 = vpop.f32.mrb[0].mxu0
      %v3026 = vadd.f32 %v2833, %v3025
      %v3027 = vpop.f32.mrb[0].mxu0
      %v3028 = vpop.f32.mrb[0].mxu0
      %v3029 = vadd.f32 %v2836, %v3028
      %v3030 = vpop.f32.mrb[0].mxu0
      %3031 = vdwg.mxu0
      %v3032 = vsel %vm2066, %v2970, -1e+30
      %v3033 = vsel %vm2067, %v2973, -1e+30
      %v3034 = vsel %vm2068, %v2978, -1e+30
      %v3035 = vsel %vm2069, %v2981, -1e+30
      %v3036 = vsel %vm2070, %v2986, -1e+30
      %v3037 = vsel %vm2071, %v2989, -1e+30
      %v3038 = vsel %vm2072, %v2994, -1e+30
      %v3039 = vsel %vm2073, %v2997, -1e+30
      %v3040 = vsel %vm2074, %v3002, -1e+30
      %v3041 = vsel %vm2075, %v3005, -1e+30
      %v3042 = vsel %vm2076, %v3010, -1e+30
      %v3043 = vsel %vm2077, %v3013, -1e+30
      %v3044 = vsel %vm2078, %v3018, -1e+30
      %v3045 = vsel %vm2079, %v3021, -1e+30
      %v3046 = vsel %vm2080, %v3026, -1e+30
      %v3047 = vsel %vm2081, %v3029, -1e+30
      %3048 = vmax.xlane.f32.xlu0 %v3032
      %v3049 = vpop.xlane.xlu0 %3048
      %3050 = vmax.xlane.f32.xlu0 %v3033
      %v3051 = vpop.xlane.xlu0 %3050
      %3052 = vmax.xlane.f32.xlu0 %v3034
      %v3053 = vpop.xlane.xlu0 %3052
      %3054 = vmax.xlane.f32.xlu0 %v3035
      %v3055 = vpop.xlane.xlu0 %3054
      %3056 = vmax.xlane.f32.xlu0 %v3036
      %v3057 = vpop.xlane.xlu0 %3056
      %3058 = vmax.xlane.f32.xlu0 %v3037
      %v3059 = vpop.xlane.xlu0 %3058
      %3060 = vmax.xlane.f32.xlu0 %v3038
      %v3061 = vpop.xlane.xlu0 %3060
      %3062 = vmax.xlane.f32.xlu0 %v3039
      %v3063 = vpop.xlane.xlu0 %3062
      %3064 = vmax.xlane.f32.xlu0 %v3040
      %v3065 = vpop.xlane.xlu0 %3064
      %3066 = vmax.xlane.f32.xlu0 %v3041
      %v3067 = vpop.xlane.xlu0 %3066
      %3068 = vmax.xlane.f32.xlu0 %v3042
      %v3069 = vpop.xlane.xlu0 %3068
      %3070 = vmax.xlane.f32.xlu0 %v3043
      %v3071 = vpop.xlane.xlu0 %3070
      %3072 = vmax.xlane.f32.xlu0 %v3044
      %v3073 = vpop.xlane.xlu0 %3072
      %3074 = vmax.xlane.f32.xlu0 %v3045
      %v3075 = vpop.xlane.xlu0 %3074
      %3076 = vmax.xlane.f32.xlu0 %v3046
      %v3077 = vpop.xlane.xlu0 %3076
      %3078 = vmax.xlane.f32.xlu0 %v3047
      %v3079 = vpop.xlane.xlu0 %3078
      %v3080 = vsub.f32 %v3032, %v3049
      %v3081 = vsub.f32 %v3033, %v3051
      %v3082 = vsub.f32 %v3034, %v3053
      %v3083 = vsub.f32 %v3035, %v3055
      %v3084 = vsub.f32 %v3036, %v3057
      %v3085 = vsub.f32 %v3037, %v3059
      %v3086 = vsub.f32 %v3038, %v3061
      %v3087 = vsub.f32 %v3039, %v3063
      %v3088 = vsub.f32 %v3040, %v3065
      %v3089 = vsub.f32 %v3041, %v3067
      %v3090 = vsub.f32 %v3042, %v3069
      %v3091 = vsub.f32 %v3043, %v3071
      %v3092 = vsub.f32 %v3044, %v3073
      %v3093 = vsub.f32 %v3045, %v3075
      %v3094 = vsub.f32 %v3046, %v3077
      %v3095 = vsub.f32 %v3047, %v3079
      %v3096 = vmul.f32 %v3080, 1.442695
      %v3097 = vpow.pop %v3096
      %v3098 = vmul.f32 %v3081, 1.442695
      %v3099 = vpow.pop %v3098
      %v3100 = vmul.f32 %v3082, 1.442695
      %v3101 = vpow.pop %v3100
      %v3102 = vmul.f32 %v3083, 1.442695
      %v3103 = vpow.pop %v3102
      %v3104 = vmul.f32 %v3084, 1.442695
      %v3105 = vpow.pop %v3104
      %v3106 = vmul.f32 %v3085, 1.442695
      %v3107 = vpow.pop %v3106
      %v3108 = vmul.f32 %v3086, 1.442695
      %v3109 = vpow.pop %v3108
      %v3110 = vmul.f32 %v3087, 1.442695
      %v3111 = vpow.pop %v3110
      %v3112 = vmul.f32 %v3088, 1.442695
      %v3113 = vpow.pop %v3112
      %v3114 = vmul.f32 %v3089, 1.442695
      %v3115 = vpow.pop %v3114
      %v3116 = vmul.f32 %v3090, 1.442695
      %v3117 = vpow.pop %v3116
      %v3118 = vmul.f32 %v3091, 1.442695
      %v3119 = vpow.pop %v3118
      %v3120 = vmul.f32 %v3092, 1.442695
      %v3121 = vpow.pop %v3120
      %v3122 = vmul.f32 %v3093, 1.442695
      %v3123 = vpow.pop %v3122
      %v3124 = vmul.f32 %v3094, 1.442695
      %v3125 = vpow.pop %v3124
      %v3126 = vmul.f32 %v3095, 1.442695
      %v3127 = vpow.pop %v3126
      %3128 = vadd.xlane.f32.xlu0 %v3097
      %v3129 = vpop.xlane.xlu0 %3128
      %3130 = vadd.xlane.f32.xlu0 %v3099
      %v3131 = vpop.xlane.xlu0 %3130
      %3132 = vadd.xlane.f32.xlu0 %v3101
      %v3133 = vpop.xlane.xlu0 %3132
      %3134 = vadd.xlane.f32.xlu0 %v3103
      %v3135 = vpop.xlane.xlu0 %3134
      %3136 = vadd.xlane.f32.xlu0 %v3105
      %v3137 = vpop.xlane.xlu0 %3136
      %3138 = vadd.xlane.f32.xlu0 %v3107
      %v3139 = vpop.xlane.xlu0 %3138
      %3140 = vadd.xlane.f32.xlu0 %v3109
      %v3141 = vpop.xlane.xlu0 %3140
      %3142 = vadd.xlane.f32.xlu0 %v3111
      %v3143 = vpop.xlane.xlu0 %3142
      %3144 = vadd.xlane.f32.xlu0 %v3113
      %v3145 = vpop.xlane.xlu0 %3144
      %3146 = vadd.xlane.f32.xlu0 %v3115
      %v3147 = vpop.xlane.xlu0 %3146
      %3148 = vadd.xlane.f32.xlu0 %v3117
      %v3149 = vpop.xlane.xlu0 %3148
      %3150 = vadd.xlane.f32.xlu0 %v3119
      %v3151 = vpop.xlane.xlu0 %3150
      %3152 = vadd.xlane.f32.xlu0 %v3121
      %v3153 = vpop.xlane.xlu0 %3152
      %3154 = vadd.xlane.f32.xlu0 %v3123
      %v3155 = vpop.xlane.xlu0 %3154
      %3156 = vadd.xlane.f32.xlu0 %v3125
      %v3157 = vpop.xlane.xlu0 %3156
      %3158 = vadd.xlane.f32.xlu0 %v3127
      %v3159 = vpop.xlane.xlu0 %3158
      %v3160 = vpack.c.bf16 %v3099, %v3097
      %v3161 = vpack.c.bf16 %v3103, %v3101
      %v3162 = vpack.c.bf16 %v3107, %v3105
      %v3163 = vpack.c.bf16 %v3111, %v3109
      %v3164 = vpack.c.bf16 %v3115, %v3113
      %v3165 = vpack.c.bf16 %v3119, %v3117
      %v3166 = vpack.c.bf16 %v3123, %v3121
      %v3167 = vpack.c.bf16 %v3127, %v3125
      %3168 = vmatprep.subr.bf16.mxu0 0
      %3169 = vmatpush1.bf16.msra.mxu0 %v1744
      %3170 = vmatprep.subr.bf16.mxu0 0
      %3171 = vmatpush1.bf16.msra.mxu0 %v1746
      %3172 = vmatprep.subr.bf16.mxu0 0
      %3173 = vmatpush1.bf16.msra.mxu0 %v1748
      %3174 = vmatprep.subr.bf16.mxu0 0
      %3175 = vmatpush1.bf16.msra.mxu0 %v1750
      %3176 = vmatprep.subr.bf16.mxu0 0
      %3177 = vmatpush1.bf16.msra.mxu0 %v1752
      %3178 = vmatprep.subr.bf16.mxu0 0
      %3179 = vmatpush1.bf16.msra.mxu0 %v1754
      %3180 = vmatprep.subr.bf16.mxu0 0
      %3181 = vmatpush1.bf16.msra.mxu0 %v1756
      %3182 = vmatprep.subr.bf16.mxu0 0
      %3183 = vmatpush1.bf16.msra.mxu0 %v1758
      %3184 = vmatprep.subr.bf16.mxu0 0
      %3185 = vmatpush1.bf16.msra.mxu0 0
      %3186 = vmatprep.subr.bf16.mxu0 0
      %3187 = vmatpush1.bf16.msra.mxu0 0
      %3188 = vmatprep.subr.bf16.mxu0 0
      %3189 = vmatpush1.bf16.msra.mxu0 0
      %3190 = vmatprep.subr.bf16.mxu0 0
      %3191 = vmatpush1.bf16.msra.mxu0 0
      %3192 = vmatprep.subr.bf16.mxu0 0
      %3193 = vmatpush1.bf16.msra.mxu0 0
      %3194 = vmatprep.subr.bf16.mxu0 0
      %3195 = vmatpush1.bf16.msra.mxu0 0
      %3196 = vmatprep.subr.bf16.mxu0 0
      %3197 = vmatpush1.bf16.msra.mxu0 0
      %3198 = vmatprep.subr.bf16.mxu0 0
      %3199 = vmatpush1.bf16.msra.mxu0 0
      %3200 = vmatprep.mubr.bf16.mxu0 0
      %3201 = vmatmul.mubr.bf16.gmra.mrb[0].mxu0 %v3160
      %v3202 = vpop.f32.mrb[0].mxu0
      %v3203 = vadd.f32 0.0, %v3202
      %v3204 = vpop.f32.mrb[0].mxu0
      %v3205 = vpop.f32.mrb[0].mxu0
      %v3206 = vadd.f32 0.0, %v3205
      %v3207 = vpop.f32.mrb[0].mxu0
      %3208 = vmatprep.mubr.bf16.mxu0 0
      %3209 = vmatmul.mubr.bf16.gmra.mrb[0].mxu0 %v3161
      %v3210 = vpop.f32.mrb[0].mxu0
      %v3211 = vadd.f32 0.0, %v3210
      %v3212 = vpop.f32.mrb[0].mxu0
      %v3213 = vpop.f32.mrb[0].mxu0
      %v3214 = vadd.f32 0.0, %v3213
      %v3215 = vpop.f32.mrb[0].mxu0
      %3216 = vmatprep.mubr.bf16.mxu0 0
      %3217 = vmatmul.mubr.bf16.gmra.mrb[0].mxu0 %v3162
      %v3218 = vpop.f32.mrb[0].mxu0
      %v3219 = vadd.f32 0.0, %v3218
      %v3220 = vpop.f32.mrb[0].mxu0
      %v3221 = vpop.f32.mrb[0].mxu0
      %v3222 = vadd.f32 0.0, %v3221
      %v3223 = vpop.f32.mrb[0].mxu0
      %3224 = vmatprep.mubr.bf16.mxu0 0
      %3225 = vmatmul.mubr.bf16.gmra.mrb[0].mxu0 %v3163
      %v3226 = vpop.f32.mrb[0].mxu0
      %v3227 = vadd.f32 0.0, %v3226
      %v3228 = vpop.f32.mrb[0].mxu0
      %v3229 = vpop.f32.mrb[0].mxu0
      %v3230 = vadd.f32 0.0, %v3229
      %v3231 = vpop.f32.mrb[0].mxu0
      %3232 = vmatprep.mubr.bf16.mxu0 0
      %3233 = vmatmul.mubr.bf16.gmra.mrb[0].mxu0 %v3164
      %v3234 = vpop.f32.mrb[0].mxu0
      %v3235 = vadd.f32 0.0, %v3234
      %v3236 = vpop.f32.mrb[0].mxu0
      %v3237 = vpop.f32.mrb[0].mxu0
      %v3238 = vadd.f32 0.0, %v3237
      %v3239 = vpop.f32.mrb[0].mxu0
      %3240 = vmatprep.mubr.bf16.mxu0 0
      %3241 = vmatmul.mubr.bf16.gmra.mrb[0].mxu0 %v3165
      %v3242 = vpop.f32.mrb[0].mxu0
      %v3243 = vadd.f32 0.0, %v3242
      %v3244 = vpop.f32.mrb[0].mxu0
      %v3245 = vpop.f32.mrb[0].mxu0
      %v3246 = vadd.f32 0.0, %v3245
      %v3247 = vpop.f32.mrb[0].mxu0
      %3248 = vmatprep.mubr.bf16.mxu0 0
      %3249 = vmatmul.mubr.bf16.gmra.mrb[0].mxu0 %v3166
      %v3250 = vpop.f32.mrb[0].mxu0
      %v3251 = vadd.f32 0.0, %v3250
      %v3252 = vpop.f32.mrb[0].mxu0
      %v3253 = vpop.f32.mrb[0].mxu0
      %v3254 = vadd.f32 0.0, %v3253
      %v3255 = vpop.f32.mrb[0].mxu0
      %3256 = vmatprep.mubr.bf16.mxu0 0
      %3257 = vmatmul.mubr.bf16.gmra.mrb[0].mxu0 %v3167
      %v3258 = vpop.f32.mrb[0].mxu0
      %v3259 = vadd.f32 0.0, %v3258
      %v3260 = vpop.f32.mrb[0].mxu0
      %v3261 = vpop.f32.mrb[0].mxu0
      %v3262 = vadd.f32 0.0, %v3261
      %v3263 = vpop.f32.mrb[0].mxu0
      %3264 = vdwg.mxu0
      %v3265 = vrcp.pop %v3129
      %v3266 = vrcp.pop %v3131
      %v3267 = vrcp.pop %v3133
      %v3268 = vrcp.pop %v3135
      %v3269 = vrcp.pop %v3137
      %v3270 = vrcp.pop %v3139
      %v3271 = vrcp.pop %v3141
      %v3272 = vrcp.pop %v3143
      %v3273 = vrcp.pop %v3145
      %v3274 = vrcp.pop %v3147
      %v3275 = vrcp.pop %v3149
      %v3276 = vrcp.pop %v3151
      %v3277 = vrcp.pop %v3153
      %v3278 = vrcp.pop %v3155
      %v3279 = vrcp.pop %v3157
      %v3280 = vrcp.pop %v3159
      %v3281 = vmul.f32 %v3203, %v3265
      %v3282 = vmul.f32 %v3206, %v3266
      %v3283 = vmul.f32 %v3211, %v3267
      %v3284 = vmul.f32 %v3214, %v3268
      %v3285 = vmul.f32 %v3219, %v3269
      %v3286 = vmul.f32 %v3222, %v3270
      %v3287 = vmul.f32 %v3227, %v3271
      %v3288 = vmul.f32 %v3230, %v3272
      %v3289 = vmul.f32 %v3235, %v3273
      %v3290 = vmul.f32 %v3238, %v3274
      %v3291 = vmul.f32 %v3243, %v3275
      %v3292 = vmul.f32 %v3246, %v3276
      %v3293 = vmul.f32 %v3251, %v3277
      %v3294 = vmul.f32 %v3254, %v3278
      %v3295 = vmul.f32 %v3259, %v3279
      %v3296 = vmul.f32 %v3262, %v3280
      %v3297 = vpack.c.bf16 %v3282, %v3281
      %v3298 = vpack.c.bf16 %v3284, %v3283
      %v3299 = vpack.c.bf16 %v3286, %v3285
      %v3300 = vpack.c.bf16 %v3288, %v3287
      %v3301 = vpack.c.bf16 %v3290, %v3289
      %v3302 = vpack.c.bf16 %v3292, %v3291
      %v3303 = vpack.c.bf16 %v3294, %v3293
      %v3304 = vpack.c.bf16 %v3296, %v3295
      %v3305 = vld [vmem:[%s481] sm:$0xff]
      %v3306 = vld [vmem:[%s481 + $0x8] sm:$0xff]
      %v3307 = vld [vmem:[%s481 + $0x10] sm:$0xff]
      %v3308 = vld [vmem:[%s481 + $0x18] sm:$0xff]
      %v3309 = vld [vmem:[%s481 + $0x20] sm:$0xff]
      %v3310 = vld [vmem:[%s481 + $0x28] sm:$0xff]
      %v3311 = vld [vmem:[%s481 + $0x30] sm:$0xff]
      %v3312 = vld [vmem:[%s481 + $0x38] sm:$0xff]
      %v3313 = vld [vmem:[%s481 + $0x40] sm:$0xff]
      %v3314 = vld [vmem:[%s481 + $0x48] sm:$0xff]
      %v3315 = vld [vmem:[%s481 + $0x50] sm:$0xff]
      %v3316 = vld [vmem:[%s481 + $0x58] sm:$0xff]
      %v3317 = vld [vmem:[%s481 + $0x60] sm:$0xff]
      %v3318 = vld [vmem:[%s481 + $0x68] sm:$0xff]
      %v3319 = vld [vmem:[%s481 + $0x70] sm:$0xff]
      %v3320 = vld [vmem:[%s481 + $0x78] sm:$0xff]
      %v3321 = vld [vmem:[%s481 + $0x80] sm:$0xff]
      %v3322 = vld [vmem:[%s481 + $0x88] sm:$0xff]
      %v3323 = vld [vmem:[%s481 + $0x90] sm:$0xff]
      %v3324 = vld [vmem:[%s481 + $0x98] sm:$0xff]
      %v3325 = vld [vmem:[%s481 + $0xa0] sm:$0xff]
      %v3326 = vld [vmem:[%s481 + $0xa8] sm:$0xff]
      %v3327 = vld [vmem:[%s481 + $0xb0] sm:$0xff]
      %v3328 = vld [vmem:[%s481 + $0xb8] sm:$0xff]
      %v3329 = vld [vmem:[%s481 + $0xc0] sm:$0xff]
      %v3330 = vld [vmem:[%s481 + $0xc8] sm:$0xff]
      %v3331 = vld [vmem:[%s481 + $0xd0] sm:$0xff]
      %v3332 = vld [vmem:[%s481 + $0xd8] sm:$0xff]
      %v3333 = vld [vmem:[%s481 + $0xe0] sm:$0xff]
      %v3334 = vld [vmem:[%s481 + $0xe8] sm:$0xff]
      %v3335 = vld [vmem:[%s481 + $0xf0] sm:$0xff]
      %v3336 = vld [vmem:[%s481 + $0xf8] sm:$0xff]
      %v3369 = vunpack.c.l.b16 %v3305
      %v3370 = vunpack.c.h.b16 %v3305
      %v3371 = vunpack.c.l.b16 %v3306
      %v3372 = vunpack.c.h.b16 %v3306
      %v3373 = vunpack.c.l.b16 %v3307
      %v3374 = vunpack.c.h.b16 %v3307
      %v3375 = vunpack.c.l.b16 %v3308
      %v3376 = vunpack.c.h.b16 %v3308
      %v3377 = vunpack.c.l.b16 %v3309
      %v3378 = vunpack.c.h.b16 %v3309
      %v3379 = vunpack.c.l.b16 %v3310
      %v3380 = vunpack.c.h.b16 %v3310
      %v3381 = vunpack.c.l.b16 %v3311
      %v3382 = vunpack.c.h.b16 %v3311
      %v3383 = vunpack.c.l.b16 %v3312
      %v3384 = vunpack.c.h.b16 %v3312
      %v3385 = vunpack.c.l.b16 %v3313
      %v3386 = vunpack.c.h.b16 %v3313
      %v3387 = vunpack.c.l.b16 %v3314
      %v3388 = vunpack.c.h.b16 %v3314
      %v3389 = vunpack.c.l.b16 %v3315
      %v3390 = vunpack.c.h.b16 %v3315
      %v3391 = vunpack.c.l.b16 %v3316
      %v3392 = vunpack.c.h.b16 %v3316
      %v3393 = vunpack.c.l.b16 %v3317
      %v3394 = vunpack.c.h.b16 %v3317
      %v3395 = vunpack.c.l.b16 %v3318
      %v3396 = vunpack.c.h.b16 %v3318
      %v3397 = vunpack.c.l.b16 %v3319
      %v3398 = vunpack.c.h.b16 %v3319
      %v3399 = vunpack.c.l.b16 %v3320
      %v3400 = vunpack.c.h.b16 %v3320
      %v3401 = vunpack.c.l.b16 %v3321
      %v3402 = vunpack.c.h.b16 %v3321
      %v3403 = vunpack.c.l.b16 %v3322
      %v3404 = vunpack.c.h.b16 %v3322
      %v3405 = vunpack.c.l.b16 %v3323
      %v3406 = vunpack.c.h.b16 %v3323
      %v3407 = vunpack.c.l.b16 %v3324
      %v3408 = vunpack.c.h.b16 %v3324
      %v3409 = vunpack.c.l.b16 %v3325
      %v3410 = vunpack.c.h.b16 %v3325
      %v3411 = vunpack.c.l.b16 %v3326
      %v3412 = vunpack.c.h.b16 %v3326
      %v3413 = vunpack.c.l.b16 %v3327
      %v3414 = vunpack.c.h.b16 %v3327
      %v3415 = vunpack.c.l.b16 %v3328
      %v3416 = vunpack.c.h.b16 %v3328
      %v3417 = vunpack.c.l.b16 %v3329
      %v3418 = vunpack.c.h.b16 %v3329
      %v3419 = vunpack.c.l.b16 %v3330
      %v3420 = vunpack.c.h.b16 %v3330
      %v3421 = vunpack.c.l.b16 %v3331
      %v3422 = vunpack.c.h.b16 %v3331
      %v3423 = vunpack.c.l.b16 %v3332
      %v3424 = vunpack.c.h.b16 %v3332
      %v3425 = vunpack.c.l.b16 %v3333
      %v3426 = vunpack.c.h.b16 %v3333
      %v3427 = vunpack.c.l.b16 %v3334
      %v3428 = vunpack.c.h.b16 %v3334
      %v3429 = vunpack.c.l.b16 %v3335
      %v3430 = vunpack.c.h.b16 %v3335
      %v3431 = vunpack.c.l.b16 %v3336
      %v3432 = vunpack.c.h.b16 %v3336
      %v3433 = vpack.c.b16 %v3371, %v3369
      %v3434 = vpack.c.b16 %v3372, %v3370
      %v3435 = vpack.c.b16 %v3375, %v3373
      %v3436 = vpack.c.b16 %v3376, %v3374
      %v3437 = vpack.c.b16 %v3379, %v3377
      %v3438 = vpack.c.b16 %v3380, %v3378
      %v3439 = vpack.c.b16 %v3383, %v3381
      %v3440 = vpack.c.b16 %v3384, %v3382
      %v3441 = vpack.c.b16 %v3387, %v3385
      %v3442 = vpack.c.b16 %v3388, %v3386
      %v3443 = vpack.c.b16 %v3391, %v3389
      %v3444 = vpack.c.b16 %v3392, %v3390
      %v3445 = vpack.c.b16 %v3395, %v3393
      %v3446 = vpack.c.b16 %v3396, %v3394
      %v3447 = vpack.c.b16 %v3399, %v3397
      %v3448 = vpack.c.b16 %v3400, %v3398
      %v3449 = vpack.c.b16 %v3403, %v3401
      %v3450 = vpack.c.b16 %v3404, %v3402
      %v3451 = vpack.c.b16 %v3407, %v3405
      %v3452 = vpack.c.b16 %v3408, %v3406
      %v3453 = vpack.c.b16 %v3411, %v3409
      %v3454 = vpack.c.b16 %v3412, %v3410
      %v3455 = vpack.c.b16 %v3415, %v3413
      %v3456 = vpack.c.b16 %v3416, %v3414
      %v3457 = vpack.c.b16 %v3419, %v3417
      %v3458 = vpack.c.b16 %v3420, %v3418
      %v3459 = vpack.c.b16 %v3423, %v3421
      %v3460 = vpack.c.b16 %v3424, %v3422
      %v3461 = vpack.c.b16 %v3427, %v3425
      %v3462 = vpack.c.b16 %v3428, %v3426
      %v3463 = vpack.c.b16 %v3431, %v3429
      %v3464 = vpack.c.b16 %v3432, %v3430
      %3497 = vmatprep.subr.bf16.mxu0 %v3434
      %3498 = vmatpush1.bf16.msra.mxu0 %v3433
      %3499 = vmatprep.subr.bf16.mxu0 %v3436
      %3500 = vmatpush1.bf16.msra.mxu0 %v3435
      %3501 = vmatprep.subr.bf16.mxu0 %v3438
      %3502 = vmatpush1.bf16.msra.mxu0 %v3437
      %3503 = vmatprep.subr.bf16.mxu0 %v3440
      %3504 = vmatpush1.bf16.msra.mxu0 %v3439
      %3505 = vmatprep.subr.bf16.mxu0 %v3442
      %3506 = vmatpush1.bf16.msra.mxu0 %v3441
      %3507 = vmatprep.subr.bf16.mxu0 %v3444
      %3508 = vmatpush1.bf16.msra.mxu0 %v3443
      %3509 = vmatprep.subr.bf16.mxu0 %v3446
      %3510 = vmatpush1.bf16.msra.mxu0 %v3445
      %3511 = vmatprep.subr.bf16.mxu0 %v3448
      %3512 = vmatpush1.bf16.msra.mxu0 %v3447
      %3513 = vmatprep.subr.bf16.mxu0 %v3450
      %3514 = vmatpush1.bf16.msra.mxu0 %v3449
      %3515 = vmatprep.subr.bf16.mxu0 %v3452
      %3516 = vmatpush1.bf16.msra.mxu0 %v3451
      %3517 = vmatprep.subr.bf16.mxu0 %v3454
      %3518 = vmatpush1.bf16.msra.mxu0 %v3453
      %3519 = vmatprep.subr.bf16.mxu0 %v3456
      %3520 = vmatpush1.bf16.msra.mxu0 %v3455
      %3521 = vmatprep.subr.bf16.mxu0 %v3458
      %3522 = vmatpush1.bf16.msra.mxu0 %v3457
      %3523 = vmatprep.subr.bf16.mxu0 %v3460
      %3524 = vmatpush1.bf16.msra.mxu0 %v3459
      %3525 = vmatprep.subr.bf16.mxu0 %v3462
      %3526 = vmatpush1.bf16.msra.mxu0 %v3461
      %3527 = vmatprep.subr.bf16.mxu0 %v3464
      %3528 = vmatpush1.bf16.msra.mxu0 %v3463
      %3529 = vmatprep.mubr.bf16.mxu0 %v3297
      %3530 = vmatmul.mubr.bf16.gmra.mrb[0].mxu0 %v2638
      %v3531 = vpop.f32.mrb[0].mxu0
      %v3532 = vadd.f32 0.0, %v3531
      %v3533 = vpop.f32.mrb[0].mxu0
      %v3534 = vadd.f32 0.0, %v3533
      %v3535 = vpop.f32.mrb[0].mxu0
      %v3536 = vadd.f32 0.0, %v3535
      %v3537 = vpop.f32.mrb[0].mxu0
      %v3538 = vadd.f32 0.0, %v3537
      %3539 = vmatprep.mubr.bf16.mxu0 %v3298
      %3540 = vmatmul.mubr.bf16.gmra.mrb[0].mxu0 %v2639
      %v3541 = vpop.f32.mrb[0].mxu0
      %v3542 = vadd.f32 0.0, %v3541
      %v3543 = vpop.f32.mrb[0].mxu0
      %v3544 = vadd.f32 0.0, %v3543
      %v3545 = vpop.f32.mrb[0].mxu0
      %v3546 = vadd.f32 0.0, %v3545
      %v3547 = vpop.f32.mrb[0].mxu0
      %v3548 = vadd.f32 0.0, %v3547
      %3549 = vmatprep.mubr.bf16.mxu0 %v3299
      %3550 = vmatmul.mubr.bf16.gmra.mrb[0].mxu0 %v2640
      %v3551 = vpop.f32.mrb[0].mxu0
      %v3552 = vadd.f32 0.0, %v3551
      %v3553 = vpop.f32.mrb[0].mxu0
      %v3554 = vadd.f32 0.0, %v3553
      %v3555 = vpop.f32.mrb[0].mxu0
      %v3556 = vadd.f32 0.0, %v3555
      %v3557 = vpop.f32.mrb[0].mxu0
      %v3558 = vadd.f32 0.0, %v3557
      %3559 = vmatprep.mubr.bf16.mxu0 %v3300
      %3560 = vmatmul.mubr.bf16.gmra.mrb[0].mxu0 %v2641
      %v3561 = vpop.f32.mrb[0].mxu0
      %v3562 = vadd.f32 0.0, %v3561
      %v3563 = vpop.f32.mrb[0].mxu0
      %v3564 = vadd.f32 0.0, %v3563
      %v3565 = vpop.f32.mrb[0].mxu0
      %v3566 = vadd.f32 0.0, %v3565
      %v3567 = vpop.f32.mrb[0].mxu0
      %v3568 = vadd.f32 0.0, %v3567
      %3569 = vmatprep.mubr.bf16.mxu0 %v3301
      %3570 = vmatmul.mubr.bf16.gmra.mrb[0].mxu0 %v2642
      %v3571 = vpop.f32.mrb[0].mxu0
      %v3572 = vadd.f32 0.0, %v3571
      %v3573 = vpop.f32.mrb[0].mxu0
      %v3574 = vadd.f32 0.0, %v3573
      %v3575 = vpop.f32.mrb[0].mxu0
      %v3576 = vadd.f32 0.0, %v3575
      %v3577 = vpop.f32.mrb[0].mxu0
      %v3578 = vadd.f32 0.0, %v3577
      %3579 = vmatprep.mubr.bf16.mxu0 %v3302
      %3580 = vmatmul.mubr.bf16.gmra.mrb[0].mxu0 %v2643
      %v3581 = vpop.f32.mrb[0].mxu0
      %v3582 = vadd.f32 0.0, %v3581
      %v3583 = vpop.f32.mrb[0].mxu0
      %v3584 = vadd.f32 0.0, %v3583
      %v3585 = vpop.f32.mrb[0].mxu0
      %v3586 = vadd.f32 0.0, %v3585
      %v3587 = vpop.f32.mrb[0].mxu0
      %v3588 = vadd.f32 0.0, %v3587
      %3589 = vmatprep.mubr.bf16.mxu0 %v3303
      %3590 = vmatmul.mubr.bf16.gmra.mrb[0].mxu0 %v2644
      %v3591 = vpop.f32.mrb[0].mxu0
      %v3592 = vadd.f32 0.0, %v3591
      %v3593 = vpop.f32.mrb[0].mxu0
      %v3594 = vadd.f32 0.0, %v3593
      %v3595 = vpop.f32.mrb[0].mxu0
      %v3596 = vadd.f32 0.0, %v3595
      %v3597 = vpop.f32.mrb[0].mxu0
      %v3598 = vadd.f32 0.0, %v3597
      %3599 = vmatprep.mubr.bf16.mxu0 %v3304
      %3600 = vmatmul.mubr.bf16.gmra.mrb[0].mxu0 %v2645
      %v3601 = vpop.f32.mrb[0].mxu0
      %v3602 = vadd.f32 0.0, %v3601
      %v3603 = vpop.f32.mrb[0].mxu0
      %v3604 = vadd.f32 0.0, %v3603
      %v3605 = vpop.f32.mrb[0].mxu0
      %v3606 = vadd.f32 0.0, %v3605
      %v3607 = vpop.f32.mrb[0].mxu0
      %v3608 = vadd.f32 0.0, %v3607
      %3609 = vdwg.mxu0
      %v3610 = vadd.f32 %v575, %v3532
      %v3611 = vadd.f32 %v576, %v3534
      %v3612 = vadd.f32 %v577, %v3536
      %v3613 = vadd.f32 %v578, %v3538
      %v3614 = vadd.f32 %v579, %v3542
      %v3615 = vadd.f32 %v580, %v3544
      %v3616 = vadd.f32 %v581, %v3546
      %v3617 = vadd.f32 %v582, %v3548
      %v3618 = vadd.f32 %v583, %v3552
      %v3619 = vadd.f32 %v584, %v3554
      %v3620 = vadd.f32 %v585, %v3556
      %v3621 = vadd.f32 %v586, %v3558
      %v3622 = vadd.f32 %v587, %v3562
      %v3623 = vadd.f32 %v588, %v3564
      %v3624 = vadd.f32 %v589, %v3566
      %v3625 = vadd.f32 %v590, %v3568
      %v3626 = vadd.f32 %v591, %v3572
      %v3627 = vadd.f32 %v592, %v3574
      %v3628 = vadd.f32 %v593, %v3576
      %v3629 = vadd.f32 %v594, %v3578
      %v3630 = vadd.f32 %v595, %v3582
      %v3631 = vadd.f32 %v596, %v3584
      %v3632 = vadd.f32 %v597, %v3586
      %v3633 = vadd.f32 %v598, %v3588
      %v3634 = vadd.f32 %v599, %v3592
      %v3635 = vadd.f32 %v600, %v3594
      %v3636 = vadd.f32 %v601, %v3596
      %v3637 = vadd.f32 %v602, %v3598
      %v3638 = vadd.f32 %v603, %v3602
      %v3639 = vadd.f32 %v604, %v3604
      %v3640 = vadd.f32 %v605, %v3606
      %v3641 = vadd.f32 %v606, %v3608
      %v3642 = vld [vmem:[%s485] sm:$0x3]
      %v3643 = vmul.f32 %v3610, %v3610
      %v3644 = vmul.f32 %v3611, %v3611
      %v3645 = vmul.f32 %v3612, %v3612
      %v3646 = vmul.f32 %v3613, %v3613
      %v3647 = vmul.f32 %v3614, %v3614
      %v3648 = vmul.f32 %v3615, %v3615
      %v3649 = vmul.f32 %v3616, %v3616
      %v3650 = vmul.f32 %v3617, %v3617
      %v3651 = vmul.f32 %v3618, %v3618
      %v3652 = vmul.f32 %v3619, %v3619
      %v3653 = vmul.f32 %v3620, %v3620
      %v3654 = vmul.f32 %v3621, %v3621
      %v3655 = vmul.f32 %v3622, %v3622
      %v3656 = vmul.f32 %v3623, %v3623
      %v3657 = vmul.f32 %v3624, %v3624
      %v3658 = vmul.f32 %v3625, %v3625
      %v3659 = vmul.f32 %v3626, %v3626
      %v3660 = vmul.f32 %v3627, %v3627
      %v3661 = vmul.f32 %v3628, %v3628
      %v3662 = vmul.f32 %v3629, %v3629
      %v3663 = vmul.f32 %v3630, %v3630
      %v3664 = vmul.f32 %v3631, %v3631
      %v3665 = vmul.f32 %v3632, %v3632
      %v3666 = vmul.f32 %v3633, %v3633
      %v3667 = vmul.f32 %v3634, %v3634
      %v3668 = vmul.f32 %v3635, %v3635
      %v3669 = vmul.f32 %v3636, %v3636
      %v3670 = vmul.f32 %v3637, %v3637
      %v3671 = vmul.f32 %v3638, %v3638
      %v3672 = vmul.f32 %v3639, %v3639
      %v3673 = vmul.f32 %v3640, %v3640
      %v3674 = vmul.f32 %v3641, %v3641
      %v3675 = vadd.f32 %v3643, %v3644
      %3676 = vadd.xlane.f32.xlu0 %v3675
      %v3677 = vpop.xlane.xlu0 %3676
      %v3678 = vadd.f32 %v3645, %v3646
      %3679 = vadd.xlane.f32.xlu0 %v3678
      %v3680 = vpop.xlane.xlu0 %3679
      %v3681 = vadd.f32 %v3647, %v3648
      %3682 = vadd.xlane.f32.xlu0 %v3681
      %v3683 = vpop.xlane.xlu0 %3682
      %v3684 = vadd.f32 %v3649, %v3650
      %3685 = vadd.xlane.f32.xlu0 %v3684
      %v3686 = vpop.xlane.xlu0 %3685
      %v3687 = vadd.f32 %v3651, %v3652
      %3688 = vadd.xlane.f32.xlu0 %v3687
      %v3689 = vpop.xlane.xlu0 %3688
      %v3690 = vadd.f32 %v3653, %v3654
      %3691 = vadd.xlane.f32.xlu0 %v3690
      %v3692 = vpop.xlane.xlu0 %3691
      %v3693 = vadd.f32 %v3655, %v3656
      %3694 = vadd.xlane.f32.xlu0 %v3693
      %v3695 = vpop.xlane.xlu0 %3694
      %v3696 = vadd.f32 %v3657, %v3658
      %3697 = vadd.xlane.f32.xlu0 %v3696
      %v3698 = vpop.xlane.xlu0 %3697
      %v3699 = vadd.f32 %v3659, %v3660
      %3700 = vadd.xlane.f32.xlu0 %v3699
      %v3701 = vpop.xlane.xlu0 %3700
      %v3702 = vadd.f32 %v3661, %v3662
      %3703 = vadd.xlane.f32.xlu0 %v3702
      %v3704 = vpop.xlane.xlu0 %3703
      %v3705 = vadd.f32 %v3663, %v3664
      %3706 = vadd.xlane.f32.xlu0 %v3705
      %v3707 = vpop.xlane.xlu0 %3706
      %v3708 = vadd.f32 %v3665, %v3666
      %3709 = vadd.xlane.f32.xlu0 %v3708
      %v3710 = vpop.xlane.xlu0 %3709
      %v3711 = vadd.f32 %v3667, %v3668
      %3712 = vadd.xlane.f32.xlu0 %v3711
      %v3713 = vpop.xlane.xlu0 %3712
      %v3714 = vadd.f32 %v3669, %v3670
      %3715 = vadd.xlane.f32.xlu0 %v3714
      %v3716 = vpop.xlane.xlu0 %3715
      %v3717 = vadd.f32 %v3671, %v3672
      %3718 = vadd.xlane.f32.xlu0 %v3717
      %v3719 = vpop.xlane.xlu0 %3718
      %v3720 = vadd.f32 %v3673, %v3674
      %3721 = vadd.xlane.f32.xlu0 %v3720
      %v3722 = vpop.xlane.xlu0 %3721
      %v3723 = vmul.f32 %v3677, %v688
      %v3724 = vmul.f32 %v3680, %v688
      %v3725 = vmul.f32 %v3683, %v688
      %v3726 = vmul.f32 %v3686, %v688
      %v3727 = vmul.f32 %v3689, %v688
      %v3728 = vmul.f32 %v3692, %v688
      %v3729 = vmul.f32 %v3695, %v688
      %v3730 = vmul.f32 %v3698, %v688
      %v3731 = vmul.f32 %v3701, %v688
      %v3732 = vmul.f32 %v3704, %v688
      %v3733 = vmul.f32 %v3707, %v688
      %v3734 = vmul.f32 %v3710, %v688
      %v3735 = vmul.f32 %v3713, %v688
      %v3736 = vmul.f32 %v3716, %v688
      %v3737 = vmul.f32 %v3719, %v688
      %v3738 = vmul.f32 %v3722, %v688
      %v3739 = vadd.f32 %v3723, 1e-06
      %v3740 = vadd.f32 %v3724, 1e-06
      %v3741 = vadd.f32 %v3725, 1e-06
      %v3742 = vadd.f32 %v3726, 1e-06
      %v3743 = vadd.f32 %v3727, 1e-06
      %v3744 = vadd.f32 %v3728, 1e-06
      %v3745 = vadd.f32 %v3729, 1e-06
      %v3746 = vadd.f32 %v3730, 1e-06
      %v3747 = vadd.f32 %v3731, 1e-06
      %v3748 = vadd.f32 %v3732, 1e-06
      %v3749 = vadd.f32 %v3733, 1e-06
      %v3750 = vadd.f32 %v3734, 1e-06
      %v3751 = vadd.f32 %v3735, 1e-06
      %v3752 = vadd.f32 %v3736, 1e-06
      %v3753 = vadd.f32 %v3737, 1e-06
      %v3754 = vadd.f32 %v3738, 1e-06
      %v3755 = vrsqrt.pop %v3739
      %v3756 = vrsqrt.pop %v3740
      %v3757 = vrsqrt.pop %v3741
      %v3758 = vrsqrt.pop %v3742
      %v3759 = vrsqrt.pop %v3743
      %v3760 = vrsqrt.pop %v3744
      %v3761 = vrsqrt.pop %v3745
      %v3762 = vrsqrt.pop %v3746
      %v3763 = vrsqrt.pop %v3747
      %v3764 = vrsqrt.pop %v3748
      %v3765 = vrsqrt.pop %v3749
      %v3766 = vrsqrt.pop %v3750
      %v3767 = vrsqrt.pop %v3751
      %v3768 = vrsqrt.pop %v3752
      %v3769 = vrsqrt.pop %v3753
      %v3770 = vrsqrt.pop %v3754
      %v3771 = vmul.f32 %v3610, %v3755
      %v3772 = vmul.f32 %v3611, %v3755
      %v3773 = vmul.f32 %v3612, %v3756
      %v3774 = vmul.f32 %v3613, %v3756
      %v3775 = vmul.f32 %v3614, %v3757
      %v3776 = vmul.f32 %v3615, %v3757
      %v3777 = vmul.f32 %v3616, %v3758
      %v3778 = vmul.f32 %v3617, %v3758
      %v3779 = vmul.f32 %v3618, %v3759
      %v3780 = vmul.f32 %v3619, %v3759
      %v3781 = vmul.f32 %v3620, %v3760
      %v3782 = vmul.f32 %v3621, %v3760
      %v3783 = vmul.f32 %v3622, %v3761
      %v3784 = vmul.f32 %v3623, %v3761
      %v3785 = vmul.f32 %v3624, %v3762
      %v3786 = vmul.f32 %v3625, %v3762
      %v3787 = vmul.f32 %v3626, %v3763
      %v3788 = vmul.f32 %v3627, %v3763
      %v3789 = vmul.f32 %v3628, %v3764
      %v3790 = vmul.f32 %v3629, %v3764
      %v3791 = vmul.f32 %v3630, %v3765
      %v3792 = vmul.f32 %v3631, %v3765
      %v3793 = vmul.f32 %v3632, %v3766
      %v3794 = vmul.f32 %v3633, %v3766
      %v3795 = vmul.f32 %v3634, %v3767
      %v3796 = vmul.f32 %v3635, %v3767
      %v3797 = vmul.f32 %v3636, %v3768
      %v3798 = vmul.f32 %v3637, %v3768
      %v3799 = vmul.f32 %v3638, %v3769
      %v3800 = vmul.f32 %v3639, %v3769
      %v3801 = vmul.f32 %v3640, %v3770
      %v3802 = vmul.f32 %v3641, %v3770
      %v3804 = vlaneseq
      %v3805 = vshrl.u32 %v3804, 7
      %v3806 = vsub.s32 0, %v3805
      %v3807 = vrot.slane %v3642, %v3806
      %v3808 = vlaneseq
      %v3809 = vshrl.u32 %v3808, 7
      %v3810 = vsub.s32 1, %v3809
      %v3811 = vrot.slane %v3642, %v3810
      %v3814 = vmul.f32 %v3771, %v3807
      %v3815 = vmul.f32 %v3772, %v3811
      %v3816 = vmul.f32 %v3773, %v3807
      %v3817 = vmul.f32 %v3774, %v3811
      %v3818 = vmul.f32 %v3775, %v3807
      %v3819 = vmul.f32 %v3776, %v3811
      %v3820 = vmul.f32 %v3777, %v3807
      %v3821 = vmul.f32 %v3778, %v3811
      %v3822 = vmul.f32 %v3779, %v3807
      %v3823 = vmul.f32 %v3780, %v3811
      %v3824 = vmul.f32 %v3781, %v3807
      %v3825 = vmul.f32 %v3782, %v3811
      %v3826 = vmul.f32 %v3783, %v3807
      %v3827 = vmul.f32 %v3784, %v3811
      %v3828 = vmul.f32 %v3785, %v3807
      %v3829 = vmul.f32 %v3786, %v3811
      %v3830 = vmul.f32 %v3787, %v3807
      %v3831 = vmul.f32 %v3788, %v3811
      %v3832 = vmul.f32 %v3789, %v3807
      %v3833 = vmul.f32 %v3790, %v3811
      %v3834 = vmul.f32 %v3791, %v3807
      %v3835 = vmul.f32 %v3792, %v3811
      %v3836 = vmul.f32 %v3793, %v3807
      %v3837 = vmul.f32 %v3794, %v3811
      %v3838 = vmul.f32 %v3795, %v3807
      %v3839 = vmul.f32 %v3796, %v3811
      %v3840 = vmul.f32 %v3797, %v3807
      %v3841 = vmul.f32 %v3798, %v3811
      %v3842 = vmul.f32 %v3799, %v3807
      %v3843 = vmul.f32 %v3800, %v3811
      %v3844 = vmul.f32 %v3801, %v3807
      %v3845 = vmul.f32 %v3802, %v3811
      %v3846 = vpack.c.bf16 %v3816, %v3814
      %v3847 = vpack.c.bf16 %v3817, %v3815
      %v3848 = vpack.c.bf16 %v3820, %v3818
      %v3849 = vpack.c.bf16 %v3821, %v3819
      %v3850 = vpack.c.bf16 %v3824, %v3822
      %v3851 = vpack.c.bf16 %v3825, %v3823
      %v3852 = vpack.c.bf16 %v3828, %v3826
      %v3853 = vpack.c.bf16 %v3829, %v3827
      %v3854 = vpack.c.bf16 %v3832, %v3830
      %v3855 = vpack.c.bf16 %v3833, %v3831
      %v3856 = vpack.c.bf16 %v3836, %v3834
      %v3857 = vpack.c.bf16 %v3837, %v3835
      %v3858 = vpack.c.bf16 %v3840, %v3838
      %v3859 = vpack.c.bf16 %v3841, %v3839
      %v3860 = vpack.c.bf16 %v3844, %v3842
      %v3861 = vpack.c.bf16 %v3845, %v3843
      %v3862 = vld [vmem:[%s490] sm:$0xff]
      %v3863 = vld [vmem:[%s490 + $0x8] sm:$0xff]
      %v3864 = vld [vmem:[%s490 + $0x10] sm:$0xff]
      %v3865 = vld [vmem:[%s490 + $0x18] sm:$0xff]
      %v3866 = vld [vmem:[%s490 + $0x20] sm:$0xff]
      %v3867 = vld [vmem:[%s490 + $0x28] sm:$0xff]
      %v3868 = vld [vmem:[%s490 + $0x30] sm:$0xff]
      %v3869 = vld [vmem:[%s490 + $0x38] sm:$0xff]
      %v3870 = vld [vmem:[%s490 + $0x40] sm:$0xff]
      %v3871 = vld [vmem:[%s490 + $0x48] sm:$0xff]
      %v3872 = vld [vmem:[%s490 + $0x50] sm:$0xff]
      %v3873 = vld [vmem:[%s490 + $0x58] sm:$0xff]
      %v3874 = vld [vmem:[%s490 + $0x60] sm:$0xff]
      %v3875 = vld [vmem:[%s490 + $0x68] sm:$0xff]
      %v3876 = vld [vmem:[%s490 + $0x70] sm:$0xff]
      %v3877 = vld [vmem:[%s490 + $0x78] sm:$0xff]
      %v3878 = vld [vmem:[%s490 + $0x80] sm:$0xff]
      %v3879 = vld [vmem:[%s490 + $0x88] sm:$0xff]
      %v3880 = vld [vmem:[%s490 + $0x90] sm:$0xff]
      %v3881 = vld [vmem:[%s490 + $0x98] sm:$0xff]
      %v3882 = vld [vmem:[%s490 + $0xa0] sm:$0xff]
      %v3883 = vld [vmem:[%s490 + $0xa8] sm:$0xff]
      %v3884 = vld [vmem:[%s490 + $0xb0] sm:$0xff]
      %v3885 = vld [vmem:[%s490 + $0xb8] sm:$0xff]
      %v3886 = vld [vmem:[%s490 + $0xc0] sm:$0xff]
      %v3887 = vld [vmem:[%s490 + $0xc8] sm:$0xff]
      %v3888 = vld [vmem:[%s490 + $0xd0] sm:$0xff]
      %v3889 = vld [vmem:[%s490 + $0xd8] sm:$0xff]
      %v3890 = vld [vmem:[%s490 + $0xe0] sm:$0xff]
      %v3891 = vld [vmem:[%s490 + $0xe8] sm:$0xff]
      %v3892 = vld [vmem:[%s490 + $0xf0] sm:$0xff]
      %v3893 = vld [vmem:[%s490 + $0xf8] sm:$0xff]
      %v3894 = vld [vmem:[%s490 + $0x100] sm:$0xff]
      %v3895 = vld [vmem:[%s490 + $0x108] sm:$0xff]
      %v3896 = vld [vmem:[%s490 + $0x110] sm:$0xff]
      %v3897 = vld [vmem:[%s490 + $0x118] sm:$0xff]
      %v3898 = vld [vmem:[%s490 + $0x120] sm:$0xff]
      %v3899 = vld [vmem:[%s490 + $0x128] sm:$0xff]
      %v3900 = vld [vmem:[%s490 + $0x130] sm:$0xff]
      %v3901 = vld [vmem:[%s490 + $0x138] sm:$0xff]
      %v3902 = vld [vmem:[%s490 + $0x140] sm:$0xff]
      %v3903 = vld [vmem:[%s490 + $0x148] sm:$0xff]
      %v3904 = vld [vmem:[%s490 + $0x150] sm:$0xff]
      %v3905 = vld [vmem:[%s490 + $0x158] sm:$0xff]
      %v3906 = vld [vmem:[%s490 + $0x160] sm:$0xff]
      %v3907 = vld [vmem:[%s490 + $0x168] sm:$0xff]
      %v3908 = vld [vmem:[%s490 + $0x170] sm:$0xff]
      %v3909 = vld [vmem:[%s490 + $0x178] sm:$0xff]
      %v3910 = vld [vmem:[%s490 + $0x180] sm:$0xff]
      %v3911 = vld [vmem:[%s490 + $0x188] sm:$0xff]
      %v3912 = vld [vmem:[%s490 + $0x190] sm:$0xff]
      %v3913 = vld [vmem:[%s490 + $0x198] sm:$0xff]
      %v3914 = vld [vmem:[%s490 + $0x1a0] sm:$0xff]
      %v3915 = vld [vmem:[%s490 + $0x1a8] sm:$0xff]
      %v3916 = vld [vmem:[%s490 + $0x1b0] sm:$0xff]
      %v3917 = vld [vmem:[%s490 + $0x1b8] sm:$0xff]
      %v3918 = vld [vmem:[%s490 + $0x1c0] sm:$0xff]
      %v3919 = vld [vmem:[%s490 + $0x1c8] sm:$0xff]
      %v3920 = vld [vmem:[%s490 + $0x1d0] sm:$0xff]
      %v3921 = vld [vmem:[%s490 + $0x1d8] sm:$0xff]
      %v3922 = vld [vmem:[%s490 + $0x1e0] sm:$0xff]
      %v3923 = vld [vmem:[%s490 + $0x1e8] sm:$0xff]
      %v3924 = vld [vmem:[%s490 + $0x1f0] sm:$0xff]
      %v3925 = vld [vmem:[%s490 + $0x1f8] sm:$0xff]
      %v3926 = vld [vmem:[%s490 + $0x200] sm:$0xff]
      %v3927 = vld [vmem:[%s490 + $0x208] sm:$0xff]
      %v3928 = vld [vmem:[%s490 + $0x210] sm:$0xff]
      %v3929 = vld [vmem:[%s490 + $0x218] sm:$0xff]
      %v3930 = vld [vmem:[%s490 + $0x220] sm:$0xff]
      %v3931 = vld [vmem:[%s490 + $0x228] sm:$0xff]
      %v3932 = vld [vmem:[%s490 + $0x230] sm:$0xff]
      %v3933 = vld [vmem:[%s490 + $0x238] sm:$0xff]
      %v3934 = vld [vmem:[%s490 + $0x240] sm:$0xff]
      %v3935 = vld [vmem:[%s490 + $0x248] sm:$0xff]
      %v3936 = vld [vmem:[%s490 + $0x250] sm:$0xff]
      %v3937 = vld [vmem:[%s490 + $0x258] sm:$0xff]
      %v3938 = vld [vmem:[%s490 + $0x260] sm:$0xff]
      %v3939 = vld [vmem:[%s490 + $0x268] sm:$0xff]
      %v3940 = vld [vmem:[%s490 + $0x270] sm:$0xff]
      %v3941 = vld [vmem:[%s490 + $0x278] sm:$0xff]
      %v3942 = vld [vmem:[%s490 + $0x280] sm:$0xff]
      %v3943 = vld [vmem:[%s490 + $0x288] sm:$0xff]
      %v3944 = vld [vmem:[%s490 + $0x290] sm:$0xff]
      %v3945 = vld [vmem:[%s490 + $0x298] sm:$0xff]
      %v3946 = vld [vmem:[%s490 + $0x2a0] sm:$0xff]
      %v3947 = vld [vmem:[%s490 + $0x2a8] sm:$0xff]
      %v3948 = vld [vmem:[%s490 + $0x2b0] sm:$0xff]
      %v3949 = vld [vmem:[%s490 + $0x2b8] sm:$0xff]
      %v3950 = vld [vmem:[%s490 + $0x2c0] sm:$0xff]
      %v3951 = vld [vmem:[%s490 + $0x2c8] sm:$0xff]
      %v3952 = vld [vmem:[%s490 + $0x2d0] sm:$0xff]
      %v3953 = vld [vmem:[%s490 + $0x2d8] sm:$0xff]
      %v3954 = vld [vmem:[%s490 + $0x2e0] sm:$0xff]
      %v3955 = vld [vmem:[%s490 + $0x2e8] sm:$0xff]
      %v3956 = vld [vmem:[%s490 + $0x2f0] sm:$0xff]
      %v3957 = vld [vmem:[%s490 + $0x2f8] sm:$0xff]
      %v4054 = vunpack.c.l.b16 %v3862
      %v4055 = vunpack.c.h.b16 %v3862
      %v4056 = vunpack.c.l.b16 %v3863
      %v4057 = vunpack.c.h.b16 %v3863
      %v4058 = vunpack.c.l.b16 %v3864
      %v4059 = vunpack.c.h.b16 %v3864
      %v4060 = vunpack.c.l.b16 %v3865
      %v4061 = vunpack.c.h.b16 %v3865
      %v4062 = vunpack.c.l.b16 %v3866
      %v4063 = vunpack.c.h.b16 %v3866
      %v4064 = vunpack.c.l.b16 %v3867
      %v4065 = vunpack.c.h.b16 %v3867
      %v4066 = vunpack.c.l.b16 %v3868
      %v4067 = vunpack.c.h.b16 %v3868
      %v4068 = vunpack.c.l.b16 %v3869
      %v4069 = vunpack.c.h.b16 %v3869
      %v4070 = vunpack.c.l.b16 %v3870
      %v4071 = vunpack.c.h.b16 %v3870
      %v4072 = vunpack.c.l.b16 %v3871
      %v4073 = vunpack.c.h.b16 %v3871
      %v4074 = vunpack.c.l.b16 %v3872
      %v4075 = vunpack.c.h.b16 %v3872
      %v4076 = vunpack.c.l.b16 %v3873
      %v4077 = vunpack.c.h.b16 %v3873
      %v4078 = vunpack.c.l.b16 %v3874
      %v4079 = vunpack.c.h.b16 %v3874
      %v4080 = vunpack.c.l.b16 %v3875
      %v4081 = vunpack.c.h.b16 %v3875
      %v4082 = vunpack.c.l.b16 %v3876
      %v4083 = vunpack.c.h.b16 %v3876
      %v4084 = vunpack.c.l.b16 %v3877
      %v4085 = vunpack.c.h.b16 %v3877
      %v4086 = vunpack.c.l.b16 %v3878
      %v4087 = vunpack.c.h.b16 %v3878
      %v4088 = vunpack.c.l.b16 %v3879
      %v4089 = vunpack.c.h.b16 %v3879
      %v4090 = vunpack.c.l.b16 %v3880
      %v4091 = vunpack.c.h.b16 %v3880
      %v4092 = vunpack.c.l.b16 %v3881
      %v4093 = vunpack.c.h.b16 %v3881
      %v4094 = vunpack.c.l.b16 %v3882
      %v4095 = vunpack.c.h.b16 %v3882
      %v4096 = vunpack.c.l.b16 %v3883
      %v4097 = vunpack.c.h.b16 %v3883
      %v4098 = vunpack.c.l.b16 %v3884
      %v4099 = vunpack.c.h.b16 %v3884
      %v4100 = vunpack.c.l.b16 %v3885
      %v4101 = vunpack.c.h.b16 %v3885
      %v4102 = vunpack.c.l.b16 %v3886
      %v4103 = vunpack.c.h.b16 %v3886
      %v4104 = vunpack.c.l.b16 %v3887
      %v4105 = vunpack.c.h.b16 %v3887
      %v4106 = vunpack.c.l.b16 %v3888
      %v4107 = vunpack.c.h.b16 %v3888
      %v4108 = vunpack.c.l.b16 %v3889
      %v4109 = vunpack.c.h.b16 %v3889
      %v4110 = vunpack.c.l.b16 %v3890
      %v4111 = vunpack.c.h.b16 %v3890
      %v4112 = vunpack.c.l.b16 %v3891
      %v4113 = vunpack.c.h.b16 %v3891
      %v4114 = vunpack.c.l.b16 %v3892
      %v4115 = vunpack.c.h.b16 %v3892
      %v4116 = vunpack.c.l.b16 %v3893
      %v4117 = vunpack.c.h.b16 %v3893
      %v4118 = vunpack.c.l.b16 %v3894
      %v4119 = vunpack.c.h.b16 %v3894
      %v4120 = vunpack.c.l.b16 %v3895
      %v4121 = vunpack.c.h.b16 %v3895
      %v4122 = vunpack.c.l.b16 %v3896
      %v4123 = vunpack.c.h.b16 %v3896
      %v4124 = vunpack.c.l.b16 %v3897
      %v4125 = vunpack.c.h.b16 %v3897
      %v4126 = vunpack.c.l.b16 %v3898
      %v4127 = vunpack.c.h.b16 %v3898
      %v4128 = vunpack.c.l.b16 %v3899
      %v4129 = vunpack.c.h.b16 %v3899
      %v4130 = vunpack.c.l.b16 %v3900
      %v4131 = vunpack.c.h.b16 %v3900
      %v4132 = vunpack.c.l.b16 %v3901
      %v4133 = vunpack.c.h.b16 %v3901
      %v4134 = vunpack.c.l.b16 %v3902
      %v4135 = vunpack.c.h.b16 %v3902
      %v4136 = vunpack.c.l.b16 %v3903
      %v4137 = vunpack.c.h.b16 %v3903
      %v4138 = vunpack.c.l.b16 %v3904
      %v4139 = vunpack.c.h.b16 %v3904
      %v4140 = vunpack.c.l.b16 %v3905
      %v4141 = vunpack.c.h.b16 %v3905
      %v4142 = vunpack.c.l.b16 %v3906
      %v4143 = vunpack.c.h.b16 %v3906
      %v4144 = vunpack.c.l.b16 %v3907
      %v4145 = vunpack.c.h.b16 %v3907
      %v4146 = vunpack.c.l.b16 %v3908
      %v4147 = vunpack.c.h.b16 %v3908
      %v4148 = vunpack.c.l.b16 %v3909
      %v4149 = vunpack.c.h.b16 %v3909
      %v4150 = vunpack.c.l.b16 %v3910
      %v4151 = vunpack.c.h.b16 %v3910
      %v4152 = vunpack.c.l.b16 %v3911
      %v4153 = vunpack.c.h.b16 %v3911
      %v4154 = vunpack.c.l.b16 %v3912
      %v4155 = vunpack.c.h.b16 %v3912
      %v4156 = vunpack.c.l.b16 %v3913
      %v4157 = vunpack.c.h.b16 %v3913
      %v4158 = vunpack.c.l.b16 %v3914
      %v4159 = vunpack.c.h.b16 %v3914
      %v4160 = vunpack.c.l.b16 %v3915
      %v4161 = vunpack.c.h.b16 %v3915
      %v4162 = vunpack.c.l.b16 %v3916
      %v4163 = vunpack.c.h.b16 %v3916
      %v4164 = vunpack.c.l.b16 %v3917
      %v4165 = vunpack.c.h.b16 %v3917
      %v4166 = vunpack.c.l.b16 %v3918
      %v4167 = vunpack.c.h.b16 %v3918
      %v4168 = vunpack.c.l.b16 %v3919
      %v4169 = vunpack.c.h.b16 %v3919
      %v4170 = vunpack.c.l.b16 %v3920
      %v4171 = vunpack.c.h.b16 %v3920
      %v4172 = vunpack.c.l.b16 %v3921
      %v4173 = vunpack.c.h.b16 %v3921
      %v4174 = vunpack.c.l.b16 %v3922
      %v4175 = vunpack.c.h.b16 %v3922
      %v4176 = vunpack.c.l.b16 %v3923
      %v4177 = vunpack.c.h.b16 %v3923
      %v4178 = vunpack.c.l.b16 %v3924
      %v4179 = vunpack.c.h.b16 %v3924
      %v4180 = vunpack.c.l.b16 %v3925
      %v4181 = vunpack.c.h.b16 %v3925
      %v4182 = vunpack.c.l.b16 %v3926
      %v4183 = vunpack.c.h.b16 %v3926
      %v4184 = vunpack.c.l.b16 %v3927
      %v4185 = vunpack.c.h.b16 %v3927
      %v4186 = vunpack.c.l.b16 %v3928
      %v4187 = vunpack.c.h.b16 %v3928
      %v4188 = vunpack.c.l.b16 %v3929
      %v4189 = vunpack.c.h.b16 %v3929
      %v4190 = vunpack.c.l.b16 %v3930
      %v4191 = vunpack.c.h.b16 %v3930
      %v4192 = vunpack.c.l.b16 %v3931
      %v4193 = vunpack.c.h.b16 %v3931
      %v4194 = vunpack.c.l.b16 %v3932
      %v4195 = vunpack.c.h.b16 %v3932
      %v4196 = vunpack.c.l.b16 %v3933
      %v4197 = vunpack.c.h.b16 %v3933
      %v4198 = vunpack.c.l.b16 %v3934
      %v4199 = vunpack.c.h.b16 %v3934
      %v4200 = vunpack.c.l.b16 %v3935
      %v4201 = vunpack.c.h.b16 %v3935
      %v4202 = vunpack.c.l.b16 %v3936
      %v4203 = vunpack.c.h.b16 %v3936
      %v4204 = vunpack.c.l.b16 %v3937
      %v4205 = vunpack.c.h.b16 %v3937
      %v4206 = vunpack.c.l.b16 %v3938
      %v4207 = vunpack.c.h.b16 %v3938
      %v4208 = vunpack.c.l.b16 %v3939
      %v4209 = vunpack.c.h.b16 %v3939
      %v4210 = vunpack.c.l.b16 %v3940
      %v4211 = vunpack.c.h.b16 %v3940
      %v4212 = vunpack.c.l.b16 %v3941
      %v4213 = vunpack.c.h.b16 %v3941
      %v4214 = vunpack.c.l.b16 %v3942
      %v4215 = vunpack.c.h.b16 %v3942
      %v4216 = vunpack.c.l.b16 %v3943
      %v4217 = vunpack.c.h.b16 %v3943
      %v4218 = vunpack.c.l.b16 %v3944
      %v4219 = vunpack.c.h.b16 %v3944
      %v4220 = vunpack.c.l.b16 %v3945
      %v4221 = vunpack.c.h.b16 %v3945
      %v4222 = vunpack.c.l.b16 %v3946
      %v4223 = vunpack.c.h.b16 %v3946
      %v4224 = vunpack.c.l.b16 %v3947
      %v4225 = vunpack.c.h.b16 %v3947
      %v4226 = vunpack.c.l.b16 %v3948
      %v4227 = vunpack.c.h.b16 %v3948
      %v4228 = vunpack.c.l.b16 %v3949
      %v4229 = vunpack.c.h.b16 %v3949
      %v4230 = vunpack.c.l.b16 %v3950
      %v4231 = vunpack.c.h.b16 %v3950
      %v4232 = vunpack.c.l.b16 %v3951
      %v4233 = vunpack.c.h.b16 %v3951
      %v4234 = vunpack.c.l.b16 %v3952
      %v4235 = vunpack.c.h.b16 %v3952
      %v4236 = vunpack.c.l.b16 %v3953
      %v4237 = vunpack.c.h.b16 %v3953
      %v4238 = vunpack.c.l.b16 %v3954
      %v4239 = vunpack.c.h.b16 %v3954
      %v4240 = vunpack.c.l.b16 %v3955
      %v4241 = vunpack.c.h.b16 %v3955
      %v4242 = vunpack.c.l.b16 %v3956
      %v4243 = vunpack.c.h.b16 %v3956
      %v4244 = vunpack.c.l.b16 %v3957
      %v4245 = vunpack.c.h.b16 %v3957
      %v4246 = vpack.c.b16 %v4060, %v4054
      %v4247 = vpack.c.b16 %v4061, %v4055
      %v4248 = vpack.c.b16 %v4062, %v4056
      %v4249 = vpack.c.b16 %v4063, %v4057
      %v4250 = vpack.c.b16 %v4064, %v4058
      %v4251 = vpack.c.b16 %v4065, %v4059
      %v4252 = vpack.c.b16 %v4072, %v4066
      %v4253 = vpack.c.b16 %v4073, %v4067
      %v4254 = vpack.c.b16 %v4074, %v4068
      %v4255 = vpack.c.b16 %v4075, %v4069
      %v4256 = vpack.c.b16 %v4076, %v4070
      %v4257 = vpack.c.b16 %v4077, %v4071
      %v4258 = vpack.c.b16 %v4084, %v4078
      %v4259 = vpack.c.b16 %v4085, %v4079
      %v4260 = vpack.c.b16 %v4086, %v4080
      %v4261 = vpack.c.b16 %v4087, %v4081
      %v4262 = vpack.c.b16 %v4088, %v4082
      %v4263 = vpack.c.b16 %v4089, %v4083
      %v4264 = vpack.c.b16 %v4096, %v4090
      %v4265 = vpack.c.b16 %v4097, %v4091
      %v4266 = vpack.c.b16 %v4098, %v4092
      %v4267 = vpack.c.b16 %v4099, %v4093
      %v4268 = vpack.c.b16 %v4100, %v4094
      %v4269 = vpack.c.b16 %v4101, %v4095
      %v4270 = vpack.c.b16 %v4108, %v4102
      %v4271 = vpack.c.b16 %v4109, %v4103
      %v4272 = vpack.c.b16 %v4110, %v4104
      %v4273 = vpack.c.b16 %v4111, %v4105
      %v4274 = vpack.c.b16 %v4112, %v4106
      %v4275 = vpack.c.b16 %v4113, %v4107
      %v4276 = vpack.c.b16 %v4120, %v4114
      %v4277 = vpack.c.b16 %v4121, %v4115
      %v4278 = vpack.c.b16 %v4122, %v4116
      %v4279 = vpack.c.b16 %v4123, %v4117
      %v4280 = vpack.c.b16 %v4124, %v4118
      %v4281 = vpack.c.b16 %v4125, %v4119
      %v4282 = vpack.c.b16 %v4132, %v4126
      %v4283 = vpack.c.b16 %v4133, %v4127
      %v4284 = vpack.c.b16 %v4134, %v4128
      %v4285 = vpack.c.b16 %v4135, %v4129
      %v4286 = vpack.c.b16 %v4136, %v4130
      %v4287 = vpack.c.b16 %v4137, %v4131
      %v4288 = vpack.c.b16 %v4144, %v4138
      %v4289 = vpack.c.b16 %v4145, %v4139
      %v4290 = vpack.c.b16 %v4146, %v4140
      %v4291 = vpack.c.b16 %v4147, %v4141
      %v4292 = vpack.c.b16 %v4148, %v4142
      %v4293 = vpack.c.b16 %v4149, %v4143
      %v4294 = vpack.c.b16 %v4156, %v4150
      %v4295 = vpack.c.b16 %v4157, %v4151
      %v4296 = vpack.c.b16 %v4158, %v4152
      %v4297 = vpack.c.b16 %v4159, %v4153
      %v4298 = vpack.c.b16 %v4160, %v4154
      %v4299 = vpack.c.b16 %v4161, %v4155
      %v4300 = vpack.c.b16 %v4168, %v4162
      %v4301 = vpack.c.b16 %v4169, %v4163
      %v4302 = vpack.c.b16 %v4170, %v4164
      %v4303 = vpack.c.b16 %v4171, %v4165
      %v4304 = vpack.c.b16 %v4172, %v4166
      %v4305 = vpack.c.b16 %v4173, %v4167
      %v4306 = vpack.c.b16 %v4180, %v4174
      %v4307 = vpack.c.b16 %v4181, %v4175
      %v4308 = vpack.c.b16 %v4182, %v4176
      %v4309 = vpack.c.b16 %v4183, %v4177
      %v4310 = vpack.c.b16 %v4184, %v4178
      %v4311 = vpack.c.b16 %v4185, %v4179
      %v4312 = vpack.c.b16 %v4192, %v4186
      %v4313 = vpack.c.b16 %v4193, %v4187
      %v4314 = vpack.c.b16 %v4194, %v4188
      %v4315 = vpack.c.b16 %v4195, %v4189
      %v4316 = vpack.c.b16 %v4196, %v4190
      %v4317 = vpack.c.b16 %v4197, %v4191
      %v4318 = vpack.c.b16 %v4204, %v4198
      %v4319 = vpack.c.b16 %v4205, %v4199
      %v4320 = vpack.c.b16 %v4206, %v4200
      %v4321 = vpack.c.b16 %v4207, %v4201
      %v4322 = vpack.c.b16 %v4208, %v4202
      %v4323 = vpack.c.b16 %v4209, %v4203
      %v4324 = vpack.c.b16 %v4216, %v4210
      %v4325 = vpack.c.b16 %v4217, %v4211
      %v4326 = vpack.c.b16 %v4218, %v4212
      %v4327 = vpack.c.b16 %v4219, %v4213
      %v4328 = vpack.c.b16 %v4220, %v4214
      %v4329 = vpack.c.b16 %v4221, %v4215
      %v4330 = vpack.c.b16 %v4228, %v4222
      %v4331 = vpack.c.b16 %v4229, %v4223
      %v4332 = vpack.c.b16 %v4230, %v4224
      %v4333 = vpack.c.b16 %v4231, %v4225
      %v4334 = vpack.c.b16 %v4232, %v4226
      %v4335 = vpack.c.b16 %v4233, %v4227
      %v4336 = vpack.c.b16 %v4240, %v4234
      %v4337 = vpack.c.b16 %v4241, %v4235
      %v4338 = vpack.c.b16 %v4242, %v4236
      %v4339 = vpack.c.b16 %v4243, %v4237
      %v4340 = vpack.c.b16 %v4244, %v4238
      %v4341 = vpack.c.b16 %v4245, %v4239
      %4438 = vmatprep.subr.bf16.mxu0 %v4247
      %4439 = vmatpush1.bf16.msra.mxu0 %v4246
      %4440 = vmatprep.subr.bf16.mxu0 %v4253
      %4441 = vmatpush1.bf16.msra.mxu0 %v4252
      %4442 = vmatprep.subr.bf16.mxu0 %v4259
      %4443 = vmatpush1.bf16.msra.mxu0 %v4258
      %4444 = vmatprep.subr.bf16.mxu0 %v4265
      %4445 = vmatpush1.bf16.msra.mxu0 %v4264
      %4446 = vmatprep.subr.bf16.mxu0 %v4271
      %4447 = vmatpush1.bf16.msra.mxu0 %v4270
      %4448 = vmatprep.subr.bf16.mxu0 %v4277
      %4449 = vmatpush1.bf16.msra.mxu0 %v4276
      %4450 = vmatprep.subr.bf16.mxu0 %v4283
      %4451 = vmatpush1.bf16.msra.mxu0 %v4282
      %4452 = vmatprep.subr.bf16.mxu0 %v4289
      %4453 = vmatpush1.bf16.msra.mxu0 %v4288
      %4454 = vmatprep.subr.bf16.mxu0 %v4295
      %4455 = vmatpush1.bf16.msra.mxu0 %v4294
      %4456 = vmatprep.subr.bf16.mxu0 %v4301
      %4457 = vmatpush1.bf16.msra.mxu0 %v4300
      %4458 = vmatprep.subr.bf16.mxu0 %v4307
      %4459 = vmatpush1.bf16.msra.mxu0 %v4306
      %4460 = vmatprep.subr.bf16.mxu0 %v4313
      %4461 = vmatpush1.bf16.msra.mxu0 %v4312
      %4462 = vmatprep.subr.bf16.mxu0 %v4319
      %4463 = vmatpush1.bf16.msra.mxu0 %v4318
      %4464 = vmatprep.subr.bf16.mxu0 %v4325
      %4465 = vmatpush1.bf16.msra.mxu0 %v4324
      %4466 = vmatprep.subr.bf16.mxu0 %v4331
      %4467 = vmatpush1.bf16.msra.mxu0 %v4330
      %4468 = vmatprep.subr.bf16.mxu0 %v4337
      %4469 = vmatpush1.bf16.msra.mxu0 %v4336
      %4470 = vmatprep.mubr.bf16.mxu0 %v3847
      %4471 = vmatmul.mubr.bf16.gmra.mrb[0].mxu0 %v3846
      %v4472 = vpop.f32.mrb[0].mxu0
      %v4473 = vadd.f32 0.0, %v4472
      %v4474 = vpop.f32.mrb[0].mxu0
      %v4475 = vadd.f32 0.0, %v4474
      %v4476 = vpop.f32.mrb[0].mxu0
      %v4477 = vadd.f32 0.0, %v4476
      %v4478 = vpop.f32.mrb[0].mxu0
      %v4479 = vadd.f32 0.0, %v4478
      %4480 = vmatprep.mubr.bf16.mxu0 %v3849
      %4481 = vmatmul.mubr.bf16.gmra.mrb[0].mxu0 %v3848
      %v4482 = vpop.f32.mrb[0].mxu0
      %v4483 = vadd.f32 0.0, %v4482
      %v4484 = vpop.f32.mrb[0].mxu0
      %v4485 = vadd.f32 0.0, %v4484
      %v4486 = vpop.f32.mrb[0].mxu0
      %v4487 = vadd.f32 0.0, %v4486
      %v4488 = vpop.f32.mrb[0].mxu0
      %v4489 = vadd.f32 0.0, %v4488
      %4490 = vmatprep.mubr.bf16.mxu0 %v3851
      %4491 = vmatmul.mubr.bf16.gmra.mrb[0].mxu0 %v3850
      %v4492 = vpop.f32.mrb[0].mxu0
      %v4493 = vadd.f32 0.0, %v4492
      %v4494 = vpop.f32.mrb[0].mxu0
      %v4495 = vadd.f32 0.0, %v4494
      %v4496 = vpop.f32.mrb[0].mxu0
      %v4497 = vadd.f32 0.0, %v4496
      %v4498 = vpop.f32.mrb[0].mxu0
      %v4499 = vadd.f32 0.0, %v4498
      %4500 = vmatprep.mubr.bf16.mxu0 %v3853
      %4501 = vmatmul.mubr.bf16.gmra.mrb[0].mxu0 %v3852
      %v4502 = vpop.f32.mrb[0].mxu0
      %v4503 = vadd.f32 0.0, %v4502
      %v4504 = vpop.f32.mrb[0].mxu0
      %v4505 = vadd.f32 0.0, %v4504
      %v4506 = vpop.f32.mrb[0].mxu0
      %v4507 = vadd.f32 0.0, %v4506
      %v4508 = vpop.f32.mrb[0].mxu0
      %v4509 = vadd.f32 0.0, %v4508
      %4510 = vmatprep.mubr.bf16.mxu0 %v3855
      %4511 = vmatmul.mubr.bf16.gmra.mrb[0].mxu0 %v3854
      %v4512 = vpop.f32.mrb[0].mxu0
      %v4513 = vadd.f32 0.0, %v4512
      %v4514 = vpop.f32.mrb[0].mxu0
      %v4515 = vadd.f32 0.0, %v4514
      %v4516 = vpop.f32.mrb[0].mxu0
      %v4517 = vadd.f32 0.0, %v4516
      %v4518 = vpop.f32.mrb[0].mxu0
      %v4519 = vadd.f32 0.0, %v4518
      %4520 = vmatprep.mubr.bf16.mxu0 %v3857
      %4521 = vmatmul.mubr.bf16.gmra.mrb[0].mxu0 %v3856
      %v4522 = vpop.f32.mrb[0].mxu0
      %v4523 = vadd.f32 0.0, %v4522
      %v4524 = vpop.f32.mrb[0].mxu0
      %v4525 = vadd.f32 0.0, %v4524
      %v4526 = vpop.f32.mrb[0].mxu0
      %v4527 = vadd.f32 0.0, %v4526
      %v4528 = vpop.f32.mrb[0].mxu0
      %v4529 = vadd.f32 0.0, %v4528
      %4530 = vmatprep.mubr.bf16.mxu0 %v3859
      %4531 = vmatmul.mubr.bf16.gmra.mrb[0].mxu0 %v3858
      %v4532 = vpop.f32.mrb[0].mxu0
      %v4533 = vadd.f32 0.0, %v4532
      %v4534 = vpop.f32.mrb[0].mxu0
      %v4535 = vadd.f32 0.0, %v4534
      %v4536 = vpop.f32.mrb[0].mxu0
      %v4537 = vadd.f32 0.0, %v4536
      %v4538 = vpop.f32.mrb[0].mxu0
      %v4539 = vadd.f32 0.0, %v4538
      %4540 = vmatprep.mubr.bf16.mxu0 %v3861
      %4541 = vmatmul.mubr.bf16.gmra.mrb[0].mxu0 %v3860
      %v4542 = vpop.f32.mrb[0].mxu0
      %v4543 = vadd.f32 0.0, %v4542
      %v4544 = vpop.f32.mrb[0].mxu0
      %v4545 = vadd.f32 0.0, %v4544
      %v4546 = vpop.f32.mrb[0].mxu0
      %v4547 = vadd.f32 0.0, %v4546
      %v4548 = vpop.f32.mrb[0].mxu0
      %v4549 = vadd.f32 0.0, %v4548
      %4550 = vdwg.mxu0
      %4551 = vmatprep.subr.bf16.mxu0 %v4249
      %4552 = vmatpush1.bf16.msra.mxu0 %v4248
      %4553 = vmatprep.subr.bf16.mxu0 %v4255
      %4554 = vmatpush1.bf16.msra.mxu0 %v4254
      %4555 = vmatprep.subr.bf16.mxu0 %v4261
      %4556 = vmatpush1.bf16.msra.mxu0 %v4260
      %4557 = vmatprep.subr.bf16.mxu0 %v4267
      %4558 = vmatpush1.bf16.msra.mxu0 %v4266
      %4559 = vmatprep.subr.bf16.mxu0 %v4273
      %4560 = vmatpush1.bf16.msra.mxu0 %v4272
      %4561 = vmatprep.subr.bf16.mxu0 %v4279
      %4562 = vmatpush1.bf16.msra.mxu0 %v4278
      %4563 = vmatprep.subr.bf16.mxu0 %v4285
      %4564 = vmatpush1.bf16.msra.mxu0 %v4284
      %4565 = vmatprep.subr.bf16.mxu0 %v4291
      %4566 = vmatpush1.bf16.msra.mxu0 %v4290
      %4567 = vmatprep.subr.bf16.mxu0 %v4297
      %4568 = vmatpush1.bf16.msra.mxu0 %v4296
      %4569 = vmatprep.subr.bf16.mxu0 %v4303
      %4570 = vmatpush1.bf16.msra.mxu0 %v4302
      %4571 = vmatprep.subr.bf16.mxu0 %v4309
      %4572 = vmatpush1.bf16.msra.mxu0 %v4308
      %4573 = vmatprep.subr.bf16.mxu0 %v4315
      %4574 = vmatpush1.bf16.msra.mxu0 %v4314
      %4575 = vmatprep.subr.bf16.mxu0 %v4321
      %4576 = vmatpush1.bf16.msra.mxu0 %v4320
      %4577 = vmatprep.subr.bf16.mxu0 %v4327
      %4578 = vmatpush1.bf16.msra.mxu0 %v4326
      %4579 = vmatprep.subr.bf16.mxu0 %v4333
      %4580 = vmatpush1.bf16.msra.mxu0 %v4332
      %4581 = vmatprep.subr.bf16.mxu0 %v4339
      %4582 = vmatpush1.bf16.msra.mxu0 %v4338
      %4583 = vmatprep.mubr.bf16.mxu0 %v3847
      %4584 = vmatmul.mubr.bf16.gmra.mrb[0].mxu0 %v3846
      %v4585 = vpop.f32.mrb[0].mxu0
      %v4586 = vadd.f32 0.0, %v4585
      %v4587 = vpop.f32.mrb[0].mxu0
      %v4588 = vadd.f32 0.0, %v4587
      %v4589 = vpop.f32.mrb[0].mxu0
      %v4590 = vadd.f32 0.0, %v4589
      %v4591 = vpop.f32.mrb[0].mxu0
      %v4592 = vadd.f32 0.0, %v4591
      %4593 = vmatprep.mubr.bf16.mxu0 %v3849
      %4594 = vmatmul.mubr.bf16.gmra.mrb[0].mxu0 %v3848
      %v4595 = vpop.f32.mrb[0].mxu0
      %v4596 = vadd.f32 0.0, %v4595
      %v4597 = vpop.f32.mrb[0].mxu0
      %v4598 = vadd.f32 0.0, %v4597
      %v4599 = vpop.f32.mrb[0].mxu0
      %v4600 = vadd.f32 0.0, %v4599
      %v4601 = vpop.f32.mrb[0].mxu0
      %v4602 = vadd.f32 0.0, %v4601
      %4603 = vmatprep.mubr.bf16.mxu0 %v3851
      %4604 = vmatmul.mubr.bf16.gmra.mrb[0].mxu0 %v3850
      %v4605 = vpop.f32.mrb[0].mxu0
      %v4606 = vadd.f32 0.0, %v4605
      %v4607 = vpop.f32.mrb[0].mxu0
      %v4608 = vadd.f32 0.0, %v4607
      %v4609 = vpop.f32.mrb[0].mxu0
      %v4610 = vadd.f32 0.0, %v4609
      %v4611 = vpop.f32.mrb[0].mxu0
      %v4612 = vadd.f32 0.0, %v4611
      %4613 = vmatprep.mubr.bf16.mxu0 %v3853
      %4614 = vmatmul.mubr.bf16.gmra.mrb[0].mxu0 %v3852
      %v4615 = vpop.f32.mrb[0].mxu0
      %v4616 = vadd.f32 0.0, %v4615
      %v4617 = vpop.f32.mrb[0].mxu0
      %v4618 = vadd.f32 0.0, %v4617
      %v4619 = vpop.f32.mrb[0].mxu0
      %v4620 = vadd.f32 0.0, %v4619
      %v4621 = vpop.f32.mrb[0].mxu0
      %v4622 = vadd.f32 0.0, %v4621
      %4623 = vmatprep.mubr.bf16.mxu0 %v3855
      %4624 = vmatmul.mubr.bf16.gmra.mrb[0].mxu0 %v3854
      %v4625 = vpop.f32.mrb[0].mxu0
      %v4626 = vadd.f32 0.0, %v4625
      %v4627 = vpop.f32.mrb[0].mxu0
      %v4628 = vadd.f32 0.0, %v4627
      %v4629 = vpop.f32.mrb[0].mxu0
      %v4630 = vadd.f32 0.0, %v4629
      %v4631 = vpop.f32.mrb[0].mxu0
      %v4632 = vadd.f32 0.0, %v4631
      %4633 = vmatprep.mubr.bf16.mxu0 %v3857
      %4634 = vmatmul.mubr.bf16.gmra.mrb[0].mxu0 %v3856
      %v4635 = vpop.f32.mrb[0].mxu0
      %v4636 = vadd.f32 0.0, %v4635
      %v4637 = vpop.f32.mrb[0].mxu0
      %v4638 = vadd.f32 0.0, %v4637
      %v4639 = vpop.f32.mrb[0].mxu0
      %v4640 = vadd.f32 0.0, %v4639
      %v4641 = vpop.f32.mrb[0].mxu0
      %v4642 = vadd.f32 0.0, %v4641
      %4643 = vmatprep.mubr.bf16.mxu0 %v3859
      %4644 = vmatmul.mubr.bf16.gmra.mrb[0].mxu0 %v3858
      %v4645 = vpop.f32.mrb[0].mxu0
      %v4646 = vadd.f32 0.0, %v4645
      %v4647 = vpop.f32.mrb[0].mxu0
      %v4648 = vadd.f32 0.0, %v4647
      %v4649 = vpop.f32.mrb[0].mxu0
      %v4650 = vadd.f32 0.0, %v4649
      %v4651 = vpop.f32.mrb[0].mxu0
      %v4652 = vadd.f32 0.0, %v4651
      %4653 = vmatprep.mubr.bf16.mxu0 %v3861
      %4654 = vmatmul.mubr.bf16.gmra.mrb[0].mxu0 %v3860
      %v4655 = vpop.f32.mrb[0].mxu0
      %v4656 = vadd.f32 0.0, %v4655
      %v4657 = vpop.f32.mrb[0].mxu0
      %v4658 = vadd.f32 0.0, %v4657
      %v4659 = vpop.f32.mrb[0].mxu0
      %v4660 = vadd.f32 0.0, %v4659
      %v4661 = vpop.f32.mrb[0].mxu0
      %v4662 = vadd.f32 0.0, %v4661
      %4663 = vdwg.mxu0
      %4664 = vmatprep.subr.bf16.mxu0 %v4251
      %4665 = vmatpush1.bf16.msra.mxu0 %v4250
      %4666 = vmatprep.subr.bf16.mxu0 %v4257
      %4667 = vmatpush1.bf16.msra.mxu0 %v4256
      %4668 = vmatprep.subr.bf16.mxu0 %v4263
      %4669 = vmatpush1.bf16.msra.mxu0 %v4262
      %4670 = vmatprep.subr.bf16.mxu0 %v4269
      %4671 = vmatpush1.bf16.msra.mxu0 %v4268
      %4672 = vmatprep.subr.bf16.mxu0 %v4275
      %4673 = vmatpush1.bf16.msra.mxu0 %v4274
      %4674 = vmatprep.subr.bf16.mxu0 %v4281
      %4675 = vmatpush1.bf16.msra.mxu0 %v4280
      %4676 = vmatprep.subr.bf16.mxu0 %v4287
      %4677 = vmatpush1.bf16.msra.mxu0 %v4286
      %4678 = vmatprep.subr.bf16.mxu0 %v4293
      %4679 = vmatpush1.bf16.msra.mxu0 %v4292
      %4680 = vmatprep.subr.bf16.mxu0 %v4299
      %4681 = vmatpush1.bf16.msra.mxu0 %v4298
      %4682 = vmatprep.subr.bf16.mxu0 %v4305
      %4683 = vmatpush1.bf16.msra.mxu0 %v4304
      %4684 = vmatprep.subr.bf16.mxu0 %v4311
      %4685 = vmatpush1.bf16.msra.mxu0 %v4310
      %4686 = vmatprep.subr.bf16.mxu0 %v4317
      %4687 = vmatpush1.bf16.msra.mxu0 %v4316
      %4688 = vmatprep.subr.bf16.mxu0 %v4323
      %4689 = vmatpush1.bf16.msra.mxu0 %v4322
      %4690 = vmatprep.subr.bf16.mxu0 %v4329
      %4691 = vmatpush1.bf16.msra.mxu0 %v4328
      %4692 = vmatprep.subr.bf16.mxu0 %v4335
      %4693 = vmatpush1.bf16.msra.mxu0 %v4334
      %4694 = vmatprep.subr.bf16.mxu0 %v4341
      %4695 = vmatpush1.bf16.msra.mxu0 %v4340
      %4696 = vmatprep.mubr.bf16.mxu0 %v3847
      %4697 = vmatmul.mubr.bf16.gmra.mrb[0].mxu0 %v3846
      %v4698 = vpop.f32.mrb[0].mxu0
      %v4699 = vadd.f32 0.0, %v4698
      %v4700 = vpop.f32.mrb[0].mxu0
      %v4701 = vadd.f32 0.0, %v4700
      %v4702 = vpop.f32.mrb[0].mxu0
      %v4703 = vadd.f32 0.0, %v4702
      %v4704 = vpop.f32.mrb[0].mxu0
      %v4705 = vadd.f32 0.0, %v4704
      %4706 = vmatprep.mubr.bf16.mxu0 %v3849
      %4707 = vmatmul.mubr.bf16.gmra.mrb[0].mxu0 %v3848
      %v4708 = vpop.f32.mrb[0].mxu0
      %v4709 = vadd.f32 0.0, %v4708
      %v4710 = vpop.f32.mrb[0].mxu0
      %v4711 = vadd.f32 0.0, %v4710
      %v4712 = vpop.f32.mrb[0].mxu0
      %v4713 = vadd.f32 0.0, %v4712
      %v4714 = vpop.f32.mrb[0].mxu0
      %v4715 = vadd.f32 0.0, %v4714
      %4716 = vmatprep.mubr.bf16.mxu0 %v3851
      %4717 = vmatmul.mubr.bf16.gmra.mrb[0].mxu0 %v3850
      %v4718 = vpop.f32.mrb[0].mxu0
      %v4719 = vadd.f32 0.0, %v4718
      %v4720 = vpop.f32.mrb[0].mxu0
      %v4721 = vadd.f32 0.0, %v4720
      %v4722 = vpop.f32.mrb[0].mxu0
      %v4723 = vadd.f32 0.0, %v4722
      %v4724 = vpop.f32.mrb[0].mxu0
      %v4725 = vadd.f32 0.0, %v4724
      %4726 = vmatprep.mubr.bf16.mxu0 %v3853
      %4727 = vmatmul.mubr.bf16.gmra.mrb[0].mxu0 %v3852
      %v4728 = vpop.f32.mrb[0].mxu0
      %v4729 = vadd.f32 0.0, %v4728
      %v4730 = vpop.f32.mrb[0].mxu0
      %v4731 = vadd.f32 0.0, %v4730
      %v4732 = vpop.f32.mrb[0].mxu0
      %v4733 = vadd.f32 0.0, %v4732
      %v4734 = vpop.f32.mrb[0].mxu0
      %v4735 = vadd.f32 0.0, %v4734
      %4736 = vmatprep.mubr.bf16.mxu0 %v3855
      %4737 = vmatmul.mubr.bf16.gmra.mrb[0].mxu0 %v3854
      %v4738 = vpop.f32.mrb[0].mxu0
      %v4739 = vadd.f32 0.0, %v4738
      %v4740 = vpop.f32.mrb[0].mxu0
      %v4741 = vadd.f32 0.0, %v4740
      %v4742 = vpop.f32.mrb[0].mxu0
      %v4743 = vadd.f32 0.0, %v4742
      %v4744 = vpop.f32.mrb[0].mxu0
      %v4745 = vadd.f32 0.0, %v4744
      %4746 = vmatprep.mubr.bf16.mxu0 %v3857
      %4747 = vmatmul.mubr.bf16.gmra.mrb[0].mxu0 %v3856
      %v4748 = vpop.f32.mrb[0].mxu0
      %v4749 = vadd.f32 0.0, %v4748
      %v4750 = vpop.f32.mrb[0].mxu0
      %v4751 = vadd.f32 0.0, %v4750
      %v4752 = vpop.f32.mrb[0].mxu0
      %v4753 = vadd.f32 0.0, %v4752
      %v4754 = vpop.f32.mrb[0].mxu0
      %v4755 = vadd.f32 0.0, %v4754
      %4756 = vmatprep.mubr.bf16.mxu0 %v3859
      %4757 = vmatmul.mubr.bf16.gmra.mrb[0].mxu0 %v3858
      %v4758 = vpop.f32.mrb[0].mxu0
      %v4759 = vadd.f32 0.0, %v4758
      %v4760 = vpop.f32.mrb[0].mxu0
      %v4761 = vadd.f32 0.0, %v4760
      %v4762 = vpop.f32.mrb[0].mxu0
      %v4763 = vadd.f32 0.0, %v4762
      %v4764 = vpop.f32.mrb[0].mxu0
      %v4765 = vadd.f32 0.0, %v4764
      %4766 = vmatprep.mubr.bf16.mxu0 %v3861
      %4767 = vmatmul.mubr.bf16.gmra.mrb[0].mxu0 %v3860
      %v4768 = vpop.f32.mrb[0].mxu0
      %v4769 = vadd.f32 0.0, %v4768
      %v4770 = vpop.f32.mrb[0].mxu0
      %v4771 = vadd.f32 0.0, %v4770
      %v4772 = vpop.f32.mrb[0].mxu0
      %v4773 = vadd.f32 0.0, %v4772
      %v4774 = vpop.f32.mrb[0].mxu0
      %v4775 = vadd.f32 0.0, %v4774
      %4776 = vdwg.mxu0
      %v4777 = vld [vmem:[%s495] sm:$0xff]
      %v4778 = vld [vmem:[%s495 + $0x8] sm:$0xff]
      %v4779 = vld [vmem:[%s495 + $0x10] sm:$0xff]
      %v4780 = vld [vmem:[%s495 + $0x18] sm:$0xff]
      %v4781 = vld [vmem:[%s495 + $0x20] sm:$0xff]
      %v4782 = vld [vmem:[%s495 + $0x28] sm:$0xff]
      %v4783 = vld [vmem:[%s495 + $0x30] sm:$0xff]
      %v4784 = vld [vmem:[%s495 + $0x38] sm:$0xff]
      %v4785 = vld [vmem:[%s495 + $0x40] sm:$0xff]
      %v4786 = vld [vmem:[%s495 + $0x48] sm:$0xff]
      %v4787 = vld [vmem:[%s495 + $0x50] sm:$0xff]
      %v4788 = vld [vmem:[%s495 + $0x58] sm:$0xff]
      %v4789 = vld [vmem:[%s495 + $0x60] sm:$0xff]
      %v4790 = vld [vmem:[%s495 + $0x68] sm:$0xff]
      %v4791 = vld [vmem:[%s495 + $0x70] sm:$0xff]
      %v4792 = vld [vmem:[%s495 + $0x78] sm:$0xff]
      %v4793 = vld [vmem:[%s495 + $0x80] sm:$0xff]
      %v4794 = vld [vmem:[%s495 + $0x88] sm:$0xff]
      %v4795 = vld [vmem:[%s495 + $0x90] sm:$0xff]
      %v4796 = vld [vmem:[%s495 + $0x98] sm:$0xff]
      %v4797 = vld [vmem:[%s495 + $0xa0] sm:$0xff]
      %v4798 = vld [vmem:[%s495 + $0xa8] sm:$0xff]
      %v4799 = vld [vmem:[%s495 + $0xb0] sm:$0xff]
      %v4800 = vld [vmem:[%s495 + $0xb8] sm:$0xff]
      %v4801 = vld [vmem:[%s495 + $0xc0] sm:$0xff]
      %v4802 = vld [vmem:[%s495 + $0xc8] sm:$0xff]
      %v4803 = vld [vmem:[%s495 + $0xd0] sm:$0xff]
      %v4804 = vld [vmem:[%s495 + $0xd8] sm:$0xff]
      %v4805 = vld [vmem:[%s495 + $0xe0] sm:$0xff]
      %v4806 = vld [vmem:[%s495 + $0xe8] sm:$0xff]
      %v4807 = vld [vmem:[%s495 + $0xf0] sm:$0xff]
      %v4808 = vld [vmem:[%s495 + $0xf8] sm:$0xff]
      %v4809 = vld [vmem:[%s495 + $0x100] sm:$0xff]
      %v4810 = vld [vmem:[%s495 + $0x108] sm:$0xff]
      %v4811 = vld [vmem:[%s495 + $0x110] sm:$0xff]
      %v4812 = vld [vmem:[%s495 + $0x118] sm:$0xff]
      %v4813 = vld [vmem:[%s495 + $0x120] sm:$0xff]
      %v4814 = vld [vmem:[%s495 + $0x128] sm:$0xff]
      %v4815 = vld [vmem:[%s495 + $0x130] sm:$0xff]
      %v4816 = vld [vmem:[%s495 + $0x138] sm:$0xff]
      %v4817 = vld [vmem:[%s495 + $0x140] sm:$0xff]
      %v4818 = vld [vmem:[%s495 + $0x148] sm:$0xff]
      %v4819 = vld [vmem:[%s495 + $0x150] sm:$0xff]
      %v4820 = vld [vmem:[%s495 + $0x158] sm:$0xff]
      %v4821 = vld [vmem:[%s495 + $0x160] sm:$0xff]
      %v4822 = vld [vmem:[%s495 + $0x168] sm:$0xff]
      %v4823 = vld [vmem:[%s495 + $0x170] sm:$0xff]
      %v4824 = vld [vmem:[%s495 + $0x178] sm:$0xff]
      %v4825 = vld [vmem:[%s495 + $0x180] sm:$0xff]
      %v4826 = vld [vmem:[%s495 + $0x188] sm:$0xff]
      %v4827 = vld [vmem:[%s495 + $0x190] sm:$0xff]
      %v4828 = vld [vmem:[%s495 + $0x198] sm:$0xff]
      %v4829 = vld [vmem:[%s495 + $0x1a0] sm:$0xff]
      %v4830 = vld [vmem:[%s495 + $0x1a8] sm:$0xff]
      %v4831 = vld [vmem:[%s495 + $0x1b0] sm:$0xff]
      %v4832 = vld [vmem:[%s495 + $0x1b8] sm:$0xff]
      %v4833 = vld [vmem:[%s495 + $0x1c0] sm:$0xff]
      %v4834 = vld [vmem:[%s495 + $0x1c8] sm:$0xff]
      %v4835 = vld [vmem:[%s495 + $0x1d0] sm:$0xff]
      %v4836 = vld [vmem:[%s495 + $0x1d8] sm:$0xff]
      %v4837 = vld [vmem:[%s495 + $0x1e0] sm:$0xff]
      %v4838 = vld [vmem:[%s495 + $0x1e8] sm:$0xff]
      %v4839 = vld [vmem:[%s495 + $0x1f0] sm:$0xff]
      %v4840 = vld [vmem:[%s495 + $0x1f8] sm:$0xff]
      %v4841 = vld [vmem:[%s495 + $0x200] sm:$0xff]
      %v4842 = vld [vmem:[%s495 + $0x208] sm:$0xff]
      %v4843 = vld [vmem:[%s495 + $0x210] sm:$0xff]
      %v4844 = vld [vmem:[%s495 + $0x218] sm:$0xff]
      %v4845 = vld [vmem:[%s495 + $0x220] sm:$0xff]
      %v4846 = vld [vmem:[%s495 + $0x228] sm:$0xff]
      %v4847 = vld [vmem:[%s495 + $0x230] sm:$0xff]
      %v4848 = vld [vmem:[%s495 + $0x238] sm:$0xff]
      %v4849 = vld [vmem:[%s495 + $0x240] sm:$0xff]
      %v4850 = vld [vmem:[%s495 + $0x248] sm:$0xff]
      %v4851 = vld [vmem:[%s495 + $0x250] sm:$0xff]
      %v4852 = vld [vmem:[%s495 + $0x258] sm:$0xff]
      %v4853 = vld [vmem:[%s495 + $0x260] sm:$0xff]
      %v4854 = vld [vmem:[%s495 + $0x268] sm:$0xff]
      %v4855 = vld [vmem:[%s495 + $0x270] sm:$0xff]
      %v4856 = vld [vmem:[%s495 + $0x278] sm:$0xff]
      %v4857 = vld [vmem:[%s495 + $0x280] sm:$0xff]
      %v4858 = vld [vmem:[%s495 + $0x288] sm:$0xff]
      %v4859 = vld [vmem:[%s495 + $0x290] sm:$0xff]
      %v4860 = vld [vmem:[%s495 + $0x298] sm:$0xff]
      %v4861 = vld [vmem:[%s495 + $0x2a0] sm:$0xff]
      %v4862 = vld [vmem:[%s495 + $0x2a8] sm:$0xff]
      %v4863 = vld [vmem:[%s495 + $0x2b0] sm:$0xff]
      %v4864 = vld [vmem:[%s495 + $0x2b8] sm:$0xff]
      %v4865 = vld [vmem:[%s495 + $0x2c0] sm:$0xff]
      %v4866 = vld [vmem:[%s495 + $0x2c8] sm:$0xff]
      %v4867 = vld [vmem:[%s495 + $0x2d0] sm:$0xff]
      %v4868 = vld [vmem:[%s495 + $0x2d8] sm:$0xff]
      %v4869 = vld [vmem:[%s495 + $0x2e0] sm:$0xff]
      %v4870 = vld [vmem:[%s495 + $0x2e8] sm:$0xff]
      %v4871 = vld [vmem:[%s495 + $0x2f0] sm:$0xff]
      %v4872 = vld [vmem:[%s495 + $0x2f8] sm:$0xff]
      %v4969 = vunpack.c.l.b16 %v4777
      %v4970 = vunpack.c.h.b16 %v4777
      %v4971 = vunpack.c.l.b16 %v4778
      %v4972 = vunpack.c.h.b16 %v4778
      %v4973 = vunpack.c.l.b16 %v4779
      %v4974 = vunpack.c.h.b16 %v4779
      %v4975 = vunpack.c.l.b16 %v4780
      %v4976 = vunpack.c.h.b16 %v4780
      %v4977 = vunpack.c.l.b16 %v4781
      %v4978 = vunpack.c.h.b16 %v4781
      %v4979 = vunpack.c.l.b16 %v4782
      %v4980 = vunpack.c.h.b16 %v4782
      %v4981 = vunpack.c.l.b16 %v4783
      %v4982 = vunpack.c.h.b16 %v4783
      %v4983 = vunpack.c.l.b16 %v4784
      %v4984 = vunpack.c.h.b16 %v4784
      %v4985 = vunpack.c.l.b16 %v4785
      %v4986 = vunpack.c.h.b16 %v4785
      %v4987 = vunpack.c.l.b16 %v4786
      %v4988 = vunpack.c.h.b16 %v4786
      %v4989 = vunpack.c.l.b16 %v4787
      %v4990 = vunpack.c.h.b16 %v4787
      %v4991 = vunpack.c.l.b16 %v4788
      %v4992 = vunpack.c.h.b16 %v4788
      %v4993 = vunpack.c.l.b16 %v4789
      %v4994 = vunpack.c.h.b16 %v4789
      %v4995 = vunpack.c.l.b16 %v4790
      %v4996 = vunpack.c.h.b16 %v4790
      %v4997 = vunpack.c.l.b16 %v4791
      %v4998 = vunpack.c.h.b16 %v4791
      %v4999 = vunpack.c.l.b16 %v4792
      %v5000 = vunpack.c.h.b16 %v4792
      %v5001 = vunpack.c.l.b16 %v4793
      %v5002 = vunpack.c.h.b16 %v4793
      %v5003 = vunpack.c.l.b16 %v4794
      %v5004 = vunpack.c.h.b16 %v4794
      %v5005 = vunpack.c.l.b16 %v4795
      %v5006 = vunpack.c.h.b16 %v4795
      %v5007 = vunpack.c.l.b16 %v4796
      %v5008 = vunpack.c.h.b16 %v4796
      %v5009 = vunpack.c.l.b16 %v4797
      %v5010 = vunpack.c.h.b16 %v4797
      %v5011 = vunpack.c.l.b16 %v4798
      %v5012 = vunpack.c.h.b16 %v4798
      %v5013 = vunpack.c.l.b16 %v4799
      %v5014 = vunpack.c.h.b16 %v4799
      %v5015 = vunpack.c.l.b16 %v4800
      %v5016 = vunpack.c.h.b16 %v4800
      %v5017 = vunpack.c.l.b16 %v4801
      %v5018 = vunpack.c.h.b16 %v4801
      %v5019 = vunpack.c.l.b16 %v4802
      %v5020 = vunpack.c.h.b16 %v4802
      %v5021 = vunpack.c.l.b16 %v4803
      %v5022 = vunpack.c.h.b16 %v4803
      %v5023 = vunpack.c.l.b16 %v4804
      %v5024 = vunpack.c.h.b16 %v4804
      %v5025 = vunpack.c.l.b16 %v4805
      %v5026 = vunpack.c.h.b16 %v4805
      %v5027 = vunpack.c.l.b16 %v4806
      %v5028 = vunpack.c.h.b16 %v4806
      %v5029 = vunpack.c.l.b16 %v4807
      %v5030 = vunpack.c.h.b16 %v4807
      %v5031 = vunpack.c.l.b16 %v4808
      %v5032 = vunpack.c.h.b16 %v4808
      %v5033 = vunpack.c.l.b16 %v4809
      %v5034 = vunpack.c.h.b16 %v4809
      %v5035 = vunpack.c.l.b16 %v4810
      %v5036 = vunpack.c.h.b16 %v4810
      %v5037 = vunpack.c.l.b16 %v4811
      %v5038 = vunpack.c.h.b16 %v4811
      %v5039 = vunpack.c.l.b16 %v4812
      %v5040 = vunpack.c.h.b16 %v4812
      %v5041 = vunpack.c.l.b16 %v4813
      %v5042 = vunpack.c.h.b16 %v4813
      %v5043 = vunpack.c.l.b16 %v4814
      %v5044 = vunpack.c.h.b16 %v4814
      %v5045 = vunpack.c.l.b16 %v4815
      %v5046 = vunpack.c.h.b16 %v4815
      %v5047 = vunpack.c.l.b16 %v4816
      %v5048 = vunpack.c.h.b16 %v4816
      %v5049 = vunpack.c.l.b16 %v4817
      %v5050 = vunpack.c.h.b16 %v4817
      %v5051 = vunpack.c.l.b16 %v4818
      %v5052 = vunpack.c.h.b16 %v4818
      %v5053 = vunpack.c.l.b16 %v4819
      %v5054 = vunpack.c.h.b16 %v4819
      %v5055 = vunpack.c.l.b16 %v4820
      %v5056 = vunpack.c.h.b16 %v4820
      %v5057 = vunpack.c.l.b16 %v4821
      %v5058 = vunpack.c.h.b16 %v4821
      %v5059 = vunpack.c.l.b16 %v4822
      %v5060 = vunpack.c.h.b16 %v4822
      %v5061 = vunpack.c.l.b16 %v4823
      %v5062 = vunpack.c.h.b16 %v4823
      %v5063 = vunpack.c.l.b16 %v4824
      %v5064 = vunpack.c.h.b16 %v4824
      %v5065 = vunpack.c.l.b16 %v4825
      %v5066 = vunpack.c.h.b16 %v4825
      %v5067 = vunpack.c.l.b16 %v4826
      %v5068 = vunpack.c.h.b16 %v4826
      %v5069 = vunpack.c.l.b16 %v4827
      %v5070 = vunpack.c.h.b16 %v4827
      %v5071 = vunpack.c.l.b16 %v4828
      %v5072 = vunpack.c.h.b16 %v4828
      %v5073 = vunpack.c.l.b16 %v4829
      %v5074 = vunpack.c.h.b16 %v4829
      %v5075 = vunpack.c.l.b16 %v4830
      %v5076 = vunpack.c.h.b16 %v4830
      %v5077 = vunpack.c.l.b16 %v4831
      %v5078 = vunpack.c.h.b16 %v4831
      %v5079 = vunpack.c.l.b16 %v4832
      %v5080 = vunpack.c.h.b16 %v4832
      %v5081 = vunpack.c.l.b16 %v4833
      %v5082 = vunpack.c.h.b16 %v4833
      %v5083 = vunpack.c.l.b16 %v4834
      %v5084 = vunpack.c.h.b16 %v4834
      %v5085 = vunpack.c.l.b16 %v4835
      %v5086 = vunpack.c.h.b16 %v4835
      %v5087 = vunpack.c.l.b16 %v4836
      %v5088 = vunpack.c.h.b16 %v4836
      %v5089 = vunpack.c.l.b16 %v4837
      %v5090 = vunpack.c.h.b16 %v4837
      %v5091 = vunpack.c.l.b16 %v4838
      %v5092 = vunpack.c.h.b16 %v4838
      %v5093 = vunpack.c.l.b16 %v4839
      %v5094 = vunpack.c.h.b16 %v4839
      %v5095 = vunpack.c.l.b16 %v4840
      %v5096 = vunpack.c.h.b16 %v4840
      %v5097 = vunpack.c.l.b16 %v4841
      %v5098 = vunpack.c.h.b16 %v4841
      %v5099 = vunpack.c.l.b16 %v4842
      %v5100 = vunpack.c.h.b16 %v4842
      %v5101 = vunpack.c.l.b16 %v4843
      %v5102 = vunpack.c.h.b16 %v4843
      %v5103 = vunpack.c.l.b16 %v4844
      %v5104 = vunpack.c.h.b16 %v4844
      %v5105 = vunpack.c.l.b16 %v4845
      %v5106 = vunpack.c.h.b16 %v4845
      %v5107 = vunpack.c.l.b16 %v4846
      %v5108 = vunpack.c.h.b16 %v4846
      %v5109 = vunpack.c.l.b16 %v4847
      %v5110 = vunpack.c.h.b16 %v4847
      %v5111 = vunpack.c.l.b16 %v4848
      %v5112 = vunpack.c.h.b16 %v4848
      %v5113 = vunpack.c.l.b16 %v4849
      %v5114 = vunpack.c.h.b16 %v4849
      %v5115 = vunpack.c.l.b16 %v4850
      %v5116 = vunpack.c.h.b16 %v4850
      %v5117 = vunpack.c.l.b16 %v4851
      %v5118 = vunpack.c.h.b16 %v4851
      %v5119 = vunpack.c.l.b16 %v4852
      %v5120 = vunpack.c.h.b16 %v4852
      %v5121 = vunpack.c.l.b16 %v4853
      %v5122 = vunpack.c.h.b16 %v4853
      %v5123 = vunpack.c.l.b16 %v4854
      %v5124 = vunpack.c.h.b16 %v4854
      %v5125 = vunpack.c.l.b16 %v4855
      %v5126 = vunpack.c.h.b16 %v4855
      %v5127 = vunpack.c.l.b16 %v4856
      %v5128 = vunpack.c.h.b16 %v4856
      %v5129 = vunpack.c.l.b16 %v4857
      %v5130 = vunpack.c.h.b16 %v4857
      %v5131 = vunpack.c.l.b16 %v4858
      %v5132 = vunpack.c.h.b16 %v4858
      %v5133 = vunpack.c.l.b16 %v4859
      %v5134 = vunpack.c.h.b16 %v4859
      %v5135 = vunpack.c.l.b16 %v4860
      %v5136 = vunpack.c.h.b16 %v4860
      %v5137 = vunpack.c.l.b16 %v4861
      %v5138 = vunpack.c.h.b16 %v4861
      %v5139 = vunpack.c.l.b16 %v4862
      %v5140 = vunpack.c.h.b16 %v4862
      %v5141 = vunpack.c.l.b16 %v4863
      %v5142 = vunpack.c.h.b16 %v4863
      %v5143 = vunpack.c.l.b16 %v4864
      %v5144 = vunpack.c.h.b16 %v4864
      %v5145 = vunpack.c.l.b16 %v4865
      %v5146 = vunpack.c.h.b16 %v4865
      %v5147 = vunpack.c.l.b16 %v4866
      %v5148 = vunpack.c.h.b16 %v4866
      %v5149 = vunpack.c.l.b16 %v4867
      %v5150 = vunpack.c.h.b16 %v4867
      %v5151 = vunpack.c.l.b16 %v4868
      %v5152 = vunpack.c.h.b16 %v4868
      %v5153 = vunpack.c.l.b16 %v4869
      %v5154 = vunpack.c.h.b16 %v4869
      %v5155 = vunpack.c.l.b16 %v4870
      %v5156 = vunpack.c.h.b16 %v4870
      %v5157 = vunpack.c.l.b16 %v4871
      %v5158 = vunpack.c.h.b16 %v4871
      %v5159 = vunpack.c.l.b16 %v4872
      %v5160 = vunpack.c.h.b16 %v4872
      %v5161 = vpack.c.b16 %v4975, %v4969
      %v5162 = vpack.c.b16 %v4976, %v4970
      %v5163 = vpack.c.b16 %v4977, %v4971
      %v5164 = vpack.c.b16 %v4978, %v4972
      %v5165 = vpack.c.b16 %v4979, %v4973
      %v5166 = vpack.c.b16 %v4980, %v4974
      %v5167 = vpack.c.b16 %v4987, %v4981
      %v5168 = vpack.c.b16 %v4988, %v4982
      %v5169 = vpack.c.b16 %v4989, %v4983
      %v5170 = vpack.c.b16 %v4990, %v4984
      %v5171 = vpack.c.b16 %v4991, %v4985
      %v5172 = vpack.c.b16 %v4992, %v4986
      %v5173 = vpack.c.b16 %v4999, %v4993
      %v5174 = vpack.c.b16 %v5000, %v4994
      %v5175 = vpack.c.b16 %v5001, %v4995
      %v5176 = vpack.c.b16 %v5002, %v4996
      %v5177 = vpack.c.b16 %v5003, %v4997
      %v5178 = vpack.c.b16 %v5004, %v4998
      %v5179 = vpack.c.b16 %v5011, %v5005
      %v5180 = vpack.c.b16 %v5012, %v5006
      %v5181 = vpack.c.b16 %v5013, %v5007
      %v5182 = vpack.c.b16 %v5014, %v5008
      %v5183 = vpack.c.b16 %v5015, %v5009
      %v5184 = vpack.c.b16 %v5016, %v5010
      %v5185 = vpack.c.b16 %v5023, %v5017
      %v5186 = vpack.c.b16 %v5024, %v5018
      %v5187 = vpack.c.b16 %v5025, %v5019
      %v5188 = vpack.c.b16 %v5026, %v5020
      %v5189 = vpack.c.b16 %v5027, %v5021
      %v5190 = vpack.c.b16 %v5028, %v5022
      %v5191 = vpack.c.b16 %v5035, %v5029
      %v5192 = vpack.c.b16 %v5036, %v5030
      %v5193 = vpack.c.b16 %v5037, %v5031
      %v5194 = vpack.c.b16 %v5038, %v5032
      %v5195 = vpack.c.b16 %v5039, %v5033
      %v5196 = vpack.c.b16 %v5040, %v5034
      %v5197 = vpack.c.b16 %v5047, %v5041
      %v5198 = vpack.c.b16 %v5048, %v5042
      %v5199 = vpack.c.b16 %v5049, %v5043
      %v5200 = vpack.c.b16 %v5050, %v5044
      %v5201 = vpack.c.b16 %v5051, %v5045
      %v5202 = vpack.c.b16 %v5052, %v5046
      %v5203 = vpack.c.b16 %v5059, %v5053
      %v5204 = vpack.c.b16 %v5060, %v5054
      %v5205 = vpack.c.b16 %v5061, %v5055
      %v5206 = vpack.c.b16 %v5062, %v5056
      %v5207 = vpack.c.b16 %v5063, %v5057
      %v5208 = vpack.c.b16 %v5064, %v5058
      %v5209 = vpack.c.b16 %v5071, %v5065
      %v5210 = vpack.c.b16 %v5072, %v5066
      %v5211 = vpack.c.b16 %v5073, %v5067
      %v5212 = vpack.c.b16 %v5074, %v5068
      %v5213 = vpack.c.b16 %v5075, %v5069
      %v5214 = vpack.c.b16 %v5076, %v5070
      %v5215 = vpack.c.b16 %v5083, %v5077
      %v5216 = vpack.c.b16 %v5084, %v5078
      %v5217 = vpack.c.b16 %v5085, %v5079
      %v5218 = vpack.c.b16 %v5086, %v5080
      %v5219 = vpack.c.b16 %v5087, %v5081
      %v5220 = vpack.c.b16 %v5088, %v5082
      %v5221 = vpack.c.b16 %v5095, %v5089
      %v5222 = vpack.c.b16 %v5096, %v5090
      %v5223 = vpack.c.b16 %v5097, %v5091
      %v5224 = vpack.c.b16 %v5098, %v5092
      %v5225 = vpack.c.b16 %v5099, %v5093
      %v5226 = vpack.c.b16 %v5100, %v5094
      %v5227 = vpack.c.b16 %v5107, %v5101
      %v5228 = vpack.c.b16 %v5108, %v5102
      %v5229 = vpack.c.b16 %v5109, %v5103
      %v5230 = vpack.c.b16 %v5110, %v5104
      %v5231 = vpack.c.b16 %v5111, %v5105
      %v5232 = vpack.c.b16 %v5112, %v5106
      %v5233 = vpack.c.b16 %v5119, %v5113
      %v5234 = vpack.c.b16 %v5120, %v5114
      %v5235 = vpack.c.b16 %v5121, %v5115
      %v5236 = vpack.c.b16 %v5122, %v5116
      %v5237 = vpack.c.b16 %v5123, %v5117
      %v5238 = vpack.c.b16 %v5124, %v5118
      %v5239 = vpack.c.b16 %v5131, %v5125
      %v5240 = vpack.c.b16 %v5132, %v5126
      %v5241 = vpack.c.b16 %v5133, %v5127
      %v5242 = vpack.c.b16 %v5134, %v5128
      %v5243 = vpack.c.b16 %v5135, %v5129
      %v5244 = vpack.c.b16 %v5136, %v5130
      %v5245 = vpack.c.b16 %v5143, %v5137
      %v5246 = vpack.c.b16 %v5144, %v5138
      %v5247 = vpack.c.b16 %v5145, %v5139
      %v5248 = vpack.c.b16 %v5146, %v5140
      %v5249 = vpack.c.b16 %v5147, %v5141
      %v5250 = vpack.c.b16 %v5148, %v5142
      %v5251 = vpack.c.b16 %v5155, %v5149
      %v5252 = vpack.c.b16 %v5156, %v5150
      %v5253 = vpack.c.b16 %v5157, %v5151
      %v5254 = vpack.c.b16 %v5158, %v5152
      %v5255 = vpack.c.b16 %v5159, %v5153
      %v5256 = vpack.c.b16 %v5160, %v5154
      %5353 = vmatprep.subr.bf16.mxu0 %v5162
      %5354 = vmatpush1.bf16.msra.mxu0 %v5161
      %5355 = vmatprep.subr.bf16.mxu0 %v5168
      %5356 = vmatpush1.bf16.msra.mxu0 %v5167
      %5357 = vmatprep.subr.bf16.mxu0 %v5174
      %5358 = vmatpush1.bf16.msra.mxu0 %v5173
      %5359 = vmatprep.subr.bf16.mxu0 %v5180
      %5360 = vmatpush1.bf16.msra.mxu0 %v5179
      %5361 = vmatprep.subr.bf16.mxu0 %v5186
      %5362 = vmatpush1.bf16.msra.mxu0 %v5185
      %5363 = vmatprep.subr.bf16.mxu0 %v5192
      %5364 = vmatpush1.bf16.msra.mxu0 %v5191
      %5365 = vmatprep.subr.bf16.mxu0 %v5198
      %5366 = vmatpush1.bf16.msra.mxu0 %v5197
      %5367 = vmatprep.subr.bf16.mxu0 %v5204
      %5368 = vmatpush1.bf16.msra.mxu0 %v5203
      %5369 = vmatprep.subr.bf16.mxu0 %v5210
      %5370 = vmatpush1.bf16.msra.mxu0 %v5209
      %5371 = vmatprep.subr.bf16.mxu0 %v5216
      %5372 = vmatpush1.bf16.msra.mxu0 %v5215
      %5373 = vmatprep.subr.bf16.mxu0 %v5222
      %5374 = vmatpush1.bf16.msra.mxu0 %v5221
      %5375 = vmatprep.subr.bf16.mxu0 %v5228
      %5376 = vmatpush1.bf16.msra.mxu0 %v5227
      %5377 = vmatprep.subr.bf16.mxu0 %v5234
      %5378 = vmatpush1.bf16.msra.mxu0 %v5233
      %5379 = vmatprep.subr.bf16.mxu0 %v5240
      %5380 = vmatpush1.bf16.msra.mxu0 %v5239
      %5381 = vmatprep.subr.bf16.mxu0 %v5246
      %5382 = vmatpush1.bf16.msra.mxu0 %v5245
      %5383 = vmatprep.subr.bf16.mxu0 %v5252
      %5384 = vmatpush1.bf16.msra.mxu0 %v5251
      %5385 = vmatprep.mubr.bf16.mxu0 %v3847
      %5386 = vmatmul.mubr.bf16.gmra.mrb[0].mxu0 %v3846
      %v5387 = vpop.f32.mrb[0].mxu0
      %v5388 = vadd.f32 0.0, %v5387
      %v5389 = vpop.f32.mrb[0].mxu0
      %v5390 = vadd.f32 0.0, %v5389
      %v5391 = vpop.f32.mrb[0].mxu0
      %v5392 = vadd.f32 0.0, %v5391
      %v5393 = vpop.f32.mrb[0].mxu0
      %v5394 = vadd.f32 0.0, %v5393
      %5395 = vmatprep.mubr.bf16.mxu0 %v3849
      %5396 = vmatmul.mubr.bf16.gmra.mrb[0].mxu0 %v3848
      %v5397 = vpop.f32.mrb[0].mxu0
      %v5398 = vadd.f32 0.0, %v5397
      %v5399 = vpop.f32.mrb[0].mxu0
      %v5400 = vadd.f32 0.0, %v5399
      %v5401 = vpop.f32.mrb[0].mxu0
      %v5402 = vadd.f32 0.0, %v5401
      %v5403 = vpop.f32.mrb[0].mxu0
      %v5404 = vadd.f32 0.0, %v5403
      %5405 = vmatprep.mubr.bf16.mxu0 %v3851
      %5406 = vmatmul.mubr.bf16.gmra.mrb[0].mxu0 %v3850
      %v5407 = vpop.f32.mrb[0].mxu0
      %v5408 = vadd.f32 0.0, %v5407
      %v5409 = vpop.f32.mrb[0].mxu0
      %v5410 = vadd.f32 0.0, %v5409
      %v5411 = vpop.f32.mrb[0].mxu0
      %v5412 = vadd.f32 0.0, %v5411
      %v5413 = vpop.f32.mrb[0].mxu0
      %v5414 = vadd.f32 0.0, %v5413
      %5415 = vmatprep.mubr.bf16.mxu0 %v3853
      %5416 = vmatmul.mubr.bf16.gmra.mrb[0].mxu0 %v3852
      %v5417 = vpop.f32.mrb[0].mxu0
      %v5418 = vadd.f32 0.0, %v5417
      %v5419 = vpop.f32.mrb[0].mxu0
      %v5420 = vadd.f32 0.0, %v5419
      %v5421 = vpop.f32.mrb[0].mxu0
      %v5422 = vadd.f32 0.0, %v5421
      %v5423 = vpop.f32.mrb[0].mxu0
      %v5424 = vadd.f32 0.0, %v5423
      %5425 = vmatprep.mubr.bf16.mxu0 %v3855
      %5426 = vmatmul.mubr.bf16.gmra.mrb[0].mxu0 %v3854
      %v5427 = vpop.f32.mrb[0].mxu0
      %v5428 = vadd.f32 0.0, %v5427
      %v5429 = vpop.f32.mrb[0].mxu0
      %v5430 = vadd.f32 0.0, %v5429
      %v5431 = vpop.f32.mrb[0].mxu0
      %v5432 = vadd.f32 0.0, %v5431
      %v5433 = vpop.f32.mrb[0].mxu0
      %v5434 = vadd.f32 0.0, %v5433
      %5435 = vmatprep.mubr.bf16.mxu0 %v3857
      %5436 = vmatmul.mubr.bf16.gmra.mrb[0].mxu0 %v3856
      %v5437 = vpop.f32.mrb[0].mxu0
      %v5438 = vadd.f32 0.0, %v5437
      %v5439 = vpop.f32.mrb[0].mxu0
      %v5440 = vadd.f32 0.0, %v5439
      %v5441 = vpop.f32.mrb[0].mxu0
      %v5442 = vadd.f32 0.0, %v5441
      %v5443 = vpop.f32.mrb[0].mxu0
      %v5444 = vadd.f32 0.0, %v5443
      %5445 = vmatprep.mubr.bf16.mxu0 %v3859
      %5446 = vmatmul.mubr.bf16.gmra.mrb[0].mxu0 %v3858
      %v5447 = vpop.f32.mrb[0].mxu0
      %v5448 = vadd.f32 0.0, %v5447
      %v5449 = vpop.f32.mrb[0].mxu0
      %v5450 = vadd.f32 0.0, %v5449
      %v5451 = vpop.f32.mrb[0].mxu0
      %v5452 = vadd.f32 0.0, %v5451
      %v5453 = vpop.f32.mrb[0].mxu0
      %v5454 = vadd.f32 0.0, %v5453
      %5455 = vmatprep.mubr.bf16.mxu0 %v3861
      %5456 = vmatmul.mubr.bf16.gmra.mrb[0].mxu0 %v3860
      %v5457 = vpop.f32.mrb[0].mxu0
      %v5458 = vadd.f32 0.0, %v5457
      %v5459 = vpop.f32.mrb[0].mxu0
      %v5460 = vadd.f32 0.0, %v5459
      %v5461 = vpop.f32.mrb[0].mxu0
      %v5462 = vadd.f32 0.0, %v5461
      %v5463 = vpop.f32.mrb[0].mxu0
      %v5464 = vadd.f32 0.0, %v5463
      %5465 = vdwg.mxu0
      %5466 = vmatprep.subr.bf16.mxu0 %v5164
      %5467 = vmatpush1.bf16.msra.mxu0 %v5163
      %5468 = vmatprep.subr.bf16.mxu0 %v5170
      %5469 = vmatpush1.bf16.msra.mxu0 %v5169
      %5470 = vmatprep.subr.bf16.mxu0 %v5176
      %5471 = vmatpush1.bf16.msra.mxu0 %v5175
      %5472 = vmatprep.subr.bf16.mxu0 %v5182
      %5473 = vmatpush1.bf16.msra.mxu0 %v5181
      %5474 = vmatprep.subr.bf16.mxu0 %v5188
      %5475 = vmatpush1.bf16.msra.mxu0 %v5187
      %5476 = vmatprep.subr.bf16.mxu0 %v5194
      %5477 = vmatpush1.bf16.msra.mxu0 %v5193
      %5478 = vmatprep.subr.bf16.mxu0 %v5200
      %5479 = vmatpush1.bf16.msra.mxu0 %v5199
      %5480 = vmatprep.subr.bf16.mxu0 %v5206
      %5481 = vmatpush1.bf16.msra.mxu0 %v5205
      %5482 = vmatprep.subr.bf16.mxu0 %v5212
      %5483 = vmatpush1.bf16.msra.mxu0 %v5211
      %5484 = vmatprep.subr.bf16.mxu0 %v5218
      %5485 = vmatpush1.bf16.msra.mxu0 %v5217
      %5486 = vmatprep.subr.bf16.mxu0 %v5224
      %5487 = vmatpush1.bf16.msra.mxu0 %v5223
      %5488 = vmatprep.subr.bf16.mxu0 %v5230
      %5489 = vmatpush1.bf16.msra.mxu0 %v5229
      %5490 = vmatprep.subr.bf16.mxu0 %v5236
      %5491 = vmatpush1.bf16.msra.mxu0 %v5235
      %5492 = vmatprep.subr.bf16.mxu0 %v5242
      %5493 = vmatpush1.bf16.msra.mxu0 %v5241
      %5494 = vmatprep.subr.bf16.mxu0 %v5248
      %5495 = vmatpush1.bf16.msra.mxu0 %v5247
      %5496 = vmatprep.subr.bf16.mxu0 %v5254
      %5497 = vmatpush1.bf16.msra.mxu0 %v5253
      %5498 = vmatprep.mubr.bf16.mxu0 %v3847
      %5499 = vmatmul.mubr.bf16.gmra.mrb[0].mxu0 %v3846
      %v5500 = vpop.f32.mrb[0].mxu0
      %v5501 = vadd.f32 0.0, %v5500
      %v5502 = vpop.f32.mrb[0].mxu0
      %v5503 = vadd.f32 0.0, %v5502
      %v5504 = vpop.f32.mrb[0].mxu0
      %v5505 = vadd.f32 0.0, %v5504
      %v5506 = vpop.f32.mrb[0].mxu0
      %v5507 = vadd.f32 0.0, %v5506
      %5508 = vmatprep.mubr.bf16.mxu0 %v3849
      %5509 = vmatmul.mubr.bf16.gmra.mrb[0].mxu0 %v3848
      %v5510 = vpop.f32.mrb[0].mxu0
      %v5511 = vadd.f32 0.0, %v5510
      %v5512 = vpop.f32.mrb[0].mxu0
      %v5513 = vadd.f32 0.0, %v5512
      %v5514 = vpop.f32.mrb[0].mxu0
      %v5515 = vadd.f32 0.0, %v5514
      %v5516 = vpop.f32.mrb[0].mxu0
      %v5517 = vadd.f32 0.0, %v5516
      %5518 = vmatprep.mubr.bf16.mxu0 %v3851
      %5519 = vmatmul.mubr.bf16.gmra.mrb[0].mxu0 %v3850
      %v5520 = vpop.f32.mrb[0].mxu0
      %v5521 = vadd.f32 0.0, %v5520
      %v5522 = vpop.f32.mrb[0].mxu0
      %v5523 = vadd.f32 0.0, %v5522
      %v5524 = vpop.f32.mrb[0].mxu0
      %v5525 = vadd.f32 0.0, %v5524
      %v5526 = vpop.f32.mrb[0].mxu0
      %v5527 = vadd.f32 0.0, %v5526
      %5528 = vmatprep.mubr.bf16.mxu0 %v3853
      %5529 = vmatmul.mubr.bf16.gmra.mrb[0].mxu0 %v3852
      %v5530 = vpop.f32.mrb[0].mxu0
      %v5531 = vadd.f32 0.0, %v5530
      %v5532 = vpop.f32.mrb[0].mxu0
      %v5533 = vadd.f32 0.0, %v5532
      %v5534 = vpop.f32.mrb[0].mxu0
      %v5535 = vadd.f32 0.0, %v5534
      %v5536 = vpop.f32.mrb[0].mxu0
      %v5537 = vadd.f32 0.0, %v5536
      %5538 = vmatprep.mubr.bf16.mxu0 %v3855
      %5539 = vmatmul.mubr.bf16.gmra.mrb[0].mxu0 %v3854
      %v5540 = vpop.f32.mrb[0].mxu0
      %v5541 = vadd.f32 0.0, %v5540
      %v5542 = vpop.f32.mrb[0].mxu0
      %v5543 = vadd.f32 0.0, %v5542
      %v5544 = vpop.f32.mrb[0].mxu0
      %v5545 = vadd.f32 0.0, %v5544
      %v5546 = vpop.f32.mrb[0].mxu0
      %v5547 = vadd.f32 0.0, %v5546
      %5548 = vmatprep.mubr.bf16.mxu0 %v3857
      %5549 = vmatmul.mubr.bf16.gmra.mrb[0].mxu0 %v3856
      %v5550 = vpop.f32.mrb[0].mxu0
      %v5551 = vadd.f32 0.0, %v5550
      %v5552 = vpop.f32.mrb[0].mxu0
      %v5553 = vadd.f32 0.0, %v5552
      %v5554 = vpop.f32.mrb[0].mxu0
      %v5555 = vadd.f32 0.0, %v5554
      %v5556 = vpop.f32.mrb[0].mxu0
      %v5557 = vadd.f32 0.0, %v5556
      %5558 = vmatprep.mubr.bf16.mxu0 %v3859
      %5559 = vmatmul.mubr.bf16.gmra.mrb[0].mxu0 %v3858
      %v5560 = vpop.f32.mrb[0].mxu0
      %v5561 = vadd.f32 0.0, %v5560
      %v5562 = vpop.f32.mrb[0].mxu0
      %v5563 = vadd.f32 0.0, %v5562
      %v5564 = vpop.f32.mrb[0].mxu0
      %v5565 = vadd.f32 0.0, %v5564
      %v5566 = vpop.f32.mrb[0].mxu0
      %v5567 = vadd.f32 0.0, %v5566
      %5568 = vmatprep.mubr.bf16.mxu0 %v3861
      %5569 = vmatmul.mubr.bf16.gmra.mrb[0].mxu0 %v3860
      %v5570 = vpop.f32.mrb[0].mxu0
      %v5571 = vadd.f32 0.0, %v5570
      %v5572 = vpop.f32.mrb[0].mxu0
      %v5573 = vadd.f32 0.0, %v5572
      %v5574 = vpop.f32.mrb[0].mxu0
      %v5575 = vadd.f32 0.0, %v5574
      %v5576 = vpop.f32.mrb[0].mxu0
      %v5577 = vadd.f32 0.0, %v5576
      %5578 = vdwg.mxu0
      %5579 = vmatprep.subr.bf16.mxu0 %v5166
      %5580 = vmatpush1.bf16.msra.mxu0 %v5165
      %5581 = vmatprep.subr.bf16.mxu0 %v5172
      %5582 = vmatpush1.bf16.msra.mxu0 %v5171
      %5583 = vmatprep.subr.bf16.mxu0 %v5178
      %5584 = vmatpush1.bf16.msra.mxu0 %v5177
      %5585 = vmatprep.subr.bf16.mxu0 %v5184
      %5586 = vmatpush1.bf16.msra.mxu0 %v5183
      %5587 = vmatprep.subr.bf16.mxu0 %v5190
      %5588 = vmatpush1.bf16.msra.mxu0 %v5189
      %5589 = vmatprep.subr.bf16.mxu0 %v5196
      %5590 = vmatpush1.bf16.msra.mxu0 %v5195
      %5591 = vmatprep.subr.bf16.mxu0 %v5202
      %5592 = vmatpush1.bf16.msra.mxu0 %v5201
      %5593 = vmatprep.subr.bf16.mxu0 %v5208
      %5594 = vmatpush1.bf16.msra.mxu0 %v5207
      %5595 = vmatprep.subr.bf16.mxu0 %v5214
      %5596 = vmatpush1.bf16.msra.mxu0 %v5213
      %5597 = vmatprep.subr.bf16.mxu0 %v5220
      %5598 = vmatpush1.bf16.msra.mxu0 %v5219
      %5599 = vmatprep.subr.bf16.mxu0 %v5226
      %5600 = vmatpush1.bf16.msra.mxu0 %v5225
      %5601 = vmatprep.subr.bf16.mxu0 %v5232
      %5602 = vmatpush1.bf16.msra.mxu0 %v5231
      %5603 = vmatprep.subr.bf16.mxu0 %v5238
      %5604 = vmatpush1.bf16.msra.mxu0 %v5237
      %5605 = vmatprep.subr.bf16.mxu0 %v5244
      %5606 = vmatpush1.bf16.msra.mxu0 %v5243
      %5607 = vmatprep.subr.bf16.mxu0 %v5250
      %5608 = vmatpush1.bf16.msra.mxu0 %v5249
      %5609 = vmatprep.subr.bf16.mxu0 %v5256
      %5610 = vmatpush1.bf16.msra.mxu0 %v5255
      %5611 = vmatprep.mubr.bf16.mxu0 %v3847
      %5612 = vmatmul.mubr.bf16.gmra.mrb[0].mxu0 %v3846
      %v5613 = vpop.f32.mrb[0].mxu0
      %v5614 = vadd.f32 0.0, %v5613
      %v5615 = vpop.f32.mrb[0].mxu0
      %v5616 = vadd.f32 0.0, %v5615
      %v5617 = vpop.f32.mrb[0].mxu0
      %v5618 = vadd.f32 0.0, %v5617
      %v5619 = vpop.f32.mrb[0].mxu0
      %v5620 = vadd.f32 0.0, %v5619
      %5621 = vmatprep.mubr.bf16.mxu0 %v3849
      %5622 = vmatmul.mubr.bf16.gmra.mrb[0].mxu0 %v3848
      %v5623 = vpop.f32.mrb[0].mxu0
      %v5624 = vadd.f32 0.0, %v5623
      %v5625 = vpop.f32.mrb[0].mxu0
      %v5626 = vadd.f32 0.0, %v5625
      %v5627 = vpop.f32.mrb[0].mxu0
      %v5628 = vadd.f32 0.0, %v5627
      %v5629 = vpop.f32.mrb[0].mxu0
      %v5630 = vadd.f32 0.0, %v5629
      %5631 = vmatprep.mubr.bf16.mxu0 %v3851
      %5632 = vmatmul.mubr.bf16.gmra.mrb[0].mxu0 %v3850
      %v5633 = vpop.f32.mrb[0].mxu0
      %v5634 = vadd.f32 0.0, %v5633
      %v5635 = vpop.f32.mrb[0].mxu0
      %v5636 = vadd.f32 0.0, %v5635
      %v5637 = vpop.f32.mrb[0].mxu0
      %v5638 = vadd.f32 0.0, %v5637
      %v5639 = vpop.f32.mrb[0].mxu0
      %v5640 = vadd.f32 0.0, %v5639
      %5641 = vmatprep.mubr.bf16.mxu0 %v3853
      %5642 = vmatmul.mubr.bf16.gmra.mrb[0].mxu0 %v3852
      %v5643 = vpop.f32.mrb[0].mxu0
      %v5644 = vadd.f32 0.0, %v5643
      %v5645 = vpop.f32.mrb[0].mxu0
      %v5646 = vadd.f32 0.0, %v5645
      %v5647 = vpop.f32.mrb[0].mxu0
      %v5648 = vadd.f32 0.0, %v5647
      %v5649 = vpop.f32.mrb[0].mxu0
      %v5650 = vadd.f32 0.0, %v5649
      %5651 = vmatprep.mubr.bf16.mxu0 %v3855
      %5652 = vmatmul.mubr.bf16.gmra.mrb[0].mxu0 %v3854
      %v5653 = vpop.f32.mrb[0].mxu0
      %v5654 = vadd.f32 0.0, %v5653
      %v5655 = vpop.f32.mrb[0].mxu0
      %v5656 = vadd.f32 0.0, %v5655
      %v5657 = vpop.f32.mrb[0].mxu0
      %v5658 = vadd.f32 0.0, %v5657
      %v5659 = vpop.f32.mrb[0].mxu0
      %v5660 = vadd.f32 0.0, %v5659
      %5661 = vmatprep.mubr.bf16.mxu0 %v3857
      %5662 = vmatmul.mubr.bf16.gmra.mrb[0].mxu0 %v3856
      %v5663 = vpop.f32.mrb[0].mxu0
      %v5664 = vadd.f32 0.0, %v5663
      %v5665 = vpop.f32.mrb[0].mxu0
      %v5666 = vadd.f32 0.0, %v5665
      %v5667 = vpop.f32.mrb[0].mxu0
      %v5668 = vadd.f32 0.0, %v5667
      %v5669 = vpop.f32.mrb[0].mxu0
      %v5670 = vadd.f32 0.0, %v5669
      %5671 = vmatprep.mubr.bf16.mxu0 %v3859
      %5672 = vmatmul.mubr.bf16.gmra.mrb[0].mxu0 %v3858
      %v5673 = vpop.f32.mrb[0].mxu0
      %v5674 = vadd.f32 0.0, %v5673
      %v5675 = vpop.f32.mrb[0].mxu0
      %v5676 = vadd.f32 0.0, %v5675
      %v5677 = vpop.f32.mrb[0].mxu0
      %v5678 = vadd.f32 0.0, %v5677
      %v5679 = vpop.f32.mrb[0].mxu0
      %v5680 = vadd.f32 0.0, %v5679
      %5681 = vmatprep.mubr.bf16.mxu0 %v3861
      %5682 = vmatmul.mubr.bf16.gmra.mrb[0].mxu0 %v3860
      %v5683 = vpop.f32.mrb[0].mxu0
      %v5684 = vadd.f32 0.0, %v5683
      %v5685 = vpop.f32.mrb[0].mxu0
      %v5686 = vadd.f32 0.0, %v5685
      %v5687 = vpop.f32.mrb[0].mxu0
      %v5688 = vadd.f32 0.0, %v5687
      %v5689 = vpop.f32.mrb[0].mxu0
      %v5690 = vadd.f32 0.0, %v5689
      %5691 = vdwg.mxu0
      %v5692 = vxor.u32 %v4473, 2147483648
      %v5693 = vxor.u32 %v4475, 2147483648
      %v5694 = vxor.u32 %v4586, 2147483648
      %v5695 = vxor.u32 %v4588, 2147483648
      %v5696 = vxor.u32 %v4699, 2147483648
      %v5697 = vxor.u32 %v4701, 2147483648
      %v5698 = vxor.u32 %v4477, 2147483648
      %v5699 = vxor.u32 %v4479, 2147483648
      %v5700 = vxor.u32 %v4590, 2147483648
      %v5701 = vxor.u32 %v4592, 2147483648
      %v5702 = vxor.u32 %v4703, 2147483648
      %v5703 = vxor.u32 %v4705, 2147483648
      %v5704 = vxor.u32 %v4483, 2147483648
      %v5705 = vxor.u32 %v4485, 2147483648
      %v5706 = vxor.u32 %v4596, 2147483648
      %v5707 = vxor.u32 %v4598, 2147483648
      %v5708 = vxor.u32 %v4709, 2147483648
      %v5709 = vxor.u32 %v4711, 2147483648
      %v5710 = vxor.u32 %v4487, 2147483648
      %v5711 = vxor.u32 %v4489, 2147483648
      %v5712 = vxor.u32 %v4600, 2147483648
      %v5713 = vxor.u32 %v4602, 2147483648
      %v5714 = vxor.u32 %v4713, 2147483648
      %v5715 = vxor.u32 %v4715, 2147483648
      %v5716 = vxor.u32 %v4493, 2147483648
      %v5717 = vxor.u32 %v4495, 2147483648
      %v5718 = vxor.u32 %v4606, 2147483648
      %v5719 = vxor.u32 %v4608, 2147483648
      %v5720 = vxor.u32 %v4719, 2147483648
      %v5721 = vxor.u32 %v4721, 2147483648
      %v5722 = vxor.u32 %v4497, 2147483648
      %v5723 = vxor.u32 %v4499, 2147483648
      %v5724 = vxor.u32 %v4610, 2147483648
      %v5725 = vxor.u32 %v4612, 2147483648
      %v5726 = vxor.u32 %v4723, 2147483648
      %v5727 = vxor.u32 %v4725, 2147483648
      %v5728 = vxor.u32 %v4503, 2147483648
      %v5729 = vxor.u32 %v4505, 2147483648
      %v5730 = vxor.u32 %v4616, 2147483648
      %v5731 = vxor.u32 %v4618, 2147483648
      %v5732 = vxor.u32 %v4729, 2147483648
      %v5733 = vxor.u32 %v4731, 2147483648
      %v5734 = vxor.u32 %v4507, 2147483648
      %v5735 = vxor.u32 %v4509, 2147483648
      %v5736 = vxor.u32 %v4620, 2147483648
      %v5737 = vxor.u32 %v4622, 2147483648
      %v5738 = vxor.u32 %v4733, 2147483648
      %v5739 = vxor.u32 %v4735, 2147483648
      %v5740 = vxor.u32 %v4513, 2147483648
      %v5741 = vxor.u32 %v4515, 2147483648
      %v5742 = vxor.u32 %v4626, 2147483648
      %v5743 = vxor.u32 %v4628, 2147483648
      %v5744 = vxor.u32 %v4739, 2147483648
      %v5745 = vxor.u32 %v4741, 2147483648
      %v5746 = vxor.u32 %v4517, 2147483648
      %v5747 = vxor.u32 %v4519, 2147483648
      %v5748 = vxor.u32 %v4630, 2147483648
      %v5749 = vxor.u32 %v4632, 2147483648
      %v5750 = vxor.u32 %v4743, 2147483648
      %v5751 = vxor.u32 %v4745, 2147483648
      %v5752 = vxor.u32 %v4523, 2147483648
      %v5753 = vxor.u32 %v4525, 2147483648
      %v5754 = vxor.u32 %v4636, 2147483648
      %v5755 = vxor.u32 %v4638, 2147483648
      %v5756 = vxor.u32 %v4749, 2147483648
      %v5757 = vxor.u32 %v4751, 2147483648
      %v5758 = vxor.u32 %v4527, 2147483648
      %v5759 = vxor.u32 %v4529, 2147483648
      %v5760 = vxor.u32 %v4640, 2147483648
      %v5761 = vxor.u32 %v4642, 2147483648
      %v5762 = vxor.u32 %v4753, 2147483648
      %v5763 = vxor.u32 %v4755, 2147483648
      %v5764 = vxor.u32 %v4533, 2147483648
      %v5765 = vxor.u32 %v4535, 2147483648
      %v5766 = vxor.u32 %v4646, 2147483648
      %v5767 = vxor.u32 %v4648, 2147483648
      %v5768 = vxor.u32 %v4759, 2147483648
      %v5769 = vxor.u32 %v4761, 2147483648
      %v5770 = vxor.u32 %v4537, 2147483648
      %v5771 = vxor.u32 %v4539, 2147483648
      %v5772 = vxor.u32 %v4650, 2147483648
      %v5773 = vxor.u32 %v4652, 2147483648
      %v5774 = vxor.u32 %v4763, 2147483648
      %v5775 = vxor.u32 %v4765, 2147483648
      %v5776 = vxor.u32 %v4543, 2147483648
      %v5777 = vxor.u32 %v4545, 2147483648
      %v5778 = vxor.u32 %v4656, 2147483648
      %v5779 = vxor.u32 %v4658, 2147483648
      %v5780 = vxor.u32 %v4769, 2147483648
      %v5781 = vxor.u32 %v4771, 2147483648
      %v5782 = vxor.u32 %v4547, 2147483648
      %v5783 = vxor.u32 %v4549, 2147483648
      %v5784 = vxor.u32 %v4660, 2147483648
      %v5785 = vxor.u32 %v4662, 2147483648
      %v5786 = vxor.u32 %v4773, 2147483648
      %v5787 = vxor.u32 %v4775, 2147483648
      %v5788 = vmul.f32 %v5692, 1.442695
      %v5789 = vpow.pop %v5788
      %v5790 = vmul.f32 %v5693, 1.442695
      %v5791 = vpow.pop %v5790
      %v5792 = vmul.f32 %v5694, 1.442695
      %v5793 = vpow.pop %v5792
      %v5794 = vmul.f32 %v5695, 1.442695
      %v5795 = vpow.pop %v5794
      %v5796 = vmul.f32 %v5696, 1.442695
      %v5797 = vpow.pop %v5796
      %v5798 = vmul.f32 %v5697, 1.442695
      %v5799 = vpow.pop %v5798
      %v5800 = vmul.f32 %v5698, 1.442695
      %v5801 = vpow.pop %v5800
      %v5802 = vmul.f32 %v5699, 1.442695
      %v5803 = vpow.pop %v5802
      %v5804 = vmul.f32 %v5700, 1.442695
      %v5805 = vpow.pop %v5804
      %v5806 = vmul.f32 %v5701, 1.442695
      %v5807 = vpow.pop %v5806
      %v5808 = vmul.f32 %v5702, 1.442695
      %v5809 = vpow.pop %v5808
      %v5810 = vmul.f32 %v5703, 1.442695
      %v5811 = vpow.pop %v5810
      %v5812 = vmul.f32 %v5704, 1.442695
      %v5813 = vpow.pop %v5812
      %v5814 = vmul.f32 %v5705, 1.442695
      %v5815 = vpow.pop %v5814
      %v5816 = vmul.f32 %v5706, 1.442695
      %v5817 = vpow.pop %v5816
      %v5818 = vmul.f32 %v5707, 1.442695
      %v5819 = vpow.pop %v5818
      %v5820 = vmul.f32 %v5708, 1.442695
      %v5821 = vpow.pop %v5820
      %v5822 = vmul.f32 %v5709, 1.442695
      %v5823 = vpow.pop %v5822
      %v5824 = vmul.f32 %v5710, 1.442695
      %v5825 = vpow.pop %v5824
      %v5826 = vmul.f32 %v5711, 1.442695
      %v5827 = vpow.pop %v5826
      %v5828 = vmul.f32 %v5712, 1.442695
      %v5829 = vpow.pop %v5828
      %v5830 = vmul.f32 %v5713, 1.442695
      %v5831 = vpow.pop %v5830
      %v5832 = vmul.f32 %v5714, 1.442695
      %v5833 = vpow.pop %v5832
      %v5834 = vmul.f32 %v5715, 1.442695
      %v5835 = vpow.pop %v5834
      %v5836 = vmul.f32 %v5716, 1.442695
      %v5837 = vpow.pop %v5836
      %v5838 = vmul.f32 %v5717, 1.442695
      %v5839 = vpow.pop %v5838
      %v5840 = vmul.f32 %v5718, 1.442695
      %v5841 = vpow.pop %v5840
      %v5842 = vmul.f32 %v5719, 1.442695
      %v5843 = vpow.pop %v5842
      %v5844 = vmul.f32 %v5720, 1.442695
      %v5845 = vpow.pop %v5844
      %v5846 = vmul.f32 %v5721, 1.442695
      %v5847 = vpow.pop %v5846
      %v5848 = vmul.f32 %v5722, 1.442695
      %v5849 = vpow.pop %v5848
      %v5850 = vmul.f32 %v5723, 1.442695
      %v5851 = vpow.pop %v5850
      %v5852 = vmul.f32 %v5724, 1.442695
      %v5853 = vpow.pop %v5852
      %v5854 = vmul.f32 %v5725, 1.442695
      %v5855 = vpow.pop %v5854
      %v5856 = vmul.f32 %v5726, 1.442695
      %v5857 = vpow.pop %v5856
      %v5858 = vmul.f32 %v5727, 1.442695
      %v5859 = vpow.pop %v5858
      %v5860 = vmul.f32 %v5728, 1.442695
      %v5861 = vpow.pop %v5860
      %v5862 = vmul.f32 %v5729, 1.442695
      %v5863 = vpow.pop %v5862
      %v5864 = vmul.f32 %v5730, 1.442695
      %v5865 = vpow.pop %v5864
      %v5866 = vmul.f32 %v5731, 1.442695
      %v5867 = vpow.pop %v5866
      %v5868 = vmul.f32 %v5732, 1.442695
      %v5869 = vpow.pop %v5868
      %v5870 = vmul.f32 %v5733, 1.442695
      %v5871 = vpow.pop %v5870
      %v5872 = vmul.f32 %v5734, 1.442695
      %v5873 = vpow.pop %v5872
      %v5874 = vmul.f32 %v5735, 1.442695
      %v5875 = vpow.pop %v5874
      %v5876 = vmul.f32 %v5736, 1.442695
      %v5877 = vpow.pop %v5876
      %v5878 = vmul.f32 %v5737, 1.442695
      %v5879 = vpow.pop %v5878
      %v5880 = vmul.f32 %v5738, 1.442695
      %v5881 = vpow.pop %v5880
      %v5882 = vmul.f32 %v5739, 1.442695
      %v5883 = vpow.pop %v5882
      %v5884 = vmul.f32 %v5740, 1.442695
      %v5885 = vpow.pop %v5884
      %v5886 = vmul.f32 %v5741, 1.442695
      %v5887 = vpow.pop %v5886
      %v5888 = vmul.f32 %v5742, 1.442695
      %v5889 = vpow.pop %v5888
      %v5890 = vmul.f32 %v5743, 1.442695
      %v5891 = vpow.pop %v5890
      %v5892 = vmul.f32 %v5744, 1.442695
      %v5893 = vpow.pop %v5892
      %v5894 = vmul.f32 %v5745, 1.442695
      %v5895 = vpow.pop %v5894
      %v5896 = vmul.f32 %v5746, 1.442695
      %v5897 = vpow.pop %v5896
      %v5898 = vmul.f32 %v5747, 1.442695
      %v5899 = vpow.pop %v5898
      %v5900 = vmul.f32 %v5748, 1.442695
      %v5901 = vpow.pop %v5900
      %v5902 = vmul.f32 %v5749, 1.442695
      %v5903 = vpow.pop %v5902
      %v5904 = vmul.f32 %v5750, 1.442695
      %v5905 = vpow.pop %v5904
      %v5906 = vmul.f32 %v5751, 1.442695
      %v5907 = vpow.pop %v5906
      %v5908 = vmul.f32 %v5752, 1.442695
      %v5909 = vpow.pop %v5908
      %v5910 = vmul.f32 %v5753, 1.442695
      %v5911 = vpow.pop %v5910
      %v5912 = vmul.f32 %v5754, 1.442695
      %v5913 = vpow.pop %v5912
      %v5914 = vmul.f32 %v5755, 1.442695
      %v5915 = vpow.pop %v5914
      %v5916 = vmul.f32 %v5756, 1.442695
      %v5917 = vpow.pop %v5916
      %v5918 = vmul.f32 %v5757, 1.442695
      %v5919 = vpow.pop %v5918
      %v5920 = vmul.f32 %v5758, 1.442695
      %v5921 = vpow.pop %v5920
      %v5922 = vmul.f32 %v5759, 1.442695
      %v5923 = vpow.pop %v5922
      %v5924 = vmul.f32 %v5760, 1.442695
      %v5925 = vpow.pop %v5924
      %v5926 = vmul.f32 %v5761, 1.442695
      %v5927 = vpow.pop %v5926
      %v5928 = vmul.f32 %v5762, 1.442695
      %v5929 = vpow.pop %v5928
      %v5930 = vmul.f32 %v5763, 1.442695
      %v5931 = vpow.pop %v5930
      %v5932 = vmul.f32 %v5764, 1.442695
      %v5933 = vpow.pop %v5932
      %v5934 = vmul.f32 %v5765, 1.442695
      %v5935 = vpow.pop %v5934
      %v5936 = vmul.f32 %v5766, 1.442695
      %v5937 = vpow.pop %v5936
      %v5938 = vmul.f32 %v5767, 1.442695
      %v5939 = vpow.pop %v5938
      %v5940 = vmul.f32 %v5768, 1.442695
      %v5941 = vpow.pop %v5940
      %v5942 = vmul.f32 %v5769, 1.442695
      %v5943 = vpow.pop %v5942
      %v5944 = vmul.f32 %v5770, 1.442695
      %v5945 = vpow.pop %v5944
      %v5946 = vmul.f32 %v5771, 1.442695
      %v5947 = vpow.pop %v5946
      %v5948 = vmul.f32 %v5772, 1.442695
      %v5949 = vpow.pop %v5948
      %v5950 = vmul.f32 %v5773, 1.442695
      %v5951 = vpow.pop %v5950
      %v5952 = vmul.f32 %v5774, 1.442695
      %v5953 = vpow.pop %v5952
      %v5954 = vmul.f32 %v5775, 1.442695
      %v5955 = vpow.pop %v5954
      %v5956 = vmul.f32 %v5776, 1.442695
      %v5957 = vpow.pop %v5956
      %v5958 = vmul.f32 %v5777, 1.442695
      %v5959 = vpow.pop %v5958
      %v5960 = vmul.f32 %v5778, 1.442695
      %v5961 = vpow.pop %v5960
      %v5962 = vmul.f32 %v5779, 1.442695
      %v5963 = vpow.pop %v5962
      %v5964 = vmul.f32 %v5780, 1.442695
      %v5965 = vpow.pop %v5964
      %v5966 = vmul.f32 %v5781, 1.442695
      %v5967 = vpow.pop %v5966
      %v5968 = vmul.f32 %v5782, 1.442695
      %v5969 = vpow.pop %v5968
      %v5970 = vmul.f32 %v5783, 1.442695
      %v5971 = vpow.pop %v5970
      %v5972 = vmul.f32 %v5784, 1.442695
      %v5973 = vpow.pop %v5972
      %v5974 = vmul.f32 %v5785, 1.442695
      %v5975 = vpow.pop %v5974
      %v5976 = vmul.f32 %v5786, 1.442695
      %v5977 = vpow.pop %v5976
      %v5978 = vmul.f32 %v5787, 1.442695
      %v5979 = vpow.pop %v5978
      %v5980 = vadd.f32 %v5789, 1.0
      %v5981 = vadd.f32 %v5791, 1.0
      %v5982 = vadd.f32 %v5793, 1.0
      %v5983 = vadd.f32 %v5795, 1.0
      %v5984 = vadd.f32 %v5797, 1.0
      %v5985 = vadd.f32 %v5799, 1.0
      %v5986 = vadd.f32 %v5801, 1.0
      %v5987 = vadd.f32 %v5803, 1.0
      %v5988 = vadd.f32 %v5805, 1.0
      %v5989 = vadd.f32 %v5807, 1.0
      %v5990 = vadd.f32 %v5809, 1.0
      %v5991 = vadd.f32 %v5811, 1.0
      %v5992 = vadd.f32 %v5813, 1.0
      %v5993 = vadd.f32 %v5815, 1.0
      %v5994 = vadd.f32 %v5817, 1.0
      %v5995 = vadd.f32 %v5819, 1.0
      %v5996 = vadd.f32 %v5821, 1.0
      %v5997 = vadd.f32 %v5823, 1.0
      %v5998 = vadd.f32 %v5825, 1.0
      %v5999 = vadd.f32 %v5827, 1.0
      %v6000 = vadd.f32 %v5829, 1.0
      %v6001 = vadd.f32 %v5831, 1.0
      %v6002 = vadd.f32 %v5833, 1.0
      %v6003 = vadd.f32 %v5835, 1.0
      %v6004 = vadd.f32 %v5837, 1.0
      %v6005 = vadd.f32 %v5839, 1.0
      %v6006 = vadd.f32 %v5841, 1.0
      %v6007 = vadd.f32 %v5843, 1.0
      %v6008 = vadd.f32 %v5845, 1.0
      %v6009 = vadd.f32 %v5847, 1.0
      %v6010 = vadd.f32 %v5849, 1.0
      %v6011 = vadd.f32 %v5851, 1.0
      %v6012 = vadd.f32 %v5853, 1.0
      %v6013 = vadd.f32 %v5855, 1.0
      %v6014 = vadd.f32 %v5857, 1.0
      %v6015 = vadd.f32 %v5859, 1.0
      %v6016 = vadd.f32 %v5861, 1.0
      %v6017 = vadd.f32 %v5863, 1.0
      %v6018 = vadd.f32 %v5865, 1.0
      %v6019 = vadd.f32 %v5867, 1.0
      %v6020 = vadd.f32 %v5869, 1.0
      %v6021 = vadd.f32 %v5871, 1.0
      %v6022 = vadd.f32 %v5873, 1.0
      %v6023 = vadd.f32 %v5875, 1.0
      %v6024 = vadd.f32 %v5877, 1.0
      %v6025 = vadd.f32 %v5879, 1.0
      %v6026 = vadd.f32 %v5881, 1.0
      %v6027 = vadd.f32 %v5883, 1.0
      %v6028 = vadd.f32 %v5885, 1.0
      %v6029 = vadd.f32 %v5887, 1.0
      %v6030 = vadd.f32 %v5889, 1.0
      %v6031 = vadd.f32 %v5891, 1.0
      %v6032 = vadd.f32 %v5893, 1.0
      %v6033 = vadd.f32 %v5895, 1.0
      %v6034 = vadd.f32 %v5897, 1.0
      %v6035 = vadd.f32 %v5899, 1.0
      %v6036 = vadd.f32 %v5901, 1.0
      %v6037 = vadd.f32 %v5903, 1.0
      %v6038 = vadd.f32 %v5905, 1.0
      %v6039 = vadd.f32 %v5907, 1.0
      %v6040 = vadd.f32 %v5909, 1.0
      %v6041 = vadd.f32 %v5911, 1.0
      %v6042 = vadd.f32 %v5913, 1.0
      %v6043 = vadd.f32 %v5915, 1.0
      %v6044 = vadd.f32 %v5917, 1.0
      %v6045 = vadd.f32 %v5919, 1.0
      %v6046 = vadd.f32 %v5921, 1.0
      %v6047 = vadd.f32 %v5923, 1.0
      %v6048 = vadd.f32 %v5925, 1.0
      %v6049 = vadd.f32 %v5927, 1.0
      %v6050 = vadd.f32 %v5929, 1.0
      %v6051 = vadd.f32 %v5931, 1.0
      %v6052 = vadd.f32 %v5933, 1.0
      %v6053 = vadd.f32 %v5935, 1.0
      %v6054 = vadd.f32 %v5937, 1.0
      %v6055 = vadd.f32 %v5939, 1.0
      %v6056 = vadd.f32 %v5941, 1.0
      %v6057 = vadd.f32 %v5943, 1.0
      %v6058 = vadd.f32 %v5945, 1.0
      %v6059 = vadd.f32 %v5947, 1.0
      %v6060 = vadd.f32 %v5949, 1.0
      %v6061 = vadd.f32 %v5951, 1.0
      %v6062 = vadd.f32 %v5953, 1.0
      %v6063 = vadd.f32 %v5955, 1.0
      %v6064 = vadd.f32 %v5957, 1.0
      %v6065 = vadd.f32 %v5959, 1.0
      %v6066 = vadd.f32 %v5961, 1.0
      %v6067 = vadd.f32 %v5963, 1.0
      %v6068 = vadd.f32 %v5965, 1.0
      %v6069 = vadd.f32 %v5967, 1.0
      %v6070 = vadd.f32 %v5969, 1.0
      %v6071 = vadd.f32 %v5971, 1.0
      %v6072 = vadd.f32 %v5973, 1.0
      %v6073 = vadd.f32 %v5975, 1.0
      %v6074 = vadd.f32 %v5977, 1.0
      %v6075 = vadd.f32 %v5979, 1.0
      %v6076 = vrcp.pop %v5980
      %v6077 = vmul.f32 1.0, %v6076
      %v6078 = vrcp.pop %v5981
      %v6079 = vmul.f32 1.0, %v6078
      %v6080 = vrcp.pop %v5982
      %v6081 = vmul.f32 1.0, %v6080
      %v6082 = vrcp.pop %v5983
      %v6083 = vmul.f32 1.0, %v6082
      %v6084 = vrcp.pop %v5984
      %v6085 = vmul.f32 1.0, %v6084
      %v6086 = vrcp.pop %v5985
      %v6087 = vmul.f32 1.0, %v6086
      %v6088 = vrcp.pop %v5986
      %v6089 = vmul.f32 1.0, %v6088
      %v6090 = vrcp.pop %v5987
      %v6091 = vmul.f32 1.0, %v6090
      %v6092 = vrcp.pop %v5988
      %v6093 = vmul.f32 1.0, %v6092
      %v6094 = vrcp.pop %v5989
      %v6095 = vmul.f32 1.0, %v6094
      %v6096 = vrcp.pop %v5990
      %v6097 = vmul.f32 1.0, %v6096
      %v6098 = vrcp.pop %v5991
      %v6099 = vmul.f32 1.0, %v6098
      %v6100 = vrcp.pop %v5992
      %v6101 = vmul.f32 1.0, %v6100
      %v6102 = vrcp.pop %v5993
      %v6103 = vmul.f32 1.0, %v6102
      %v6104 = vrcp.pop %v5994
      %v6105 = vmul.f32 1.0, %v6104
      %v6106 = vrcp.pop %v5995
      %v6107 = vmul.f32 1.0, %v6106
      %v6108 = vrcp.pop %v5996
      %v6109 = vmul.f32 1.0, %v6108
      %v6110 = vrcp.pop %v5997
      %v6111 = vmul.f32 1.0, %v6110
      %v6112 = vrcp.pop %v5998
      %v6113 = vmul.f32 1.0, %v6112
      %v6114 = vrcp.pop %v5999
      %v6115 = vmul.f32 1.0, %v6114
      %v6116 = vrcp.pop %v6000
      %v6117 = vmul.f32 1.0, %v6116
      %v6118 = vrcp.pop %v6001
      %v6119 = vmul.f32 1.0, %v6118
      %v6120 = vrcp.pop %v6002
      %v6121 = vmul.f32 1.0, %v6120
      %v6122 = vrcp.pop %v6003
      %v6123 = vmul.f32 1.0, %v6122
      %v6124 = vrcp.pop %v6004
      %v6125 = vmul.f32 1.0, %v6124
      %v6126 = vrcp.pop %v6005
      %v6127 = vmul.f32 1.0, %v6126
      %v6128 = vrcp.pop %v6006
      %v6129 = vmul.f32 1.0, %v6128
      %v6130 = vrcp.pop %v6007
      %v6131 = vmul.f32 1.0, %v6130
      %v6132 = vrcp.pop %v6008
      %v6133 = vmul.f32 1.0, %v6132
      %v6134 = vrcp.pop %v6009
      %v6135 = vmul.f32 1.0, %v6134
      %v6136 = vrcp.pop %v6010
      %v6137 = vmul.f32 1.0, %v6136
      %v6138 = vrcp.pop %v6011
      %v6139 = vmul.f32 1.0, %v6138
      %v6140 = vrcp.pop %v6012
      %v6141 = vmul.f32 1.0, %v6140
      %v6142 = vrcp.pop %v6013
      %v6143 = vmul.f32 1.0, %v6142
      %v6144 = vrcp.pop %v6014
      %v6145 = vmul.f32 1.0, %v6144
      %v6146 = vrcp.pop %v6015
      %v6147 = vmul.f32 1.0, %v6146
      %v6148 = vrcp.pop %v6016
      %v6149 = vmul.f32 1.0, %v6148
      %v6150 = vrcp.pop %v6017
      %v6151 = vmul.f32 1.0, %v6150
      %v6152 = vrcp.pop %v6018
      %v6153 = vmul.f32 1.0, %v6152
      %v6154 = vrcp.pop %v6019
      %v6155 = vmul.f32 1.0, %v6154
      %v6156 = vrcp.pop %v6020
      %v6157 = vmul.f32 1.0, %v6156
      %v6158 = vrcp.pop %v6021
      %v6159 = vmul.f32 1.0, %v6158
      %v6160 = vrcp.pop %v6022
      %v6161 = vmul.f32 1.0, %v6160
      %v6162 = vrcp.pop %v6023
      %v6163 = vmul.f32 1.0, %v6162
      %v6164 = vrcp.pop %v6024
      %v6165 = vmul.f32 1.0, %v6164
      %v6166 = vrcp.pop %v6025
      %v6167 = vmul.f32 1.0, %v6166
      %v6168 = vrcp.pop %v6026
      %v6169 = vmul.f32 1.0, %v6168
      %v6170 = vrcp.pop %v6027
      %v6171 = vmul.f32 1.0, %v6170
      %v6172 = vrcp.pop %v6028
      %v6173 = vmul.f32 1.0, %v6172
      %v6174 = vrcp.pop %v6029
      %v6175 = vmul.f32 1.0, %v6174
      %v6176 = vrcp.pop %v6030
      %v6177 = vmul.f32 1.0, %v6176
      %v6178 = vrcp.pop %v6031
      %v6179 = vmul.f32 1.0, %v6178
      %v6180 = vrcp.pop %v6032
      %v6181 = vmul.f32 1.0, %v6180
      %v6182 = vrcp.pop %v6033
      %v6183 = vmul.f32 1.0, %v6182
      %v6184 = vrcp.pop %v6034
      %v6185 = vmul.f32 1.0, %v6184
      %v6186 = vrcp.pop %v6035
      %v6187 = vmul.f32 1.0, %v6186
      %v6188 = vrcp.pop %v6036
      %v6189 = vmul.f32 1.0, %v6188
      %v6190 = vrcp.pop %v6037
      %v6191 = vmul.f32 1.0, %v6190
      %v6192 = vrcp.pop %v6038
      %v6193 = vmul.f32 1.0, %v6192
      %v6194 = vrcp.pop %v6039
      %v6195 = vmul.f32 1.0, %v6194
      %v6196 = vrcp.pop %v6040
      %v6197 = vmul.f32 1.0, %v6196
      %v6198 = vrcp.pop %v6041
      %v6199 = vmul.f32 1.0, %v6198
      %v6200 = vrcp.pop %v6042
      %v6201 = vmul.f32 1.0, %v6200
      %v6202 = vrcp.pop %v6043
      %v6203 = vmul.f32 1.0, %v6202
      %v6204 = vrcp.pop %v6044
      %v6205 = vmul.f32 1.0, %v6204
      %v6206 = vrcp.pop %v6045
      %v6207 = vmul.f32 1.0, %v6206
      %v6208 = vrcp.pop %v6046
      %v6209 = vmul.f32 1.0, %v6208
      %v6210 = vrcp.pop %v6047
      %v6211 = vmul.f32 1.0, %v6210
      %v6212 = vrcp.pop %v6048
      %v6213 = vmul.f32 1.0, %v6212
      %v6214 = vrcp.pop %v6049
      %v6215 = vmul.f32 1.0, %v6214
      %v6216 = vrcp.pop %v6050
      %v6217 = vmul.f32 1.0, %v6216
      %v6218 = vrcp.pop %v6051
      %v6219 = vmul.f32 1.0, %v6218
      %v6220 = vrcp.pop %v6052
      %v6221 = vmul.f32 1.0, %v6220
      %v6222 = vrcp.pop %v6053
      %v6223 = vmul.f32 1.0, %v6222
      %v6224 = vrcp.pop %v6054
      %v6225 = vmul.f32 1.0, %v6224
      %v6226 = vrcp.pop %v6055
      %v6227 = vmul.f32 1.0, %v6226
      %v6228 = vrcp.pop %v6056
      %v6229 = vmul.f32 1.0, %v6228
      %v6230 = vrcp.pop %v6057
      %v6231 = vmul.f32 1.0, %v6230
      %v6232 = vrcp.pop %v6058
      %v6233 = vmul.f32 1.0, %v6232
      %v6234 = vrcp.pop %v6059
      %v6235 = vmul.f32 1.0, %v6234
      %v6236 = vrcp.pop %v6060
      %v6237 = vmul.f32 1.0, %v6236
      %v6238 = vrcp.pop %v6061
      %v6239 = vmul.f32 1.0, %v6238
      %v6240 = vrcp.pop %v6062
      %v6241 = vmul.f32 1.0, %v6240
      %v6242 = vrcp.pop %v6063
      %v6243 = vmul.f32 1.0, %v6242
      %v6244 = vrcp.pop %v6064
      %v6245 = vmul.f32 1.0, %v6244
      %v6246 = vrcp.pop %v6065
      %v6247 = vmul.f32 1.0, %v6246
      %v6248 = vrcp.pop %v6066
      %v6249 = vmul.f32 1.0, %v6248
      %v6250 = vrcp.pop %v6067
      %v6251 = vmul.f32 1.0, %v6250
      %v6252 = vrcp.pop %v6068
      %v6253 = vmul.f32 1.0, %v6252
      %v6254 = vrcp.pop %v6069
      %v6255 = vmul.f32 1.0, %v6254
      %v6256 = vrcp.pop %v6070
      %v6257 = vmul.f32 1.0, %v6256
      %v6258 = vrcp.pop %v6071
      %v6259 = vmul.f32 1.0, %v6258
      %v6260 = vrcp.pop %v6072
      %v6261 = vmul.f32 1.0, %v6260
      %v6262 = vrcp.pop %v6073
      %v6263 = vmul.f32 1.0, %v6262
      %v6264 = vrcp.pop %v6074
      %v6265 = vmul.f32 1.0, %v6264
      %v6266 = vrcp.pop %v6075
      %v6267 = vmul.f32 1.0, %v6266
      %v6268 = vmul.f32 %v4473, %v6077
      %v6269 = vmul.f32 %v4475, %v6079
      %v6270 = vmul.f32 %v4586, %v6081
      %v6271 = vmul.f32 %v4588, %v6083
      %v6272 = vmul.f32 %v4699, %v6085
      %v6273 = vmul.f32 %v4701, %v6087
      %v6274 = vmul.f32 %v4477, %v6089
      %v6275 = vmul.f32 %v4479, %v6091
      %v6276 = vmul.f32 %v4590, %v6093
      %v6277 = vmul.f32 %v4592, %v6095
      %v6278 = vmul.f32 %v4703, %v6097
      %v6279 = vmul.f32 %v4705, %v6099
      %v6280 = vmul.f32 %v4483, %v6101
      %v6281 = vmul.f32 %v4485, %v6103
      %v6282 = vmul.f32 %v4596, %v6105
      %v6283 = vmul.f32 %v4598, %v6107
      %v6284 = vmul.f32 %v4709, %v6109
      %v6285 = vmul.f32 %v4711, %v6111
      %v6286 = vmul.f32 %v4487, %v6113
      %v6287 = vmul.f32 %v4489, %v6115
      %v6288 = vmul.f32 %v4600, %v6117
      %v6289 = vmul.f32 %v4602, %v6119
      %v6290 = vmul.f32 %v4713, %v6121
      %v6291 = vmul.f32 %v4715, %v6123
      %v6292 = vmul.f32 %v4493, %v6125
      %v6293 = vmul.f32 %v4495, %v6127
      %v6294 = vmul.f32 %v4606, %v6129
      %v6295 = vmul.f32 %v4608, %v6131
      %v6296 = vmul.f32 %v4719, %v6133
      %v6297 = vmul.f32 %v4721, %v6135
      %v6298 = vmul.f32 %v4497, %v6137
      %v6299 = vmul.f32 %v4499, %v6139
      %v6300 = vmul.f32 %v4610, %v6141
      %v6301 = vmul.f32 %v4612, %v6143
      %v6302 = vmul.f32 %v4723, %v6145
      %v6303 = vmul.f32 %v4725, %v6147
      %v6304 = vmul.f32 %v4503, %v6149
      %v6305 = vmul.f32 %v4505, %v6151
      %v6306 = vmul.f32 %v4616, %v6153
      %v6307 = vmul.f32 %v4618, %v6155
      %v6308 = vmul.f32 %v4729, %v6157
      %v6309 = vmul.f32 %v4731, %v6159
      %v6310 = vmul.f32 %v4507, %v6161
      %v6311 = vmul.f32 %v4509, %v6163
      %v6312 = vmul.f32 %v4620, %v6165
      %v6313 = vmul.f32 %v4622, %v6167
      %v6314 = vmul.f32 %v4733, %v6169
      %v6315 = vmul.f32 %v4735, %v6171
      %v6316 = vmul.f32 %v4513, %v6173
      %v6317 = vmul.f32 %v4515, %v6175
      %v6318 = vmul.f32 %v4626, %v6177
      %v6319 = vmul.f32 %v4628, %v6179
      %v6320 = vmul.f32 %v4739, %v6181
      %v6321 = vmul.f32 %v4741, %v6183
      %v6322 = vmul.f32 %v4517, %v6185
      %v6323 = vmul.f32 %v4519, %v6187
      %v6324 = vmul.f32 %v4630, %v6189
      %v6325 = vmul.f32 %v4632, %v6191
      %v6326 = vmul.f32 %v4743, %v6193
      %v6327 = vmul.f32 %v4745, %v6195
      %v6328 = vmul.f32 %v4523, %v6197
      %v6329 = vmul.f32 %v4525, %v6199
      %v6330 = vmul.f32 %v4636, %v6201
      %v6331 = vmul.f32 %v4638, %v6203
      %v6332 = vmul.f32 %v4749, %v6205
      %v6333 = vmul.f32 %v4751, %v6207
      %v6334 = vmul.f32 %v4527, %v6209
      %v6335 = vmul.f32 %v4529, %v6211
      %v6336 = vmul.f32 %v4640, %v6213
      %v6337 = vmul.f32 %v4642, %v6215
      %v6338 = vmul.f32 %v4753, %v6217
      %v6339 = vmul.f32 %v4755, %v6219
      %v6340 = vmul.f32 %v4533, %v6221
      %v6341 = vmul.f32 %v4535, %v6223
      %v6342 = vmul.f32 %v4646, %v6225
      %v6343 = vmul.f32 %v4648, %v6227
      %v6344 = vmul.f32 %v4759, %v6229
      %v6345 = vmul.f32 %v4761, %v6231
      %v6346 = vmul.f32 %v4537, %v6233
      %v6347 = vmul.f32 %v4539, %v6235
      %v6348 = vmul.f32 %v4650, %v6237
      %v6349 = vmul.f32 %v4652, %v6239
      %v6350 = vmul.f32 %v4763, %v6241
      %v6351 = vmul.f32 %v4765, %v6243
      %v6352 = vmul.f32 %v4543, %v6245
      %v6353 = vmul.f32 %v4545, %v6247
      %v6354 = vmul.f32 %v4656, %v6249
      %v6355 = vmul.f32 %v4658, %v6251
      %v6356 = vmul.f32 %v4769, %v6253
      %v6357 = vmul.f32 %v4771, %v6255
      %v6358 = vmul.f32 %v4547, %v6257
      %v6359 = vmul.f32 %v4549, %v6259
      %v6360 = vmul.f32 %v4660, %v6261
      %v6361 = vmul.f32 %v4662, %v6263
      %v6362 = vmul.f32 %v4773, %v6265
      %v6363 = vmul.f32 %v4775, %v6267
      %v6364 = vmul.f32 %v6268, %v5388
      %v6365 = vmul.f32 %v6269, %v5390
      %v6366 = vmul.f32 %v6270, %v5501
      %v6367 = vmul.f32 %v6271, %v5503
      %v6368 = vmul.f32 %v6272, %v5614
      %v6369 = vmul.f32 %v6273, %v5616
      %v6370 = vmul.f32 %v6274, %v5392
      %v6371 = vmul.f32 %v6275, %v5394
      %v6372 = vmul.f32 %v6276, %v5505
      %v6373 = vmul.f32 %v6277, %v5507
      %v6374 = vmul.f32 %v6278, %v5618
      %v6375 = vmul.f32 %v6279, %v5620
      %v6376 = vmul.f32 %v6280, %v5398
      %v6377 = vmul.f32 %v6281, %v5400
      %v6378 = vmul.f32 %v6282, %v5511
      %v6379 = vmul.f32 %v6283, %v5513
      %v6380 = vmul.f32 %v6284, %v5624
      %v6381 = vmul.f32 %v6285, %v5626
      %v6382 = vmul.f32 %v6286, %v5402
      %v6383 = vmul.f32 %v6287, %v5404
      %v6384 = vmul.f32 %v6288, %v5515
      %v6385 = vmul.f32 %v6289, %v5517
      %v6386 = vmul.f32 %v6290, %v5628
      %v6387 = vmul.f32 %v6291, %v5630
      %v6388 = vmul.f32 %v6292, %v5408
      %v6389 = vmul.f32 %v6293, %v5410
      %v6390 = vmul.f32 %v6294, %v5521
      %v6391 = vmul.f32 %v6295, %v5523
      %v6392 = vmul.f32 %v6296, %v5634
      %v6393 = vmul.f32 %v6297, %v5636
      %v6394 = vmul.f32 %v6298, %v5412
      %v6395 = vmul.f32 %v6299, %v5414
      %v6396 = vmul.f32 %v6300, %v5525
      %v6397 = vmul.f32 %v6301, %v5527
      %v6398 = vmul.f32 %v6302, %v5638
      %v6399 = vmul.f32 %v6303, %v5640
      %v6400 = vmul.f32 %v6304, %v5418
      %v6401 = vmul.f32 %v6305, %v5420
      %v6402 = vmul.f32 %v6306, %v5531
      %v6403 = vmul.f32 %v6307, %v5533
      %v6404 = vmul.f32 %v6308, %v5644
      %v6405 = vmul.f32 %v6309, %v5646
      %v6406 = vmul.f32 %v6310, %v5422
      %v6407 = vmul.f32 %v6311, %v5424
      %v6408 = vmul.f32 %v6312, %v5535
      %v6409 = vmul.f32 %v6313, %v5537
      %v6410 = vmul.f32 %v6314, %v5648
      %v6411 = vmul.f32 %v6315, %v5650
      %v6412 = vmul.f32 %v6316, %v5428
      %v6413 = vmul.f32 %v6317, %v5430
      %v6414 = vmul.f32 %v6318, %v5541
      %v6415 = vmul.f32 %v6319, %v5543
      %v6416 = vmul.f32 %v6320, %v5654
      %v6417 = vmul.f32 %v6321, %v5656
      %v6418 = vmul.f32 %v6322, %v5432
      %v6419 = vmul.f32 %v6323, %v5434
      %v6420 = vmul.f32 %v6324, %v5545
      %v6421 = vmul.f32 %v6325, %v5547
      %v6422 = vmul.f32 %v6326, %v5658
      %v6423 = vmul.f32 %v6327, %v5660
      %v6424 = vmul.f32 %v6328, %v5438
      %v6425 = vmul.f32 %v6329, %v5440
      %v6426 = vmul.f32 %v6330, %v5551
      %v6427 = vmul.f32 %v6331, %v5553
      %v6428 = vmul.f32 %v6332, %v5664
      %v6429 = vmul.f32 %v6333, %v5666
      %v6430 = vmul.f32 %v6334, %v5442
      %v6431 = vmul.f32 %v6335, %v5444
      %v6432 = vmul.f32 %v6336, %v5555
      %v6433 = vmul.f32 %v6337, %v5557
      %v6434 = vmul.f32 %v6338, %v5668
      %v6435 = vmul.f32 %v6339, %v5670
      %v6436 = vmul.f32 %v6340, %v5448
      %v6437 = vmul.f32 %v6341, %v5450
      %v6438 = vmul.f32 %v6342, %v5561
      %v6439 = vmul.f32 %v6343, %v5563
      %v6440 = vmul.f32 %v6344, %v5674
      %v6441 = vmul.f32 %v6345, %v5676
      %v6442 = vmul.f32 %v6346, %v5452
      %v6443 = vmul.f32 %v6347, %v5454
      %v6444 = vmul.f32 %v6348, %v5565
      %v6445 = vmul.f32 %v6349, %v5567
      %v6446 = vmul.f32 %v6350, %v5678
      %v6447 = vmul.f32 %v6351, %v5680
      %v6448 = vmul.f32 %v6352, %v5458
      %v6449 = vmul.f32 %v6353, %v5460
      %v6450 = vmul.f32 %v6354, %v5571
      %v6451 = vmul.f32 %v6355, %v5573
      %v6452 = vmul.f32 %v6356, %v5684
      %v6453 = vmul.f32 %v6357, %v5686
      %v6454 = vmul.f32 %v6358, %v5462
      %v6455 = vmul.f32 %v6359, %v5464
      %v6456 = vmul.f32 %v6360, %v5575
      %v6457 = vmul.f32 %v6361, %v5577
      %v6458 = vmul.f32 %v6362, %v5688
      %v6459 = vmul.f32 %v6363, %v5690
      %v6460 = vpack.c.bf16 %v6370, %v6364
      %v6461 = vpack.c.bf16 %v6371, %v6365
      %v6462 = vpack.c.bf16 %v6372, %v6366
      %v6463 = vpack.c.bf16 %v6373, %v6367
      %v6464 = vpack.c.bf16 %v6374, %v6368
      %v6465 = vpack.c.bf16 %v6375, %v6369
      %v6466 = vpack.c.bf16 %v6382, %v6376
      %v6467 = vpack.c.bf16 %v6383, %v6377
      %v6468 = vpack.c.bf16 %v6384, %v6378
      %v6469 = vpack.c.bf16 %v6385, %v6379
      %v6470 = vpack.c.bf16 %v6386, %v6380
      %v6471 = vpack.c.bf16 %v6387, %v6381
      %v6472 = vpack.c.bf16 %v6394, %v6388
      %v6473 = vpack.c.bf16 %v6395, %v6389
      %v6474 = vpack.c.bf16 %v6396, %v6390
      %v6475 = vpack.c.bf16 %v6397, %v6391
      %v6476 = vpack.c.bf16 %v6398, %v6392
      %v6477 = vpack.c.bf16 %v6399, %v6393
      %v6478 = vpack.c.bf16 %v6406, %v6400
      %v6479 = vpack.c.bf16 %v6407, %v6401
      %v6480 = vpack.c.bf16 %v6408, %v6402
      %v6481 = vpack.c.bf16 %v6409, %v6403
      %v6482 = vpack.c.bf16 %v6410, %v6404
      %v6483 = vpack.c.bf16 %v6411, %v6405
      %v6484 = vpack.c.bf16 %v6418, %v6412
      %v6485 = vpack.c.bf16 %v6419, %v6413
      %v6486 = vpack.c.bf16 %v6420, %v6414
      %v6487 = vpack.c.bf16 %v6421, %v6415
      %v6488 = vpack.c.bf16 %v6422, %v6416
      %v6489 = vpack.c.bf16 %v6423, %v6417
      %v6490 = vpack.c.bf16 %v6430, %v6424
      %v6491 = vpack.c.bf16 %v6431, %v6425
      %v6492 = vpack.c.bf16 %v6432, %v6426
      %v6493 = vpack.c.bf16 %v6433, %v6427
      %v6494 = vpack.c.bf16 %v6434, %v6428
      %v6495 = vpack.c.bf16 %v6435, %v6429
      %v6496 = vpack.c.bf16 %v6442, %v6436
      %v6497 = vpack.c.bf16 %v6443, %v6437
      %v6498 = vpack.c.bf16 %v6444, %v6438
      %v6499 = vpack.c.bf16 %v6445, %v6439
      %v6500 = vpack.c.bf16 %v6446, %v6440
      %v6501 = vpack.c.bf16 %v6447, %v6441
      %v6502 = vpack.c.bf16 %v6454, %v6448
      %v6503 = vpack.c.bf16 %v6455, %v6449
      %v6504 = vpack.c.bf16 %v6456, %v6450
      %v6505 = vpack.c.bf16 %v6457, %v6451
      %v6506 = vpack.c.bf16 %v6458, %v6452
      %v6507 = vpack.c.bf16 %v6459, %v6453
      %v6508 = vld [vmem:[%s500] sm:$0xff]
      %v6509 = vld [vmem:[%s500 + $0x8] sm:$0xff]
      %v6510 = vld [vmem:[%s500 + $0x10] sm:$0xff]
      %v6511 = vld [vmem:[%s500 + $0x18] sm:$0xff]
      %v6512 = vld [vmem:[%s500 + $0x20] sm:$0xff]
      %v6513 = vld [vmem:[%s500 + $0x28] sm:$0xff]
      %v6514 = vld [vmem:[%s500 + $0x30] sm:$0xff]
      %v6515 = vld [vmem:[%s500 + $0x38] sm:$0xff]
      %v6516 = vld [vmem:[%s500 + $0x40] sm:$0xff]
      %v6517 = vld [vmem:[%s500 + $0x48] sm:$0xff]
      %v6518 = vld [vmem:[%s500 + $0x50] sm:$0xff]
      %v6519 = vld [vmem:[%s500 + $0x58] sm:$0xff]
      %v6520 = vld [vmem:[%s500 + $0x60] sm:$0xff]
      %v6521 = vld [vmem:[%s500 + $0x68] sm:$0xff]
      %v6522 = vld [vmem:[%s500 + $0x70] sm:$0xff]
      %v6523 = vld [vmem:[%s500 + $0x78] sm:$0xff]
      %v6524 = vld [vmem:[%s500 + $0x80] sm:$0xff]
      %v6525 = vld [vmem:[%s500 + $0x88] sm:$0xff]
      %v6526 = vld [vmem:[%s500 + $0x90] sm:$0xff]
      %v6527 = vld [vmem:[%s500 + $0x98] sm:$0xff]
      %v6528 = vld [vmem:[%s500 + $0xa0] sm:$0xff]
      %v6529 = vld [vmem:[%s500 + $0xa8] sm:$0xff]
      %v6530 = vld [vmem:[%s500 + $0xb0] sm:$0xff]
      %v6531 = vld [vmem:[%s500 + $0xb8] sm:$0xff]
      %v6532 = vld [vmem:[%s500 + $0xc0] sm:$0xff]
      %v6533 = vld [vmem:[%s500 + $0xc8] sm:$0xff]
      %v6534 = vld [vmem:[%s500 + $0xd0] sm:$0xff]
      %v6535 = vld [vmem:[%s500 + $0xd8] sm:$0xff]
      %v6536 = vld [vmem:[%s500 + $0xe0] sm:$0xff]
      %v6537 = vld [vmem:[%s500 + $0xe8] sm:$0xff]
      %v6538 = vld [vmem:[%s500 + $0xf0] sm:$0xff]
      %v6539 = vld [vmem:[%s500 + $0xf8] sm:$0xff]
      %v6540 = vld [vmem:[%s500 + $0x100] sm:$0xff]
      %v6541 = vld [vmem:[%s500 + $0x108] sm:$0xff]
      %v6542 = vld [vmem:[%s500 + $0x110] sm:$0xff]
      %v6543 = vld [vmem:[%s500 + $0x118] sm:$0xff]
      %v6544 = vld [vmem:[%s500 + $0x120] sm:$0xff]
      %v6545 = vld [vmem:[%s500 + $0x128] sm:$0xff]
      %v6546 = vld [vmem:[%s500 + $0x130] sm:$0xff]
      %v6547 = vld [vmem:[%s500 + $0x138] sm:$0xff]
      %v6548 = vld [vmem:[%s500 + $0x140] sm:$0xff]
      %v6549 = vld [vmem:[%s500 + $0x148] sm:$0xff]
      %v6550 = vld [vmem:[%s500 + $0x150] sm:$0xff]
      %v6551 = vld [vmem:[%s500 + $0x158] sm:$0xff]
      %v6552 = vld [vmem:[%s500 + $0x160] sm:$0xff]
      %v6553 = vld [vmem:[%s500 + $0x168] sm:$0xff]
      %v6554 = vld [vmem:[%s500 + $0x170] sm:$0xff]
      %v6555 = vld [vmem:[%s500 + $0x178] sm:$0xff]
      %v6556 = vld [vmem:[%s500 + $0x180] sm:$0xff]
      %v6557 = vld [vmem:[%s500 + $0x188] sm:$0xff]
      %v6558 = vld [vmem:[%s500 + $0x190] sm:$0xff]
      %v6559 = vld [vmem:[%s500 + $0x198] sm:$0xff]
      %v6560 = vld [vmem:[%s500 + $0x1a0] sm:$0xff]
      %v6561 = vld [vmem:[%s500 + $0x1a8] sm:$0xff]
      %v6562 = vld [vmem:[%s500 + $0x1b0] sm:$0xff]
      %v6563 = vld [vmem:[%s500 + $0x1b8] sm:$0xff]
      %v6564 = vld [vmem:[%s500 + $0x1c0] sm:$0xff]
      %v6565 = vld [vmem:[%s500 + $0x1c8] sm:$0xff]
      %v6566 = vld [vmem:[%s500 + $0x1d0] sm:$0xff]
      %v6567 = vld [vmem:[%s500 + $0x1d8] sm:$0xff]
      %v6568 = vld [vmem:[%s500 + $0x1e0] sm:$0xff]
      %v6569 = vld [vmem:[%s500 + $0x1e8] sm:$0xff]
      %v6570 = vld [vmem:[%s500 + $0x1f0] sm:$0xff]
      %v6571 = vld [vmem:[%s500 + $0x1f8] sm:$0xff]
      %v6572 = vld [vmem:[%s500 + $0x200] sm:$0xff]
      %v6573 = vld [vmem:[%s500 + $0x208] sm:$0xff]
      %v6574 = vld [vmem:[%s500 + $0x210] sm:$0xff]
      %v6575 = vld [vmem:[%s500 + $0x218] sm:$0xff]
      %v6576 = vld [vmem:[%s500 + $0x220] sm:$0xff]
      %v6577 = vld [vmem:[%s500 + $0x228] sm:$0xff]
      %v6578 = vld [vmem:[%s500 + $0x230] sm:$0xff]
      %v6579 = vld [vmem:[%s500 + $0x238] sm:$0xff]
      %v6580 = vld [vmem:[%s500 + $0x240] sm:$0xff]
      %v6581 = vld [vmem:[%s500 + $0x248] sm:$0xff]
      %v6582 = vld [vmem:[%s500 + $0x250] sm:$0xff]
      %v6583 = vld [vmem:[%s500 + $0x258] sm:$0xff]
      %v6584 = vld [vmem:[%s500 + $0x260] sm:$0xff]
      %v6585 = vld [vmem:[%s500 + $0x268] sm:$0xff]
      %v6586 = vld [vmem:[%s500 + $0x270] sm:$0xff]
      %v6587 = vld [vmem:[%s500 + $0x278] sm:$0xff]
      %v6588 = vld [vmem:[%s500 + $0x280] sm:$0xff]
      %v6589 = vld [vmem:[%s500 + $0x288] sm:$0xff]
      %v6590 = vld [vmem:[%s500 + $0x290] sm:$0xff]
      %v6591 = vld [vmem:[%s500 + $0x298] sm:$0xff]
      %v6592 = vld [vmem:[%s500 + $0x2a0] sm:$0xff]
      %v6593 = vld [vmem:[%s500 + $0x2a8] sm:$0xff]
      %v6594 = vld [vmem:[%s500 + $0x2b0] sm:$0xff]
      %v6595 = vld [vmem:[%s500 + $0x2b8] sm:$0xff]
      %v6596 = vld [vmem:[%s500 + $0x2c0] sm:$0xff]
      %v6597 = vld [vmem:[%s500 + $0x2c8] sm:$0xff]
      %v6598 = vld [vmem:[%s500 + $0x2d0] sm:$0xff]
      %v6599 = vld [vmem:[%s500 + $0x2d8] sm:$0xff]
      %v6600 = vld [vmem:[%s500 + $0x2e0] sm:$0xff]
      %v6601 = vld [vmem:[%s500 + $0x2e8] sm:$0xff]
      %v6602 = vld [vmem:[%s500 + $0x2f0] sm:$0xff]
      %v6603 = vld [vmem:[%s500 + $0x2f8] sm:$0xff]
      %v6700 = vunpack.c.l.b16 %v6508
      %v6701 = vunpack.c.h.b16 %v6508
      %v6702 = vunpack.c.l.b16 %v6509
      %v6703 = vunpack.c.h.b16 %v6509
      %v6704 = vunpack.c.l.b16 %v6510
      %v6705 = vunpack.c.h.b16 %v6510
      %v6706 = vunpack.c.l.b16 %v6511
      %v6707 = vunpack.c.h.b16 %v6511
      %v6708 = vunpack.c.l.b16 %v6512
      %v6709 = vunpack.c.h.b16 %v6512
      %v6710 = vunpack.c.l.b16 %v6513
      %v6711 = vunpack.c.h.b16 %v6513
      %v6712 = vunpack.c.l.b16 %v6514
      %v6713 = vunpack.c.h.b16 %v6514
      %v6714 = vunpack.c.l.b16 %v6515
      %v6715 = vunpack.c.h.b16 %v6515
      %v6716 = vunpack.c.l.b16 %v6516
      %v6717 = vunpack.c.h.b16 %v6516
      %v6718 = vunpack.c.l.b16 %v6517
      %v6719 = vunpack.c.h.b16 %v6517
      %v6720 = vunpack.c.l.b16 %v6518
      %v6721 = vunpack.c.h.b16 %v6518
      %v6722 = vunpack.c.l.b16 %v6519
      %v6723 = vunpack.c.h.b16 %v6519
      %v6724 = vunpack.c.l.b16 %v6520
      %v6725 = vunpack.c.h.b16 %v6520
      %v6726 = vunpack.c.l.b16 %v6521
      %v6727 = vunpack.c.h.b16 %v6521
      %v6728 = vunpack.c.l.b16 %v6522
      %v6729 = vunpack.c.h.b16 %v6522
      %v6730 = vunpack.c.l.b16 %v6523
      %v6731 = vunpack.c.h.b16 %v6523
      %v6732 = vunpack.c.l.b16 %v6524
      %v6733 = vunpack.c.h.b16 %v6524
      %v6734 = vunpack.c.l.b16 %v6525
      %v6735 = vunpack.c.h.b16 %v6525
      %v6736 = vunpack.c.l.b16 %v6526
      %v6737 = vunpack.c.h.b16 %v6526
      %v6738 = vunpack.c.l.b16 %v6527
      %v6739 = vunpack.c.h.b16 %v6527
      %v6740 = vunpack.c.l.b16 %v6528
      %v6741 = vunpack.c.h.b16 %v6528
      %v6742 = vunpack.c.l.b16 %v6529
      %v6743 = vunpack.c.h.b16 %v6529
      %v6744 = vunpack.c.l.b16 %v6530
      %v6745 = vunpack.c.h.b16 %v6530
      %v6746 = vunpack.c.l.b16 %v6531
      %v6747 = vunpack.c.h.b16 %v6531
      %v6748 = vunpack.c.l.b16 %v6532
      %v6749 = vunpack.c.h.b16 %v6532
      %v6750 = vunpack.c.l.b16 %v6533
      %v6751 = vunpack.c.h.b16 %v6533
      %v6752 = vunpack.c.l.b16 %v6534
      %v6753 = vunpack.c.h.b16 %v6534
      %v6754 = vunpack.c.l.b16 %v6535
      %v6755 = vunpack.c.h.b16 %v6535
      %v6756 = vunpack.c.l.b16 %v6536
      %v6757 = vunpack.c.h.b16 %v6536
      %v6758 = vunpack.c.l.b16 %v6537
      %v6759 = vunpack.c.h.b16 %v6537
      %v6760 = vunpack.c.l.b16 %v6538
      %v6761 = vunpack.c.h.b16 %v6538
      %v6762 = vunpack.c.l.b16 %v6539
      %v6763 = vunpack.c.h.b16 %v6539
      %v6764 = vunpack.c.l.b16 %v6540
      %v6765 = vunpack.c.h.b16 %v6540
      %v6766 = vunpack.c.l.b16 %v6541
      %v6767 = vunpack.c.h.b16 %v6541
      %v6768 = vunpack.c.l.b16 %v6542
      %v6769 = vunpack.c.h.b16 %v6542
      %v6770 = vunpack.c.l.b16 %v6543
      %v6771 = vunpack.c.h.b16 %v6543
      %v6772 = vunpack.c.l.b16 %v6544
      %v6773 = vunpack.c.h.b16 %v6544
      %v6774 = vunpack.c.l.b16 %v6545
      %v6775 = vunpack.c.h.b16 %v6545
      %v6776 = vunpack.c.l.b16 %v6546
      %v6777 = vunpack.c.h.b16 %v6546
      %v6778 = vunpack.c.l.b16 %v6547
      %v6779 = vunpack.c.h.b16 %v6547
      %v6780 = vunpack.c.l.b16 %v6548
      %v6781 = vunpack.c.h.b16 %v6548
      %v6782 = vunpack.c.l.b16 %v6549
      %v6783 = vunpack.c.h.b16 %v6549
      %v6784 = vunpack.c.l.b16 %v6550
      %v6785 = vunpack.c.h.b16 %v6550
      %v6786 = vunpack.c.l.b16 %v6551
      %v6787 = vunpack.c.h.b16 %v6551
      %v6788 = vunpack.c.l.b16 %v6552
      %v6789 = vunpack.c.h.b16 %v6552
      %v6790 = vunpack.c.l.b16 %v6553
      %v6791 = vunpack.c.h.b16 %v6553
      %v6792 = vunpack.c.l.b16 %v6554
      %v6793 = vunpack.c.h.b16 %v6554
      %v6794 = vunpack.c.l.b16 %v6555
      %v6795 = vunpack.c.h.b16 %v6555
      %v6796 = vunpack.c.l.b16 %v6556
      %v6797 = vunpack.c.h.b16 %v6556
      %v6798 = vunpack.c.l.b16 %v6557
      %v6799 = vunpack.c.h.b16 %v6557
      %v6800 = vunpack.c.l.b16 %v6558
      %v6801 = vunpack.c.h.b16 %v6558
      %v6802 = vunpack.c.l.b16 %v6559
      %v6803 = vunpack.c.h.b16 %v6559
      %v6804 = vunpack.c.l.b16 %v6560
      %v6805 = vunpack.c.h.b16 %v6560
      %v6806 = vunpack.c.l.b16 %v6561
      %v6807 = vunpack.c.h.b16 %v6561
      %v6808 = vunpack.c.l.b16 %v6562
      %v6809 = vunpack.c.h.b16 %v6562
      %v6810 = vunpack.c.l.b16 %v6563
      %v6811 = vunpack.c.h.b16 %v6563
      %v6812 = vunpack.c.l.b16 %v6564
      %v6813 = vunpack.c.h.b16 %v6564
      %v6814 = vunpack.c.l.b16 %v6565
      %v6815 = vunpack.c.h.b16 %v6565
      %v6816 = vunpack.c.l.b16 %v6566
      %v6817 = vunpack.c.h.b16 %v6566
      %v6818 = vunpack.c.l.b16 %v6567
      %v6819 = vunpack.c.h.b16 %v6567
      %v6820 = vunpack.c.l.b16 %v6568
      %v6821 = vunpack.c.h.b16 %v6568
      %v6822 = vunpack.c.l.b16 %v6569
      %v6823 = vunpack.c.h.b16 %v6569
      %v6824 = vunpack.c.l.b16 %v6570
      %v6825 = vunpack.c.h.b16 %v6570
      %v6826 = vunpack.c.l.b16 %v6571
      %v6827 = vunpack.c.h.b16 %v6571
      %v6828 = vunpack.c.l.b16 %v6572
      %v6829 = vunpack.c.h.b16 %v6572
      %v6830 = vunpack.c.l.b16 %v6573
      %v6831 = vunpack.c.h.b16 %v6573
      %v6832 = vunpack.c.l.b16 %v6574
      %v6833 = vunpack.c.h.b16 %v6574
      %v6834 = vunpack.c.l.b16 %v6575
      %v6835 = vunpack.c.h.b16 %v6575
      %v6836 = vunpack.c.l.b16 %v6576
      %v6837 = vunpack.c.h.b16 %v6576
      %v6838 = vunpack.c.l.b16 %v6577
      %v6839 = vunpack.c.h.b16 %v6577
      %v6840 = vunpack.c.l.b16 %v6578
      %v6841 = vunpack.c.h.b16 %v6578
      %v6842 = vunpack.c.l.b16 %v6579
      %v6843 = vunpack.c.h.b16 %v6579
      %v6844 = vunpack.c.l.b16 %v6580
      %v6845 = vunpack.c.h.b16 %v6580
      %v6846 = vunpack.c.l.b16 %v6581
      %v6847 = vunpack.c.h.b16 %v6581
      %v6848 = vunpack.c.l.b16 %v6582
      %v6849 = vunpack.c.h.b16 %v6582
      %v6850 = vunpack.c.l.b16 %v6583
      %v6851 = vunpack.c.h.b16 %v6583
      %v6852 = vunpack.c.l.b16 %v6584
      %v6853 = vunpack.c.h.b16 %v6584
      %v6854 = vunpack.c.l.b16 %v6585
      %v6855 = vunpack.c.h.b16 %v6585
      %v6856 = vunpack.c.l.b16 %v6586
      %v6857 = vunpack.c.h.b16 %v6586
      %v6858 = vunpack.c.l.b16 %v6587
      %v6859 = vunpack.c.h.b16 %v6587
      %v6860 = vunpack.c.l.b16 %v6588
      %v6861 = vunpack.c.h.b16 %v6588
      %v6862 = vunpack.c.l.b16 %v6589
      %v6863 = vunpack.c.h.b16 %v6589
      %v6864 = vunpack.c.l.b16 %v6590
      %v6865 = vunpack.c.h.b16 %v6590
      %v6866 = vunpack.c.l.b16 %v6591
      %v6867 = vunpack.c.h.b16 %v6591
      %v6868 = vunpack.c.l.b16 %v6592
      %v6869 = vunpack.c.h.b16 %v6592
      %v6870 = vunpack.c.l.b16 %v6593
      %v6871 = vunpack.c.h.b16 %v6593
      %v6872 = vunpack.c.l.b16 %v6594
      %v6873 = vunpack.c.h.b16 %v6594
      %v6874 = vunpack.c.l.b16 %v6595
      %v6875 = vunpack.c.h.b16 %v6595
      %v6876 = vunpack.c.l.b16 %v6596
      %v6877 = vunpack.c.h.b16 %v6596
      %v6878 = vunpack.c.l.b16 %v6597
      %v6879 = vunpack.c.h.b16 %v6597
      %v6880 = vunpack.c.l.b16 %v6598
      %v6881 = vunpack.c.h.b16 %v6598
      %v6882 = vunpack.c.l.b16 %v6599
      %v6883 = vunpack.c.h.b16 %v6599
      %v6884 = vunpack.c.l.b16 %v6600
      %v6885 = vunpack.c.h.b16 %v6600
      %v6886 = vunpack.c.l.b16 %v6601
      %v6887 = vunpack.c.h.b16 %v6601
      %v6888 = vunpack.c.l.b16 %v6602
      %v6889 = vunpack.c.h.b16 %v6602
      %v6890 = vunpack.c.l.b16 %v6603
      %v6891 = vunpack.c.h.b16 %v6603
      %v6892 = vpack.c.b16 %v6702, %v6700
      %v6893 = vpack.c.b16 %v6703, %v6701
      %v6894 = vpack.c.b16 %v6706, %v6704
      %v6895 = vpack.c.b16 %v6707, %v6705
      %v6896 = vpack.c.b16 %v6710, %v6708
      %v6897 = vpack.c.b16 %v6711, %v6709
      %v6898 = vpack.c.b16 %v6714, %v6712
      %v6899 = vpack.c.b16 %v6715, %v6713
      %v6900 = vpack.c.b16 %v6718, %v6716
      %v6901 = vpack.c.b16 %v6719, %v6717
      %v6902 = vpack.c.b16 %v6722, %v6720
      %v6903 = vpack.c.b16 %v6723, %v6721
      %v6904 = vpack.c.b16 %v6726, %v6724
      %v6905 = vpack.c.b16 %v6727, %v6725
      %v6906 = vpack.c.b16 %v6730, %v6728
      %v6907 = vpack.c.b16 %v6731, %v6729
      %v6908 = vpack.c.b16 %v6734, %v6732
      %v6909 = vpack.c.b16 %v6735, %v6733
      %v6910 = vpack.c.b16 %v6738, %v6736
      %v6911 = vpack.c.b16 %v6739, %v6737
      %v6912 = vpack.c.b16 %v6742, %v6740
      %v6913 = vpack.c.b16 %v6743, %v6741
      %v6914 = vpack.c.b16 %v6746, %v6744
      %v6915 = vpack.c.b16 %v6747, %v6745
      %v6916 = vpack.c.b16 %v6750, %v6748
      %v6917 = vpack.c.b16 %v6751, %v6749
      %v6918 = vpack.c.b16 %v6754, %v6752
      %v6919 = vpack.c.b16 %v6755, %v6753
      %v6920 = vpack.c.b16 %v6758, %v6756
      %v6921 = vpack.c.b16 %v6759, %v6757
      %v6922 = vpack.c.b16 %v6762, %v6760
      %v6923 = vpack.c.b16 %v6763, %v6761
      %v6924 = vpack.c.b16 %v6766, %v6764
      %v6925 = vpack.c.b16 %v6767, %v6765
      %v6926 = vpack.c.b16 %v6770, %v6768
      %v6927 = vpack.c.b16 %v6771, %v6769
      %v6928 = vpack.c.b16 %v6774, %v6772
      %v6929 = vpack.c.b16 %v6775, %v6773
      %v6930 = vpack.c.b16 %v6778, %v6776
      %v6931 = vpack.c.b16 %v6779, %v6777
      %v6932 = vpack.c.b16 %v6782, %v6780
      %v6933 = vpack.c.b16 %v6783, %v6781
      %v6934 = vpack.c.b16 %v6786, %v6784
      %v6935 = vpack.c.b16 %v6787, %v6785
      %v6936 = vpack.c.b16 %v6790, %v6788
      %v6937 = vpack.c.b16 %v6791, %v6789
      %v6938 = vpack.c.b16 %v6794, %v6792
      %v6939 = vpack.c.b16 %v6795, %v6793
      %v6940 = vpack.c.b16 %v6798, %v6796
      %v6941 = vpack.c.b16 %v6799, %v6797
      %v6942 = vpack.c.b16 %v6802, %v6800
      %v6943 = vpack.c.b16 %v6803, %v6801
      %v6944 = vpack.c.b16 %v6806, %v6804
      %v6945 = vpack.c.b16 %v6807, %v6805
      %v6946 = vpack.c.b16 %v6810, %v6808
      %v6947 = vpack.c.b16 %v6811, %v6809
      %v6948 = vpack.c.b16 %v6814, %v6812
      %v6949 = vpack.c.b16 %v6815, %v6813
      %v6950 = vpack.c.b16 %v6818, %v6816
      %v6951 = vpack.c.b16 %v6819, %v6817
      %v6952 = vpack.c.b16 %v6822, %v6820
      %v6953 = vpack.c.b16 %v6823, %v6821
      %v6954 = vpack.c.b16 %v6826, %v6824
      %v6955 = vpack.c.b16 %v6827, %v6825
      %v6956 = vpack.c.b16 %v6830, %v6828
      %v6957 = vpack.c.b16 %v6831, %v6829
      %v6958 = vpack.c.b16 %v6834, %v6832
      %v6959 = vpack.c.b16 %v6835, %v6833
      %v6960 = vpack.c.b16 %v6838, %v6836
      %v6961 = vpack.c.b16 %v6839, %v6837
      %v6962 = vpack.c.b16 %v6842, %v6840
      %v6963 = vpack.c.b16 %v6843, %v6841
      %v6964 = vpack.c.b16 %v6846, %v6844
      %v6965 = vpack.c.b16 %v6847, %v6845
      %v6966 = vpack.c.b16 %v6850, %v6848
      %v6967 = vpack.c.b16 %v6851, %v6849
      %v6968 = vpack.c.b16 %v6854, %v6852
      %v6969 = vpack.c.b16 %v6855, %v6853
      %v6970 = vpack.c.b16 %v6858, %v6856
      %v6971 = vpack.c.b16 %v6859, %v6857
      %v6972 = vpack.c.b16 %v6862, %v6860
      %v6973 = vpack.c.b16 %v6863, %v6861
      %v6974 = vpack.c.b16 %v6866, %v6864
      %v6975 = vpack.c.b16 %v6867, %v6865
      %v6976 = vpack.c.b16 %v6870, %v6868
      %v6977 = vpack.c.b16 %v6871, %v6869
      %v6978 = vpack.c.b16 %v6874, %v6872
      %v6979 = vpack.c.b16 %v6875, %v6873
      %v6980 = vpack.c.b16 %v6878, %v6876
      %v6981 = vpack.c.b16 %v6879, %v6877
      %v6982 = vpack.c.b16 %v6882, %v6880
      %v6983 = vpack.c.b16 %v6883, %v6881
      %v6984 = vpack.c.b16 %v6886, %v6884
      %v6985 = vpack.c.b16 %v6887, %v6885
      %v6986 = vpack.c.b16 %v6890, %v6888
      %v6987 = vpack.c.b16 %v6891, %v6889
      %7084 = vmatprep.subr.bf16.mxu0 %v6893
      %7085 = vmatpush1.bf16.msra.mxu0 %v6892
      %7086 = vmatprep.subr.bf16.mxu0 %v6895
      %7087 = vmatpush1.bf16.msra.mxu0 %v6894
      %7088 = vmatprep.subr.bf16.mxu0 %v6897
      %7089 = vmatpush1.bf16.msra.mxu0 %v6896
      %7090 = vmatprep.subr.bf16.mxu0 %v6899
      %7091 = vmatpush1.bf16.msra.mxu0 %v6898
      %7092 = vmatprep.subr.bf16.mxu0 %v6901
      %7093 = vmatpush1.bf16.msra.mxu0 %v6900
      %7094 = vmatprep.subr.bf16.mxu0 %v6903
      %7095 = vmatpush1.bf16.msra.mxu0 %v6902
      %7096 = vmatprep.subr.bf16.mxu0 %v6905
      %7097 = vmatpush1.bf16.msra.mxu0 %v6904
      %7098 = vmatprep.subr.bf16.mxu0 %v6907
      %7099 = vmatpush1.bf16.msra.mxu0 %v6906
      %7100 = vmatprep.subr.bf16.mxu0 %v6909
      %7101 = vmatpush1.bf16.msra.mxu0 %v6908
      %7102 = vmatprep.subr.bf16.mxu0 %v6911
      %7103 = vmatpush1.bf16.msra.mxu0 %v6910
      %7104 = vmatprep.subr.bf16.mxu0 %v6913
      %7105 = vmatpush1.bf16.msra.mxu0 %v6912
      %7106 = vmatprep.subr.bf16.mxu0 %v6915
      %7107 = vmatpush1.bf16.msra.mxu0 %v6914
      %7108 = vmatprep.subr.bf16.mxu0 %v6917
      %7109 = vmatpush1.bf16.msra.mxu0 %v6916
      %7110 = vmatprep.subr.bf16.mxu0 %v6919
      %7111 = vmatpush1.bf16.msra.mxu0 %v6918
      %7112 = vmatprep.subr.bf16.mxu0 %v6921
      %7113 = vmatpush1.bf16.msra.mxu0 %v6920
      %7114 = vmatprep.subr.bf16.mxu0 %v6923
      %7115 = vmatpush1.bf16.msra.mxu0 %v6922
      %7116 = vmatprep.mubr.bf16.mxu0 %v6461
      %7117 = vmatmul.mubr.bf16.gmra.mrb[0].mxu0 %v6460
      %v7118 = vpop.f32.mrb[0].mxu0
      %v7119 = vadd.f32 0.0, %v7118
      %v7120 = vpop.f32.mrb[0].mxu0
      %v7121 = vadd.f32 0.0, %v7120
      %v7122 = vpop.f32.mrb[0].mxu0
      %v7123 = vadd.f32 0.0, %v7122
      %v7124 = vpop.f32.mrb[0].mxu0
      %v7125 = vadd.f32 0.0, %v7124
      %7126 = vmatprep.mubr.bf16.mxu0 %v6467
      %7127 = vmatmul.mubr.bf16.gmra.mrb[0].mxu0 %v6466
      %v7128 = vpop.f32.mrb[0].mxu0
      %v7129 = vadd.f32 0.0, %v7128
      %v7130 = vpop.f32.mrb[0].mxu0
      %v7131 = vadd.f32 0.0, %v7130
      %v7132 = vpop.f32.mrb[0].mxu0
      %v7133 = vadd.f32 0.0, %v7132
      %v7134 = vpop.f32.mrb[0].mxu0
      %v7135 = vadd.f32 0.0, %v7134
      %7136 = vmatprep.mubr.bf16.mxu0 %v6473
      %7137 = vmatmul.mubr.bf16.gmra.mrb[0].mxu0 %v6472
      %v7138 = vpop.f32.mrb[0].mxu0
      %v7139 = vadd.f32 0.0, %v7138
      %v7140 = vpop.f32.mrb[0].mxu0
      %v7141 = vadd.f32 0.0, %v7140
      %v7142 = vpop.f32.mrb[0].mxu0
      %v7143 = vadd.f32 0.0, %v7142
      %v7144 = vpop.f32.mrb[0].mxu0
      %v7145 = vadd.f32 0.0, %v7144
      %7146 = vmatprep.mubr.bf16.mxu0 %v6479
      %7147 = vmatmul.mubr.bf16.gmra.mrb[0].mxu0 %v6478
      %v7148 = vpop.f32.mrb[0].mxu0
      %v7149 = vadd.f32 0.0, %v7148
      %v7150 = vpop.f32.mrb[0].mxu0
      %v7151 = vadd.f32 0.0, %v7150
      %v7152 = vpop.f32.mrb[0].mxu0
      %v7153 = vadd.f32 0.0, %v7152
      %v7154 = vpop.f32.mrb[0].mxu0
      %v7155 = vadd.f32 0.0, %v7154
      %7156 = vmatprep.mubr.bf16.mxu0 %v6485
      %7157 = vmatmul.mubr.bf16.gmra.mrb[0].mxu0 %v6484
      %v7158 = vpop.f32.mrb[0].mxu0
      %v7159 = vadd.f32 0.0, %v7158
      %v7160 = vpop.f32.mrb[0].mxu0
      %v7161 = vadd.f32 0.0, %v7160
      %v7162 = vpop.f32.mrb[0].mxu0
      %v7163 = vadd.f32 0.0, %v7162
      %v7164 = vpop.f32.mrb[0].mxu0
      %v7165 = vadd.f32 0.0, %v7164
      %7166 = vmatprep.mubr.bf16.mxu0 %v6491
      %7167 = vmatmul.mubr.bf16.gmra.mrb[0].mxu0 %v6490
      %v7168 = vpop.f32.mrb[0].mxu0
      %v7169 = vadd.f32 0.0, %v7168
      %v7170 = vpop.f32.mrb[0].mxu0
      %v7171 = vadd.f32 0.0, %v7170
      %v7172 = vpop.f32.mrb[0].mxu0
      %v7173 = vadd.f32 0.0, %v7172
      %v7174 = vpop.f32.mrb[0].mxu0
      %v7175 = vadd.f32 0.0, %v7174
      %7176 = vmatprep.mubr.bf16.mxu0 %v6497
      %7177 = vmatmul.mubr.bf16.gmra.mrb[0].mxu0 %v6496
      %v7178 = vpop.f32.mrb[0].mxu0
      %v7179 = vadd.f32 0.0, %v7178
      %v7180 = vpop.f32.mrb[0].mxu0
      %v7181 = vadd.f32 0.0, %v7180
      %v7182 = vpop.f32.mrb[0].mxu0
      %v7183 = vadd.f32 0.0, %v7182
      %v7184 = vpop.f32.mrb[0].mxu0
      %v7185 = vadd.f32 0.0, %v7184
      %7186 = vmatprep.mubr.bf16.mxu0 %v6503
      %7187 = vmatmul.mubr.bf16.gmra.mrb[0].mxu0 %v6502
      %v7188 = vpop.f32.mrb[0].mxu0
      %v7189 = vadd.f32 0.0, %v7188
      %v7190 = vpop.f32.mrb[0].mxu0
      %v7191 = vadd.f32 0.0, %v7190
      %v7192 = vpop.f32.mrb[0].mxu0
      %v7193 = vadd.f32 0.0, %v7192
      %v7194 = vpop.f32.mrb[0].mxu0
      %v7195 = vadd.f32 0.0, %v7194
      %7196 = vdwg.mxu0
      %7197 = vmatprep.subr.bf16.mxu0 %v6925
      %7198 = vmatpush1.bf16.msra.mxu0 %v6924
      %7199 = vmatprep.subr.bf16.mxu0 %v6927
      %7200 = vmatpush1.bf16.msra.mxu0 %v6926
      %7201 = vmatprep.subr.bf16.mxu0 %v6929
      %7202 = vmatpush1.bf16.msra.mxu0 %v6928
      %7203 = vmatprep.subr.bf16.mxu0 %v6931
      %7204 = vmatpush1.bf16.msra.mxu0 %v6930
      %7205 = vmatprep.subr.bf16.mxu0 %v6933
      %7206 = vmatpush1.bf16.msra.mxu0 %v6932
      %7207 = vmatprep.subr.bf16.mxu0 %v6935
      %7208 = vmatpush1.bf16.msra.mxu0 %v6934
      %7209 = vmatprep.subr.bf16.mxu0 %v6937
      %7210 = vmatpush1.bf16.msra.mxu0 %v6936
      %7211 = vmatprep.subr.bf16.mxu0 %v6939
      %7212 = vmatpush1.bf16.msra.mxu0 %v6938
      %7213 = vmatprep.subr.bf16.mxu0 %v6941
      %7214 = vmatpush1.bf16.msra.mxu0 %v6940
      %7215 = vmatprep.subr.bf16.mxu0 %v6943
      %7216 = vmatpush1.bf16.msra.mxu0 %v6942
      %7217 = vmatprep.subr.bf16.mxu0 %v6945
      %7218 = vmatpush1.bf16.msra.mxu0 %v6944
      %7219 = vmatprep.subr.bf16.mxu0 %v6947
      %7220 = vmatpush1.bf16.msra.mxu0 %v6946
      %7221 = vmatprep.subr.bf16.mxu0 %v6949
      %7222 = vmatpush1.bf16.msra.mxu0 %v6948
      %7223 = vmatprep.subr.bf16.mxu0 %v6951
      %7224 = vmatpush1.bf16.msra.mxu0 %v6950
      %7225 = vmatprep.subr.bf16.mxu0 %v6953
      %7226 = vmatpush1.bf16.msra.mxu0 %v6952
      %7227 = vmatprep.subr.bf16.mxu0 %v6955
      %7228 = vmatpush1.bf16.msra.mxu0 %v6954
      %7229 = vmatprep.mubr.bf16.mxu0 %v6463
      %7230 = vmatmul.mubr.bf16.gmra.mrb[0].mxu0 %v6462
      %v7231 = vpop.f32.mrb[0].mxu0
      %v7232 = vadd.f32 %v7119, %v7231
      %v7233 = vpop.f32.mrb[0].mxu0
      %v7234 = vadd.f32 %v7121, %v7233
      %v7235 = vpop.f32.mrb[0].mxu0
      %v7236 = vadd.f32 %v7123, %v7235
      %v7237 = vpop.f32.mrb[0].mxu0
      %v7238 = vadd.f32 %v7125, %v7237
      %7239 = vmatprep.mubr.bf16.mxu0 %v6469
      %7240 = vmatmul.mubr.bf16.gmra.mrb[0].mxu0 %v6468
      %v7241 = vpop.f32.mrb[0].mxu0
      %v7242 = vadd.f32 %v7129, %v7241
      %v7243 = vpop.f32.mrb[0].mxu0
      %v7244 = vadd.f32 %v7131, %v7243
      %v7245 = vpop.f32.mrb[0].mxu0
      %v7246 = vadd.f32 %v7133, %v7245
      %v7247 = vpop.f32.mrb[0].mxu0
      %v7248 = vadd.f32 %v7135, %v7247
      %7249 = vmatprep.mubr.bf16.mxu0 %v6475
      %7250 = vmatmul.mubr.bf16.gmra.mrb[0].mxu0 %v6474
      %v7251 = vpop.f32.mrb[0].mxu0
      %v7252 = vadd.f32 %v7139, %v7251
      %v7253 = vpop.f32.mrb[0].mxu0
      %v7254 = vadd.f32 %v7141, %v7253
      %v7255 = vpop.f32.mrb[0].mxu0
      %v7256 = vadd.f32 %v7143, %v7255
      %v7257 = vpop.f32.mrb[0].mxu0
      %v7258 = vadd.f32 %v7145, %v7257
      %7259 = vmatprep.mubr.bf16.mxu0 %v6481
      %7260 = vmatmul.mubr.bf16.gmra.mrb[0].mxu0 %v6480
      %v7261 = vpop.f32.mrb[0].mxu0
      %v7262 = vadd.f32 %v7149, %v7261
      %v7263 = vpop.f32.mrb[0].mxu0
      %v7264 = vadd.f32 %v7151, %v7263
      %v7265 = vpop.f32.mrb[0].mxu0
      %v7266 = vadd.f32 %v7153, %v7265
      %v7267 = vpop.f32.mrb[0].mxu0
      %v7268 = vadd.f32 %v7155, %v7267
      %7269 = vmatprep.mubr.bf16.mxu0 %v6487
      %7270 = vmatmul.mubr.bf16.gmra.mrb[0].mxu0 %v6486
      %v7271 = vpop.f32.mrb[0].mxu0
      %v7272 = vadd.f32 %v7159, %v7271
      %v7273 = vpop.f32.mrb[0].mxu0
      %v7274 = vadd.f32 %v7161, %v7273
      %v7275 = vpop.f32.mrb[0].mxu0
      %v7276 = vadd.f32 %v7163, %v7275
      %v7277 = vpop.f32.mrb[0].mxu0
      %v7278 = vadd.f32 %v7165, %v7277
      %7279 = vmatprep.mubr.bf16.mxu0 %v6493
      %7280 = vmatmul.mubr.bf16.gmra.mrb[0].mxu0 %v6492
      %v7281 = vpop.f32.mrb[0].mxu0
      %v7282 = vadd.f32 %v7169, %v7281
      %v7283 = vpop.f32.mrb[0].mxu0
      %v7284 = vadd.f32 %v7171, %v7283
      %v7285 = vpop.f32.mrb[0].mxu0
      %v7286 = vadd.f32 %v7173, %v7285
      %v7287 = vpop.f32.mrb[0].mxu0
      %v7288 = vadd.f32 %v7175, %v7287
      %7289 = vmatprep.mubr.bf16.mxu0 %v6499
      %7290 = vmatmul.mubr.bf16.gmra.mrb[0].mxu0 %v6498
      %v7291 = vpop.f32.mrb[0].mxu0
      %v7292 = vadd.f32 %v7179, %v7291
      %v7293 = vpop.f32.mrb[0].mxu0
      %v7294 = vadd.f32 %v7181, %v7293
      %v7295 = vpop.f32.mrb[0].mxu0
      %v7296 = vadd.f32 %v7183, %v7295
      %v7297 = vpop.f32.mrb[0].mxu0
      %v7298 = vadd.f32 %v7185, %v7297
      %7299 = vmatprep.mubr.bf16.mxu0 %v6505
      %7300 = vmatmul.mubr.bf16.gmra.mrb[0].mxu0 %v6504
      %v7301 = vpop.f32.mrb[0].mxu0
      %v7302 = vadd.f32 %v7189, %v7301
      %v7303 = vpop.f32.mrb[0].mxu0
      %v7304 = vadd.f32 %v7191, %v7303
      %v7305 = vpop.f32.mrb[0].mxu0
      %v7306 = vadd.f32 %v7193, %v7305
      %v7307 = vpop.f32.mrb[0].mxu0
      %v7308 = vadd.f32 %v7195, %v7307
      %7309 = vdwg.mxu0
      %7310 = vmatprep.subr.bf16.mxu0 %v6957
      %7311 = vmatpush1.bf16.msra.mxu0 %v6956
      %7312 = vmatprep.subr.bf16.mxu0 %v6959
      %7313 = vmatpush1.bf16.msra.mxu0 %v6958
      %7314 = vmatprep.subr.bf16.mxu0 %v6961
      %7315 = vmatpush1.bf16.msra.mxu0 %v6960
      %7316 = vmatprep.subr.bf16.mxu0 %v6963
      %7317 = vmatpush1.bf16.msra.mxu0 %v6962
      %7318 = vmatprep.subr.bf16.mxu0 %v6965
      %7319 = vmatpush1.bf16.msra.mxu0 %v6964
      %7320 = vmatprep.subr.bf16.mxu0 %v6967
      %7321 = vmatpush1.bf16.msra.mxu0 %v6966
      %7322 = vmatprep.subr.bf16.mxu0 %v6969
      %7323 = vmatpush1.bf16.msra.mxu0 %v6968
      %7324 = vmatprep.subr.bf16.mxu0 %v6971
      %7325 = vmatpush1.bf16.msra.mxu0 %v6970
      %7326 = vmatprep.subr.bf16.mxu0 %v6973
      %7327 = vmatpush1.bf16.msra.mxu0 %v6972
      %7328 = vmatprep.subr.bf16.mxu0 %v6975
      %7329 = vmatpush1.bf16.msra.mxu0 %v6974
      %7330 = vmatprep.subr.bf16.mxu0 %v6977
      %7331 = vmatpush1.bf16.msra.mxu0 %v6976
      %7332 = vmatprep.subr.bf16.mxu0 %v6979
      %7333 = vmatpush1.bf16.msra.mxu0 %v6978
      %7334 = vmatprep.subr.bf16.mxu0 %v6981
      %7335 = vmatpush1.bf16.msra.mxu0 %v6980
      %7336 = vmatprep.subr.bf16.mxu0 %v6983
      %7337 = vmatpush1.bf16.msra.mxu0 %v6982
      %7338 = vmatprep.subr.bf16.mxu0 %v6985
      %7339 = vmatpush1.bf16.msra.mxu0 %v6984
      %7340 = vmatprep.subr.bf16.mxu0 %v6987
      %7341 = vmatpush1.bf16.msra.mxu0 %v6986
      %7342 = vmatprep.mubr.bf16.mxu0 %v6465
      %7343 = vmatmul.mubr.bf16.gmra.mrb[0].mxu0 %v6464
      %v7344 = vpop.f32.mrb[0].mxu0
      %v7345 = vadd.f32 %v7232, %v7344
      %v7346 = vpop.f32.mrb[0].mxu0
      %v7347 = vadd.f32 %v7234, %v7346
      %v7348 = vpop.f32.mrb[0].mxu0
      %v7349 = vadd.f32 %v7236, %v7348
      %v7350 = vpop.f32.mrb[0].mxu0
      %v7351 = vadd.f32 %v7238, %v7350
      %7352 = vmatprep.mubr.bf16.mxu0 %v6471
      %7353 = vmatmul.mubr.bf16.gmra.mrb[0].mxu0 %v6470
      %v7354 = vpop.f32.mrb[0].mxu0
      %v7355 = vadd.f32 %v7242, %v7354
      %v7356 = vpop.f32.mrb[0].mxu0
      %v7357 = vadd.f32 %v7244, %v7356
      %v7358 = vpop.f32.mrb[0].mxu0
      %v7359 = vadd.f32 %v7246, %v7358
      %v7360 = vpop.f32.mrb[0].mxu0
      %v7361 = vadd.f32 %v7248, %v7360
      %7362 = vmatprep.mubr.bf16.mxu0 %v6477
      %7363 = vmatmul.mubr.bf16.gmra.mrb[0].mxu0 %v6476
      %v7364 = vpop.f32.mrb[0].mxu0
      %v7365 = vadd.f32 %v7252, %v7364
      %v7366 = vpop.f32.mrb[0].mxu0
      %v7367 = vadd.f32 %v7254, %v7366
      %v7368 = vpop.f32.mrb[0].mxu0
      %v7369 = vadd.f32 %v7256, %v7368
      %v7370 = vpop.f32.mrb[0].mxu0
      %v7371 = vadd.f32 %v7258, %v7370
      %7372 = vmatprep.mubr.bf16.mxu0 %v6483
      %7373 = vmatmul.mubr.bf16.gmra.mrb[0].mxu0 %v6482
      %v7374 = vpop.f32.mrb[0].mxu0
      %v7375 = vadd.f32 %v7262, %v7374
      %v7376 = vpop.f32.mrb[0].mxu0
      %v7377 = vadd.f32 %v7264, %v7376
      %v7378 = vpop.f32.mrb[0].mxu0
      %v7379 = vadd.f32 %v7266, %v7378
      %v7380 = vpop.f32.mrb[0].mxu0
      %v7381 = vadd.f32 %v7268, %v7380
      %7382 = vmatprep.mubr.bf16.mxu0 %v6489
      %7383 = vmatmul.mubr.bf16.gmra.mrb[0].mxu0 %v6488
      %v7384 = vpop.f32.mrb[0].mxu0
      %v7385 = vadd.f32 %v7272, %v7384
      %v7386 = vpop.f32.mrb[0].mxu0
      %v7387 = vadd.f32 %v7274, %v7386
      %v7388 = vpop.f32.mrb[0].mxu0
      %v7389 = vadd.f32 %v7276, %v7388
      %v7390 = vpop.f32.mrb[0].mxu0
      %v7391 = vadd.f32 %v7278, %v7390
      %7392 = vmatprep.mubr.bf16.mxu0 %v6495
      %7393 = vmatmul.mubr.bf16.gmra.mrb[0].mxu0 %v6494
      %v7394 = vpop.f32.mrb[0].mxu0
      %v7395 = vadd.f32 %v7282, %v7394
      %v7396 = vpop.f32.mrb[0].mxu0
      %v7397 = vadd.f32 %v7284, %v7396
      %v7398 = vpop.f32.mrb[0].mxu0
      %v7399 = vadd.f32 %v7286, %v7398
      %v7400 = vpop.f32.mrb[0].mxu0
      %v7401 = vadd.f32 %v7288, %v7400
      %7402 = vmatprep.mubr.bf16.mxu0 %v6501
      %7403 = vmatmul.mubr.bf16.gmra.mrb[0].mxu0 %v6500
      %v7404 = vpop.f32.mrb[0].mxu0
      %v7405 = vadd.f32 %v7292, %v7404
      %v7406 = vpop.f32.mrb[0].mxu0
      %v7407 = vadd.f32 %v7294, %v7406
      %v7408 = vpop.f32.mrb[0].mxu0
      %v7409 = vadd.f32 %v7296, %v7408
      %v7410 = vpop.f32.mrb[0].mxu0
      %v7411 = vadd.f32 %v7298, %v7410
      %7412 = vmatprep.mubr.bf16.mxu0 %v6507
      %7413 = vmatmul.mubr.bf16.gmra.mrb[0].mxu0 %v6506
      %v7414 = vpop.f32.mrb[0].mxu0
      %v7415 = vadd.f32 %v7302, %v7414
      %v7416 = vpop.f32.mrb[0].mxu0
      %v7417 = vadd.f32 %v7304, %v7416
      %v7418 = vpop.f32.mrb[0].mxu0
      %v7419 = vadd.f32 %v7306, %v7418
      %v7420 = vpop.f32.mrb[0].mxu0
      %v7421 = vadd.f32 %v7308, %v7420
      %7422 = vdwg.mxu0
      %v7423 = vadd.f32 %v3610, %v7345
      %v7424 = vadd.f32 %v3611, %v7347
      %v7425 = vadd.f32 %v3612, %v7349
      %v7426 = vadd.f32 %v3613, %v7351
      %v7427 = vadd.f32 %v3614, %v7355
      %v7428 = vadd.f32 %v3615, %v7357
      %v7429 = vadd.f32 %v3616, %v7359
      %v7430 = vadd.f32 %v3617, %v7361
      %v7431 = vadd.f32 %v3618, %v7365
      %v7432 = vadd.f32 %v3619, %v7367
      %v7433 = vadd.f32 %v3620, %v7369
      %v7434 = vadd.f32 %v3621, %v7371
      %v7435 = vadd.f32 %v3622, %v7375
      %v7436 = vadd.f32 %v3623, %v7377
      %v7437 = vadd.f32 %v3624, %v7379
      %v7438 = vadd.f32 %v3625, %v7381
      %v7439 = vadd.f32 %v3626, %v7385
      %v7440 = vadd.f32 %v3627, %v7387
      %v7441 = vadd.f32 %v3628, %v7389
      %v7442 = vadd.f32 %v3629, %v7391
      %v7443 = vadd.f32 %v3630, %v7395
      %v7444 = vadd.f32 %v3631, %v7397
      %v7445 = vadd.f32 %v3632, %v7399
      %v7446 = vadd.f32 %v3633, %v7401
      %v7447 = vadd.f32 %v3634, %v7405
      %v7448 = vadd.f32 %v3635, %v7407
      %v7449 = vadd.f32 %v3636, %v7409
      %v7450 = vadd.f32 %v3637, %v7411
      %v7451 = vadd.f32 %v3638, %v7415
      %v7452 = vadd.f32 %v3639, %v7417
      %v7453 = vadd.f32 %v3640, %v7419
      %v7454 = vadd.f32 %v3641, %v7421
      %7455 = vst [vmem:[%s505] sm:$0xff] %v7423
      %7456 = vst [vmem:[%s505 + $0x8] sm:$0xff] %v7424
      %7457 = vst [vmem:[%s505 + $0x10] sm:$0xff] %v7425
      %7458 = vst [vmem:[%s505 + $0x18] sm:$0xff] %v7426
      %7459 = vst [vmem:[%s505 + $0x20] sm:$0xff] %v7427
      %7460 = vst [vmem:[%s505 + $0x28] sm:$0xff] %v7428
      %7461 = vst [vmem:[%s505 + $0x30] sm:$0xff] %v7429
      %7462 = vst [vmem:[%s505 + $0x38] sm:$0xff] %v7430
      %7463 = vst [vmem:[%s505 + $0x40] sm:$0xff] %v7431
      %7464 = vst [vmem:[%s505 + $0x48] sm:$0xff] %v7432
      %7465 = vst [vmem:[%s505 + $0x50] sm:$0xff] %v7433
      %7466 = vst [vmem:[%s505 + $0x58] sm:$0xff] %v7434
      %7467 = vst [vmem:[%s505 + $0x60] sm:$0xff] %v7435
      %7468 = vst [vmem:[%s505 + $0x68] sm:$0xff] %v7436
      %7469 = vst [vmem:[%s505 + $0x70] sm:$0xff] %v7437
      %7470 = vst [vmem:[%s505 + $0x78] sm:$0xff] %v7438
      %7471 = vst [vmem:[%s505 + $0x80] sm:$0xff] %v7439
      %7472 = vst [vmem:[%s505 + $0x88] sm:$0xff] %v7440
      %7473 = vst [vmem:[%s505 + $0x90] sm:$0xff] %v7441
      %7474 = vst [vmem:[%s505 + $0x98] sm:$0xff] %v7442
      %7475 = vst [vmem:[%s505 + $0xa0] sm:$0xff] %v7443
      %7476 = vst [vmem:[%s505 + $0xa8] sm:$0xff] %v7444
      %7477 = vst [vmem:[%s505 + $0xb0] sm:$0xff] %v7445
      %7478 = vst [vmem:[%s505 + $0xb8] sm:$0xff] %v7446
      %7479 = vst [vmem:[%s505 + $0xc0] sm:$0xff] %v7447
      %7480 = vst [vmem:[%s505 + $0xc8] sm:$0xff] %v7448
      %7481 = vst [vmem:[%s505 + $0xd0] sm:$0xff] %v7449
      %7482 = vst [vmem:[%s505 + $0xd8] sm:$0xff] %v7450
      %7483 = vst [vmem:[%s505 + $0xe0] sm:$0xff] %v7451
      %7484 = vst [vmem:[%s505 + $0xe8] sm:$0xff] %v7452
      %7485 = vst [vmem:[%s505 + $0xf0] sm:$0xff] %v7453
      %7486 = vst [vmem:[%s505 + $0xf8] sm:$0xff] %v7454
      %p7487 = scmp.lt.s32.totalorder %s25, 1
      %s7488 = scalar_select %p7487, %s25, 1
      %s7489 = smul.addr %s7488, 32
      %s7490 = smul.addr %s7489, 8
      %s7491 = scalar_lea.vmem %s10, %s7490
      // Predicated region
      $region65: #{_lambda_.3} parent=59 // pred_check
        %p7492 = pneg %p301
      $region66: #{_lambda_.3} parent=59 // pred_check_branch
        %7494 = sbr.rel (%p7492) target = $region68
      $region67: #{_lambda_.3} parent=59 // pred_region
        _
      $region68: #{_lambda_.3} parent=59 // pred_fallthru
        _
    $region60: #{_lambda_.3} parent=5 // pred_fallthru
      _
    %p7495 = scmp.le.s32.totalorder 2, %s16
    // Predicated region
    $region69: #{_lambda_.3} parent=5 // pred_check
      %p7496 = pneg %p7495
    $region70: #{_lambda_.3} parent=5 // pred_check_branch
      %7498 = sbr.rel (%p7496) target = $region72
    $region71: #{_lambda_.3} parent=5 // pred_region
      %s7499 = ssub.s32 %s16, 2
      // Predicated region
      $region73: #{_lambda_.3} parent=71 // pred_check
        %p7500 = pneg %p307
      $region74: #{_lambda_.3} parent=71 // pred_check_branch
        %7502 = sbr.rel (%p7500) target = $region76
      $region75: #{_lambda_.3} parent=71 // pred_region
        %p7503 = scmp.lt.s32.totalorder %s27, 1
        %s7504 = scalar_select %p7503, %s27, 1
        %s7505 = smul.addr %s7504, 32
        %s7506 = smul.addr %s7505, 8
        %s7507 = scalar_lea.vmem %s10, %s7506
      $region76: #{_lambda_.3} parent=71 // pred_fallthru
        _
    $region72: #{_lambda_.3} parent=5 // pred_fallthru
      _
  $region6: #{_lambda_.3} parent=0 // loop_footer
    %s20 = sadd.s32 1, %s16
  $region7: #{_lambda_.3} parent=0 // loop_footer_branch
    %15 = sbr.rel target = $region3
  $region8: #{_lambda_.3} parent=0 // loop_exit
    _

</llo_original>
